<compile_context>
chip_gen: v7x
topology: tpu7x:2x2x1
jax: 0.10.0
libtpu: 0.0.40
codegen_flags: <defaults>
</compile_context>

<pallas_src>
import functools

import jax
import jax.numpy as jnp
from jax.experimental import pallas as pl
from jax.experimental.pallas import tpu as pltpu

_LANE = 128
_SUBLANE = 8
_BN_EPS = 1e-5
_TA_CAP = 4096            # max rows per step in the streaming BN-apply pass


def _cdiv(a, b):
    return (a + b - 1) // b


def _round_up(x, m):
    return (x + m - 1) // m * m


def _tpu_vmem_capacity():
    """Per-generation VMEM (128 MiB v5e/v6e, 64 MiB per-TC v7x); safe fallback."""
    try:
        info = pltpu.get_tpu_info()
        cap = getattr(info, "vmem_capacity_bytes", None)
        if cap:
            return int(cap)
    except Exception:
        pass
    return 64 * 1024 * 1024


_VMEM_CAP = _tpu_vmem_capacity()
_VMEM_LIMIT = min(_VMEM_CAP * 3 // 4, 96 * 1024 * 1024)
_TILE_BUDGET = int(_VMEM_LIMIT * 0.6)     # what our double-buffered blocks may use
_TM_PREF = 1024 if _VMEM_CAP >= 100 * 1024 * 1024 else 512


def _act(y, act):
    if act == "lrelu":
        return jnp.where(y > 0, y, 0.2 * y)   # nn.LeakyReLU(0.2)
    if act == "relu":
        return jnp.maximum(y, 0.0)
    if act == "tanh":
        return jnp.tanh(y)
    return y


# ----------------------------------------------------------------------------
# Pallas kernels
# ----------------------------------------------------------------------------
def _mm_stats_kernel(x_ref, w_ref, y_ref, s_ref, q_ref):
    """BN pass 1: bf16 MXU matmul (f32 accumulate), bf16 y written to HBM,
    per-(phase, shard, co-tile) partial sum / sum-of-squares accumulated in f32
    across the innermost ('arbitrary') M-tile axis only -- the outer axes are
    'parallel', so each megacore shard owns its own partial-stat blocks."""
    i = pl.program_id(3)

    @pl.when(i == 0)
    def _init():
        s_ref[...] = jnp.zeros_like(s_ref)
        q_ref[...] = jnp.zeros_like(q_ref)

    y = jnp.dot(x_ref[0], w_ref[0], preferred_element_type=jnp.float32)
    y_ref[0] = y.astype(y_ref.dtype)
    s_ref[0] += jnp.sum(y, axis=0, keepdims=True)
    q_ref[0] += jnp.sum(y * y, axis=0, keepdims=True)


def _bn_apply_kernel(y_ref, s_ref, q_ref, g_ref, b_ref, o_ref, *, inv_count, act):
    """BN pass 2: combine partial stats, fold into scale/shift, apply + act.
    Streaming over large flattened row tiles; all math in f32, bf16 out."""
    mean = jnp.sum(s_ref[...], axis=0) * inv_count          # (1, Co)
    ex2 = jnp.sum(q_ref[...], axis=0) * inv_count
    var = jnp.maximum(ex2 - mean * mean, 0.0)
    scale = g_ref[...] * jax.lax.rsqrt(var + _BN_EPS)
    shift = b_ref[...] - mean * scale
    y = y_ref[...].astype(jnp.float32)
    o_ref[...] = _act(y * scale + shift, act).astype(o_ref.dtype)


def _mm_bias_act_kernel(x_ref, w_ref, b_ref, o_ref, *, act):
    """No-BN layer: bf16 matmul (f32 accumulate) + bias + activation, bf16 out."""
    y = jnp.dot(x_ref[0], w_ref[0], preferred_element_type=jnp.float32) + b_ref[...]
    o_ref[0] = _act(y, act).astype(o_ref.dtype)


# ----------------------------------------------------------------------------
# Fused layer wrapper (tiling, padding, pallas_call plumbing)
# ----------------------------------------------------------------------------
def _fused_conv_layer(patches_p, weights_p, bias, gamma, beta, act, use_bn):
    """patches_p (P, M, K) bf16, weights_p (P, K, Co) f32 -> (P, M, Co_eff) bf16.

    Co_eff is the lane-padded output-channel count; it is intentionally NOT
    trimmed so the next layer consumes the activation without a pad/slice copy
    (the padded columns are exactly zero and hit zero weight rows downstream).
    """
    P, M, K = patches_p.shape
    Co = weights_p.shape[2]

    K_pad = _round_up(K, _LANE)
    Co_pad = _round_up(Co, _LANE)

    # ---- tile selection (per-generation, VMEM-budget aware) -----------------
    tm = min(_TM_PREF, max(_SUBLANE, _round_up(M, _SUBLANE)))
    tn = Co_pad

    def mm_vmem(tm_, tn_):    # double-buffered bf16 matmul-pass blocks (+ slack)
        return 2 * (tm_ * K_pad + K_pad * tn_ + tm_ * tn_) * 2 + 32 * Co_pad * 4

    while mm_vmem(tm, tn) > _TILE_BUDGET and tn > 2 * _LANE:
        tn = _round_up(tn // 2, _LANE)
    while mm_vmem(tm, tn) > _TILE_BUDGET and tm > 256:
        tm = _round_up(tm // 2, _SUBLANE)

    Co_eff = _round_up(Co_pad, tn)
    co_t = Co_eff // tn

    mt_total = _cdiv(M, tm)
    # Split the M-tile axis into S parallel shards of partial BN statistics so
    # both v7x TensorCores get stats-matmul work even when P == co_t == 1.
    S = 2 if (use_bn and P == 1 and co_t == 1 and mt_total >= 2) else 1
    mt_inner = _cdiv(mt_total, S)
    M_pad = S * mt_inner * tm

    xp = patches_p.astype(jnp.bfloat16)           # already bf16: no-op cast
    if M_pad != M or K_pad != K:
        xp = jnp.pad(xp, ((0, 0), (0, M_pad - M), (0, K_pad - K)))
    wp = jnp.pad(weights_p, ((0, 0), (0, K_pad - K), (0, Co_eff - Co))).astype(jnp.bfloat16)

    mm_flops = 2 * P * M_pad * K_pad * Co_eff
    mm_bytes = xp.size * 2 * co_t + wp.size * 2 + P * M_pad * Co_eff * 2

    if use_bn:
        # Conv bias is dropped: it is exactly cancelled by the BN mean subtraction.
        g = jnp.pad(gamma, (0, Co_eff - Co)).reshape(1, Co_eff).astype(jnp.float32)
        bt = jnp.pad(beta, (0, Co_eff - Co)).reshape(1, Co_eff).astype(jnp.float32)
        inv_count = 1.0 / float(P * M)   # zero-padded rows contribute 0 to the sums

        x_spec = pl.BlockSpec((1, tm, K_pad), lambda p, j, co, i: (p, j * mt_inner + i, 0))
        # TODO(synk): single-buffer this block (pl.Buffered(1)) -- its index only
        # changes with (p, co); kept default-buffered for lowering safety.
        w_spec = pl.BlockSpec((1, K_pad, tn), lambda p, j, co, i: (p, 0, co))
        y_spec = pl.BlockSpec((1, tm, tn), lambda p, j, co, i: (p, j * mt_inner + i, co))
        st_spec = pl.BlockSpec((1, 1, tn), lambda p, j, co, i: (p * S + j, 0, co))

        y_raw, s_sum, s_sq = pl.pallas_call(
            _mm_stats_kernel,
            out_shape=(
                jax.ShapeDtypeStruct((P, M_pad, Co_eff), jnp.bfloat16),
                jax.ShapeDtypeStruct((P * S, 1, Co_eff), jnp.float32),
                jax.ShapeDtypeStruct((P * S, 1, Co_eff), jnp.float32),
            ),
            grid=(P, S, co_t, mt_inner),
            in_specs=[x_spec, w_spec],
            out_specs=(y_spec, st_spec, st_spec),
            compiler_params=pltpu.CompilerParams(
                dimension_semantics=("parallel", "parallel", "parallel", "arbitrary"),
                vmem_limit_bytes=_VMEM_LIMIT),
            cost_estimate=pl.CostEstimate(
                flops=mm_flops + 3 * P * M_pad * Co_eff,
                transcendentals=0,
                bytes_accessed=mm_bytes + 2 * P * S * Co_eff * 4),
        )(xp, wp)

        # ---- pass 2: streaming scale/shift + activation over big row tiles --
        rows = P * M_pad
        q = rows // tm
        f = min(q,
                max(1, _TILE_BUDGET // (8 * Co_eff * tm)),
                max(1, _TA_CAP // tm))
        while q % f:
            f -= 1
        ta = f * tm

        y_flat = y_raw.reshape(rows, Co_eff)
        row_spec = pl.BlockSpec((ta, Co_eff), lambda r: (r, 0))
        stf_spec = pl.BlockSpec((P * S, 1, Co_eff), lambda r: (0, 0, 0))
        vec_spec = pl.BlockSpec((1, Co_eff), lambda r: (0, 0))

        out_flat = pl.pallas_call(
            functools.partial(_bn_apply_kernel, inv_count=inv_count, act=act),
            out_shape=jax.ShapeDtypeStruct((rows, Co_eff), jnp.bfloat16),
            grid=(rows // ta,),
            in_specs=[row_spec, stf_spec, stf_spec, vec_spec, vec_spec],
            out_specs=row_spec,
            compiler_params=pltpu.CompilerParams(
                dimension_semantics=("parallel",),
                vmem_limit_bytes=_VMEM_LIMIT),
            cost_estimate=pl.CostEstimate(
                flops=4 * rows * Co_eff,
                transcendentals=rows * Co_eff if act == "tanh" else 0,
                bytes_accessed=4 * rows * Co_eff + (2 * P * S + 2) * Co_eff * 4),
        )(y_flat, s_sum, s_sq, g, bt)
        out = out_flat.reshape(P, M_pad, Co_eff)
    else:
        b = jnp.pad(bias, (0, Co_eff - Co)).reshape(1, Co_eff).astype(jnp.float32)
        mt = S * mt_inner
        x_spec = pl.BlockSpec((1, tm, K_pad), lambda p, co, i: (p, i, 0))
        w_spec = pl.BlockSpec((1, K_pad, tn), lambda p, co, i: (p, 0, co))
        y_spec = pl.BlockSpec((1, tm, tn), lambda p, co, i: (p, i, co))
        vec_spec = pl.BlockSpec((1, tn), lambda p, co, i: (0, co))
        out = pl.pallas_call(
            functools.partial(_mm_bias_act_kernel, act=act),
            out_shape=jax.ShapeDtypeStruct((P, M_pad, Co_eff), jnp.bfloat16),
            grid=(P, co_t, mt),
            in_specs=[x_spec, w_spec, vec_spec],
            out_specs=y_spec,
            compiler_params=pltpu.CompilerParams(
                dimension_semantics=("parallel", "parallel", "parallel"),
                vmem_limit_bytes=_VMEM_LIMIT),
            cost_estimate=pl.CostEstimate(
                flops=mm_flops,
                transcendentals=P * M_pad * Co_eff if act == "tanh" else 0,
                bytes_accessed=mm_bytes),
        )(xp, wp, b)

    # Keep the lane-padded channel dim for the next layer; only trim padded rows.
    return out[:, :M, :]


# ----------------------------------------------------------------------------
# JAX glue: bf16 im2col patch extraction, conv / conv-transpose layer wrappers
# ----------------------------------------------------------------------------
def _im2col(x_nhwc, kh, kw, stride, pt, pb, pleft, pright):
    # Operates directly on the bf16, channel-padded activation so the 9x/4x tap
    # duplication is bf16 and needs no post-hoc pad/cast.
    N, H, W, C = x_nhwc.shape
    xp = jnp.pad(x_nhwc, ((0, 0), (pt, pb), (pleft, pright), (0, 0)))
    OH = (H + pt + pb - kh) // stride + 1
    OW = (W + pleft + pright - kw) // stride + 1
    cols = []
    for dh in range(kh):
        for dw in range(kw):
            cols.append(xp[:, dh:dh + stride * OH:stride,
                           dw:dw + stride * OW:stride, :])
    patches = jnp.concatenate(cols, axis=-1)            # (N, OH, OW, kh*kw*C)
    return patches.reshape(N * OH * OW, kh * kw * C), (N, OH, OW)


def conv2d_layer(x, layer_params, stride, pad, act, use_bn):
    """x: NHWC bf16 whose channel dim may be lane-padded beyond the real cin."""
    w_hwio, b, gamma, beta = layer_params
    kh, kw, cin, cout = w_hwio.shape
    c_act = x.shape[-1]
    # Pad weights per-tap up to the activation's channel count; padded activation
    # channels hit zero weight rows, so their contents are ignored.
    w = jnp.pad(w_hwio, ((0, 0), (0, 0), (0, c_act - cin), (0, 0)))
    w_flat = w.reshape(kh * kw * c_act, cout)
    patches, (N, OH, OW) = _im2col(x, kh, kw, stride, pad, pad, pad, pad)
    out = _fused_conv_layer(patches[None], w_flat[None], b, gamma, beta, act, use_bn)
    return out[0].reshape(N, OH, OW, out.shape[-1])


def conv_transpose2d_layer(x, layer_params, act, use_bn):
    """ConvTranspose2d(k=4, stride=2, pad=1) via sub-pixel decomposition:
    4 phase outputs, each a 2x2 stride-1 conv at input resolution, interleaved.
    """
    w_pt, b, gamma, beta = layer_params                  # (cin, cout, 4, 4)
    cin, cout, _, _ = w_pt.shape
    N, H, W, c_act = x.shape
    w_pt = jnp.pad(w_pt, ((0, c_act - cin), (0, 0), (0, 0), (0, 0)))

    # Phase r uses ConvT kernel rows KTAP[r] (in im2col tap order) and
    # one-sided padding PADS[r]; same tables apply to the x dimension.
    KTAP = ((3, 1), (2, 0))
    PADS = ((1, 0), (0, 1))

    patch_list, weight_list = [], []
    for r in range(2):
        for s in range(2):
            pt, pb = PADS[r]
            pleft, pright = PADS[s]
            patches, _ = _im2col(x, 2, 2, 1, pt, pb, pleft, pright)       # (N*H*W, 4*c_act)
            w_sub = w_pt[:, :, list(KTAP[r]), :][:, :, :, list(KTAP[s])]  # (c_act,cout,2,2)
            w_sub = jnp.transpose(w_sub, (2, 3, 0, 1))                    # (2,2,c_act,cout)
            weight_list.append(w_sub.reshape(2 * 2 * c_act, cout))
            patch_list.append(patches)

    patches_p = jnp.stack(patch_list, axis=0)             # (4, N*H*W, 4*c_act) bf16
    weights_p = jnp.stack(weight_list, axis=0)             # (4, 4*c_act, cout)

    out = _fused_conv_layer(patches_p, weights_p, b, gamma, beta, act, use_bn)
    cpad = out.shape[-1]
    # TODO(synk): do this interleave with the Pallas output DMA instead of an
    # XLA 6-D transpose (one full activation round-trip per decoder layer).
    out = out.reshape(2, 2, N, H, W, cpad)                 # (r, s, N, H, W, C)
    out = jnp.transpose(out, (2, 3, 0, 4, 1, 5))           # (N, H, r, W, s, C)
    return out.reshape(N, 2 * H, 2 * W, cpad)


# ----------------------------------------------------------------------------
# Deterministic parameter initialization (shapes from Generator.__init__)
# ----------------------------------------------------------------------------
def init_params(key, input_channels, output_channels, ngf, n_residual_layers):
    params = {}

    def conv_p(k, kh, kw, cin, cout):
        k1, k2 = jax.random.split(k)
        w = jax.random.normal(k1, (kh, kw, cin, cout), jnp.float32) * 0.05
        b = jax.random.normal(k2, (cout,), jnp.float32) * 0.05
        g = jnp.ones((cout,), jnp.float32)    # BN weight init (PyTorch default)
        bt = jnp.zeros((cout,), jnp.float32)  # BN bias init
        return (w, b, g, bt)

    def convT_p(k, cin, cout, kh, kw):
        k1, k2 = jax.random.split(k)
        w = jax.random.normal(k1, (cin, cout, kh, kw), jnp.float32) * 0.05
        b = jax.random.normal(k2, (cout,), jnp.float32) * 0.05
        g = jnp.ones((cout,), jnp.float32)
        bt = jnp.zeros((cout,), jnp.float32)
        return (w, b, g, bt)

    n_keys = 3 + 2 * n_residual_layers + 3
    keys = jax.random.split(key, n_keys)
    ki = iter(keys)

    # encoder
    params["enc1"] = conv_p(next(ki), 3, 3, input_channels, ngf)
    params["enc2"] = conv_p(next(ki), 3, 3, ngf, ngf * 2)
    params["enc3"] = conv_p(next(ki), 3, 3, ngf * 2, ngf * 4)
    # residual blocks
    for i in range(n_residual_layers):
        params[f"res{i}_a"] = conv_p(next(ki), 3, 3, ngf * 4, ngf * 4)
        params[f"res{i}_b"] = conv_p(next(ki), 3, 3, ngf * 4, ngf * 4)
    # decoder
    params["dec1"] = convT_p(next(ki), ngf * 4, ngf * 2, 4, 4)
    params["dec2"] = convT_p(next(ki), ngf * 2, ngf, 4, 4)
    params["dec3"] = conv_p(next(ki), 3, 3, ngf, output_channels)
    return params


# ----------------------------------------------------------------------------
# Forward pass (mirrors Generator.forward with vision_transformer=False)
# ----------------------------------------------------------------------------
def generator_forward(params, x_nchw, n_residual_layers):
    # NCHW -> NHWC, bf16 (intentional precision tradeoff vs the f32 reference).
    x = jnp.transpose(x_nchw, (0, 2, 3, 1)).astype(jnp.bfloat16)

    # encoder: Conv(s1)+LReLU, Conv(s2)+BN+LReLU, Conv(s2)+BN+LReLU
    x = conv2d_layer(x, params["enc1"], stride=1, pad=1, act="lrelu", use_bn=False)
    x = conv2d_layer(x, params["enc2"], stride=2, pad=1, act="lrelu", use_bn=True)
    x = conv2d_layer(x, params["enc3"], stride=2, pad=1, act="lrelu", use_bn=True)

    # "residual" blocks: the PyTorch module wraps them in nn.Sequential and
    # never adds a skip connection in forward -- reproduced exactly (no skip).
    for i in range(n_residual_layers):
        x = conv2d_layer(x, params[f"res{i}_a"], stride=1, pad=1, act="relu", use_bn=True)
        x = conv2d_layer(x, params[f"res{i}_b"], stride=1, pad=1, act="none", use_bn=True)

    # decoder: ConvT(s2)+BN+ReLU, ConvT(s2)+BN+ReLU, Conv(s1)+Tanh
    x = conv_transpose2d_layer(x, params["dec1"], act="relu", use_bn=True)
    x = conv_transpose2d_layer(x, params["dec2"], act="relu", use_bn=True)
    x = conv2d_layer(x, params["dec3"], stride=1, pad=1, act="tanh", use_bn=False)

    # Strip the lane padding only at the very end; return f32 NCHW like the module.
    cout = params["dec3"][0].shape[-1]
    x = x[..., :cout].astype(jnp.float32)
    return jnp.transpose(x, (0, 3, 1, 2))                  # NHWC -> NCHW


if __name__ == "__main__":
    key = jax.random.PRNGKey(0)
    kx, kp = jax.random.split(key)

    # Small shapes consistent with the module:
    N, Cin, H, W = 2, 4, 16, 16
    ngf, Cout, n_res = 8, 3, 2

    x = jax.random.normal(kx, (N, Cin, H, W), jnp.float32)
    params = init_params(kp, Cin, Cout, ngf, n_res)

    fwd = jax.jit(functools.partial(generator_forward, n_residual_layers=n_res))
    y = fwd(params, x)
    y = jax.block_until_ready(y)

    assert y.shape == (N, Cout, H, W), y.shape
    assert bool(jnp.all(jnp.isfinite(y)))
    assert bool(jnp.all(jnp.abs(y) <= 1.0))  # final Tanh
    print("KERNEL_OK")
</pallas_src>

<mosaic_0001>
module attributes {stable_mosaic.version = 11 : i64} {
  func.func @_mm_bias_act_kernel(%arg0: i32, %arg1: i32, %arg2: i32, %arg3: memref<1x512x128xbf16, #tpu.memory_space<vmem>>, %arg4: memref<1x128x128xbf16, #tpu.memory_space<vmem>>, %arg5: memref<1x128xf32, #tpu.memory_space<vmem>>, %arg6: memref<1x512x128xbf16, #tpu.memory_space<vmem>>) attributes {dimension_semantics = [#tpu.dimension_semantics<parallel>, #tpu.dimension_semantics<parallel>, #tpu.dimension_semantics<parallel>], iteration_bounds = array<i64: 1, 1, 1>, scalar_prefetch = 0 : i64, scratch_operands = 0 : i64, tpu.core_type = #tpu.core_type<tc>, window_params = [{transform_indices = @transform_0, window_bounds = array<i64: 1, 512, 128>}, {transform_indices = @transform_1, window_bounds = array<i64: 1, 128, 128>}, {transform_indices = @transform_2, window_bounds = array<i64: 1, 128>}, {transform_indices = @transform_3, window_bounds = array<i64: 1, 512, 128>}]} {
    %c0 = arith.constant 0 : index
    %c0_0 = arith.constant 0 : index
    %c0_1 = arith.constant 0 : index
    %0 = vector.load %arg3[%c0, %c0_0, %c0_1] : memref<1x512x128xbf16, #tpu.memory_space<vmem>>, vector<1x512x128xbf16>
    %1 = vector.shape_cast %0 : vector<1x512x128xbf16> to vector<512x128xbf16>
    %c0_2 = arith.constant 0 : index
    %c0_3 = arith.constant 0 : index
    %c0_4 = arith.constant 0 : index
    %2 = vector.load %arg4[%c0_2, %c0_3, %c0_4] : memref<1x128x128xbf16, #tpu.memory_space<vmem>>, vector<1x128x128xbf16>
    %3 = vector.shape_cast %2 : vector<1x128x128xbf16> to vector<128x128xbf16>
    %cst = arith.constant dense<0.000000e+00> : vector<512x128xf32>
    %4 = tpu.matmul %1, %3, %cst {dimension_numbers = #tpu.dot_dimension_numbers<[1], [0], [0], [1], [0, 0, 1, 1], [], []>} : vector<512x128xbf16>, vector<128x128xbf16>, vector<512x128xf32> -> vector<512x128xf32>
    %c0_5 = arith.constant 0 : index
    %c0_6 = arith.constant 0 : index
    %5 = vector.load %arg5[%c0_5, %c0_6] : memref<1x128xf32, #tpu.memory_space<vmem>>, vector<1x128xf32>
    %6 = vector.broadcast %5 : vector<1x128xf32> to vector<512x128xf32>
    %7 = arith.addf %4, %6 : vector<512x128xf32>
    %cst_7 = arith.constant 0.000000e+00 : f32
    %8 = vector.broadcast %cst_7 : f32 to vector<512x128xf32>
    %9 = arith.cmpf ogt, %7, %8 : vector<512x128xf32>
    %cst_8 = arith.constant 2.000000e-01 : f32
    %10 = vector.broadcast %cst_8 : f32 to vector<512x128xf32>
    %11 = arith.mulf %10, %7 : vector<512x128xf32>
    %12 = arith.select %9, %7, %11 : vector<512x128xi1>, vector<512x128xf32>
    %13 = arith.truncf %12 : vector<512x128xf32> to vector<512x128xbf16>
    %c0_9 = arith.constant 0 : index
    %c0_10 = arith.constant 0 : index
    %c0_11 = arith.constant 0 : index
    %14 = vector.load %arg6[%c0_9, %c0_10, %c0_11] : memref<1x512x128xbf16, #tpu.memory_space<vmem>>, vector<1x512x128xbf16>
    %15 = vector.shape_cast %14 : vector<1x512x128xbf16> to vector<512x128xbf16>
    %16 = vector.shape_cast %13 : vector<512x128xbf16> to vector<1x512x128xbf16>
    tpu.vector_store %arg6[%c0_9, %c0_10, %c0_11], %16 {strides = array<i32>} : memref<1x512x128xbf16, #tpu.memory_space<vmem>>, vector<1x512x128xbf16>,
    return
  }
  func.func @transform_0(%arg0: i32, %arg1: i32, %arg2: i32) -> (i32, i32, i32) {
    %c0_i32 = arith.constant 0 : i32
    %c0_i32_0 = arith.constant 0 : i32
    return %arg0, %arg2, %c0_i32 : i32, i32, i32
  }
  func.func @transform_1(%arg0: i32, %arg1: i32, %arg2: i32) -> (i32, i32, i32) {
    %c0_i32 = arith.constant 0 : i32
    %c0_i32_0 = arith.constant 0 : i32
    return %arg0, %c0_i32, %arg1 : i32, i32, i32
  }
  func.func @transform_2(%arg0: i32, %arg1: i32, %arg2: i32) -> (i32, i32) {
    %c0_i32 = arith.constant 0 : i32
    %c0_i32_0 = arith.constant 0 : i32
    return %c0_i32, %arg1 : i32, i32
  }
  func.func @transform_3(%arg0: i32, %arg1: i32, %arg2: i32) -> (i32, i32, i32) {
    %c0_i32 = arith.constant 0 : i32
    return %arg0, %arg2, %arg1 : i32, i32, i32
  }
}

module attributes {stable_mosaic.version = 11 : i64} {
  func.func @_mm_stats_kernel(%arg0: i32, %arg1: i32, %arg2: i32, %arg3: i32, %arg4: memref<1x128x1152xbf16, #tpu.memory_space<vmem>>, %arg5: memref<1x1152x128xbf16, #tpu.memory_space<vmem>>, %arg6: memref<1x128x128xbf16, #tpu.memory_space<vmem>>, %arg7: memref<1x1x128xf32, #tpu.memory_space<vmem>>, %arg8: memref<1x1x128xf32, #tpu.memory_space<vmem>>) attributes {dimension_semantics = [#tpu.dimension_semantics<parallel>, #tpu.dimension_semantics<parallel>, #tpu.dimension_semantics<parallel>, #tpu.dimension_semantics<arbitrary>], iteration_bounds = array<i64: 1, 1, 1, 1>, scalar_prefetch = 0 : i64, scratch_operands = 0 : i64, tpu.core_type = #tpu.core_type<tc>, window_params = [{transform_indices = @transform_0, window_bounds = array<i64: 1, 128, 1152>}, {transform_indices = @transform_1, window_bounds = array<i64: 1, 1152, 128>}, {transform_indices = @transform_2, window_bounds = array<i64: 1, 128, 128>}, {transform_indices = @transform_3, window_bounds = array<i64: 1, 1, 128>}, {transform_indices = @transform_4, window_bounds = array<i64: 1, 1, 128>}]} {
    %c0_i32 = arith.constant 0 : i32
    %0 = arith.cmpi eq, %arg3, %c0_i32 : i32
    %1 = arith.extui %0 : i1 to i32
    %c0_i32_0 = arith.constant 0 : i32
    %2 = arith.cmpi ne, %1, %c0_i32_0 : i32
    scf.if %2 {
      %cst_23 = arith.constant 0.000000e+00 : f32
      %29 = vector.broadcast %cst_23 : f32 to vector<1x1x128xf32>
      %c0_24 = arith.constant 0 : index
      %c0_25 = arith.constant 0 : index
      %c0_26 = arith.constant 0 : index
      %30 = vector.load %arg7[%c0_24, %c0_25, %c0_26] : memref<1x1x128xf32, #tpu.memory_space<vmem>>, vector<1x1x128xf32>
      tpu.vector_store %arg7[%c0_24, %c0_25, %c0_26], %29 {strides = array<i32>} : memref<1x1x128xf32, #tpu.memory_space<vmem>>, vector<1x1x128xf32>,
      %cst_27 = arith.constant 0.000000e+00 : f32
      %31 = vector.broadcast %cst_27 : f32 to vector<1x1x128xf32>
      %c0_28 = arith.constant 0 : index
      %c0_29 = arith.constant 0 : index
      %c0_30 = arith.constant 0 : index
      %32 = vector.load %arg8[%c0_28, %c0_29, %c0_30] : memref<1x1x128xf32, #tpu.memory_space<vmem>>, vector<1x1x128xf32>
      tpu.vector_store %arg8[%c0_28, %c0_29, %c0_30], %31 {strides = array<i32>} : memref<1x1x128xf32, #tpu.memory_space<vmem>>, vector<1x1x128xf32>,
    } else {
    }
    %c0 = arith.constant 0 : index
    %c0_1 = arith.constant 0 : index
    %c0_2 = arith.constant 0 : index
    %3 = vector.load %arg4[%c0, %c0_1, %c0_2] : memref<1x128x1152xbf16, #tpu.memory_space<vmem>>, vector<1x128x1152xbf16>
    %4 = vector.shape_cast %3 : vector<1x128x1152xbf16> to vector<128x1152xbf16>
    %c0_3 = arith.constant 0 : index
    %c0_4 = arith.constant 0 : index
    %c0_5 = arith.constant 0 : index
    %5 = vector.load %arg5[%c0_3, %c0_4, %c0_5] : memref<1x1152x128xbf16, #tpu.memory_space<vmem>>, vector<1x1152x128xbf16>
    %6 = vector.shape_cast %5 : vector<1x1152x128xbf16> to vector<1152x128xbf16>
    %cst = arith.constant dense<0.000000e+00> : vector<128x128xf32>
    %7 = tpu.matmul %4, %6, %cst {dimension_numbers = #tpu.dot_dimension_numbers<[1], [0], [0], [1], [0, 0, 1, 1], [], []>} : vector<128x1152xbf16>, vector<1152x128xbf16>, vector<128x128xf32> -> vector<128x128xf32>
    %8 = arith.truncf %7 : vector<128x128xf32> to vector<128x128xbf16>
    %c0_6 = arith.constant 0 : index
    %c0_7 = arith.constant 0 : index
    %c0_8 = arith.constant 0 : index
    %9 = vector.load %arg6[%c0_6, %c0_7, %c0_8] : memref<1x128x128xbf16, #tpu.memory_space<vmem>>, vector<1x128x128xbf16>
    %10 = vector.shape_cast %9 : vector<1x128x128xbf16> to vector<128x128xbf16>
    %11 = vector.shape_cast %8 : vector<128x128xbf16> to vector<1x128x128xbf16>
    tpu.vector_store %arg6[%c0_6, %c0_7, %c0_8], %11 {strides = array<i32>} : memref<1x128x128xbf16, #tpu.memory_space<vmem>>, vector<1x128x128xbf16>,
    %c0_9 = arith.constant 0 : index
    %c0_10 = arith.constant 0 : index
    %c0_11 = arith.constant 0 : index
    %12 = vector.load %arg7[%c0_9, %c0_10, %c0_11] : memref<1x1x128xf32, #tpu.memory_space<vmem>>, vector<1x1x128xf32>
    %13 = vector.shape_cast %12 : vector<1x1x128xf32> to vector<1x128xf32>
    %cst_12 = arith.constant dense<0.000000e+00> : vector<128xf32>
    %14 = vector.multi_reduction <add>, %7, %cst_12 [0] : vector<128x128xf32> to vector<128xf32>
    %15 = vector.shape_cast %14 : vector<128xf32> to vector<1x128xf32>
    %16 = arith.addf %13, %15 : vector<1x128xf32>
    %c0_13 = arith.constant 0 : index
    %c0_14 = arith.constant 0 : index
    %c0_15 = arith.constant 0 : index
    %17 = vector.load %arg7[%c0_13, %c0_14, %c0_15] : memref<1x1x128xf32, #tpu.memory_space<vmem>>, vector<1x1x128xf32>
    %18 = vector.shape_cast %17 : vector<1x1x128xf32> to vector<1x128xf32>
    %19 = vector.shape_cast %16 : vector<1x128xf32> to vector<1x1x128xf32>
    tpu.vector_store %arg7[%c0_13, %c0_14, %c0_15], %19 {strides = array<i32>} : memref<1x1x128xf32, #tpu.memory_space<vmem>>, vector<1x1x128xf32>,
    %c0_16 = arith.constant 0 : index
    %c0_17 = arith.constant 0 : index
    %c0_18 = arith.constant 0 : index
    %20 = vector.load %arg8[%c0_16, %c0_17, %c0_18] : memref<1x1x128xf32, #tpu.memory_space<vmem>>, vector<1x1x128xf32>
    %21 = vector.shape_cast %20 : vector<1x1x128xf32> to vector<1x128xf32>
    %22 = arith.mulf %7, %7 : vector<128x128xf32>
    %cst_19 = arith.constant dense<0.000000e+00> : vector<128xf32>
    %23 = vector.multi_reduction <add>, %22, %cst_19 [0] : vector<128x128xf32> to vector<128xf32>
    %24 = vector.shape_cast %23 : vector<128xf32> to vector<1x128xf32>
    %25 = arith.addf %21, %24 : vector<1x128xf32>
    %c0_20 = arith.constant 0 : index
    %c0_21 = arith.constant 0 : index
    %c0_22 = arith.constant 0 : index
    %26 = vector.load %arg8[%c0_20, %c0_21, %c0_22] : memref<1x1x128xf32, #tpu.memory_space<vmem>>, vector<1x1x128xf32>
    %27 = vector.shape_cast %26 : vector<1x1x128xf32> to vector<1x128xf32>
    %28 = vector.shape_cast %25 : vector<1x128xf32> to vector<1x1x128xf32>
    tpu.vector_store %arg8[%c0_20, %c0_21, %c0_22], %28 {strides = array<i32>} : memref<1x1x128xf32, #tpu.memory_space<vmem>>, vector<1x1x128xf32>,
    return
  }
  func.func @transform_0(%arg0: i32, %arg1: i32, %arg2: i32, %arg3: i32) -> (i32, i32, i32) {
    %c1_i32 = arith.constant 1 : i32
    %0 = arith.muli %arg1, %c1_i32 : i32
    %1 = arith.addi %0, %arg3 : i32
    %c0_i32 = arith.constant 0 : i32
    %c0_i32_0 = arith.constant 0 : i32
    return %arg0, %1, %c0_i32 : i32, i32, i32
  }
  func.func @transform_1(%arg0: i32, %arg1: i32, %arg2: i32, %arg3: i32) -> (i32, i32, i32) {
    %c0_i32 = arith.constant 0 : i32
    %c0_i32_0 = arith.constant 0 : i32
    return %arg0, %c0_i32, %arg2 : i32, i32, i32
  }
  func.func @transform_2(%arg0: i32, %arg1: i32, %arg2: i32, %arg3: i32) -> (i32, i32, i32) {
    %c1_i32 = arith.constant 1 : i32
    %0 = arith.muli %arg1, %c1_i32 : i32
    %1 = arith.addi %0, %arg3 : i32
    %c0_i32 = arith.constant 0 : i32
    return %arg0, %1, %arg2 : i32, i32, i32
  }
  func.func @transform_3(%arg0: i32, %arg1: i32, %arg2: i32, %arg3: i32) -> (i32, i32, i32) {
    %c1_i32 = arith.constant 1 : i32
    %0 = arith.muli %arg0, %c1_i32 : i32
    %1 = arith.addi %0, %arg1 : i32
    %c0_i32 = arith.constant 0 : i32
    %c0_i32_0 = arith.constant 0 : i32
    return %1, %c0_i32, %arg2 : i32, i32, i32
  }
  func.func @transform_4(%arg0: i32, %arg1: i32, %arg2: i32, %arg3: i32) -> (i32, i32, i32) {
    %c1_i32 = arith.constant 1 : i32
    %0 = arith.muli %arg0, %c1_i32 : i32
    %1 = arith.addi %0, %arg1 : i32
    %c0_i32 = arith.constant 0 : i32
    %c0_i32_0 = arith.constant 0 : i32
    return %1, %c0_i32, %arg2 : i32, i32, i32
  }
}

module attributes {stable_mosaic.version = 11 : i64} {
  func.func @_bn_apply_kernel(%arg0: i32, %arg1: memref<128x128xbf16, #tpu.memory_space<vmem>>, %arg2: memref<1x1x128xf32, #tpu.memory_space<vmem>>, %arg3: memref<1x1x128xf32, #tpu.memory_space<vmem>>, %arg4: memref<1x128xf32, #tpu.memory_space<vmem>>, %arg5: memref<1x128xf32, #tpu.memory_space<vmem>>, %arg6: memref<128x128xbf16, #tpu.memory_space<vmem>>) attributes {dimension_semantics = [#tpu.dimension_semantics<parallel>], iteration_bounds = array<i64: 1>, scalar_prefetch = 0 : i64, scratch_operands = 0 : i64, tpu.core_type = #tpu.core_type<tc>, window_params = [{transform_indices = @transform_0, window_bounds = array<i64: 128, 128>}, {pipeline_mode = #tpu.pipeline_mode<synchronous>, transform_indices = @transform_1, window_bounds = array<i64: 1, 1, 128>}, {pipeline_mode = #tpu.pipeline_mode<synchronous>, transform_indices = @transform_2, window_bounds = array<i64: 1, 1, 128>}, {pipeline_mode = #tpu.pipeline_mode<synchronous>, transform_indices = @transform_3, window_bounds = array<i64: 1, 128>}, {pipeline_mode = #tpu.pipeline_mode<synchronous>, transform_indices = @transform_4, window_bounds = array<i64: 1, 128>}, {transform_indices = @transform_5, window_bounds = array<i64: 128, 128>}]} {
    %c0 = arith.constant 0 : index
    %c0_0 = arith.constant 0 : index
    %c0_1 = arith.constant 0 : index
    %0 = vector.load %arg2[%c0, %c0_0, %c0_1] : memref<1x1x128xf32, #tpu.memory_space<vmem>>, vector<1x1x128xf32>
    %cst = arith.constant dense<0.000000e+00> : vector<1x128xf32>
    %1 = vector.multi_reduction <add>, %0, %cst [0] : vector<1x1x128xf32> to vector<1x128xf32>
    %cst_2 = arith.constant 7.812500e-03 : f32
    %2 = vector.broadcast %cst_2 : f32 to vector<1x128xf32>
    %3 = arith.mulf %1, %2 : vector<1x128xf32>
    %c0_3 = arith.constant 0 : index
    %c0_4 = arith.constant 0 : index
    %c0_5 = arith.constant 0 : index
    %4 = vector.load %arg3[%c0_3, %c0_4, %c0_5] : memref<1x1x128xf32, #tpu.memory_space<vmem>>, vector<1x1x128xf32>
    %cst_6 = arith.constant dense<0.000000e+00> : vector<1x128xf32>
    %5 = vector.multi_reduction <add>, %4, %cst_6 [0] : vector<1x1x128xf32> to vector<1x128xf32>
    %cst_7 = arith.constant 7.812500e-03 : f32
    %6 = vector.broadcast %cst_7 : f32 to vector<1x128xf32>
    %7 = arith.mulf %5, %6 : vector<1x128xf32>
    %8 = arith.mulf %3, %3 : vector<1x128xf32>
    %9 = arith.subf %7, %8 : vector<1x128xf32>
    %cst_8 = arith.constant 0.000000e+00 : f32
    %10 = vector.broadcast %cst_8 : f32 to vector<1x128xf32>
    %11 = arith.maximumf %9, %10 : vector<1x128xf32>
    %c0_9 = arith.constant 0 : index
    %c0_10 = arith.constant 0 : index
    %12 = vector.load %arg4[%c0_9, %c0_10] : memref<1x128xf32, #tpu.memory_space<vmem>>, vector<1x128xf32>
    %cst_11 = arith.constant 9.99999974E-6 : f32
    %13 = vector.broadcast %cst_11 : f32 to vector<1x128xf32>
    %14 = arith.addf %11, %13 : vector<1x128xf32>
    %15 = math.rsqrt %14 : vector<1x128xf32>
    %16 = arith.mulf %12, %15 : vector<1x128xf32>
    %c0_12 = arith.constant 0 : index
    %c0_13 = arith.constant 0 : index
    %17 = vector.load %arg5[%c0_12, %c0_13] : memref<1x128xf32, #tpu.memory_space<vmem>>, vector<1x128xf32>
    %18 = arith.mulf %3, %16 : vector<1x128xf32>
    %19 = arith.subf %17, %18 : vector<1x128xf32>
    %c0_14 = arith.constant 0 : index
    %c0_15 = arith.constant 0 : index
    %20 = vector.load %arg1[%c0_14, %c0_15] : memref<128x128xbf16, #tpu.memory_space<vmem>>, vector<128x128xbf16>
    %21 = arith.extf %20 : vector<128x128xbf16> to vector<128x128xf32>
    %22 = vector.broadcast %16 : vector<1x128xf32> to vector<128x128xf32>
    %23 = arith.mulf %21, %22 : vector<128x128xf32>
    %24 = vector.broadcast %19 : vector<1x128xf32> to vector<128x128xf32>
    %25 = arith.addf %23, %24 : vector<128x128xf32>
    %cst_16 = arith.constant 0.000000e+00 : f32
    %26 = vector.broadcast %cst_16 : f32 to vector<128x128xf32>
    %27 = arith.cmpf ogt, %25, %26 : vector<128x128xf32>
    %cst_17 = arith.constant 2.000000e-01 : f32
    %28 = vector.broadcast %cst_17 : f32 to vector<128x128xf32>
    %29 = arith.mulf %28, %25 : vector<128x128xf32>
    %30 = arith.select %27, %25, %29 : vector<128x128xi1>, vector<128x128xf32>
    %31 = arith.truncf %30 : vector<128x128xf32> to vector<128x128xbf16>
    %c0_18 = arith.constant 0 : index
    %c0_19 = arith.constant 0 : index
    %32 = vector.load %arg6[%c0_18, %c0_19] : memref<128x128xbf16, #tpu.memory_space<vmem>>, vector<128x128xbf16>
    tpu.vector_store %arg6[%c0_18, %c0_19], %31 {strides = array<i32>} : memref<128x128xbf16, #tpu.memory_space<vmem>>, vector<128x128xbf16>,
    return
  }
  func.func @transform_0(%arg0: i32) -> (i32, i32) {
    %c0_i32 = arith.constant 0 : i32
    %c0_i32_0 = arith.constant 0 : i32
    return %arg0, %c0_i32 : i32, i32
  }
  func.func @transform_1(%arg0: i32) -> (i32, i32, i32) {
    %c0_i32 = arith.constant 0 : i32
    %c0_i32_0 = arith.constant 0 : i32
    %c0_i32_1 = arith.constant 0 : i32
    %c0_i32_2 = arith.constant 0 : i32
    return %c0_i32, %c0_i32_0, %c0_i32_1 : i32, i32, i32
  }
  func.func @transform_2(%arg0: i32) -> (i32, i32, i32) {
    %c0_i32 = arith.constant 0 : i32
    %c0_i32_0 = arith.constant 0 : i32
    %c0_i32_1 = arith.constant 0 : i32
    %c0_i32_2 = arith.constant 0 : i32
    return %c0_i32, %c0_i32_0, %c0_i32_1 : i32, i32, i32
  }
  func.func @transform_3(%arg0: i32) -> (i32, i32) {
    %c0_i32 = arith.constant 0 : i32
    %c0_i32_0 = arith.constant 0 : i32
    %c0_i32_1 = arith.constant 0 : i32
    return %c0_i32, %c0_i32_0 : i32, i32
  }
  func.func @transform_4(%arg0: i32) -> (i32, i32) {
    %c0_i32 = arith.constant 0 : i32
    %c0_i32_0 = arith.constant 0 : i32
    %c0_i32_1 = arith.constant 0 : i32
    return %c0_i32, %c0_i32_0 : i32, i32
  }
  func.func @transform_5(%arg0: i32) -> (i32, i32) {
    %c0_i32 = arith.constant 0 : i32
    %c0_i32_0 = arith.constant 0 : i32
    return %arg0, %c0_i32 : i32, i32
  }
}

module attributes {stable_mosaic.version = 11 : i64} {
  func.func @_mm_stats_kernel(%arg0: i32, %arg1: i32, %arg2: i32, %arg3: i32, %arg4: memref<1x32x1152xbf16, #tpu.memory_space<vmem>>, %arg5: memref<1x1152x128xbf16, #tpu.memory_space<vmem>>, %arg6: memref<1x32x128xbf16, #tpu.memory_space<vmem>>, %arg7: memref<1x1x128xf32, #tpu.memory_space<vmem>>, %arg8: memref<1x1x128xf32, #tpu.memory_space<vmem>>) attributes {dimension_semantics = [#tpu.dimension_semantics<parallel>, #tpu.dimension_semantics<parallel>, #tpu.dimension_semantics<parallel>, #tpu.dimension_semantics<arbitrary>], iteration_bounds = array<i64: 1, 1, 1, 1>, scalar_prefetch = 0 : i64, scratch_operands = 0 : i64, tpu.core_type = #tpu.core_type<tc>, window_params = [{transform_indices = @transform_0, window_bounds = array<i64: 1, 32, 1152>}, {transform_indices = @transform_1, window_bounds = array<i64: 1, 1152, 128>}, {transform_indices = @transform_2, window_bounds = array<i64: 1, 32, 128>}, {transform_indices = @transform_3, window_bounds = array<i64: 1, 1, 128>}, {transform_indices = @transform_4, window_bounds = array<i64: 1, 1, 128>}]} {
    %c0_i32 = arith.constant 0 : i32
    %0 = arith.cmpi eq, %arg3, %c0_i32 : i32
    %1 = arith.extui %0 : i1 to i32
    %c0_i32_0 = arith.constant 0 : i32
    %2 = arith.cmpi ne, %1, %c0_i32_0 : i32
    scf.if %2 {
      %cst_23 = arith.constant 0.000000e+00 : f32
      %29 = vector.broadcast %cst_23 : f32 to vector<1x1x128xf32>
      %c0_24 = arith.constant 0 : index
      %c0_25 = arith.constant 0 : index
      %c0_26 = arith.constant 0 : index
      %30 = vector.load %arg7[%c0_24, %c0_25, %c0_26] : memref<1x1x128xf32, #tpu.memory_space<vmem>>, vector<1x1x128xf32>
      tpu.vector_store %arg7[%c0_24, %c0_25, %c0_26], %29 {strides = array<i32>} : memref<1x1x128xf32, #tpu.memory_space<vmem>>, vector<1x1x128xf32>,
      %cst_27 = arith.constant 0.000000e+00 : f32
      %31 = vector.broadcast %cst_27 : f32 to vector<1x1x128xf32>
      %c0_28 = arith.constant 0 : index
      %c0_29 = arith.constant 0 : index
      %c0_30 = arith.constant 0 : index
      %32 = vector.load %arg8[%c0_28, %c0_29, %c0_30] : memref<1x1x128xf32, #tpu.memory_space<vmem>>, vector<1x1x128xf32>
      tpu.vector_store %arg8[%c0_28, %c0_29, %c0_30], %31 {strides = array<i32>} : memref<1x1x128xf32, #tpu.memory_space<vmem>>, vector<1x1x128xf32>,
    } else {
    }
    %c0 = arith.constant 0 : index
    %c0_1 = arith.constant 0 : index
    %c0_2 = arith.constant 0 : index
    %3 = vector.load %arg4[%c0, %c0_1, %c0_2] : memref<1x32x1152xbf16, #tpu.memory_space<vmem>>, vector<1x32x1152xbf16>
    %4 = vector.shape_cast %3 : vector<1x32x1152xbf16> to vector<32x1152xbf16>
    %c0_3 = arith.constant 0 : index
    %c0_4 = arith.constant 0 : index
    %c0_5 = arith.constant 0 : index
    %5 = vector.load %arg5[%c0_3, %c0_4, %c0_5] : memref<1x1152x128xbf16, #tpu.memory_space<vmem>>, vector<1x1152x128xbf16>
    %6 = vector.shape_cast %5 : vector<1x1152x128xbf16> to vector<1152x128xbf16>
    %cst = arith.constant dense<0.000000e+00> : vector<32x128xf32>
    %7 = tpu.matmul %4, %6, %cst {dimension_numbers = #tpu.dot_dimension_numbers<[1], [0], [0], [1], [0, 0, 1, 1], [], []>} : vector<32x1152xbf16>, vector<1152x128xbf16>, vector<32x128xf32> -> vector<32x128xf32>
    %8 = arith.truncf %7 : vector<32x128xf32> to vector<32x128xbf16>
    %c0_6 = arith.constant 0 : index
    %c0_7 = arith.constant 0 : index
    %c0_8 = arith.constant 0 : index
    %9 = vector.load %arg6[%c0_6, %c0_7, %c0_8] : memref<1x32x128xbf16, #tpu.memory_space<vmem>>, vector<1x32x128xbf16>
    %10 = vector.shape_cast %9 : vector<1x32x128xbf16> to vector<32x128xbf16>
    %11 = vector.shape_cast %8 : vector<32x128xbf16> to vector<1x32x128xbf16>
    tpu.vector_store %arg6[%c0_6, %c0_7, %c0_8], %11 {strides = array<i32>} : memref<1x32x128xbf16, #tpu.memory_space<vmem>>, vector<1x32x128xbf16>,
    %c0_9 = arith.constant 0 : index
    %c0_10 = arith.constant 0 : index
    %c0_11 = arith.constant 0 : index
    %12 = vector.load %arg7[%c0_9, %c0_10, %c0_11] : memref<1x1x128xf32, #tpu.memory_space<vmem>>, vector<1x1x128xf32>
    %13 = vector.shape_cast %12 : vector<1x1x128xf32> to vector<1x128xf32>
    %cst_12 = arith.constant dense<0.000000e+00> : vector<128xf32>
    %14 = vector.multi_reduction <add>, %7, %cst_12 [0] : vector<32x128xf32> to vector<128xf32>
    %15 = vector.shape_cast %14 : vector<128xf32> to vector<1x128xf32>
    %16 = arith.addf %13, %15 : vector<1x128xf32>
    %c0_13 = arith.constant 0 : index
    %c0_14 = arith.constant 0 : index
    %c0_15 = arith.constant 0 : index
    %17 = vector.load %arg7[%c0_13, %c0_14, %c0_15] : memref<1x1x128xf32, #tpu.memory_space<vmem>>, vector<1x1x128xf32>
    %18 = vector.shape_cast %17 : vector<1x1x128xf32> to vector<1x128xf32>
    %19 = vector.shape_cast %16 : vector<1x128xf32> to vector<1x1x128xf32>
    tpu.vector_store %arg7[%c0_13, %c0_14, %c0_15], %19 {strides = array<i32>} : memref<1x1x128xf32, #tpu.memory_space<vmem>>, vector<1x1x128xf32>,
    %c0_16 = arith.constant 0 : index
    %c0_17 = arith.constant 0 : index
    %c0_18 = arith.constant 0 : index
    %20 = vector.load %arg8[%c0_16, %c0_17, %c0_18] : memref<1x1x128xf32, #tpu.memory_space<vmem>>, vector<1x1x128xf32>
    %21 = vector.shape_cast %20 : vector<1x1x128xf32> to vector<1x128xf32>
    %22 = arith.mulf %7, %7 : vector<32x128xf32>
    %cst_19 = arith.constant dense<0.000000e+00> : vector<128xf32>
    %23 = vector.multi_reduction <add>, %22, %cst_19 [0] : vector<32x128xf32> to vector<128xf32>
    %24 = vector.shape_cast %23 : vector<128xf32> to vector<1x128xf32>
    %25 = arith.addf %21, %24 : vector<1x128xf32>
    %c0_20 = arith.constant 0 : index
    %c0_21 = arith.constant 0 : index
    %c0_22 = arith.constant 0 : index
    %26 = vector.load %arg8[%c0_20, %c0_21, %c0_22] : memref<1x1x128xf32, #tpu.memory_space<vmem>>, vector<1x1x128xf32>
    %27 = vector.shape_cast %26 : vector<1x1x128xf32> to vector<1x128xf32>
    %28 = vector.shape_cast %25 : vector<1x128xf32> to vector<1x1x128xf32>
    tpu.vector_store %arg8[%c0_20, %c0_21, %c0_22], %28 {strides = array<i32>} : memref<1x1x128xf32, #tpu.memory_space<vmem>>, vector<1x1x128xf32>,
    return
  }
  func.func @transform_0(%arg0: i32, %arg1: i32, %arg2: i32, %arg3: i32) -> (i32, i32, i32) {
    %c1_i32 = arith.constant 1 : i32
    %0 = arith.muli %arg1, %c1_i32 : i32
    %1 = arith.addi %0, %arg3 : i32
    %c0_i32 = arith.constant 0 : i32
    %c0_i32_0 = arith.constant 0 : i32
    return %arg0, %1, %c0_i32 : i32, i32, i32
  }
  func.func @transform_1(%arg0: i32, %arg1: i32, %arg2: i32, %arg3: i32) -> (i32, i32, i32) {
    %c0_i32 = arith.constant 0 : i32
    %c0_i32_0 = arith.constant 0 : i32
    return %arg0, %c0_i32, %arg2 : i32, i32, i32
  }
  func.func @transform_2(%arg0: i32, %arg1: i32, %arg2: i32, %arg3: i32) -> (i32, i32, i32) {
    %c1_i32 = arith.constant 1 : i32
    %0 = arith.muli %arg1, %c1_i32 : i32
    %1 = arith.addi %0, %arg3 : i32
    %c0_i32 = arith.constant 0 : i32
    return %arg0, %1, %arg2 : i32, i32, i32
  }
  func.func @transform_3(%arg0: i32, %arg1: i32, %arg2: i32, %arg3: i32) -> (i32, i32, i32) {
    %c1_i32 = arith.constant 1 : i32
    %0 = arith.muli %arg0, %c1_i32 : i32
    %1 = arith.addi %0, %arg1 : i32
    %c0_i32 = arith.constant 0 : i32
    %c0_i32_0 = arith.constant 0 : i32
    return %1, %c0_i32, %arg2 : i32, i32, i32
  }
  func.func @transform_4(%arg0: i32, %arg1: i32, %arg2: i32, %arg3: i32) -> (i32, i32, i32) {
    %c1_i32 = arith.constant 1 : i32
    %0 = arith.muli %arg0, %c1_i32 : i32
    %1 = arith.addi %0, %arg1 : i32
    %c0_i32 = arith.constant 0 : i32
    %c0_i32_0 = arith.constant 0 : i32
    return %1, %c0_i32, %arg2 : i32, i32, i32
  }
}

module attributes {stable_mosaic.version = 11 : i64} {
  func.func @_bn_apply_kernel(%arg0: i32, %arg1: memref<32x128xbf16, #tpu.memory_space<vmem>>, %arg2: memref<1x1x128xf32, #tpu.memory_space<vmem>>, %arg3: memref<1x1x128xf32, #tpu.memory_space<vmem>>, %arg4: memref<1x128xf32, #tpu.memory_space<vmem>>, %arg5: memref<1x128xf32, #tpu.memory_space<vmem>>, %arg6: memref<32x128xbf16, #tpu.memory_space<vmem>>) attributes {dimension_semantics = [#tpu.dimension_semantics<parallel>], iteration_bounds = array<i64: 1>, scalar_prefetch = 0 : i64, scratch_operands = 0 : i64, tpu.core_type = #tpu.core_type<tc>, window_params = [{transform_indices = @transform_0, window_bounds = array<i64: 32, 128>}, {pipeline_mode = #tpu.pipeline_mode<synchronous>, transform_indices = @transform_1, window_bounds = array<i64: 1, 1, 128>}, {pipeline_mode = #tpu.pipeline_mode<synchronous>, transform_indices = @transform_2, window_bounds = array<i64: 1, 1, 128>}, {pipeline_mode = #tpu.pipeline_mode<synchronous>, transform_indices = @transform_3, window_bounds = array<i64: 1, 128>}, {pipeline_mode = #tpu.pipeline_mode<synchronous>, transform_indices = @transform_4, window_bounds = array<i64: 1, 128>}, {transform_indices = @transform_5, window_bounds = array<i64: 32, 128>}]} {
    %c0 = arith.constant 0 : index
    %c0_0 = arith.constant 0 : index
    %c0_1 = arith.constant 0 : index
    %0 = vector.load %arg2[%c0, %c0_0, %c0_1] : memref<1x1x128xf32, #tpu.memory_space<vmem>>, vector<1x1x128xf32>
    %cst = arith.constant dense<0.000000e+00> : vector<1x128xf32>
    %1 = vector.multi_reduction <add>, %0, %cst [0] : vector<1x1x128xf32> to vector<1x128xf32>
    %cst_2 = arith.constant 3.125000e-02 : f32
    %2 = vector.broadcast %cst_2 : f32 to vector<1x128xf32>
    %3 = arith.mulf %1, %2 : vector<1x128xf32>
    %c0_3 = arith.constant 0 : index
    %c0_4 = arith.constant 0 : index
    %c0_5 = arith.constant 0 : index
    %4 = vector.load %arg3[%c0_3, %c0_4, %c0_5] : memref<1x1x128xf32, #tpu.memory_space<vmem>>, vector<1x1x128xf32>
    %cst_6 = arith.constant dense<0.000000e+00> : vector<1x128xf32>
    %5 = vector.multi_reduction <add>, %4, %cst_6 [0] : vector<1x1x128xf32> to vector<1x128xf32>
    %cst_7 = arith.constant 3.125000e-02 : f32
    %6 = vector.broadcast %cst_7 : f32 to vector<1x128xf32>
    %7 = arith.mulf %5, %6 : vector<1x128xf32>
    %8 = arith.mulf %3, %3 : vector<1x128xf32>
    %9 = arith.subf %7, %8 : vector<1x128xf32>
    %cst_8 = arith.constant 0.000000e+00 : f32
    %10 = vector.broadcast %cst_8 : f32 to vector<1x128xf32>
    %11 = arith.maximumf %9, %10 : vector<1x128xf32>
    %c0_9 = arith.constant 0 : index
    %c0_10 = arith.constant 0 : index
    %12 = vector.load %arg4[%c0_9, %c0_10] : memref<1x128xf32, #tpu.memory_space<vmem>>, vector<1x128xf32>
    %cst_11 = arith.constant 9.99999974E-6 : f32
    %13 = vector.broadcast %cst_11 : f32 to vector<1x128xf32>
    %14 = arith.addf %11, %13 : vector<1x128xf32>
    %15 = math.rsqrt %14 : vector<1x128xf32>
    %16 = arith.mulf %12, %15 : vector<1x128xf32>
    %c0_12 = arith.constant 0 : index
    %c0_13 = arith.constant 0 : index
    %17 = vector.load %arg5[%c0_12, %c0_13] : memref<1x128xf32, #tpu.memory_space<vmem>>, vector<1x128xf32>
    %18 = arith.mulf %3, %16 : vector<1x128xf32>
    %19 = arith.subf %17, %18 : vector<1x128xf32>
    %c0_14 = arith.constant 0 : index
    %c0_15 = arith.constant 0 : index
    %20 = vector.load %arg1[%c0_14, %c0_15] : memref<32x128xbf16, #tpu.memory_space<vmem>>, vector<32x128xbf16>
    %21 = arith.extf %20 : vector<32x128xbf16> to vector<32x128xf32>
    %22 = vector.broadcast %16 : vector<1x128xf32> to vector<32x128xf32>
    %23 = arith.mulf %21, %22 : vector<32x128xf32>
    %24 = vector.broadcast %19 : vector<1x128xf32> to vector<32x128xf32>
    %25 = arith.addf %23, %24 : vector<32x128xf32>
    %cst_16 = arith.constant 0.000000e+00 : f32
    %26 = vector.broadcast %cst_16 : f32 to vector<32x128xf32>
    %27 = arith.cmpf ogt, %25, %26 : vector<32x128xf32>
    %cst_17 = arith.constant 2.000000e-01 : f32
    %28 = vector.broadcast %cst_17 : f32 to vector<32x128xf32>
    %29 = arith.mulf %28, %25 : vector<32x128xf32>
    %30 = arith.select %27, %25, %29 : vector<32x128xi1>, vector<32x128xf32>
    %31 = arith.truncf %30 : vector<32x128xf32> to vector<32x128xbf16>
    %c0_18 = arith.constant 0 : index
    %c0_19 = arith.constant 0 : index
    %32 = vector.load %arg6[%c0_18, %c0_19] : memref<32x128xbf16, #tpu.memory_space<vmem>>, vector<32x128xbf16>
    tpu.vector_store %arg6[%c0_18, %c0_19], %31 {strides = array<i32>} : memref<32x128xbf16, #tpu.memory_space<vmem>>, vector<32x128xbf16>,
    return
  }
  func.func @transform_0(%arg0: i32) -> (i32, i32) {
    %c0_i32 = arith.constant 0 : i32
    %c0_i32_0 = arith.constant 0 : i32
    return %arg0, %c0_i32 : i32, i32
  }
  func.func @transform_1(%arg0: i32) -> (i32, i32, i32) {
    %c0_i32 = arith.constant 0 : i32
    %c0_i32_0 = arith.constant 0 : i32
    %c0_i32_1 = arith.constant 0 : i32
    %c0_i32_2 = arith.constant 0 : i32
    return %c0_i32, %c0_i32_0, %c0_i32_1 : i32, i32, i32
  }
  func.func @transform_2(%arg0: i32) -> (i32, i32, i32) {
    %c0_i32 = arith.constant 0 : i32
    %c0_i32_0 = arith.constant 0 : i32
    %c0_i32_1 = arith.constant 0 : i32
    %c0_i32_2 = arith.constant 0 : i32
    return %c0_i32, %c0_i32_0, %c0_i32_1 : i32, i32, i32
  }
  func.func @transform_3(%arg0: i32) -> (i32, i32) {
    %c0_i32 = arith.constant 0 : i32
    %c0_i32_0 = arith.constant 0 : i32
    %c0_i32_1 = arith.constant 0 : i32
    return %c0_i32, %c0_i32_0 : i32, i32
  }
  func.func @transform_4(%arg0: i32) -> (i32, i32) {
    %c0_i32 = arith.constant 0 : i32
    %c0_i32_0 = arith.constant 0 : i32
    %c0_i32_1 = arith.constant 0 : i32
    return %c0_i32, %c0_i32_0 : i32, i32
  }
  func.func @transform_5(%arg0: i32) -> (i32, i32) {
    %c0_i32 = arith.constant 0 : i32
    %c0_i32_0 = arith.constant 0 : i32
    return %arg0, %c0_i32 : i32, i32
  }
}

module attributes {stable_mosaic.version = 11 : i64} {
  func.func @_bn_apply_kernel(%arg0: i32, %arg1: memref<32x128xbf16, #tpu.memory_space<vmem>>, %arg2: memref<1x1x128xf32, #tpu.memory_space<vmem>>, %arg3: memref<1x1x128xf32, #tpu.memory_space<vmem>>, %arg4: memref<1x128xf32, #tpu.memory_space<vmem>>, %arg5: memref<1x128xf32, #tpu.memory_space<vmem>>, %arg6: memref<32x128xbf16, #tpu.memory_space<vmem>>) attributes {dimension_semantics = [#tpu.dimension_semantics<parallel>], iteration_bounds = array<i64: 1>, scalar_prefetch = 0 : i64, scratch_operands = 0 : i64, tpu.core_type = #tpu.core_type<tc>, window_params = [{transform_indices = @transform_0, window_bounds = array<i64: 32, 128>}, {pipeline_mode = #tpu.pipeline_mode<synchronous>, transform_indices = @transform_1, window_bounds = array<i64: 1, 1, 128>}, {pipeline_mode = #tpu.pipeline_mode<synchronous>, transform_indices = @transform_2, window_bounds = array<i64: 1, 1, 128>}, {pipeline_mode = #tpu.pipeline_mode<synchronous>, transform_indices = @transform_3, window_bounds = array<i64: 1, 128>}, {pipeline_mode = #tpu.pipeline_mode<synchronous>, transform_indices = @transform_4, window_bounds = array<i64: 1, 128>}, {transform_indices = @transform_5, window_bounds = array<i64: 32, 128>}]} {
    %c0 = arith.constant 0 : index
    %c0_0 = arith.constant 0 : index
    %c0_1 = arith.constant 0 : index
    %0 = vector.load %arg2[%c0, %c0_0, %c0_1] : memref<1x1x128xf32, #tpu.memory_space<vmem>>, vector<1x1x128xf32>
    %cst = arith.constant dense<0.000000e+00> : vector<1x128xf32>
    %1 = vector.multi_reduction <add>, %0, %cst [0] : vector<1x1x128xf32> to vector<1x128xf32>
    %cst_2 = arith.constant 3.125000e-02 : f32
    %2 = vector.broadcast %cst_2 : f32 to vector<1x128xf32>
    %3 = arith.mulf %1, %2 : vector<1x128xf32>
    %c0_3 = arith.constant 0 : index
    %c0_4 = arith.constant 0 : index
    %c0_5 = arith.constant 0 : index
    %4 = vector.load %arg3[%c0_3, %c0_4, %c0_5] : memref<1x1x128xf32, #tpu.memory_space<vmem>>, vector<1x1x128xf32>
    %cst_6 = arith.constant dense<0.000000e+00> : vector<1x128xf32>
    %5 = vector.multi_reduction <add>, %4, %cst_6 [0] : vector<1x1x128xf32> to vector<1x128xf32>
    %cst_7 = arith.constant 3.125000e-02 : f32
    %6 = vector.broadcast %cst_7 : f32 to vector<1x128xf32>
    %7 = arith.mulf %5, %6 : vector<1x128xf32>
    %8 = arith.mulf %3, %3 : vector<1x128xf32>
    %9 = arith.subf %7, %8 : vector<1x128xf32>
    %cst_8 = arith.constant 0.000000e+00 : f32
    %10 = vector.broadcast %cst_8 : f32 to vector<1x128xf32>
    %11 = arith.maximumf %9, %10 : vector<1x128xf32>
    %c0_9 = arith.constant 0 : index
    %c0_10 = arith.constant 0 : index
    %12 = vector.load %arg4[%c0_9, %c0_10] : memref<1x128xf32, #tpu.memory_space<vmem>>, vector<1x128xf32>
    %cst_11 = arith.constant 9.99999974E-6 : f32
    %13 = vector.broadcast %cst_11 : f32 to vector<1x128xf32>
    %14 = arith.addf %11, %13 : vector<1x128xf32>
    %15 = math.rsqrt %14 : vector<1x128xf32>
    %16 = arith.mulf %12, %15 : vector<1x128xf32>
    %c0_12 = arith.constant 0 : index
    %c0_13 = arith.constant 0 : index
    %17 = vector.load %arg5[%c0_12, %c0_13] : memref<1x128xf32, #tpu.memory_space<vmem>>, vector<1x128xf32>
    %18 = arith.mulf %3, %16 : vector<1x128xf32>
    %19 = arith.subf %17, %18 : vector<1x128xf32>
    %c0_14 = arith.constant 0 : index
    %c0_15 = arith.constant 0 : index
    %20 = vector.load %arg1[%c0_14, %c0_15] : memref<32x128xbf16, #tpu.memory_space<vmem>>, vector<32x128xbf16>
    %21 = arith.extf %20 : vector<32x128xbf16> to vector<32x128xf32>
    %22 = vector.broadcast %16 : vector<1x128xf32> to vector<32x128xf32>
    %23 = arith.mulf %21, %22 : vector<32x128xf32>
    %24 = vector.broadcast %19 : vector<1x128xf32> to vector<32x128xf32>
    %25 = arith.addf %23, %24 : vector<32x128xf32>
    %26 = arith.truncf %25 : vector<32x128xf32> to vector<32x128xbf16>
    %c0_16 = arith.constant 0 : index
    %c0_17 = arith.constant 0 : index
    %27 = vector.load %arg6[%c0_16, %c0_17] : memref<32x128xbf16, #tpu.memory_space<vmem>>, vector<32x128xbf16>
    tpu.vector_store %arg6[%c0_16, %c0_17], %26 {strides = array<i32>} : memref<32x128xbf16, #tpu.memory_space<vmem>>, vector<32x128xbf16>,
    return
  }
  func.func @transform_0(%arg0: i32) -> (i32, i32) {
    %c0_i32 = arith.constant 0 : i32
    %c0_i32_0 = arith.constant 0 : i32
    return %arg0, %c0_i32 : i32, i32
  }
  func.func @transform_1(%arg0: i32) -> (i32, i32, i32) {
    %c0_i32 = arith.constant 0 : i32
    %c0_i32_0 = arith.constant 0 : i32
    %c0_i32_1 = arith.constant 0 : i32
    %c0_i32_2 = arith.constant 0 : i32
    return %c0_i32, %c0_i32_0, %c0_i32_1 : i32, i32, i32
  }
  func.func @transform_2(%arg0: i32) -> (i32, i32, i32) {
    %c0_i32 = arith.constant 0 : i32
    %c0_i32_0 = arith.constant 0 : i32
    %c0_i32_1 = arith.constant 0 : i32
    %c0_i32_2 = arith.constant 0 : i32
    return %c0_i32, %c0_i32_0, %c0_i32_1 : i32, i32, i32
  }
  func.func @transform_3(%arg0: i32) -> (i32, i32) {
    %c0_i32 = arith.constant 0 : i32
    %c0_i32_0 = arith.constant 0 : i32
    %c0_i32_1 = arith.constant 0 : i32
    return %c0_i32, %c0_i32_0 : i32, i32
  }
  func.func @transform_4(%arg0: i32) -> (i32, i32) {
    %c0_i32 = arith.constant 0 : i32
    %c0_i32_0 = arith.constant 0 : i32
    %c0_i32_1 = arith.constant 0 : i32
    return %c0_i32, %c0_i32_0 : i32, i32
  }
  func.func @transform_5(%arg0: i32) -> (i32, i32) {
    %c0_i32 = arith.constant 0 : i32
    %c0_i32_0 = arith.constant 0 : i32
    return %arg0, %c0_i32 : i32, i32
  }
}

module attributes {stable_mosaic.version = 11 : i64} {
  func.func @_bn_apply_kernel(%arg0: i32, %arg1: memref<32x128xbf16, #tpu.memory_space<vmem>>, %arg2: memref<1x1x128xf32, #tpu.memory_space<vmem>>, %arg3: memref<1x1x128xf32, #tpu.memory_space<vmem>>, %arg4: memref<1x128xf32, #tpu.memory_space<vmem>>, %arg5: memref<1x128xf32, #tpu.memory_space<vmem>>, %arg6: memref<32x128xbf16, #tpu.memory_space<vmem>>) attributes {dimension_semantics = [#tpu.dimension_semantics<parallel>], iteration_bounds = array<i64: 1>, scalar_prefetch = 0 : i64, scratch_operands = 0 : i64, tpu.core_type = #tpu.core_type<tc>, window_params = [{transform_indices = @transform_0, window_bounds = array<i64: 32, 128>}, {pipeline_mode = #tpu.pipeline_mode<synchronous>, transform_indices = @transform_1, window_bounds = array<i64: 1, 1, 128>}, {pipeline_mode = #tpu.pipeline_mode<synchronous>, transform_indices = @transform_2, window_bounds = array<i64: 1, 1, 128>}, {pipeline_mode = #tpu.pipeline_mode<synchronous>, transform_indices = @transform_3, window_bounds = array<i64: 1, 128>}, {pipeline_mode = #tpu.pipeline_mode<synchronous>, transform_indices = @transform_4, window_bounds = array<i64: 1, 128>}, {transform_indices = @transform_5, window_bounds = array<i64: 32, 128>}]} {
    %c0 = arith.constant 0 : index
    %c0_0 = arith.constant 0 : index
    %c0_1 = arith.constant 0 : index
    %0 = vector.load %arg2[%c0, %c0_0, %c0_1] : memref<1x1x128xf32, #tpu.memory_space<vmem>>, vector<1x1x128xf32>
    %cst = arith.constant dense<0.000000e+00> : vector<1x128xf32>
    %1 = vector.multi_reduction <add>, %0, %cst [0] : vector<1x1x128xf32> to vector<1x128xf32>
    %cst_2 = arith.constant 3.125000e-02 : f32
    %2 = vector.broadcast %cst_2 : f32 to vector<1x128xf32>
    %3 = arith.mulf %1, %2 : vector<1x128xf32>
    %c0_3 = arith.constant 0 : index
    %c0_4 = arith.constant 0 : index
    %c0_5 = arith.constant 0 : index
    %4 = vector.load %arg3[%c0_3, %c0_4, %c0_5] : memref<1x1x128xf32, #tpu.memory_space<vmem>>, vector<1x1x128xf32>
    %cst_6 = arith.constant dense<0.000000e+00> : vector<1x128xf32>
    %5 = vector.multi_reduction <add>, %4, %cst_6 [0] : vector<1x1x128xf32> to vector<1x128xf32>
    %cst_7 = arith.constant 3.125000e-02 : f32
    %6 = vector.broadcast %cst_7 : f32 to vector<1x128xf32>
    %7 = arith.mulf %5, %6 : vector<1x128xf32>
    %8 = arith.mulf %3, %3 : vector<1x128xf32>
    %9 = arith.subf %7, %8 : vector<1x128xf32>
    %cst_8 = arith.constant 0.000000e+00 : f32
    %10 = vector.broadcast %cst_8 : f32 to vector<1x128xf32>
    %11 = arith.maximumf %9, %10 : vector<1x128xf32>
    %c0_9 = arith.constant 0 : index
    %c0_10 = arith.constant 0 : index
    %12 = vector.load %arg4[%c0_9, %c0_10] : memref<1x128xf32, #tpu.memory_space<vmem>>, vector<1x128xf32>
    %cst_11 = arith.constant 9.99999974E-6 : f32
    %13 = vector.broadcast %cst_11 : f32 to vector<1x128xf32>
    %14 = arith.addf %11, %13 : vector<1x128xf32>
    %15 = math.rsqrt %14 : vector<1x128xf32>
    %16 = arith.mulf %12, %15 : vector<1x128xf32>
    %c0_12 = arith.constant 0 : index
    %c0_13 = arith.constant 0 : index
    %17 = vector.load %arg5[%c0_12, %c0_13] : memref<1x128xf32, #tpu.memory_space<vmem>>, vector<1x128xf32>
    %18 = arith.mulf %3, %16 : vector<1x128xf32>
    %19 = arith.subf %17, %18 : vector<1x128xf32>
    %c0_14 = arith.constant 0 : index
    %c0_15 = arith.constant 0 : index
    %20 = vector.load %arg1[%c0_14, %c0_15] : memref<32x128xbf16, #tpu.memory_space<vmem>>, vector<32x128xbf16>
    %21 = arith.extf %20 : vector<32x128xbf16> to vector<32x128xf32>
    %22 = vector.broadcast %16 : vector<1x128xf32> to vector<32x128xf32>
    %23 = arith.mulf %21, %22 : vector<32x128xf32>
    %24 = vector.broadcast %19 : vector<1x128xf32> to vector<32x128xf32>
    %25 = arith.addf %23, %24 : vector<32x128xf32>
    %cst_16 = arith.constant 0.000000e+00 : f32
    %26 = vector.broadcast %cst_16 : f32 to vector<32x128xf32>
    %27 = arith.maximumf %25, %26 : vector<32x128xf32>
    %28 = arith.truncf %27 : vector<32x128xf32> to vector<32x128xbf16>
    %c0_17 = arith.constant 0 : index
    %c0_18 = arith.constant 0 : index
    %29 = vector.load %arg6[%c0_17, %c0_18] : memref<32x128xbf16, #tpu.memory_space<vmem>>, vector<32x128xbf16>
    tpu.vector_store %arg6[%c0_17, %c0_18], %28 {strides = array<i32>} : memref<32x128xbf16, #tpu.memory_space<vmem>>, vector<32x128xbf16>,
    return
  }
  func.func @transform_0(%arg0: i32) -> (i32, i32) {
    %c0_i32 = arith.constant 0 : i32
    %c0_i32_0 = arith.constant 0 : i32
    return %arg0, %c0_i32 : i32, i32
  }
  func.func @transform_1(%arg0: i32) -> (i32, i32, i32) {
    %c0_i32 = arith.constant 0 : i32
    %c0_i32_0 = arith.constant 0 : i32
    %c0_i32_1 = arith.constant 0 : i32
    %c0_i32_2 = arith.constant 0 : i32
    return %c0_i32, %c0_i32_0, %c0_i32_1 : i32, i32, i32
  }
  func.func @transform_2(%arg0: i32) -> (i32, i32, i32) {
    %c0_i32 = arith.constant 0 : i32
    %c0_i32_0 = arith.constant 0 : i32
    %c0_i32_1 = arith.constant 0 : i32
    %c0_i32_2 = arith.constant 0 : i32
    return %c0_i32, %c0_i32_0, %c0_i32_1 : i32, i32, i32
  }
  func.func @transform_3(%arg0: i32) -> (i32, i32) {
    %c0_i32 = arith.constant 0 : i32
    %c0_i32_0 = arith.constant 0 : i32
    %c0_i32_1 = arith.constant 0 : i32
    return %c0_i32, %c0_i32_0 : i32, i32
  }
  func.func @transform_4(%arg0: i32) -> (i32, i32) {
    %c0_i32 = arith.constant 0 : i32
    %c0_i32_0 = arith.constant 0 : i32
    %c0_i32_1 = arith.constant 0 : i32
    return %c0_i32, %c0_i32_0 : i32, i32
  }
  func.func @transform_5(%arg0: i32) -> (i32, i32) {
    %c0_i32 = arith.constant 0 : i32
    %c0_i32_0 = arith.constant 0 : i32
    return %arg0, %c0_i32 : i32, i32
  }
}

module attributes {stable_mosaic.version = 11 : i64} {
  func.func @_mm_stats_kernel(%arg0: i32, %arg1: i32, %arg2: i32, %arg3: i32, %arg4: memref<1x32x512xbf16, #tpu.memory_space<vmem>>, %arg5: memref<1x512x128xbf16, #tpu.memory_space<vmem>>, %arg6: memref<1x32x128xbf16, #tpu.memory_space<vmem>>, %arg7: memref<1x1x128xf32, #tpu.memory_space<vmem>>, %arg8: memref<1x1x128xf32, #tpu.memory_space<vmem>>) attributes {dimension_semantics = [#tpu.dimension_semantics<parallel>, #tpu.dimension_semantics<parallel>, #tpu.dimension_semantics<parallel>, #tpu.dimension_semantics<arbitrary>], iteration_bounds = array<i64: 4, 1, 1, 1>, scalar_prefetch = 0 : i64, scratch_operands = 0 : i64, tpu.core_type = #tpu.core_type<tc>, window_params = [{transform_indices = @transform_0, window_bounds = array<i64: 1, 32, 512>}, {transform_indices = @transform_1, window_bounds = array<i64: 1, 512, 128>}, {transform_indices = @transform_2, window_bounds = array<i64: 1, 32, 128>}, {transform_indices = @transform_3, window_bounds = array<i64: 1, 1, 128>}, {transform_indices = @transform_4, window_bounds = array<i64: 1, 1, 128>}]} {
    %c0_i32 = arith.constant 0 : i32
    %0 = arith.cmpi eq, %arg3, %c0_i32 : i32
    %1 = arith.extui %0 : i1 to i32
    %c0_i32_0 = arith.constant 0 : i32
    %2 = arith.cmpi ne, %1, %c0_i32_0 : i32
    scf.if %2 {
      %cst_23 = arith.constant 0.000000e+00 : f32
      %29 = vector.broadcast %cst_23 : f32 to vector<1x1x128xf32>
      %c0_24 = arith.constant 0 : index
      %c0_25 = arith.constant 0 : index
      %c0_26 = arith.constant 0 : index
      %30 = vector.load %arg7[%c0_24, %c0_25, %c0_26] : memref<1x1x128xf32, #tpu.memory_space<vmem>>, vector<1x1x128xf32>
      tpu.vector_store %arg7[%c0_24, %c0_25, %c0_26], %29 {strides = array<i32>} : memref<1x1x128xf32, #tpu.memory_space<vmem>>, vector<1x1x128xf32>,
      %cst_27 = arith.constant 0.000000e+00 : f32
      %31 = vector.broadcast %cst_27 : f32 to vector<1x1x128xf32>
      %c0_28 = arith.constant 0 : index
      %c0_29 = arith.constant 0 : index
      %c0_30 = arith.constant 0 : index
      %32 = vector.load %arg8[%c0_28, %c0_29, %c0_30] : memref<1x1x128xf32, #tpu.memory_space<vmem>>, vector<1x1x128xf32>
      tpu.vector_store %arg8[%c0_28, %c0_29, %c0_30], %31 {strides = array<i32>} : memref<1x1x128xf32, #tpu.memory_space<vmem>>, vector<1x1x128xf32>,
    } else {
    }
    %c0 = arith.constant 0 : index
    %c0_1 = arith.constant 0 : index
    %c0_2 = arith.constant 0 : index
    %3 = vector.load %arg4[%c0, %c0_1, %c0_2] : memref<1x32x512xbf16, #tpu.memory_space<vmem>>, vector<1x32x512xbf16>
    %4 = vector.shape_cast %3 : vector<1x32x512xbf16> to vector<32x512xbf16>
    %c0_3 = arith.constant 0 : index
    %c0_4 = arith.constant 0 : index
    %c0_5 = arith.constant 0 : index
    %5 = vector.load %arg5[%c0_3, %c0_4, %c0_5] : memref<1x512x128xbf16, #tpu.memory_space<vmem>>, vector<1x512x128xbf16>
    %6 = vector.shape_cast %5 : vector<1x512x128xbf16> to vector<512x128xbf16>
    %cst = arith.constant dense<0.000000e+00> : vector<32x128xf32>
    %7 = tpu.matmul %4, %6, %cst {dimension_numbers = #tpu.dot_dimension_numbers<[1], [0], [0], [1], [0, 0, 1, 1], [], []>} : vector<32x512xbf16>, vector<512x128xbf16>, vector<32x128xf32> -> vector<32x128xf32>
    %8 = arith.truncf %7 : vector<32x128xf32> to vector<32x128xbf16>
    %c0_6 = arith.constant 0 : index
    %c0_7 = arith.constant 0 : index
    %c0_8 = arith.constant 0 : index
    %9 = vector.load %arg6[%c0_6, %c0_7, %c0_8] : memref<1x32x128xbf16, #tpu.memory_space<vmem>>, vector<1x32x128xbf16>
    %10 = vector.shape_cast %9 : vector<1x32x128xbf16> to vector<32x128xbf16>
    %11 = vector.shape_cast %8 : vector<32x128xbf16> to vector<1x32x128xbf16>
    tpu.vector_store %arg6[%c0_6, %c0_7, %c0_8], %11 {strides = array<i32>} : memref<1x32x128xbf16, #tpu.memory_space<vmem>>, vector<1x32x128xbf16>,
    %c0_9 = arith.constant 0 : index
    %c0_10 = arith.constant 0 : index
    %c0_11 = arith.constant 0 : index
    %12 = vector.load %arg7[%c0_9, %c0_10, %c0_11] : memref<1x1x128xf32, #tpu.memory_space<vmem>>, vector<1x1x128xf32>
    %13 = vector.shape_cast %12 : vector<1x1x128xf32> to vector<1x128xf32>
    %cst_12 = arith.constant dense<0.000000e+00> : vector<128xf32>
    %14 = vector.multi_reduction <add>, %7, %cst_12 [0] : vector<32x128xf32> to vector<128xf32>
    %15 = vector.shape_cast %14 : vector<128xf32> to vector<1x128xf32>
    %16 = arith.addf %13, %15 : vector<1x128xf32>
    %c0_13 = arith.constant 0 : index
    %c0_14 = arith.constant 0 : index
    %c0_15 = arith.constant 0 : index
    %17 = vector.load %arg7[%c0_13, %c0_14, %c0_15] : memref<1x1x128xf32, #tpu.memory_space<vmem>>, vector<1x1x128xf32>
    %18 = vector.shape_cast %17 : vector<1x1x128xf32> to vector<1x128xf32>
    %19 = vector.shape_cast %16 : vector<1x128xf32> to vector<1x1x128xf32>
    tpu.vector_store %arg7[%c0_13, %c0_14, %c0_15], %19 {strides = array<i32>} : memref<1x1x128xf32, #tpu.memory_space<vmem>>, vector<1x1x128xf32>,
    %c0_16 = arith.constant 0 : index
    %c0_17 = arith.constant 0 : index
    %c0_18 = arith.constant 0 : index
    %20 = vector.load %arg8[%c0_16, %c0_17, %c0_18] : memref<1x1x128xf32, #tpu.memory_space<vmem>>, vector<1x1x128xf32>
    %21 = vector.shape_cast %20 : vector<1x1x128xf32> to vector<1x128xf32>
    %22 = arith.mulf %7, %7 : vector<32x128xf32>
    %cst_19 = arith.constant dense<0.000000e+00> : vector<128xf32>
    %23 = vector.multi_reduction <add>, %22, %cst_19 [0] : vector<32x128xf32> to vector<128xf32>
    %24 = vector.shape_cast %23 : vector<128xf32> to vector<1x128xf32>
    %25 = arith.addf %21, %24 : vector<1x128xf32>
    %c0_20 = arith.constant 0 : index
    %c0_21 = arith.constant 0 : index
    %c0_22 = arith.constant 0 : index
    %26 = vector.load %arg8[%c0_20, %c0_21, %c0_22] : memref<1x1x128xf32, #tpu.memory_space<vmem>>, vector<1x1x128xf32>
    %27 = vector.shape_cast %26 : vector<1x1x128xf32> to vector<1x128xf32>
    %28 = vector.shape_cast %25 : vector<1x128xf32> to vector<1x1x128xf32>
    tpu.vector_store %arg8[%c0_20, %c0_21, %c0_22], %28 {strides = array<i32>} : memref<1x1x128xf32, #tpu.memory_space<vmem>>, vector<1x1x128xf32>,
    return
  }
  func.func @transform_0(%arg0: i32, %arg1: i32, %arg2: i32, %arg3: i32) -> (i32, i32, i32) {
    %c1_i32 = arith.constant 1 : i32
    %0 = arith.muli %arg1, %c1_i32 : i32
    %1 = arith.addi %0, %arg3 : i32
    %c0_i32 = arith.constant 0 : i32
    %c0_i32_0 = arith.constant 0 : i32
    return %arg0, %1, %c0_i32 : i32, i32, i32
  }
  func.func @transform_1(%arg0: i32, %arg1: i32, %arg2: i32, %arg3: i32) -> (i32, i32, i32) {
    %c0_i32 = arith.constant 0 : i32
    %c0_i32_0 = arith.constant 0 : i32
    return %arg0, %c0_i32, %arg2 : i32, i32, i32
  }
  func.func @transform_2(%arg0: i32, %arg1: i32, %arg2: i32, %arg3: i32) -> (i32, i32, i32) {
    %c1_i32 = arith.constant 1 : i32
    %0 = arith.muli %arg1, %c1_i32 : i32
    %1 = arith.addi %0, %arg3 : i32
    %c0_i32 = arith.constant 0 : i32
    return %arg0, %1, %arg2 : i32, i32, i32
  }
  func.func @transform_3(%arg0: i32, %arg1: i32, %arg2: i32, %arg3: i32) -> (i32, i32, i32) {
    %c1_i32 = arith.constant 1 : i32
    %0 = arith.muli %arg0, %c1_i32 : i32
    %1 = arith.addi %0, %arg1 : i32
    %c0_i32 = arith.constant 0 : i32
    %c0_i32_0 = arith.constant 0 : i32
    return %1, %c0_i32, %arg2 : i32, i32, i32
  }
  func.func @transform_4(%arg0: i32, %arg1: i32, %arg2: i32, %arg3: i32) -> (i32, i32, i32) {
    %c1_i32 = arith.constant 1 : i32
    %0 = arith.muli %arg0, %c1_i32 : i32
    %1 = arith.addi %0, %arg1 : i32
    %c0_i32 = arith.constant 0 : i32
    %c0_i32_0 = arith.constant 0 : i32
    return %1, %c0_i32, %arg2 : i32, i32, i32
  }
}

module attributes {stable_mosaic.version = 11 : i64} {
  func.func @_bn_apply_kernel(%arg0: i32, %arg1: memref<128x128xbf16, #tpu.memory_space<vmem>>, %arg2: memref<4x1x128xf32, #tpu.memory_space<vmem>>, %arg3: memref<4x1x128xf32, #tpu.memory_space<vmem>>, %arg4: memref<1x128xf32, #tpu.memory_space<vmem>>, %arg5: memref<1x128xf32, #tpu.memory_space<vmem>>, %arg6: memref<128x128xbf16, #tpu.memory_space<vmem>>) attributes {dimension_semantics = [#tpu.dimension_semantics<parallel>], iteration_bounds = array<i64: 1>, scalar_prefetch = 0 : i64, scratch_operands = 0 : i64, tpu.core_type = #tpu.core_type<tc>, window_params = [{transform_indices = @transform_0, window_bounds = array<i64: 128, 128>}, {pipeline_mode = #tpu.pipeline_mode<synchronous>, transform_indices = @transform_1, window_bounds = array<i64: 4, 1, 128>}, {pipeline_mode = #tpu.pipeline_mode<synchronous>, transform_indices = @transform_2, window_bounds = array<i64: 4, 1, 128>}, {pipeline_mode = #tpu.pipeline_mode<synchronous>, transform_indices = @transform_3, window_bounds = array<i64: 1, 128>}, {pipeline_mode = #tpu.pipeline_mode<synchronous>, transform_indices = @transform_4, window_bounds = array<i64: 1, 128>}, {transform_indices = @transform_5, window_bounds = array<i64: 128, 128>}]} {
    %c0 = arith.constant 0 : index
    %c0_0 = arith.constant 0 : index
    %c0_1 = arith.constant 0 : index
    %0 = vector.load %arg2[%c0, %c0_0, %c0_1] : memref<4x1x128xf32, #tpu.memory_space<vmem>>, vector<4x1x128xf32>
    %cst = arith.constant dense<0.000000e+00> : vector<1x128xf32>
    %1 = vector.multi_reduction <add>, %0, %cst [0] : vector<4x1x128xf32> to vector<1x128xf32>
    %cst_2 = arith.constant 7.812500e-03 : f32
    %2 = vector.broadcast %cst_2 : f32 to vector<1x128xf32>
    %3 = arith.mulf %1, %2 : vector<1x128xf32>
    %c0_3 = arith.constant 0 : index
    %c0_4 = arith.constant 0 : index
    %c0_5 = arith.constant 0 : index
    %4 = vector.load %arg3[%c0_3, %c0_4, %c0_5] : memref<4x1x128xf32, #tpu.memory_space<vmem>>, vector<4x1x128xf32>
    %cst_6 = arith.constant dense<0.000000e+00> : vector<1x128xf32>
    %5 = vector.multi_reduction <add>, %4, %cst_6 [0] : vector<4x1x128xf32> to vector<1x128xf32>
    %cst_7 = arith.constant 7.812500e-03 : f32
    %6 = vector.broadcast %cst_7 : f32 to vector<1x128xf32>
    %7 = arith.mulf %5, %6 : vector<1x128xf32>
    %8 = arith.mulf %3, %3 : vector<1x128xf32>
    %9 = arith.subf %7, %8 : vector<1x128xf32>
    %cst_8 = arith.constant 0.000000e+00 : f32
    %10 = vector.broadcast %cst_8 : f32 to vector<1x128xf32>
    %11 = arith.maximumf %9, %10 : vector<1x128xf32>
    %c0_9 = arith.constant 0 : index
    %c0_10 = arith.constant 0 : index
    %12 = vector.load %arg4[%c0_9, %c0_10] : memref<1x128xf32, #tpu.memory_space<vmem>>, vector<1x128xf32>
    %cst_11 = arith.constant 9.99999974E-6 : f32
    %13 = vector.broadcast %cst_11 : f32 to vector<1x128xf32>
    %14 = arith.addf %11, %13 : vector<1x128xf32>
    %15 = math.rsqrt %14 : vector<1x128xf32>
    %16 = arith.mulf %12, %15 : vector<1x128xf32>
    %c0_12 = arith.constant 0 : index
    %c0_13 = arith.constant 0 : index
    %17 = vector.load %arg5[%c0_12, %c0_13] : memref<1x128xf32, #tpu.memory_space<vmem>>, vector<1x128xf32>
    %18 = arith.mulf %3, %16 : vector<1x128xf32>
    %19 = arith.subf %17, %18 : vector<1x128xf32>
    %c0_14 = arith.constant 0 : index
    %c0_15 = arith.constant 0 : index
    %20 = vector.load %arg1[%c0_14, %c0_15] : memref<128x128xbf16, #tpu.memory_space<vmem>>, vector<128x128xbf16>
    %21 = arith.extf %20 : vector<128x128xbf16> to vector<128x128xf32>
    %22 = vector.broadcast %16 : vector<1x128xf32> to vector<128x128xf32>
    %23 = arith.mulf %21, %22 : vector<128x128xf32>
    %24 = vector.broadcast %19 : vector<1x128xf32> to vector<128x128xf32>
    %25 = arith.addf %23, %24 : vector<128x128xf32>
    %cst_16 = arith.constant 0.000000e+00 : f32
    %26 = vector.broadcast %cst_16 : f32 to vector<128x128xf32>
    %27 = arith.maximumf %25, %26 : vector<128x128xf32>
    %28 = arith.truncf %27 : vector<128x128xf32> to vector<128x128xbf16>
    %c0_17 = arith.constant 0 : index
    %c0_18 = arith.constant 0 : index
    %29 = vector.load %arg6[%c0_17, %c0_18] : memref<128x128xbf16, #tpu.memory_space<vmem>>, vector<128x128xbf16>
    tpu.vector_store %arg6[%c0_17, %c0_18], %28 {strides = array<i32>} : memref<128x128xbf16, #tpu.memory_space<vmem>>, vector<128x128xbf16>,
    return
  }
  func.func @transform_0(%arg0: i32) -> (i32, i32) {
    %c0_i32 = arith.constant 0 : i32
    %c0_i32_0 = arith.constant 0 : i32
    return %arg0, %c0_i32 : i32, i32
  }
  func.func @transform_1(%arg0: i32) -> (i32, i32, i32) {
    %c0_i32 = arith.constant 0 : i32
    %c0_i32_0 = arith.constant 0 : i32
    %c0_i32_1 = arith.constant 0 : i32
    %c0_i32_2 = arith.constant 0 : i32
    return %c0_i32, %c0_i32_0, %c0_i32_1 : i32, i32, i32
  }
  func.func @transform_2(%arg0: i32) -> (i32, i32, i32) {
    %c0_i32 = arith.constant 0 : i32
    %c0_i32_0 = arith.constant 0 : i32
    %c0_i32_1 = arith.constant 0 : i32
    %c0_i32_2 = arith.constant 0 : i32
    return %c0_i32, %c0_i32_0, %c0_i32_1 : i32, i32, i32
  }
  func.func @transform_3(%arg0: i32) -> (i32, i32) {
    %c0_i32 = arith.constant 0 : i32
    %c0_i32_0 = arith.constant 0 : i32
    %c0_i32_1 = arith.constant 0 : i32
    return %c0_i32, %c0_i32_0 : i32, i32
  }
  func.func @transform_4(%arg0: i32) -> (i32, i32) {
    %c0_i32 = arith.constant 0 : i32
    %c0_i32_0 = arith.constant 0 : i32
    %c0_i32_1 = arith.constant 0 : i32
    return %c0_i32, %c0_i32_0 : i32, i32
  }
  func.func @transform_5(%arg0: i32) -> (i32, i32) {
    %c0_i32 = arith.constant 0 : i32
    %c0_i32_0 = arith.constant 0 : i32
    return %arg0, %c0_i32 : i32, i32
  }
}

module attributes {stable_mosaic.version = 11 : i64} {
  func.func @_mm_stats_kernel(%arg0: i32, %arg1: i32, %arg2: i32, %arg3: i32, %arg4: memref<1x128x512xbf16, #tpu.memory_space<vmem>>, %arg5: memref<1x512x128xbf16, #tpu.memory_space<vmem>>, %arg6: memref<1x128x128xbf16, #tpu.memory_space<vmem>>, %arg7: memref<1x1x128xf32, #tpu.memory_space<vmem>>, %arg8: memref<1x1x128xf32, #tpu.memory_space<vmem>>) attributes {dimension_semantics = [#tpu.dimension_semantics<parallel>, #tpu.dimension_semantics<parallel>, #tpu.dimension_semantics<parallel>, #tpu.dimension_semantics<arbitrary>], iteration_bounds = array<i64: 4, 1, 1, 1>, scalar_prefetch = 0 : i64, scratch_operands = 0 : i64, tpu.core_type = #tpu.core_type<tc>, window_params = [{transform_indices = @transform_0, window_bounds = array<i64: 1, 128, 512>}, {transform_indices = @transform_1, window_bounds = array<i64: 1, 512, 128>}, {transform_indices = @transform_2, window_bounds = array<i64: 1, 128, 128>}, {transform_indices = @transform_3, window_bounds = array<i64: 1, 1, 128>}, {transform_indices = @transform_4, window_bounds = array<i64: 1, 1, 128>}]} {
    %c0_i32 = arith.constant 0 : i32
    %0 = arith.cmpi eq, %arg3, %c0_i32 : i32
    %1 = arith.extui %0 : i1 to i32
    %c0_i32_0 = arith.constant 0 : i32
    %2 = arith.cmpi ne, %1, %c0_i32_0 : i32
    scf.if %2 {
      %cst_23 = arith.constant 0.000000e+00 : f32
      %29 = vector.broadcast %cst_23 : f32 to vector<1x1x128xf32>
      %c0_24 = arith.constant 0 : index
      %c0_25 = arith.constant 0 : index
      %c0_26 = arith.constant 0 : index
      %30 = vector.load %arg7[%c0_24, %c0_25, %c0_26] : memref<1x1x128xf32, #tpu.memory_space<vmem>>, vector<1x1x128xf32>
      tpu.vector_store %arg7[%c0_24, %c0_25, %c0_26], %29 {strides = array<i32>} : memref<1x1x128xf32, #tpu.memory_space<vmem>>, vector<1x1x128xf32>,
      %cst_27 = arith.constant 0.000000e+00 : f32
      %31 = vector.broadcast %cst_27 : f32 to vector<1x1x128xf32>
      %c0_28 = arith.constant 0 : index
      %c0_29 = arith.constant 0 : index
      %c0_30 = arith.constant 0 : index
      %32 = vector.load %arg8[%c0_28, %c0_29, %c0_30] : memref<1x1x128xf32, #tpu.memory_space<vmem>>, vector<1x1x128xf32>
      tpu.vector_store %arg8[%c0_28, %c0_29, %c0_30], %31 {strides = array<i32>} : memref<1x1x128xf32, #tpu.memory_space<vmem>>, vector<1x1x128xf32>,
    } else {
    }
    %c0 = arith.constant 0 : index
    %c0_1 = arith.constant 0 : index
    %c0_2 = arith.constant 0 : index
    %3 = vector.load %arg4[%c0, %c0_1, %c0_2] : memref<1x128x512xbf16, #tpu.memory_space<vmem>>, vector<1x128x512xbf16>
    %4 = vector.shape_cast %3 : vector<1x128x512xbf16> to vector<128x512xbf16>
    %c0_3 = arith.constant 0 : index
    %c0_4 = arith.constant 0 : index
    %c0_5 = arith.constant 0 : index
    %5 = vector.load %arg5[%c0_3, %c0_4, %c0_5] : memref<1x512x128xbf16, #tpu.memory_space<vmem>>, vector<1x512x128xbf16>
    %6 = vector.shape_cast %5 : vector<1x512x128xbf16> to vector<512x128xbf16>
    %cst = arith.constant dense<0.000000e+00> : vector<128x128xf32>
    %7 = tpu.matmul %4, %6, %cst {dimension_numbers = #tpu.dot_dimension_numbers<[1], [0], [0], [1], [0, 0, 1, 1], [], []>} : vector<128x512xbf16>, vector<512x128xbf16>, vector<128x128xf32> -> vector<128x128xf32>
    %8 = arith.truncf %7 : vector<128x128xf32> to vector<128x128xbf16>
    %c0_6 = arith.constant 0 : index
    %c0_7 = arith.constant 0 : index
    %c0_8 = arith.constant 0 : index
    %9 = vector.load %arg6[%c0_6, %c0_7, %c0_8] : memref<1x128x128xbf16, #tpu.memory_space<vmem>>, vector<1x128x128xbf16>
    %10 = vector.shape_cast %9 : vector<1x128x128xbf16> to vector<128x128xbf16>
    %11 = vector.shape_cast %8 : vector<128x128xbf16> to vector<1x128x128xbf16>
    tpu.vector_store %arg6[%c0_6, %c0_7, %c0_8], %11 {strides = array<i32>} : memref<1x128x128xbf16, #tpu.memory_space<vmem>>, vector<1x128x128xbf16>,
    %c0_9 = arith.constant 0 : index
    %c0_10 = arith.constant 0 : index
    %c0_11 = arith.constant 0 : index
    %12 = vector.load %arg7[%c0_9, %c0_10, %c0_11] : memref<1x1x128xf32, #tpu.memory_space<vmem>>, vector<1x1x128xf32>
    %13 = vector.shape_cast %12 : vector<1x1x128xf32> to vector<1x128xf32>
    %cst_12 = arith.constant dense<0.000000e+00> : vector<128xf32>
    %14 = vector.multi_reduction <add>, %7, %cst_12 [0] : vector<128x128xf32> to vector<128xf32>
    %15 = vector.shape_cast %14 : vector<128xf32> to vector<1x128xf32>
    %16 = arith.addf %13, %15 : vector<1x128xf32>
    %c0_13 = arith.constant 0 : index
    %c0_14 = arith.constant 0 : index
    %c0_15 = arith.constant 0 : index
    %17 = vector.load %arg7[%c0_13, %c0_14, %c0_15] : memref<1x1x128xf32, #tpu.memory_space<vmem>>, vector<1x1x128xf32>
    %18 = vector.shape_cast %17 : vector<1x1x128xf32> to vector<1x128xf32>
    %19 = vector.shape_cast %16 : vector<1x128xf32> to vector<1x1x128xf32>
    tpu.vector_store %arg7[%c0_13, %c0_14, %c0_15], %19 {strides = array<i32>} : memref<1x1x128xf32, #tpu.memory_space<vmem>>, vector<1x1x128xf32>,
    %c0_16 = arith.constant 0 : index
    %c0_17 = arith.constant 0 : index
    %c0_18 = arith.constant 0 : index
    %20 = vector.load %arg8[%c0_16, %c0_17, %c0_18] : memref<1x1x128xf32, #tpu.memory_space<vmem>>, vector<1x1x128xf32>
    %21 = vector.shape_cast %20 : vector<1x1x128xf32> to vector<1x128xf32>
    %22 = arith.mulf %7, %7 : vector<128x128xf32>
    %cst_19 = arith.constant dense<0.000000e+00> : vector<128xf32>
    %23 = vector.multi_reduction <add>, %22, %cst_19 [0] : vector<128x128xf32> to vector<128xf32>
    %24 = vector.shape_cast %23 : vector<128xf32> to vector<1x128xf32>
    %25 = arith.addf %21, %24 : vector<1x128xf32>
    %c0_20 = arith.constant 0 : index
    %c0_21 = arith.constant 0 : index
    %c0_22 = arith.constant 0 : index
    %26 = vector.load %arg8[%c0_20, %c0_21, %c0_22] : memref<1x1x128xf32, #tpu.memory_space<vmem>>, vector<1x1x128xf32>
    %27 = vector.shape_cast %26 : vector<1x1x128xf32> to vector<1x128xf32>
    %28 = vector.shape_cast %25 : vector<1x128xf32> to vector<1x1x128xf32>
    tpu.vector_store %arg8[%c0_20, %c0_21, %c0_22], %28 {strides = array<i32>} : memref<1x1x128xf32, #tpu.memory_space<vmem>>, vector<1x1x128xf32>,
    return
  }
  func.func @transform_0(%arg0: i32, %arg1: i32, %arg2: i32, %arg3: i32) -> (i32, i32, i32) {
    %c1_i32 = arith.constant 1 : i32
    %0 = arith.muli %arg1, %c1_i32 : i32
    %1 = arith.addi %0, %arg3 : i32
    %c0_i32 = arith.constant 0 : i32
    %c0_i32_0 = arith.constant 0 : i32
    return %arg0, %1, %c0_i32 : i32, i32, i32
  }
  func.func @transform_1(%arg0: i32, %arg1: i32, %arg2: i32, %arg3: i32) -> (i32, i32, i32) {
    %c0_i32 = arith.constant 0 : i32
    %c0_i32_0 = arith.constant 0 : i32
    return %arg0, %c0_i32, %arg2 : i32, i32, i32
  }
  func.func @transform_2(%arg0: i32, %arg1: i32, %arg2: i32, %arg3: i32) -> (i32, i32, i32) {
    %c1_i32 = arith.constant 1 : i32
    %0 = arith.muli %arg1, %c1_i32 : i32
    %1 = arith.addi %0, %arg3 : i32
    %c0_i32 = arith.constant 0 : i32
    return %arg0, %1, %arg2 : i32, i32, i32
  }
  func.func @transform_3(%arg0: i32, %arg1: i32, %arg2: i32, %arg3: i32) -> (i32, i32, i32) {
    %c1_i32 = arith.constant 1 : i32
    %0 = arith.muli %arg0, %c1_i32 : i32
    %1 = arith.addi %0, %arg1 : i32
    %c0_i32 = arith.constant 0 : i32
    %c0_i32_0 = arith.constant 0 : i32
    return %1, %c0_i32, %arg2 : i32, i32, i32
  }
  func.func @transform_4(%arg0: i32, %arg1: i32, %arg2: i32, %arg3: i32) -> (i32, i32, i32) {
    %c1_i32 = arith.constant 1 : i32
    %0 = arith.muli %arg0, %c1_i32 : i32
    %1 = arith.addi %0, %arg1 : i32
    %c0_i32 = arith.constant 0 : i32
    %c0_i32_0 = arith.constant 0 : i32
    return %1, %c0_i32, %arg2 : i32, i32, i32
  }
}

module attributes {stable_mosaic.version = 11 : i64} {
  func.func @_bn_apply_kernel(%arg0: i32, %arg1: memref<512x128xbf16, #tpu.memory_space<vmem>>, %arg2: memref<4x1x128xf32, #tpu.memory_space<vmem>>, %arg3: memref<4x1x128xf32, #tpu.memory_space<vmem>>, %arg4: memref<1x128xf32, #tpu.memory_space<vmem>>, %arg5: memref<1x128xf32, #tpu.memory_space<vmem>>, %arg6: memref<512x128xbf16, #tpu.memory_space<vmem>>) attributes {dimension_semantics = [#tpu.dimension_semantics<parallel>], iteration_bounds = array<i64: 1>, scalar_prefetch = 0 : i64, scratch_operands = 0 : i64, tpu.core_type = #tpu.core_type<tc>, window_params = [{transform_indices = @transform_0, window_bounds = array<i64: 512, 128>}, {pipeline_mode = #tpu.pipeline_mode<synchronous>, transform_indices = @transform_1, window_bounds = array<i64: 4, 1, 128>}, {pipeline_mode = #tpu.pipeline_mode<synchronous>, transform_indices = @transform_2, window_bounds = array<i64: 4, 1, 128>}, {pipeline_mode = #tpu.pipeline_mode<synchronous>, transform_indices = @transform_3, window_bounds = array<i64: 1, 128>}, {pipeline_mode = #tpu.pipeline_mode<synchronous>, transform_indices = @transform_4, window_bounds = array<i64: 1, 128>}, {transform_indices = @transform_5, window_bounds = array<i64: 512, 128>}]} {
    %c0 = arith.constant 0 : index
    %c0_0 = arith.constant 0 : index
    %c0_1 = arith.constant 0 : index
    %0 = vector.load %arg2[%c0, %c0_0, %c0_1] : memref<4x1x128xf32, #tpu.memory_space<vmem>>, vector<4x1x128xf32>
    %cst = arith.constant dense<0.000000e+00> : vector<1x128xf32>
    %1 = vector.multi_reduction <add>, %0, %cst [0] : vector<4x1x128xf32> to vector<1x128xf32>
    %cst_2 = arith.constant 0.001953125 : f32
    %2 = vector.broadcast %cst_2 : f32 to vector<1x128xf32>
    %3 = arith.mulf %1, %2 : vector<1x128xf32>
    %c0_3 = arith.constant 0 : index
    %c0_4 = arith.constant 0 : index
    %c0_5 = arith.constant 0 : index
    %4 = vector.load %arg3[%c0_3, %c0_4, %c0_5] : memref<4x1x128xf32, #tpu.memory_space<vmem>>, vector<4x1x128xf32>
    %cst_6 = arith.constant dense<0.000000e+00> : vector<1x128xf32>
    %5 = vector.multi_reduction <add>, %4, %cst_6 [0] : vector<4x1x128xf32> to vector<1x128xf32>
    %cst_7 = arith.constant 0.001953125 : f32
    %6 = vector.broadcast %cst_7 : f32 to vector<1x128xf32>
    %7 = arith.mulf %5, %6 : vector<1x128xf32>
    %8 = arith.mulf %3, %3 : vector<1x128xf32>
    %9 = arith.subf %7, %8 : vector<1x128xf32>
    %cst_8 = arith.constant 0.000000e+00 : f32
    %10 = vector.broadcast %cst_8 : f32 to vector<1x128xf32>
    %11 = arith.maximumf %9, %10 : vector<1x128xf32>
    %c0_9 = arith.constant 0 : index
    %c0_10 = arith.constant 0 : index
    %12 = vector.load %arg4[%c0_9, %c0_10] : memref<1x128xf32, #tpu.memory_space<vmem>>, vector<1x128xf32>
    %cst_11 = arith.constant 9.99999974E-6 : f32
    %13 = vector.broadcast %cst_11 : f32 to vector<1x128xf32>
    %14 = arith.addf %11, %13 : vector<1x128xf32>
    %15 = math.rsqrt %14 : vector<1x128xf32>
    %16 = arith.mulf %12, %15 : vector<1x128xf32>
    %c0_12 = arith.constant 0 : index
    %c0_13 = arith.constant 0 : index
    %17 = vector.load %arg5[%c0_12, %c0_13] : memref<1x128xf32, #tpu.memory_space<vmem>>, vector<1x128xf32>
    %18 = arith.mulf %3, %16 : vector<1x128xf32>
    %19 = arith.subf %17, %18 : vector<1x128xf32>
    %c0_14 = arith.constant 0 : index
    %c0_15 = arith.constant 0 : index
    %20 = vector.load %arg1[%c0_14, %c0_15] : memref<512x128xbf16, #tpu.memory_space<vmem>>, vector<512x128xbf16>
    %21 = arith.extf %20 : vector<512x128xbf16> to vector<512x128xf32>
    %22 = vector.broadcast %16 : vector<1x128xf32> to vector<512x128xf32>
    %23 = arith.mulf %21, %22 : vector<512x128xf32>
    %24 = vector.broadcast %19 : vector<1x128xf32> to vector<512x128xf32>
    %25 = arith.addf %23, %24 : vector<512x128xf32>
    %cst_16 = arith.constant 0.000000e+00 : f32
    %26 = vector.broadcast %cst_16 : f32 to vector<512x128xf32>
    %27 = arith.maximumf %25, %26 : vector<512x128xf32>
    %28 = arith.truncf %27 : vector<512x128xf32> to vector<512x128xbf16>
    %c0_17 = arith.constant 0 : index
    %c0_18 = arith.constant 0 : index
    %29 = vector.load %arg6[%c0_17, %c0_18] : memref<512x128xbf16, #tpu.memory_space<vmem>>, vector<512x128xbf16>
    tpu.vector_store %arg6[%c0_17, %c0_18], %28 {strides = array<i32>} : memref<512x128xbf16, #tpu.memory_space<vmem>>, vector<512x128xbf16>,
    return
  }
  func.func @transform_0(%arg0: i32) -> (i32, i32) {
    %c0_i32 = arith.constant 0 : i32
    %c0_i32_0 = arith.constant 0 : i32
    return %arg0, %c0_i32 : i32, i32
  }
  func.func @transform_1(%arg0: i32) -> (i32, i32, i32) {
    %c0_i32 = arith.constant 0 : i32
    %c0_i32_0 = arith.constant 0 : i32
    %c0_i32_1 = arith.constant 0 : i32
    %c0_i32_2 = arith.constant 0 : i32
    return %c0_i32, %c0_i32_0, %c0_i32_1 : i32, i32, i32
  }
  func.func @transform_2(%arg0: i32) -> (i32, i32, i32) {
    %c0_i32 = arith.constant 0 : i32
    %c0_i32_0 = arith.constant 0 : i32
    %c0_i32_1 = arith.constant 0 : i32
    %c0_i32_2 = arith.constant 0 : i32
    return %c0_i32, %c0_i32_0, %c0_i32_1 : i32, i32, i32
  }
  func.func @transform_3(%arg0: i32) -> (i32, i32) {
    %c0_i32 = arith.constant 0 : i32
    %c0_i32_0 = arith.constant 0 : i32
    %c0_i32_1 = arith.constant 0 : i32
    return %c0_i32, %c0_i32_0 : i32, i32
  }
  func.func @transform_4(%arg0: i32) -> (i32, i32) {
    %c0_i32 = arith.constant 0 : i32
    %c0_i32_0 = arith.constant 0 : i32
    %c0_i32_1 = arith.constant 0 : i32
    return %c0_i32, %c0_i32_0 : i32, i32
  }
  func.func @transform_5(%arg0: i32) -> (i32, i32) {
    %c0_i32 = arith.constant 0 : i32
    %c0_i32_0 = arith.constant 0 : i32
    return %arg0, %c0_i32 : i32, i32
  }
}

module attributes {stable_mosaic.version = 11 : i64} {
  func.func @_mm_bias_act_kernel(%arg0: i32, %arg1: i32, %arg2: i32, %arg3: memref<1x512x1152xbf16, #tpu.memory_space<vmem>>, %arg4: memref<1x1152x128xbf16, #tpu.memory_space<vmem>>, %arg5: memref<1x128xf32, #tpu.memory_space<vmem>>, %arg6: memref<1x512x128xbf16, #tpu.memory_space<vmem>>) attributes {dimension_semantics = [#tpu.dimension_semantics<parallel>, #tpu.dimension_semantics<parallel>, #tpu.dimension_semantics<parallel>], iteration_bounds = array<i64: 1, 1, 1>, scalar_prefetch = 0 : i64, scratch_operands = 0 : i64, tpu.core_type = #tpu.core_type<tc>, window_params = [{transform_indices = @transform_0, window_bounds = array<i64: 1, 512, 1152>}, {transform_indices = @transform_1, window_bounds = array<i64: 1, 1152, 128>}, {transform_indices = @transform_2, window_bounds = array<i64: 1, 128>}, {transform_indices = @transform_3, window_bounds = array<i64: 1, 512, 128>}]} {
    %c0 = arith.constant 0 : index
    %c0_0 = arith.constant 0 : index
    %c0_1 = arith.constant 0 : index
    %0 = vector.load %arg3[%c0, %c0_0, %c0_1] : memref<1x512x1152xbf16, #tpu.memory_space<vmem>>, vector<1x512x1152xbf16>
    %1 = vector.shape_cast %0 : vector<1x512x1152xbf16> to vector<512x1152xbf16>
    %c0_2 = arith.constant 0 : index
    %c0_3 = arith.constant 0 : index
    %c0_4 = arith.constant 0 : index
    %2 = vector.load %arg4[%c0_2, %c0_3, %c0_4] : memref<1x1152x128xbf16, #tpu.memory_space<vmem>>, vector<1x1152x128xbf16>
    %3 = vector.shape_cast %2 : vector<1x1152x128xbf16> to vector<1152x128xbf16>
    %cst = arith.constant dense<0.000000e+00> : vector<512x128xf32>
    %4 = tpu.matmul %1, %3, %cst {dimension_numbers = #tpu.dot_dimension_numbers<[1], [0], [0], [1], [0, 0, 1, 1], [], []>} : vector<512x1152xbf16>, vector<1152x128xbf16>, vector<512x128xf32> -> vector<512x128xf32>
    %c0_5 = arith.constant 0 : index
    %c0_6 = arith.constant 0 : index
    %5 = vector.load %arg5[%c0_5, %c0_6] : memref<1x128xf32, #tpu.memory_space<vmem>>, vector<1x128xf32>
    %6 = vector.broadcast %5 : vector<1x128xf32> to vector<512x128xf32>
    %7 = arith.addf %4, %6 : vector<512x128xf32>
    %8 = math.tanh %7 : vector<512x128xf32>
    %9 = arith.truncf %8 : vector<512x128xf32> to vector<512x128xbf16>
    %c0_7 = arith.constant 0 : index
    %c0_8 = arith.constant 0 : index
    %c0_9 = arith.constant 0 : index
    %10 = vector.load %arg6[%c0_7, %c0_8, %c0_9] : memref<1x512x128xbf16, #tpu.memory_space<vmem>>, vector<1x512x128xbf16>
    %11 = vector.shape_cast %10 : vector<1x512x128xbf16> to vector<512x128xbf16>
    %12 = vector.shape_cast %9 : vector<512x128xbf16> to vector<1x512x128xbf16>
    tpu.vector_store %arg6[%c0_7, %c0_8, %c0_9], %12 {strides = array<i32>} : memref<1x512x128xbf16, #tpu.memory_space<vmem>>, vector<1x512x128xbf16>,
    return
  }
  func.func @transform_0(%arg0: i32, %arg1: i32, %arg2: i32) -> (i32, i32, i32) {
    %c0_i32 = arith.constant 0 : i32
    %c0_i32_0 = arith.constant 0 : i32
    return %arg0, %arg2, %c0_i32 : i32, i32, i32
  }
  func.func @transform_1(%arg0: i32, %arg1: i32, %arg2: i32) -> (i32, i32, i32) {
    %c0_i32 = arith.constant 0 : i32
    %c0_i32_0 = arith.constant 0 : i32
    return %arg0, %c0_i32, %arg1 : i32, i32, i32
  }
  func.func @transform_2(%arg0: i32, %arg1: i32, %arg2: i32) -> (i32, i32) {
    %c0_i32 = arith.constant 0 : i32
    %c0_i32_0 = arith.constant 0 : i32
    return %c0_i32, %arg1 : i32, i32
  }
  func.func @transform_3(%arg0: i32, %arg1: i32, %arg2: i32) -> (i32, i32, i32) {
    %c0_i32 = arith.constant 0 : i32
    return %arg0, %arg2, %arg1 : i32, i32, i32
  }
}

</mosaic_0001>

<llo_original>
// kernel: generator_forward.18
$region0: #{generator_forward.18}
  #allocation0 [shape = 'u32[]', space=smem, size = 0x4, offset = 0x4, fixed_abs, tag = 'smem constant byte address 0x4 - core index']
  #allocation1 [shape = 'u32[144,128]{1,0:T(1,128)}', space=vmem, size = 0x12000, scoped, tag = 'internal scratch']
  %s0 = inlined_call_operand.vmem [shape: bf16[1,512,128], index: 0, kind: input, shape index: {}]
  %s1 = inlined_call_operand.vmem [shape: bf16[1,128,128], index: 1, kind: input, shape index: {}]
  %s2 = inlined_call_operand.vmem [shape: f32[1,128], index: 2, kind: input, shape index: {}]
  %s3 = inlined_call_operand.vmem [shape: bf16[1,512,128], index: 3, kind: output, shape index: {}]
  %s4 = sld [smem:[#allocation0]]
  $region22: #{generator_forward.18} parent=0
    _
  %s6 = ssub.s32 1, %s4
  %s7 = scalar_select 0, %s6, %s4
  // Predicated region
  $region2: #{generator_forward.18} parent=0 // pred_check
    _
  $region3: #{generator_forward.18} parent=0 // pred_check_branch
    %9 = sbr.rel (0) target = $region5
  $region4: #{generator_forward.18} parent=0 // pred_region
    _
  $region5: #{generator_forward.18} parent=0 // pred_fallthru
    _
  // Predicated region
  $region6: #{generator_forward.18} parent=0 // pred_check
    _
  $region7: #{generator_forward.18} parent=0 // pred_check_branch
    %11 = sbr.rel (0) target = $region9
  $region8: #{generator_forward.18} parent=0 // pred_region
    _
  $region9: #{generator_forward.18} parent=0 // pred_fallthru
    _
  // Predicated region
  $region10: #{generator_forward.18} parent=0 // pred_check
    _
  $region11: #{generator_forward.18} parent=0 // pred_check_branch
    %13 = sbr.rel (0) target = $region13
  $region12: #{generator_forward.18} parent=0 // pred_region
    _
  $region13: #{generator_forward.18} parent=0 // pred_fallthru
    _
  %v15 = vld [vmem:[%s0] sm:$0xf]
  %v16 = vld [vmem:[%s0 + $0x4] sm:$0xf]
  %v17 = vld [vmem:[%s0 + $0x8] sm:$0xf]
  %v18 = vld [vmem:[%s0 + $0xc] sm:$0xf]
  %v19 = vld [vmem:[%s0 + $0x10] sm:$0xf]
  %v20 = vld [vmem:[%s0 + $0x14] sm:$0xf]
  %v21 = vld [vmem:[%s0 + $0x18] sm:$0xf]
  %v22 = vld [vmem:[%s0 + $0x1c] sm:$0xf]
  %v23 = vld [vmem:[%s0 + $0x20] sm:$0xf]
  %v24 = vld [vmem:[%s0 + $0x24] sm:$0xf]
  %v25 = vld [vmem:[%s0 + $0x28] sm:$0xf]
  %v26 = vld [vmem:[%s0 + $0x2c] sm:$0xf]
  %v27 = vld [vmem:[%s0 + $0x30] sm:$0xf]
  %v28 = vld [vmem:[%s0 + $0x34] sm:$0xf]
  %v29 = vld [vmem:[%s0 + $0x38] sm:$0xf]
  %v30 = vld [vmem:[%s0 + $0x3c] sm:$0xf]
  %v31 = vld [vmem:[%s0 + $0x40] sm:$0xf]
  %v32 = vld [vmem:[%s0 + $0x44] sm:$0xf]
  %v33 = vld [vmem:[%s0 + $0x48] sm:$0xf]
  %v34 = vld [vmem:[%s0 + $0x4c] sm:$0xf]
  %v35 = vld [vmem:[%s0 + $0x50] sm:$0xf]
  %v36 = vld [vmem:[%s0 + $0x54] sm:$0xf]
  %v37 = vld [vmem:[%s0 + $0x58] sm:$0xf]
  %v38 = vld [vmem:[%s0 + $0x5c] sm:$0xf]
  %v39 = vld [vmem:[%s0 + $0x60] sm:$0xf]
  %v40 = vld [vmem:[%s0 + $0x64] sm:$0xf]
  %v41 = vld [vmem:[%s0 + $0x68] sm:$0xf]
  %v42 = vld [vmem:[%s0 + $0x6c] sm:$0xf]
  %v43 = vld [vmem:[%s0 + $0x70] sm:$0xf]
  %v44 = vld [vmem:[%s0 + $0x74] sm:$0xf]
  %v45 = vld [vmem:[%s0 + $0x78] sm:$0xf]
  %v46 = vld [vmem:[%s0 + $0x7c] sm:$0xf]
  %v47 = vld [vmem:[%s0 + $0x80] sm:$0xf]
  %v48 = vld [vmem:[%s0 + $0x84] sm:$0xf]
  %v49 = vld [vmem:[%s0 + $0x88] sm:$0xf]
  %v50 = vld [vmem:[%s0 + $0x8c] sm:$0xf]
  %v51 = vld [vmem:[%s0 + $0x90] sm:$0xf]
  %v52 = vld [vmem:[%s0 + $0x94] sm:$0xf]
  %v53 = vld [vmem:[%s0 + $0x98] sm:$0xf]
  %v54 = vld [vmem:[%s0 + $0x9c] sm:$0xf]
  %v55 = vld [vmem:[%s0 + $0xa0] sm:$0xf]
  %v56 = vld [vmem:[%s0 + $0xa4] sm:$0xf]
  %v57 = vld [vmem:[%s0 + $0xa8] sm:$0xf]
  %v58 = vld [vmem:[%s0 + $0xac] sm:$0xf]
  %v59 = vld [vmem:[%s0 + $0xb0] sm:$0xf]
  %v60 = vld [vmem:[%s0 + $0xb4] sm:$0xf]
  %v61 = vld [vmem:[%s0 + $0xb8] sm:$0xf]
  %v62 = vld [vmem:[%s0 + $0xbc] sm:$0xf]
  %v63 = vld [vmem:[%s0 + $0xc0] sm:$0xf]
  %v64 = vld [vmem:[%s0 + $0xc4] sm:$0xf]
  %v65 = vld [vmem:[%s0 + $0xc8] sm:$0xf]
  %v66 = vld [vmem:[%s0 + $0xcc] sm:$0xf]
  %v67 = vld [vmem:[%s0 + $0xd0] sm:$0xf]
  %v68 = vld [vmem:[%s0 + $0xd4] sm:$0xf]
  %v69 = vld [vmem:[%s0 + $0xd8] sm:$0xf]
  %v70 = vld [vmem:[%s0 + $0xdc] sm:$0xf]
  %v71 = vld [vmem:[%s0 + $0xe0] sm:$0xf]
  %v72 = vld [vmem:[%s0 + $0xe4] sm:$0xf]
  %v73 = vld [vmem:[%s0 + $0xe8] sm:$0xf]
  %v74 = vld [vmem:[%s0 + $0xec] sm:$0xf]
  %v75 = vld [vmem:[%s0 + $0xf0] sm:$0xf]
  %v76 = vld [vmem:[%s0 + $0xf4] sm:$0xf]
  %v77 = vld [vmem:[%s0 + $0xf8] sm:$0xf]
  %v78 = vld [vmem:[%s0 + $0xfc] sm:$0xf]
  %v79 = vld [vmem:[%s1] sm:$0xf]
  %v80 = vld [vmem:[%s1 + $0x4] sm:$0xf]
  %v81 = vld [vmem:[%s1 + $0x8] sm:$0xf]
  %v82 = vld [vmem:[%s1 + $0xc] sm:$0xf]
  %v83 = vld [vmem:[%s1 + $0x10] sm:$0xf]
  %v84 = vld [vmem:[%s1 + $0x14] sm:$0xf]
  %v85 = vld [vmem:[%s1 + $0x18] sm:$0xf]
  %v86 = vld [vmem:[%s1 + $0x1c] sm:$0xf]
  %v87 = vld [vmem:[%s1 + $0x20] sm:$0xf]
  %v88 = vld [vmem:[%s1 + $0x24] sm:$0xf]
  %v89 = vld [vmem:[%s1 + $0x28] sm:$0xf]
  %v90 = vld [vmem:[%s1 + $0x2c] sm:$0xf]
  %v91 = vld [vmem:[%s1 + $0x30] sm:$0xf]
  %v92 = vld [vmem:[%s1 + $0x34] sm:$0xf]
  %v93 = vld [vmem:[%s1 + $0x38] sm:$0xf]
  %v94 = vld [vmem:[%s1 + $0x3c] sm:$0xf]
  %v95 = vld [vmem:[%s2] sm:$0x1]
  %v97 = vlaneseq
  %v98 = vshrl.u32 %v97, 7
  %v99 = vsub.s32 0, %v98
  %v100 = vrot.slane %v95, %v99
  %v166 = vunpack.c.l.b16 %v15
  %v167 = vunpack.c.l.b16 %v16
  %v168 = vunpack.c.l.b16 %v17
  %v169 = vunpack.c.l.b16 %v18
  %v170 = vunpack.c.l.b16 %v19
  %v171 = vunpack.c.l.b16 %v20
  %v172 = vunpack.c.l.b16 %v21
  %v173 = vunpack.c.l.b16 %v22
  %v174 = vunpack.c.l.b16 %v23
  %v175 = vunpack.c.l.b16 %v24
  %v176 = vunpack.c.l.b16 %v25
  %v177 = vunpack.c.l.b16 %v26
  %v178 = vunpack.c.l.b16 %v27
  %v179 = vunpack.c.l.b16 %v28
  %v180 = vunpack.c.l.b16 %v29
  %v181 = vunpack.c.l.b16 %v30
  %v182 = vunpack.c.l.b16 %v31
  %v183 = vunpack.c.l.b16 %v32
  %v184 = vunpack.c.l.b16 %v33
  %v185 = vunpack.c.l.b16 %v34
  %v186 = vunpack.c.l.b16 %v35
  %v187 = vunpack.c.l.b16 %v36
  %v188 = vunpack.c.l.b16 %v37
  %v189 = vunpack.c.l.b16 %v38
  %v190 = vunpack.c.l.b16 %v39
  %v191 = vunpack.c.l.b16 %v40
  %v192 = vunpack.c.l.b16 %v41
  %v193 = vunpack.c.l.b16 %v42
  %v194 = vunpack.c.l.b16 %v43
  %v195 = vunpack.c.l.b16 %v44
  %v196 = vunpack.c.l.b16 %v45
  %v197 = vunpack.c.l.b16 %v46
  %v198 = vunpack.c.l.b16 %v47
  %v199 = vunpack.c.l.b16 %v48
  %v200 = vunpack.c.l.b16 %v49
  %v201 = vunpack.c.l.b16 %v50
  %v202 = vunpack.c.l.b16 %v51
  %v203 = vunpack.c.l.b16 %v52
  %v204 = vunpack.c.l.b16 %v53
  %v205 = vunpack.c.l.b16 %v54
  %v206 = vunpack.c.l.b16 %v55
  %v207 = vunpack.c.l.b16 %v56
  %v208 = vunpack.c.l.b16 %v57
  %v209 = vunpack.c.l.b16 %v58
  %v210 = vunpack.c.l.b16 %v59
  %v211 = vunpack.c.l.b16 %v60
  %v212 = vunpack.c.l.b16 %v61
  %v213 = vunpack.c.l.b16 %v62
  %v214 = vunpack.c.l.b16 %v63
  %v215 = vunpack.c.l.b16 %v64
  %v216 = vunpack.c.l.b16 %v65
  %v217 = vunpack.c.l.b16 %v66
  %v218 = vunpack.c.l.b16 %v67
  %v219 = vunpack.c.l.b16 %v68
  %v220 = vunpack.c.l.b16 %v69
  %v221 = vunpack.c.l.b16 %v70
  %v222 = vunpack.c.l.b16 %v71
  %v223 = vunpack.c.l.b16 %v72
  %v224 = vunpack.c.l.b16 %v73
  %v225 = vunpack.c.l.b16 %v74
  %v226 = vunpack.c.l.b16 %v75
  %v227 = vunpack.c.l.b16 %v76
  %v228 = vunpack.c.l.b16 %v77
  %v229 = vunpack.c.l.b16 %v78
  %v230 = vpack.c.b16 %v167, %v166
  %v231 = vpack.c.b16 %v169, %v168
  %v232 = vpack.c.b16 %v171, %v170
  %v233 = vpack.c.b16 %v173, %v172
  %v234 = vpack.c.b16 %v175, %v174
  %v235 = vpack.c.b16 %v177, %v176
  %v236 = vpack.c.b16 %v179, %v178
  %v237 = vpack.c.b16 %v181, %v180
  %v238 = vpack.c.b16 %v183, %v182
  %v239 = vpack.c.b16 %v185, %v184
  %v240 = vpack.c.b16 %v187, %v186
  %v241 = vpack.c.b16 %v189, %v188
  %v242 = vpack.c.b16 %v191, %v190
  %v243 = vpack.c.b16 %v193, %v192
  %v244 = vpack.c.b16 %v195, %v194
  %v245 = vpack.c.b16 %v197, %v196
  %v246 = vpack.c.b16 %v199, %v198
  %v247 = vpack.c.b16 %v201, %v200
  %v248 = vpack.c.b16 %v203, %v202
  %v249 = vpack.c.b16 %v205, %v204
  %v250 = vpack.c.b16 %v207, %v206
  %v251 = vpack.c.b16 %v209, %v208
  %v252 = vpack.c.b16 %v211, %v210
  %v253 = vpack.c.b16 %v213, %v212
  %v254 = vpack.c.b16 %v215, %v214
  %v255 = vpack.c.b16 %v217, %v216
  %v256 = vpack.c.b16 %v219, %v218
  %v257 = vpack.c.b16 %v221, %v220
  %v258 = vpack.c.b16 %v223, %v222
  %v259 = vpack.c.b16 %v225, %v224
  %v260 = vpack.c.b16 %v227, %v226
  %v261 = vpack.c.b16 %v229, %v228
  %v310 = vunpack.c.l.b16 %v79
  %v311 = vunpack.c.l.b16 %v80
  %v312 = vunpack.c.l.b16 %v81
  %v313 = vunpack.c.l.b16 %v82
  %v314 = vunpack.c.l.b16 %v83
  %v315 = vunpack.c.l.b16 %v84
  %v316 = vunpack.c.l.b16 %v85
  %v317 = vunpack.c.l.b16 %v86
  %v318 = vunpack.c.l.b16 %v87
  %v319 = vunpack.c.l.b16 %v88
  %v320 = vunpack.c.l.b16 %v89
  %v321 = vunpack.c.l.b16 %v90
  %v322 = vunpack.c.l.b16 %v91
  %v323 = vunpack.c.l.b16 %v92
  %v324 = vunpack.c.l.b16 %v93
  %v325 = vunpack.c.l.b16 %v94
  %v326 = vpack.c.b16 %v311, %v310
  %v327 = vpack.c.b16 %v313, %v312
  %v328 = vpack.c.b16 %v315, %v314
  %v329 = vpack.c.b16 %v317, %v316
  %v330 = vpack.c.b16 %v319, %v318
  %v331 = vpack.c.b16 %v321, %v320
  %v332 = vpack.c.b16 %v323, %v322
  %v333 = vpack.c.b16 %v325, %v324
  %342 = vmatprep.subr.bf16.mxu0 0
  %343 = vmatpush1.bf16.msra.mxu0 %v326
  %344 = vmatprep.subr.bf16.mxu0 0
  %345 = vmatpush1.bf16.msra.mxu0 %v327
  %346 = vmatprep.subr.bf16.mxu0 0
  %347 = vmatpush1.bf16.msra.mxu0 %v328
  %348 = vmatprep.subr.bf16.mxu0 0
  %349 = vmatpush1.bf16.msra.mxu0 %v329
  %350 = vmatprep.subr.bf16.mxu0 0
  %351 = vmatpush1.bf16.msra.mxu0 %v330
  %352 = vmatprep.subr.bf16.mxu0 0
  %353 = vmatpush1.bf16.msra.mxu0 %v331
  %354 = vmatprep.subr.bf16.mxu0 0
  %355 = vmatpush1.bf16.msra.mxu0 %v332
  %356 = vmatprep.subr.bf16.mxu0 0
  %357 = vmatpush1.bf16.msra.mxu0 %v333
  %358 = vmatprep.subr.bf16.mxu0 0
  %359 = vmatpush1.bf16.msra.mxu0 0
  %360 = vmatprep.subr.bf16.mxu0 0
  %361 = vmatpush1.bf16.msra.mxu0 0
  %362 = vmatprep.subr.bf16.mxu0 0
  %363 = vmatpush1.bf16.msra.mxu0 0
  %364 = vmatprep.subr.bf16.mxu0 0
  %365 = vmatpush1.bf16.msra.mxu0 0
  %366 = vmatprep.subr.bf16.mxu0 0
  %367 = vmatpush1.bf16.msra.mxu0 0
  %368 = vmatprep.subr.bf16.mxu0 0
  %369 = vmatpush1.bf16.msra.mxu0 0
  %370 = vmatprep.subr.bf16.mxu0 0
  %371 = vmatpush1.bf16.msra.mxu0 0
  %372 = vmatprep.subr.bf16.mxu0 0
  %373 = vmatpush1.bf16.msra.mxu0 0
  %374 = vmatprep.mubr.bf16.mxu0 0
  %375 = vmatmul.mubr.bf16.gmra.mrb[0].mxu0 %v230
  %v376 = vpop.f32.mrb[0].mxu0
  %v377 = vadd.f32 %v100, %v376
  %v378 = vpop.f32.mrb[0].mxu0
  %v379 = vpop.f32.mrb[0].mxu0
  %v380 = vadd.f32 %v100, %v379
  %v381 = vpop.f32.mrb[0].mxu0
  %382 = vmatprep.mubr.bf16.mxu0 0
  %383 = vmatmul.mubr.bf16.gmra.mrb[0].mxu0 %v231
  %v384 = vpop.f32.mrb[0].mxu0
  %v385 = vadd.f32 %v100, %v384
  %v386 = vpop.f32.mrb[0].mxu0
  %v387 = vpop.f32.mrb[0].mxu0
  %v388 = vadd.f32 %v100, %v387
  %v389 = vpop.f32.mrb[0].mxu0
  %390 = vmatprep.mubr.bf16.mxu0 0
  %391 = vmatmul.mubr.bf16.gmra.mrb[0].mxu0 %v232
  %v392 = vpop.f32.mrb[0].mxu0
  %v393 = vadd.f32 %v100, %v392
  %v394 = vpop.f32.mrb[0].mxu0
  %v395 = vpop.f32.mrb[0].mxu0
  %v396 = vadd.f32 %v100, %v395
  %v397 = vpop.f32.mrb[0].mxu0
  %398 = vmatprep.mubr.bf16.mxu0 0
  %399 = vmatmul.mubr.bf16.gmra.mrb[0].mxu0 %v233
  %v400 = vpop.f32.mrb[0].mxu0
  %v401 = vadd.f32 %v100, %v400
  %v402 = vpop.f32.mrb[0].mxu0
  %v403 = vpop.f32.mrb[0].mxu0
  %v404 = vadd.f32 %v100, %v403
  %v405 = vpop.f32.mrb[0].mxu0
  %406 = vmatprep.mubr.bf16.mxu0 0
  %407 = vmatmul.mubr.bf16.gmra.mrb[0].mxu0 %v234
  %v408 = vpop.f32.mrb[0].mxu0
  %v409 = vadd.f32 %v100, %v408
  %v410 = vpop.f32.mrb[0].mxu0
  %v411 = vpop.f32.mrb[0].mxu0
  %v412 = vadd.f32 %v100, %v411
  %v413 = vpop.f32.mrb[0].mxu0
  %414 = vmatprep.mubr.bf16.mxu0 0
  %415 = vmatmul.mubr.bf16.gmra.mrb[0].mxu0 %v235
  %v416 = vpop.f32.mrb[0].mxu0
  %v417 = vadd.f32 %v100, %v416
  %v418 = vpop.f32.mrb[0].mxu0
  %v419 = vpop.f32.mrb[0].mxu0
  %v420 = vadd.f32 %v100, %v419
  %v421 = vpop.f32.mrb[0].mxu0
  %422 = vmatprep.mubr.bf16.mxu0 0
  %423 = vmatmul.mubr.bf16.gmra.mrb[0].mxu0 %v236
  %v424 = vpop.f32.mrb[0].mxu0
  %v425 = vadd.f32 %v100, %v424
  %v426 = vpop.f32.mrb[0].mxu0
  %v427 = vpop.f32.mrb[0].mxu0
  %v428 = vadd.f32 %v100, %v427
  %v429 = vpop.f32.mrb[0].mxu0
  %430 = vmatprep.mubr.bf16.mxu0 0
  %431 = vmatmul.mubr.bf16.gmra.mrb[0].mxu0 %v237
  %v432 = vpop.f32.mrb[0].mxu0
  %v433 = vadd.f32 %v100, %v432
  %v434 = vpop.f32.mrb[0].mxu0
  %v435 = vpop.f32.mrb[0].mxu0
  %v436 = vadd.f32 %v100, %v435
  %v437 = vpop.f32.mrb[0].mxu0
  %438 = vmatprep.mubr.bf16.mxu0 0
  %439 = vmatmul.mubr.bf16.gmra.mrb[0].mxu0 %v238
  %v440 = vpop.f32.mrb[0].mxu0
  %v441 = vadd.f32 %v100, %v440
  %v442 = vpop.f32.mrb[0].mxu0
  %v443 = vpop.f32.mrb[0].mxu0
  %v444 = vadd.f32 %v100, %v443
  %v445 = vpop.f32.mrb[0].mxu0
  %446 = vmatprep.mubr.bf16.mxu0 0
  %447 = vmatmul.mubr.bf16.gmra.mrb[0].mxu0 %v239
  %v448 = vpop.f32.mrb[0].mxu0
  %v449 = vadd.f32 %v100, %v448
  %v450 = vpop.f32.mrb[0].mxu0
  %v451 = vpop.f32.mrb[0].mxu0
  %v452 = vadd.f32 %v100, %v451
  %v453 = vpop.f32.mrb[0].mxu0
  %454 = vmatprep.mubr.bf16.mxu0 0
  %455 = vmatmul.mubr.bf16.gmra.mrb[0].mxu0 %v240
  %v456 = vpop.f32.mrb[0].mxu0
  %v457 = vadd.f32 %v100, %v456
  %v458 = vpop.f32.mrb[0].mxu0
  %v459 = vpop.f32.mrb[0].mxu0
  %v460 = vadd.f32 %v100, %v459
  %v461 = vpop.f32.mrb[0].mxu0
  %462 = vmatprep.mubr.bf16.mxu0 0
  %463 = vmatmul.mubr.bf16.gmra.mrb[0].mxu0 %v241
  %v464 = vpop.f32.mrb[0].mxu0
  %v465 = vadd.f32 %v100, %v464
  %v466 = vpop.f32.mrb[0].mxu0
  %v467 = vpop.f32.mrb[0].mxu0
  %v468 = vadd.f32 %v100, %v467
  %v469 = vpop.f32.mrb[0].mxu0
  %470 = vmatprep.mubr.bf16.mxu0 0
  %471 = vmatmul.mubr.bf16.gmra.mrb[0].mxu0 %v242
  %v472 = vpop.f32.mrb[0].mxu0
  %v473 = vadd.f32 %v100, %v472
  %v474 = vpop.f32.mrb[0].mxu0
  %v475 = vpop.f32.mrb[0].mxu0
  %v476 = vadd.f32 %v100, %v475
  %v477 = vpop.f32.mrb[0].mxu0
  %478 = vmatprep.mubr.bf16.mxu0 0
  %479 = vmatmul.mubr.bf16.gmra.mrb[0].mxu0 %v243
  %v480 = vpop.f32.mrb[0].mxu0
  %v481 = vadd.f32 %v100, %v480
  %v482 = vpop.f32.mrb[0].mxu0
  %v483 = vpop.f32.mrb[0].mxu0
  %v484 = vadd.f32 %v100, %v483
  %v485 = vpop.f32.mrb[0].mxu0
  %486 = vmatprep.mubr.bf16.mxu0 0
  %487 = vmatmul.mubr.bf16.gmra.mrb[0].mxu0 %v244
  %v488 = vpop.f32.mrb[0].mxu0
  %v489 = vadd.f32 %v100, %v488
  %v490 = vpop.f32.mrb[0].mxu0
  %v491 = vpop.f32.mrb[0].mxu0
  %v492 = vadd.f32 %v100, %v491
  %v493 = vpop.f32.mrb[0].mxu0
  %494 = vmatprep.mubr.bf16.mxu0 0
  %495 = vmatmul.mubr.bf16.gmra.mrb[0].mxu0 %v245
  %v496 = vpop.f32.mrb[0].mxu0
  %v497 = vadd.f32 %v100, %v496
  %v498 = vpop.f32.mrb[0].mxu0
  %v499 = vpop.f32.mrb[0].mxu0
  %v500 = vadd.f32 %v100, %v499
  %v501 = vpop.f32.mrb[0].mxu0
  %502 = vmatprep.mubr.bf16.mxu0 0
  %503 = vmatmul.mubr.bf16.gmra.mrb[0].mxu0 %v246
  %v504 = vpop.f32.mrb[0].mxu0
  %v505 = vadd.f32 %v100, %v504
  %v506 = vpop.f32.mrb[0].mxu0
  %v507 = vpop.f32.mrb[0].mxu0
  %v508 = vadd.f32 %v100, %v507
  %v509 = vpop.f32.mrb[0].mxu0
  %510 = vmatprep.mubr.bf16.mxu0 0
  %511 = vmatmul.mubr.bf16.gmra.mrb[0].mxu0 %v247
  %v512 = vpop.f32.mrb[0].mxu0
  %v513 = vadd.f32 %v100, %v512
  %v514 = vpop.f32.mrb[0].mxu0
  %v515 = vpop.f32.mrb[0].mxu0
  %v516 = vadd.f32 %v100, %v515
  %v517 = vpop.f32.mrb[0].mxu0
  %518 = vmatprep.mubr.bf16.mxu0 0
  %519 = vmatmul.mubr.bf16.gmra.mrb[0].mxu0 %v248
  %v520 = vpop.f32.mrb[0].mxu0
  %v521 = vadd.f32 %v100, %v520
  %v522 = vpop.f32.mrb[0].mxu0
  %v523 = vpop.f32.mrb[0].mxu0
  %v524 = vadd.f32 %v100, %v523
  %v525 = vpop.f32.mrb[0].mxu0
  %526 = vmatprep.mubr.bf16.mxu0 0
  %527 = vmatmul.mubr.bf16.gmra.mrb[0].mxu0 %v249
  %v528 = vpop.f32.mrb[0].mxu0
  %v529 = vadd.f32 %v100, %v528
  %v530 = vpop.f32.mrb[0].mxu0
  %v531 = vpop.f32.mrb[0].mxu0
  %v532 = vadd.f32 %v100, %v531
  %v533 = vpop.f32.mrb[0].mxu0
  %534 = vmatprep.mubr.bf16.mxu0 0
  %535 = vmatmul.mubr.bf16.gmra.mrb[0].mxu0 %v250
  %v536 = vpop.f32.mrb[0].mxu0
  %v537 = vadd.f32 %v100, %v536
  %v538 = vpop.f32.mrb[0].mxu0
  %v539 = vpop.f32.mrb[0].mxu0
  %v540 = vadd.f32 %v100, %v539
  %v541 = vpop.f32.mrb[0].mxu0
  %542 = vmatprep.mubr.bf16.mxu0 0
  %543 = vmatmul.mubr.bf16.gmra.mrb[0].mxu0 %v251
  %v544 = vpop.f32.mrb[0].mxu0
  %v545 = vadd.f32 %v100, %v544
  %v546 = vpop.f32.mrb[0].mxu0
  %v547 = vpop.f32.mrb[0].mxu0
  %v548 = vadd.f32 %v100, %v547
  %v549 = vpop.f32.mrb[0].mxu0
  %550 = vmatprep.mubr.bf16.mxu0 0
  %551 = vmatmul.mubr.bf16.gmra.mrb[0].mxu0 %v252
  %v552 = vpop.f32.mrb[0].mxu0
  %v553 = vadd.f32 %v100, %v552
  %v554 = vpop.f32.mrb[0].mxu0
  %v555 = vpop.f32.mrb[0].mxu0
  %v556 = vadd.f32 %v100, %v555
  %v557 = vpop.f32.mrb[0].mxu0
  %558 = vmatprep.mubr.bf16.mxu0 0
  %559 = vmatmul.mubr.bf16.gmra.mrb[0].mxu0 %v253
  %v560 = vpop.f32.mrb[0].mxu0
  %v561 = vadd.f32 %v100, %v560
  %v562 = vpop.f32.mrb[0].mxu0
  %v563 = vpop.f32.mrb[0].mxu0
  %v564 = vadd.f32 %v100, %v563
  %v565 = vpop.f32.mrb[0].mxu0
  %566 = vmatprep.mubr.bf16.mxu0 0
  %567 = vmatmul.mubr.bf16.gmra.mrb[0].mxu0 %v254
  %v568 = vpop.f32.mrb[0].mxu0
  %v569 = vadd.f32 %v100, %v568
  %v570 = vpop.f32.mrb[0].mxu0
  %v571 = vpop.f32.mrb[0].mxu0
  %v572 = vadd.f32 %v100, %v571
  %v573 = vpop.f32.mrb[0].mxu0
  %574 = vmatprep.mubr.bf16.mxu0 0
  %575 = vmatmul.mubr.bf16.gmra.mrb[0].mxu0 %v255
  %v576 = vpop.f32.mrb[0].mxu0
  %v577 = vadd.f32 %v100, %v576
  %v578 = vpop.f32.mrb[0].mxu0
  %v579 = vpop.f32.mrb[0].mxu0
  %v580 = vadd.f32 %v100, %v579
  %v581 = vpop.f32.mrb[0].mxu0
  %582 = vmatprep.mubr.bf16.mxu0 0
  %583 = vmatmul.mubr.bf16.gmra.mrb[0].mxu0 %v256
  %v584 = vpop.f32.mrb[0].mxu0
  %v585 = vadd.f32 %v100, %v584
  %v586 = vpop.f32.mrb[0].mxu0
  %v587 = vpop.f32.mrb[0].mxu0
  %v588 = vadd.f32 %v100, %v587
  %v589 = vpop.f32.mrb[0].mxu0
  %590 = vmatprep.mubr.bf16.mxu0 0
  %591 = vmatmul.mubr.bf16.gmra.mrb[0].mxu0 %v257
  %v592 = vpop.f32.mrb[0].mxu0
  %v593 = vadd.f32 %v100, %v592
  %v594 = vpop.f32.mrb[0].mxu0
  %v595 = vpop.f32.mrb[0].mxu0
  %v596 = vadd.f32 %v100, %v595
  %v597 = vpop.f32.mrb[0].mxu0
  %598 = vmatprep.mubr.bf16.mxu0 0
  %599 = vmatmul.mubr.bf16.gmra.mrb[0].mxu0 %v258
  %v600 = vpop.f32.mrb[0].mxu0
  %v601 = vadd.f32 %v100, %v600
  %v602 = vpop.f32.mrb[0].mxu0
  %v603 = vpop.f32.mrb[0].mxu0
  %v604 = vadd.f32 %v100, %v603
  %v605 = vpop.f32.mrb[0].mxu0
  %606 = vmatprep.mubr.bf16.mxu0 0
  %607 = vmatmul.mubr.bf16.gmra.mrb[0].mxu0 %v259
  %v608 = vpop.f32.mrb[0].mxu0
  %v609 = vadd.f32 %v100, %v608
  %v610 = vpop.f32.mrb[0].mxu0
  %v611 = vpop.f32.mrb[0].mxu0
  %v612 = vadd.f32 %v100, %v611
  %v613 = vpop.f32.mrb[0].mxu0
  %614 = vmatprep.mubr.bf16.mxu0 0
  %615 = vmatmul.mubr.bf16.gmra.mrb[0].mxu0 %v260
  %v616 = vpop.f32.mrb[0].mxu0
  %v617 = vadd.f32 %v100, %v616
  %v618 = vpop.f32.mrb[0].mxu0
  %v619 = vpop.f32.mrb[0].mxu0
  %v620 = vadd.f32 %v100, %v619
  %v621 = vpop.f32.mrb[0].mxu0
  %622 = vmatprep.mubr.bf16.mxu0 0
  %623 = vmatmul.mubr.bf16.gmra.mrb[0].mxu0 %v261
  %v624 = vpop.f32.mrb[0].mxu0
  %v625 = vadd.f32 %v100, %v624
  %v626 = vpop.f32.mrb[0].mxu0
  %v627 = vpop.f32.mrb[0].mxu0
  %v628 = vadd.f32 %v100, %v627
  %v629 = vpop.f32.mrb[0].mxu0
  %630 = vdwg.mxu0
  %vm631 = vcmp.gt.f32.partialorder %v377, 0.0
  %vm632 = vcmp.gt.f32.partialorder %v380, 0.0
  %vm633 = vcmp.gt.f32.partialorder %v385, 0.0
  %vm634 = vcmp.gt.f32.partialorder %v388, 0.0
  %vm635 = vcmp.gt.f32.partialorder %v393, 0.0
  %vm636 = vcmp.gt.f32.partialorder %v396, 0.0
  %vm637 = vcmp.gt.f32.partialorder %v401, 0.0
  %vm638 = vcmp.gt.f32.partialorder %v404, 0.0
  %vm639 = vcmp.gt.f32.partialorder %v409, 0.0
  %vm640 = vcmp.gt.f32.partialorder %v412, 0.0
  %vm641 = vcmp.gt.f32.partialorder %v417, 0.0
  %vm642 = vcmp.gt.f32.partialorder %v420, 0.0
  %vm643 = vcmp.gt.f32.partialorder %v425, 0.0
  %vm644 = vcmp.gt.f32.partialorder %v428, 0.0
  %vm645 = vcmp.gt.f32.partialorder %v433, 0.0
  %vm646 = vcmp.gt.f32.partialorder %v436, 0.0
  %vm647 = vcmp.gt.f32.partialorder %v441, 0.0
  %vm648 = vcmp.gt.f32.partialorder %v444, 0.0
  %vm649 = vcmp.gt.f32.partialorder %v449, 0.0
  %vm650 = vcmp.gt.f32.partialorder %v452, 0.0
  %vm651 = vcmp.gt.f32.partialorder %v457, 0.0
  %vm652 = vcmp.gt.f32.partialorder %v460, 0.0
  %vm653 = vcmp.gt.f32.partialorder %v465, 0.0
  %vm654 = vcmp.gt.f32.partialorder %v468, 0.0
  %vm655 = vcmp.gt.f32.partialorder %v473, 0.0
  %vm656 = vcmp.gt.f32.partialorder %v476, 0.0
  %vm657 = vcmp.gt.f32.partialorder %v481, 0.0
  %vm658 = vcmp.gt.f32.partialorder %v484, 0.0
  %vm659 = vcmp.gt.f32.partialorder %v489, 0.0
  %vm660 = vcmp.gt.f32.partialorder %v492, 0.0
  %vm661 = vcmp.gt.f32.partialorder %v497, 0.0
  %vm662 = vcmp.gt.f32.partialorder %v500, 0.0
  %vm663 = vcmp.gt.f32.partialorder %v505, 0.0
  %vm664 = vcmp.gt.f32.partialorder %v508, 0.0
  %vm665 = vcmp.gt.f32.partialorder %v513, 0.0
  %vm666 = vcmp.gt.f32.partialorder %v516, 0.0
  %vm667 = vcmp.gt.f32.partialorder %v521, 0.0
  %vm668 = vcmp.gt.f32.partialorder %v524, 0.0
  %vm669 = vcmp.gt.f32.partialorder %v529, 0.0
  %vm670 = vcmp.gt.f32.partialorder %v532, 0.0
  %vm671 = vcmp.gt.f32.partialorder %v537, 0.0
  %vm672 = vcmp.gt.f32.partialorder %v540, 0.0
  %vm673 = vcmp.gt.f32.partialorder %v545, 0.0
  %vm674 = vcmp.gt.f32.partialorder %v548, 0.0
  %vm675 = vcmp.gt.f32.partialorder %v553, 0.0
  %vm676 = vcmp.gt.f32.partialorder %v556, 0.0
  %vm677 = vcmp.gt.f32.partialorder %v561, 0.0
  %vm678 = vcmp.gt.f32.partialorder %v564, 0.0
  %vm679 = vcmp.gt.f32.partialorder %v569, 0.0
  %vm680 = vcmp.gt.f32.partialorder %v572, 0.0
  %vm681 = vcmp.gt.f32.partialorder %v577, 0.0
  %vm682 = vcmp.gt.f32.partialorder %v580, 0.0
  %vm683 = vcmp.gt.f32.partialorder %v585, 0.0
  %vm684 = vcmp.gt.f32.partialorder %v588, 0.0
  %vm685 = vcmp.gt.f32.partialorder %v593, 0.0
  %vm686 = vcmp.gt.f32.partialorder %v596, 0.0
  %vm687 = vcmp.gt.f32.partialorder %v601, 0.0
  %vm688 = vcmp.gt.f32.partialorder %v604, 0.0
  %vm689 = vcmp.gt.f32.partialorder %v609, 0.0
  %vm690 = vcmp.gt.f32.partialorder %v612, 0.0
  %vm691 = vcmp.gt.f32.partialorder %v617, 0.0
  %vm692 = vcmp.gt.f32.partialorder %v620, 0.0
  %vm693 = vcmp.gt.f32.partialorder %v625, 0.0
  %vm694 = vcmp.gt.f32.partialorder %v628, 0.0
  %v695 = vmul.f32 %v377, 0.2
  %v696 = vmul.f32 %v380, 0.2
  %v697 = vmul.f32 %v385, 0.2
  %v698 = vmul.f32 %v388, 0.2
  %v699 = vmul.f32 %v393, 0.2
  %v700 = vmul.f32 %v396, 0.2
  %v701 = vmul.f32 %v401, 0.2
  %v702 = vmul.f32 %v404, 0.2
  %v703 = vmul.f32 %v409, 0.2
  %v704 = vmul.f32 %v412, 0.2
  %v705 = vmul.f32 %v417, 0.2
  %v706 = vmul.f32 %v420, 0.2
  %v707 = vmul.f32 %v425, 0.2
  %v708 = vmul.f32 %v428, 0.2
  %v709 = vmul.f32 %v433, 0.2
  %v710 = vmul.f32 %v436, 0.2
  %v711 = vmul.f32 %v441, 0.2
  %v712 = vmul.f32 %v444, 0.2
  %v713 = vmul.f32 %v449, 0.2
  %v714 = vmul.f32 %v452, 0.2
  %v715 = vmul.f32 %v457, 0.2
  %v716 = vmul.f32 %v460, 0.2
  %v717 = vmul.f32 %v465, 0.2
  %v718 = vmul.f32 %v468, 0.2
  %v719 = vmul.f32 %v473, 0.2
  %v720 = vmul.f32 %v476, 0.2
  %v721 = vmul.f32 %v481, 0.2
  %v722 = vmul.f32 %v484, 0.2
  %v723 = vmul.f32 %v489, 0.2
  %v724 = vmul.f32 %v492, 0.2
  %v725 = vmul.f32 %v497, 0.2
  %v726 = vmul.f32 %v500, 0.2
  %v727 = vmul.f32 %v505, 0.2
  %v728 = vmul.f32 %v508, 0.2
  %v729 = vmul.f32 %v513, 0.2
  %v730 = vmul.f32 %v516, 0.2
  %v731 = vmul.f32 %v521, 0.2
  %v732 = vmul.f32 %v524, 0.2
  %v733 = vmul.f32 %v529, 0.2
  %v734 = vmul.f32 %v532, 0.2
  %v735 = vmul.f32 %v537, 0.2
  %v736 = vmul.f32 %v540, 0.2
  %v737 = vmul.f32 %v545, 0.2
  %v738 = vmul.f32 %v548, 0.2
  %v739 = vmul.f32 %v553, 0.2
  %v740 = vmul.f32 %v556, 0.2
  %v741 = vmul.f32 %v561, 0.2
  %v742 = vmul.f32 %v564, 0.2
  %v743 = vmul.f32 %v569, 0.2
  %v744 = vmul.f32 %v572, 0.2
  %v745 = vmul.f32 %v577, 0.2
  %v746 = vmul.f32 %v580, 0.2
  %v747 = vmul.f32 %v585, 0.2
  %v748 = vmul.f32 %v588, 0.2
  %v749 = vmul.f32 %v593, 0.2
  %v750 = vmul.f32 %v596, 0.2
  %v751 = vmul.f32 %v601, 0.2
  %v752 = vmul.f32 %v604, 0.2
  %v753 = vmul.f32 %v609, 0.2
  %v754 = vmul.f32 %v612, 0.2
  %v755 = vmul.f32 %v617, 0.2
  %v756 = vmul.f32 %v620, 0.2
  %v757 = vmul.f32 %v625, 0.2
  %v758 = vmul.f32 %v628, 0.2
  %v759 = vsel %vm631, %v377, %v695
  %v760 = vsel %vm632, %v380, %v696
  %v761 = vsel %vm633, %v385, %v697
  %v762 = vsel %vm634, %v388, %v698
  %v763 = vsel %vm635, %v393, %v699
  %v764 = vsel %vm636, %v396, %v700
  %v765 = vsel %vm637, %v401, %v701
  %v766 = vsel %vm638, %v404, %v702
  %v767 = vsel %vm639, %v409, %v703
  %v768 = vsel %vm640, %v412, %v704
  %v769 = vsel %vm641, %v417, %v705
  %v770 = vsel %vm642, %v420, %v706
  %v771 = vsel %vm643, %v425, %v707
  %v772 = vsel %vm644, %v428, %v708
  %v773 = vsel %vm645, %v433, %v709
  %v774 = vsel %vm646, %v436, %v710
  %v775 = vsel %vm647, %v441, %v711
  %v776 = vsel %vm648, %v444, %v712
  %v777 = vsel %vm649, %v449, %v713
  %v778 = vsel %vm650, %v452, %v714
  %v779 = vsel %vm651, %v457, %v715
  %v780 = vsel %vm652, %v460, %v716
  %v781 = vsel %vm653, %v465, %v717
  %v782 = vsel %vm654, %v468, %v718
  %v783 = vsel %vm655, %v473, %v719
  %v784 = vsel %vm656, %v476, %v720
  %v785 = vsel %vm657, %v481, %v721
  %v786 = vsel %vm658, %v484, %v722
  %v787 = vsel %vm659, %v489, %v723
  %v788 = vsel %vm660, %v492, %v724
  %v789 = vsel %vm661, %v497, %v725
  %v790 = vsel %vm662, %v500, %v726
  %v791 = vsel %vm663, %v505, %v727
  %v792 = vsel %vm664, %v508, %v728
  %v793 = vsel %vm665, %v513, %v729
  %v794 = vsel %vm666, %v516, %v730
  %v795 = vsel %vm667, %v521, %v731
  %v796 = vsel %vm668, %v524, %v732
  %v797 = vsel %vm669, %v529, %v733
  %v798 = vsel %vm670, %v532, %v734
  %v799 = vsel %vm671, %v537, %v735
  %v800 = vsel %vm672, %v540, %v736
  %v801 = vsel %vm673, %v545, %v737
  %v802 = vsel %vm674, %v548, %v738
  %v803 = vsel %vm675, %v553, %v739
  %v804 = vsel %vm676, %v556, %v740
  %v805 = vsel %vm677, %v561, %v741
  %v806 = vsel %vm678, %v564, %v742
  %v807 = vsel %vm679, %v569, %v743
  %v808 = vsel %vm680, %v572, %v744
  %v809 = vsel %vm681, %v577, %v745
  %v810 = vsel %vm682, %v580, %v746
  %v811 = vsel %vm683, %v585, %v747
  %v812 = vsel %vm684, %v588, %v748
  %v813 = vsel %vm685, %v593, %v749
  %v814 = vsel %vm686, %v596, %v750
  %v815 = vsel %vm687, %v601, %v751
  %v816 = vsel %vm688, %v604, %v752
  %v817 = vsel %vm689, %v609, %v753
  %v818 = vsel %vm690, %v612, %v754
  %v819 = vsel %vm691, %v617, %v755
  %v820 = vsel %vm692, %v620, %v756
  %v821 = vsel %vm693, %v625, %v757
  %v822 = vsel %vm694, %v628, %v758
  %v823 = vpack.c.bf16 %v760, %v759
  %v824 = vpack.c.bf16 %v762, %v761
  %v825 = vpack.c.bf16 %v764, %v763
  %v826 = vpack.c.bf16 %v766, %v765
  %v827 = vpack.c.bf16 %v768, %v767
  %v828 = vpack.c.bf16 %v770, %v769
  %v829 = vpack.c.bf16 %v772, %v771
  %v830 = vpack.c.bf16 %v774, %v773
  %v831 = vpack.c.bf16 %v776, %v775
  %v832 = vpack.c.bf16 %v778, %v777
  %v833 = vpack.c.bf16 %v780, %v779
  %v834 = vpack.c.bf16 %v782, %v781
  %v835 = vpack.c.bf16 %v784, %v783
  %v836 = vpack.c.bf16 %v786, %v785
  %v837 = vpack.c.bf16 %v788, %v787
  %v838 = vpack.c.bf16 %v790, %v789
  %v839 = vpack.c.bf16 %v792, %v791
  %v840 = vpack.c.bf16 %v794, %v793
  %v841 = vpack.c.bf16 %v796, %v795
  %v842 = vpack.c.bf16 %v798, %v797
  %v843 = vpack.c.bf16 %v800, %v799
  %v844 = vpack.c.bf16 %v802, %v801
  %v845 = vpack.c.bf16 %v804, %v803
  %v846 = vpack.c.bf16 %v806, %v805
  %v847 = vpack.c.bf16 %v808, %v807
  %v848 = vpack.c.bf16 %v810, %v809
  %v849 = vpack.c.bf16 %v812, %v811
  %v850 = vpack.c.bf16 %v814, %v813
  %v851 = vpack.c.bf16 %v816, %v815
  %v852 = vpack.c.bf16 %v818, %v817
  %v853 = vpack.c.bf16 %v820, %v819
  %v854 = vpack.c.bf16 %v822, %v821
  %v887 = vunpack.c.l.b16 %v823
  %v888 = vunpack.c.h.b16 %v823
  %v889 = vunpack.c.l.b16 %v824
  %v890 = vunpack.c.h.b16 %v824
  %v891 = vunpack.c.l.b16 %v825
  %v892 = vunpack.c.h.b16 %v825
  %v893 = vunpack.c.l.b16 %v826
  %v894 = vunpack.c.h.b16 %v826
  %v895 = vunpack.c.l.b16 %v827
  %v896 = vunpack.c.h.b16 %v827
  %v897 = vunpack.c.l.b16 %v828
  %v898 = vunpack.c.h.b16 %v828
  %v899 = vunpack.c.l.b16 %v829
  %v900 = vunpack.c.h.b16 %v829
  %v901 = vunpack.c.l.b16 %v830
  %v902 = vunpack.c.h.b16 %v830
  %v903 = vunpack.c.l.b16 %v831
  %v904 = vunpack.c.h.b16 %v831
  %v905 = vunpack.c.l.b16 %v832
  %v906 = vunpack.c.h.b16 %v832
  %v907 = vunpack.c.l.b16 %v833
  %v908 = vunpack.c.h.b16 %v833
  %v909 = vunpack.c.l.b16 %v834
  %v910 = vunpack.c.h.b16 %v834
  %v911 = vunpack.c.l.b16 %v835
  %v912 = vunpack.c.h.b16 %v835
  %v913 = vunpack.c.l.b16 %v836
  %v914 = vunpack.c.h.b16 %v836
  %v915 = vunpack.c.l.b16 %v837
  %v916 = vunpack.c.h.b16 %v837
  %v917 = vunpack.c.l.b16 %v838
  %v918 = vunpack.c.h.b16 %v838
  %v919 = vunpack.c.l.b16 %v839
  %v920 = vunpack.c.h.b16 %v839
  %v921 = vunpack.c.l.b16 %v840
  %v922 = vunpack.c.h.b16 %v840
  %v923 = vunpack.c.l.b16 %v841
  %v924 = vunpack.c.h.b16 %v841
  %v925 = vunpack.c.l.b16 %v842
  %v926 = vunpack.c.h.b16 %v842
  %v927 = vunpack.c.l.b16 %v843
  %v928 = vunpack.c.h.b16 %v843
  %v929 = vunpack.c.l.b16 %v844
  %v930 = vunpack.c.h.b16 %v844
  %v931 = vunpack.c.l.b16 %v845
  %v932 = vunpack.c.h.b16 %v845
  %v933 = vunpack.c.l.b16 %v846
  %v934 = vunpack.c.h.b16 %v846
  %v935 = vunpack.c.l.b16 %v847
  %v936 = vunpack.c.h.b16 %v847
  %v937 = vunpack.c.l.b16 %v848
  %v938 = vunpack.c.h.b16 %v848
  %v939 = vunpack.c.l.b16 %v849
  %v940 = vunpack.c.h.b16 %v849
  %v941 = vunpack.c.l.b16 %v850
  %v942 = vunpack.c.h.b16 %v850
  %v943 = vunpack.c.l.b16 %v851
  %v944 = vunpack.c.h.b16 %v851
  %v945 = vunpack.c.l.b16 %v852
  %v946 = vunpack.c.h.b16 %v852
  %v947 = vunpack.c.l.b16 %v853
  %v948 = vunpack.c.h.b16 %v853
  %v949 = vunpack.c.l.b16 %v854
  %v950 = vunpack.c.h.b16 %v854
  %v951 = vpack.c.b16 %v887, %v887
  %v952 = vpack.c.b16 %v888, %v888
  %v953 = vpack.c.b16 %v889, %v889
  %v954 = vpack.c.b16 %v890, %v890
  %v955 = vpack.c.b16 %v891, %v891
  %v956 = vpack.c.b16 %v892, %v892
  %v957 = vpack.c.b16 %v893, %v893
  %v958 = vpack.c.b16 %v894, %v894
  %v959 = vpack.c.b16 %v895, %v895
  %v960 = vpack.c.b16 %v896, %v896
  %v961 = vpack.c.b16 %v897, %v897
  %v962 = vpack.c.b16 %v898, %v898
  %v963 = vpack.c.b16 %v899, %v899
  %v964 = vpack.c.b16 %v900, %v900
  %v965 = vpack.c.b16 %v901, %v901
  %v966 = vpack.c.b16 %v902, %v902
  %v967 = vpack.c.b16 %v903, %v903
  %v968 = vpack.c.b16 %v904, %v904
  %v969 = vpack.c.b16 %v905, %v905
  %v970 = vpack.c.b16 %v906, %v906
  %v971 = vpack.c.b16 %v907, %v907
  %v972 = vpack.c.b16 %v908, %v908
  %v973 = vpack.c.b16 %v909, %v909
  %v974 = vpack.c.b16 %v910, %v910
  %v975 = vpack.c.b16 %v911, %v911
  %v976 = vpack.c.b16 %v912, %v912
  %v977 = vpack.c.b16 %v913, %v913
  %v978 = vpack.c.b16 %v914, %v914
  %v979 = vpack.c.b16 %v915, %v915
  %v980 = vpack.c.b16 %v916, %v916
  %v981 = vpack.c.b16 %v917, %v917
  %v982 = vpack.c.b16 %v918, %v918
  %v983 = vpack.c.b16 %v919, %v919
  %v984 = vpack.c.b16 %v920, %v920
  %v985 = vpack.c.b16 %v921, %v921
  %v986 = vpack.c.b16 %v922, %v922
  %v987 = vpack.c.b16 %v923, %v923
  %v988 = vpack.c.b16 %v924, %v924
  %v989 = vpack.c.b16 %v925, %v925
  %v990 = vpack.c.b16 %v926, %v926
  %v991 = vpack.c.b16 %v927, %v927
  %v992 = vpack.c.b16 %v928, %v928
  %v993 = vpack.c.b16 %v929, %v929
  %v994 = vpack.c.b16 %v930, %v930
  %v995 = vpack.c.b16 %v931, %v931
  %v996 = vpack.c.b16 %v932, %v932
  %v997 = vpack.c.b16 %v933, %v933
  %v998 = vpack.c.b16 %v934, %v934
  %v999 = vpack.c.b16 %v935, %v935
  %v1000 = vpack.c.b16 %v936, %v936
  %v1001 = vpack.c.b16 %v937, %v937
  %v1002 = vpack.c.b16 %v938, %v938
  %v1003 = vpack.c.b16 %v939, %v939
  %v1004 = vpack.c.b16 %v940, %v940
  %v1005 = vpack.c.b16 %v941, %v941
  %v1006 = vpack.c.b16 %v942, %v942
  %v1007 = vpack.c.b16 %v943, %v943
  %v1008 = vpack.c.b16 %v944, %v944
  %v1009 = vpack.c.b16 %v945, %v945
  %v1010 = vpack.c.b16 %v946, %v946
  %v1011 = vpack.c.b16 %v947, %v947
  %v1012 = vpack.c.b16 %v948, %v948
  %v1013 = vpack.c.b16 %v949, %v949
  %v1014 = vpack.c.b16 %v950, %v950
  %1079 = vst [vmem:[%s3] sm:$0xf] %v951
  %1080 = vst [vmem:[%s3 + $0x4] sm:$0xf] %v952
  %1081 = vst [vmem:[%s3 + $0x8] sm:$0xf] %v953
  %1082 = vst [vmem:[%s3 + $0xc] sm:$0xf] %v954
  %1083 = vst [vmem:[%s3 + $0x10] sm:$0xf] %v955
  %1084 = vst [vmem:[%s3 + $0x14] sm:$0xf] %v956
  %1085 = vst [vmem:[%s3 + $0x18] sm:$0xf] %v957
  %1086 = vst [vmem:[%s3 + $0x1c] sm:$0xf] %v958
  %1087 = vst [vmem:[%s3 + $0x20] sm:$0xf] %v959
  %1088 = vst [vmem:[%s3 + $0x24] sm:$0xf] %v960
  %1089 = vst [vmem:[%s3 + $0x28] sm:$0xf] %v961
  %1090 = vst [vmem:[%s3 + $0x2c] sm:$0xf] %v962
  %1091 = vst [vmem:[%s3 + $0x30] sm:$0xf] %v963
  %1092 = vst [vmem:[%s3 + $0x34] sm:$0xf] %v964
  %1093 = vst [vmem:[%s3 + $0x38] sm:$0xf] %v965
  %1094 = vst [vmem:[%s3 + $0x3c] sm:$0xf] %v966
  %1095 = vst [vmem:[%s3 + $0x40] sm:$0xf] %v967
  %1096 = vst [vmem:[%s3 + $0x44] sm:$0xf] %v968
  %1097 = vst [vmem:[%s3 + $0x48] sm:$0xf] %v969
  %1098 = vst [vmem:[%s3 + $0x4c] sm:$0xf] %v970
  %1099 = vst [vmem:[%s3 + $0x50] sm:$0xf] %v971
  %1100 = vst [vmem:[%s3 + $0x54] sm:$0xf] %v972
  %1101 = vst [vmem:[%s3 + $0x58] sm:$0xf] %v973
  %1102 = vst [vmem:[%s3 + $0x5c] sm:$0xf] %v974
  %1103 = vst [vmem:[%s3 + $0x60] sm:$0xf] %v975
  %1104 = vst [vmem:[%s3 + $0x64] sm:$0xf] %v976
  %1105 = vst [vmem:[%s3 + $0x68] sm:$0xf] %v977
  %1106 = vst [vmem:[%s3 + $0x6c] sm:$0xf] %v978
  %1107 = vst [vmem:[%s3 + $0x70] sm:$0xf] %v979
  %1108 = vst [vmem:[%s3 + $0x74] sm:$0xf] %v980
  %1109 = vst [vmem:[%s3 + $0x78] sm:$0xf] %v981
  %1110 = vst [vmem:[%s3 + $0x7c] sm:$0xf] %v982
  %1111 = vst [vmem:[%s3 + $0x80] sm:$0xf] %v983
  %1112 = vst [vmem:[%s3 + $0x84] sm:$0xf] %v984
  %1113 = vst [vmem:[%s3 + $0x88] sm:$0xf] %v985
  %1114 = vst [vmem:[%s3 + $0x8c] sm:$0xf] %v986
  %1115 = vst [vmem:[%s3 + $0x90] sm:$0xf] %v987
  %1116 = vst [vmem:[%s3 + $0x94] sm:$0xf] %v988
  %1117 = vst [vmem:[%s3 + $0x98] sm:$0xf] %v989
  %1118 = vst [vmem:[%s3 + $0x9c] sm:$0xf] %v990
  %1119 = vst [vmem:[%s3 + $0xa0] sm:$0xf] %v991
  %1120 = vst [vmem:[%s3 + $0xa4] sm:$0xf] %v992
  %1121 = vst [vmem:[%s3 + $0xa8] sm:$0xf] %v993
  %1122 = vst [vmem:[%s3 + $0xac] sm:$0xf] %v994
  %1123 = vst [vmem:[%s3 + $0xb0] sm:$0xf] %v995
  %1124 = vst [vmem:[%s3 + $0xb4] sm:$0xf] %v996
  %1125 = vst [vmem:[%s3 + $0xb8] sm:$0xf] %v997
  %1126 = vst [vmem:[%s3 + $0xbc] sm:$0xf] %v998
  %1127 = vst [vmem:[%s3 + $0xc0] sm:$0xf] %v999
  %1128 = vst [vmem:[%s3 + $0xc4] sm:$0xf] %v1000
  %1129 = vst [vmem:[%s3 + $0xc8] sm:$0xf] %v1001
  %1130 = vst [vmem:[%s3 + $0xcc] sm:$0xf] %v1002
  %1131 = vst [vmem:[%s3 + $0xd0] sm:$0xf] %v1003
  %1132 = vst [vmem:[%s3 + $0xd4] sm:$0xf] %v1004
  %1133 = vst [vmem:[%s3 + $0xd8] sm:$0xf] %v1005
  %1134 = vst [vmem:[%s3 + $0xdc] sm:$0xf] %v1006
  %1135 = vst [vmem:[%s3 + $0xe0] sm:$0xf] %v1007
  %1136 = vst [vmem:[%s3 + $0xe4] sm:$0xf] %v1008
  %1137 = vst [vmem:[%s3 + $0xe8] sm:$0xf] %v1009
  %1138 = vst [vmem:[%s3 + $0xec] sm:$0xf] %v1010
  %1139 = vst [vmem:[%s3 + $0xf0] sm:$0xf] %v1011
  %1140 = vst [vmem:[%s3 + $0xf4] sm:$0xf] %v1012
  %1141 = vst [vmem:[%s3 + $0xf8] sm:$0xf] %v1013
  %1142 = vst [vmem:[%s3 + $0xfc] sm:$0xf] %v1014
  // Predicated region
  $region14: #{generator_forward.18} parent=0 // pred_check
    _
  $region15: #{generator_forward.18} parent=0 // pred_check_branch
    %1144 = sbr.rel (0) target = $region17
  $region16: #{generator_forward.18} parent=0 // pred_region
    _
  $region17: #{generator_forward.18} parent=0 // pred_fallthru
    _
  // Predicated region
  $region18: #{generator_forward.18} parent=0 // pred_check
    _
  $region19: #{generator_forward.18} parent=0 // pred_check_branch
    %1146 = sbr.rel (0) target = $region21
  $region20: #{generator_forward.18} parent=0 // pred_region
    _
  $region21: #{generator_forward.18} parent=0 // pred_fallthru
    _

// kernel: generator_forward.20
$region0: #{generator_forward.20}
  #allocation0 [shape = 'u32[]', space=smem, size = 0x4, offset = 0x4, fixed_abs, tag = 'smem constant byte address 0x4 - core index']
  #allocation1 [shape = 'u32[144,128]{1,0:T(1,128)}', space=vmem, size = 0x12000, scoped, tag = 'internal scratch']
  %s0 = inlined_call_operand.vmem [shape: bf16[128,128], index: 0, kind: input, shape index: {}]
  %s1 = inlined_call_operand.vmem [shape: f32[1,1,128], index: 1, kind: input, shape index: {}]
  %s2 = inlined_call_operand.vmem [shape: f32[1,1,128], index: 2, kind: input, shape index: {}]
  %s3 = inlined_call_operand.vmem [shape: f32[1,128], index: 3, kind: input, shape index: {}]
  %s4 = inlined_call_operand.vmem [shape: f32[1,128], index: 4, kind: input, shape index: {}]
  %s5 = inlined_call_operand.vmem [shape: bf16[128,128], index: 5, kind: output, shape index: {}]
  %s6 = sld [smem:[#allocation0]]
  $region30: #{generator_forward.20} parent=0
    _
  %s8 = ssub.s32 1, %s6
  %s9 = scalar_select 0, %s8, %s6
  // Predicated region
  $region2: #{generator_forward.20} parent=0 // pred_check
    _
  $region3: #{generator_forward.20} parent=0 // pred_check_branch
    %11 = sbr.rel (0) target = $region5
  $region4: #{generator_forward.20} parent=0 // pred_region
    _
  $region5: #{generator_forward.20} parent=0 // pred_fallthru
    _
  // Predicated region
  $region6: #{generator_forward.20} parent=0 // pred_check
    _
  $region7: #{generator_forward.20} parent=0 // pred_check_branch
    %13 = sbr.rel (0) target = $region9
  $region8: #{generator_forward.20} parent=0 // pred_region
    _
  $region9: #{generator_forward.20} parent=0 // pred_fallthru
    _
  // Predicated region
  $region10: #{generator_forward.20} parent=0 // pred_check
    _
  $region11: #{generator_forward.20} parent=0 // pred_check_branch
    %15 = sbr.rel (0) target = $region13
  $region12: #{generator_forward.20} parent=0 // pred_region
    _
  $region13: #{generator_forward.20} parent=0 // pred_fallthru
    _
  // Predicated region
  $region14: #{generator_forward.20} parent=0 // pred_check
    _
  $region15: #{generator_forward.20} parent=0 // pred_check_branch
    %17 = sbr.rel (0) target = $region17
  $region16: #{generator_forward.20} parent=0 // pred_region
    _
  $region17: #{generator_forward.20} parent=0 // pred_fallthru
    _
  // Predicated region
  $region18: #{generator_forward.20} parent=0 // pred_check
    _
  $region19: #{generator_forward.20} parent=0 // pred_check_branch
    %19 = sbr.rel (0) target = $region21
  $region20: #{generator_forward.20} parent=0 // pred_region
    _
  $region21: #{generator_forward.20} parent=0 // pred_fallthru
    _
  %v20 = vld [vmem:[%s1] sm:$0x1]
  %v21 = vadd.f32 %v20, 0.0
  %v22 = vmul.f32 %v21, 0.0078125
  %v23 = vld [vmem:[%s2] sm:$0x1]
  %v24 = vadd.f32 %v23, 0.0
  %v25 = vmul.f32 %v24, 0.0078125
  %v26 = vmul.f32 %v22, %v22
  %v27 = vsub.f32 %v25, %v26
  %v28 = vmax.f32 %v27, 0.0
  %v29 = vld [vmem:[%s3] sm:$0x1]
  %v30 = vadd.f32 %v28, 1e-05
  %v31 = vrsqrt.pop %v30
  %v32 = vmul.f32 %v29, %v31
  %v33 = vld [vmem:[%s4] sm:$0x1]
  %v34 = vmul.f32 %v22, %v32
  %v35 = vsub.f32 %v33, %v34
  %v36 = vld [vmem:[%s0] sm:$0xf]
  %v37 = vld [vmem:[%s0 + $0x4] sm:$0xf]
  %v38 = vld [vmem:[%s0 + $0x8] sm:$0xf]
  %v39 = vld [vmem:[%s0 + $0xc] sm:$0xf]
  %v40 = vld [vmem:[%s0 + $0x10] sm:$0xf]
  %v41 = vld [vmem:[%s0 + $0x14] sm:$0xf]
  %v42 = vld [vmem:[%s0 + $0x18] sm:$0xf]
  %v43 = vld [vmem:[%s0 + $0x1c] sm:$0xf]
  %v44 = vld [vmem:[%s0 + $0x20] sm:$0xf]
  %v45 = vld [vmem:[%s0 + $0x24] sm:$0xf]
  %v46 = vld [vmem:[%s0 + $0x28] sm:$0xf]
  %v47 = vld [vmem:[%s0 + $0x2c] sm:$0xf]
  %v48 = vld [vmem:[%s0 + $0x30] sm:$0xf]
  %v49 = vld [vmem:[%s0 + $0x34] sm:$0xf]
  %v50 = vld [vmem:[%s0 + $0x38] sm:$0xf]
  %v51 = vld [vmem:[%s0 + $0x3c] sm:$0xf]
  %v52 = vunpack.c.l.bf16 %v36
  %v53 = vunpack.c.l.bf16 %v37
  %v54 = vunpack.c.l.bf16 %v38
  %v55 = vunpack.c.l.bf16 %v39
  %v56 = vunpack.c.l.bf16 %v40
  %v57 = vunpack.c.l.bf16 %v41
  %v58 = vunpack.c.l.bf16 %v42
  %v59 = vunpack.c.l.bf16 %v43
  %v60 = vunpack.c.l.bf16 %v44
  %v61 = vunpack.c.l.bf16 %v45
  %v62 = vunpack.c.l.bf16 %v46
  %v63 = vunpack.c.l.bf16 %v47
  %v64 = vunpack.c.l.bf16 %v48
  %v65 = vunpack.c.l.bf16 %v49
  %v66 = vunpack.c.l.bf16 %v50
  %v67 = vunpack.c.l.bf16 %v51
  %v69 = vlaneseq
  %v70 = vshrl.u32 %v69, 7
  %v71 = vsub.s32 0, %v70
  %v72 = vrot.slane %v32, %v71
  %v74 = vmul.f32 %v52, %v72
  %v75 = vmul.f32 %v53, %v72
  %v76 = vmul.f32 %v54, %v72
  %v77 = vmul.f32 %v55, %v72
  %v78 = vmul.f32 %v56, %v72
  %v79 = vmul.f32 %v57, %v72
  %v80 = vmul.f32 %v58, %v72
  %v81 = vmul.f32 %v59, %v72
  %v82 = vmul.f32 %v60, %v72
  %v83 = vmul.f32 %v61, %v72
  %v84 = vmul.f32 %v62, %v72
  %v85 = vmul.f32 %v63, %v72
  %v86 = vmul.f32 %v64, %v72
  %v87 = vmul.f32 %v65, %v72
  %v88 = vmul.f32 %v66, %v72
  %v89 = vmul.f32 %v67, %v72
  %v91 = vlaneseq
  %v92 = vshrl.u32 %v91, 7
  %v93 = vsub.s32 0, %v92
  %v94 = vrot.slane %v35, %v93
  %v96 = vadd.f32 %v74, %v94
  %v97 = vadd.f32 %v75, %v94
  %v98 = vadd.f32 %v76, %v94
  %v99 = vadd.f32 %v77, %v94
  %v100 = vadd.f32 %v78, %v94
  %v101 = vadd.f32 %v79, %v94
  %v102 = vadd.f32 %v80, %v94
  %v103 = vadd.f32 %v81, %v94
  %v104 = vadd.f32 %v82, %v94
  %v105 = vadd.f32 %v83, %v94
  %v106 = vadd.f32 %v84, %v94
  %v107 = vadd.f32 %v85, %v94
  %v108 = vadd.f32 %v86, %v94
  %v109 = vadd.f32 %v87, %v94
  %v110 = vadd.f32 %v88, %v94
  %v111 = vadd.f32 %v89, %v94
  %vm112 = vcmp.gt.f32.partialorder %v96, 0.0
  %vm113 = vcmp.gt.f32.partialorder %v97, 0.0
  %vm114 = vcmp.gt.f32.partialorder %v98, 0.0
  %vm115 = vcmp.gt.f32.partialorder %v99, 0.0
  %vm116 = vcmp.gt.f32.partialorder %v100, 0.0
  %vm117 = vcmp.gt.f32.partialorder %v101, 0.0
  %vm118 = vcmp.gt.f32.partialorder %v102, 0.0
  %vm119 = vcmp.gt.f32.partialorder %v103, 0.0
  %vm120 = vcmp.gt.f32.partialorder %v104, 0.0
  %vm121 = vcmp.gt.f32.partialorder %v105, 0.0
  %vm122 = vcmp.gt.f32.partialorder %v106, 0.0
  %vm123 = vcmp.gt.f32.partialorder %v107, 0.0
  %vm124 = vcmp.gt.f32.partialorder %v108, 0.0
  %vm125 = vcmp.gt.f32.partialorder %v109, 0.0
  %vm126 = vcmp.gt.f32.partialorder %v110, 0.0
  %vm127 = vcmp.gt.f32.partialorder %v111, 0.0
  %v128 = vmul.f32 %v96, 0.2
  %v129 = vmul.f32 %v97, 0.2
  %v130 = vmul.f32 %v98, 0.2
  %v131 = vmul.f32 %v99, 0.2
  %v132 = vmul.f32 %v100, 0.2
  %v133 = vmul.f32 %v101, 0.2
  %v134 = vmul.f32 %v102, 0.2
  %v135 = vmul.f32 %v103, 0.2
  %v136 = vmul.f32 %v104, 0.2
  %v137 = vmul.f32 %v105, 0.2
  %v138 = vmul.f32 %v106, 0.2
  %v139 = vmul.f32 %v107, 0.2
  %v140 = vmul.f32 %v108, 0.2
  %v141 = vmul.f32 %v109, 0.2
  %v142 = vmul.f32 %v110, 0.2
  %v143 = vmul.f32 %v111, 0.2
  %v144 = vsel %vm112, %v96, %v128
  %v145 = vsel %vm113, %v97, %v129
  %v146 = vsel %vm114, %v98, %v130
  %v147 = vsel %vm115, %v99, %v131
  %v148 = vsel %vm116, %v100, %v132
  %v149 = vsel %vm117, %v101, %v133
  %v150 = vsel %vm118, %v102, %v134
  %v151 = vsel %vm119, %v103, %v135
  %v152 = vsel %vm120, %v104, %v136
  %v153 = vsel %vm121, %v105, %v137
  %v154 = vsel %vm122, %v106, %v138
  %v155 = vsel %vm123, %v107, %v139
  %v156 = vsel %vm124, %v108, %v140
  %v157 = vsel %vm125, %v109, %v141
  %v158 = vsel %vm126, %v110, %v142
  %v159 = vsel %vm127, %v111, %v143
  %v160 = vpack.c.bf16 %v145, %v144
  %v161 = vpack.c.bf16 %v147, %v146
  %v162 = vpack.c.bf16 %v149, %v148
  %v163 = vpack.c.bf16 %v151, %v150
  %v164 = vpack.c.bf16 %v153, %v152
  %v165 = vpack.c.bf16 %v155, %v154
  %v166 = vpack.c.bf16 %v157, %v156
  %v167 = vpack.c.bf16 %v159, %v158
  %v176 = vunpack.c.l.b16 %v160
  %v177 = vunpack.c.h.b16 %v160
  %v178 = vunpack.c.l.b16 %v161
  %v179 = vunpack.c.h.b16 %v161
  %v180 = vunpack.c.l.b16 %v162
  %v181 = vunpack.c.h.b16 %v162
  %v182 = vunpack.c.l.b16 %v163
  %v183 = vunpack.c.h.b16 %v163
  %v184 = vunpack.c.l.b16 %v164
  %v185 = vunpack.c.h.b16 %v164
  %v186 = vunpack.c.l.b16 %v165
  %v187 = vunpack.c.h.b16 %v165
  %v188 = vunpack.c.l.b16 %v166
  %v189 = vunpack.c.h.b16 %v166
  %v190 = vunpack.c.l.b16 %v167
  %v191 = vunpack.c.h.b16 %v167
  %v192 = vpack.c.b16 %v176, %v176
  %v193 = vpack.c.b16 %v177, %v177
  %v194 = vpack.c.b16 %v178, %v178
  %v195 = vpack.c.b16 %v179, %v179
  %v196 = vpack.c.b16 %v180, %v180
  %v197 = vpack.c.b16 %v181, %v181
  %v198 = vpack.c.b16 %v182, %v182
  %v199 = vpack.c.b16 %v183, %v183
  %v200 = vpack.c.b16 %v184, %v184
  %v201 = vpack.c.b16 %v185, %v185
  %v202 = vpack.c.b16 %v186, %v186
  %v203 = vpack.c.b16 %v187, %v187
  %v204 = vpack.c.b16 %v188, %v188
  %v205 = vpack.c.b16 %v189, %v189
  %v206 = vpack.c.b16 %v190, %v190
  %v207 = vpack.c.b16 %v191, %v191
  %224 = vst [vmem:[%s5] sm:$0xf] %v192
  %225 = vst [vmem:[%s5 + $0x4] sm:$0xf] %v193
  %226 = vst [vmem:[%s5 + $0x8] sm:$0xf] %v194
  %227 = vst [vmem:[%s5 + $0xc] sm:$0xf] %v195
  %228 = vst [vmem:[%s5 + $0x10] sm:$0xf] %v196
  %229 = vst [vmem:[%s5 + $0x14] sm:$0xf] %v197
  %230 = vst [vmem:[%s5 + $0x18] sm:$0xf] %v198
  %231 = vst [vmem:[%s5 + $0x1c] sm:$0xf] %v199
  %232 = vst [vmem:[%s5 + $0x20] sm:$0xf] %v200
  %233 = vst [vmem:[%s5 + $0x24] sm:$0xf] %v201
  %234 = vst [vmem:[%s5 + $0x28] sm:$0xf] %v202
  %235 = vst [vmem:[%s5 + $0x2c] sm:$0xf] %v203
  %236 = vst [vmem:[%s5 + $0x30] sm:$0xf] %v204
  %237 = vst [vmem:[%s5 + $0x34] sm:$0xf] %v205
  %238 = vst [vmem:[%s5 + $0x38] sm:$0xf] %v206
  %239 = vst [vmem:[%s5 + $0x3c] sm:$0xf] %v207
  // Predicated region
  $region22: #{generator_forward.20} parent=0 // pred_check
    _
  $region23: #{generator_forward.20} parent=0 // pred_check_branch
    %241 = sbr.rel (0) target = $region25
  $region24: #{generator_forward.20} parent=0 // pred_region
    _
  $region25: #{generator_forward.20} parent=0 // pred_fallthru
    _
  // Predicated region
  $region26: #{generator_forward.20} parent=0 // pred_check
    _
  $region27: #{generator_forward.20} parent=0 // pred_check_branch
    %243 = sbr.rel (0) target = $region29
  $region28: #{generator_forward.20} parent=0 // pred_region
    _
  $region29: #{generator_forward.20} parent=0 // pred_fallthru
    _

// kernel: generator_forward.19
$region0: #{generator_forward.19}
  #allocation0 [shape = 'u32[]', space=smem, size = 0x4, offset = 0x4, fixed_abs, tag = 'smem constant byte address 0x4 - core index']
  #allocation1 [shape = 'u32[144,128]{1,0:T(1,128)}', space=vmem, size = 0x12000, scoped, tag = 'internal scratch']
  %s0 = inlined_call_operand.vmem [shape: bf16[1,128,1152], index: 0, kind: input, shape index: {}]
  %s1 = inlined_call_operand.vmem [shape: bf16[1,1152,128], index: 1, kind: input, shape index: {}]
  %s2 = inlined_call_operand.vmem [shape: bf16[1,128,128], index: 2, kind: output, shape index: {0}]
  %s3 = inlined_call_operand.vmem [shape: f32[1,1,128], index: 3, kind: output, shape index: {1}]
  %s4 = inlined_call_operand.vmem [shape: f32[1,1,128], index: 4, kind: output, shape index: {2}]
  %5 = xla_tuple %s2, %s3, %s4
  %s6 = sld [smem:[#allocation0]]
  $region38: #{generator_forward.19} parent=0
    _
  %s8 = ssub.s32 1, %s6
  %s9 = scalar_select 0, %s8, %s6
  // Predicated region
  $region2: #{generator_forward.19} parent=0 // pred_check
    _
  $region3: #{generator_forward.19} parent=0 // pred_check_branch
    %11 = sbr.rel (0) target = $region5
  $region4: #{generator_forward.19} parent=0 // pred_region
    %s12 = sadd.s32 0, 0
    %s13 = smul.u32 16, %s12
    %p14 = scmp.lt.s32.totalorder %s13, 15
    %s15 = scalar_select %p14, %s13, 15
    %s16 = smul.addr %s15, 9
    %s17 = smul.addr %s16, 4
    %s18 = scalar_lea.vmem %s0, %s17
    %s19 = sadd.s32 0, 0
    %s20 = smul.u32 16, %s19
  $region5: #{generator_forward.19} parent=0 // pred_fallthru
    _
  // Predicated region
  $region6: #{generator_forward.19} parent=0 // pred_check
    _
  $region7: #{generator_forward.19} parent=0 // pred_check_branch
    %22 = sbr.rel (0) target = $region9
  $region8: #{generator_forward.19} parent=0 // pred_region
    _
  $region9: #{generator_forward.19} parent=0 // pred_fallthru
    _
  %s23 = sadd.s32 0, 0
  %s24 = smul.u32 16, %s23
  %p25 = scmp.lt.s32.totalorder %s24, 15
  %s26 = scalar_select %p25, %s24, 15
  %s27 = smul.addr %s26, 9
  %s28 = smul.addr %s27, 4
  %s29 = scalar_lea.vmem %s0, %s28
  %s30 = sadd.s32 0, 0
  %s31 = smul.u32 16, %s30
  %p32 = scmp.lt.s32.totalorder %s31, 15
  %s33 = scalar_select %p32, %s31, 15
  %s34 = smul.addr %s33, 4
  %s35 = scalar_lea.vmem %s2, %s34
  %s36 = sadd.s32 0, 0
  %p37 = scmp.lt.s32.totalorder %s36, 0
  %s38 = scalar_select %p37, %s36, 0
  %s39 = scalar_lea.vmem %s3, %s38
  %s40 = sadd.s32 0, 0
  %p41 = scmp.lt.s32.totalorder %s40, 0
  %s42 = scalar_select %p41, %s40, 0
  %s43 = scalar_lea.vmem %s4, %s42
  %s44 = sadd.s32 0, 0
  %s45 = smul.u32 16, %s44
  %p46 = scmp.lt.s32.totalorder %s45, 15
  %s47 = scalar_select %p46, %s45, 15
  %s48 = smul.addr %s47, 9
  %s49 = smul.addr %s48, 4
  %s50 = scalar_lea.vmem %s0, %s49
  %s51 = sadd.s32 0, 0
  %s52 = smul.u32 16, %s51
  %s53 = sadd.s32 0, 0
  %s54 = smul.u32 16, %s53
  %p55 = scmp.lt.s32.totalorder %s54, 15
  %s56 = scalar_select %p55, %s54, 15
  %s57 = smul.addr %s56, 4
  %s58 = scalar_lea.vmem %s2, %s57
  %s59 = sadd.s32 0, 0
  %s60 = smul.u32 16, %s59
  %s61 = sadd.s32 0, 0
  %p62 = scmp.lt.s32.totalorder %s61, 0
  %s63 = scalar_select %p62, %s61, 0
  %s64 = scalar_lea.vmem %s3, %s63
  %s65 = sadd.s32 0, 0
  %s66 = sadd.s32 0, 0
  %p67 = scmp.lt.s32.totalorder %s66, 0
  %s68 = scalar_select %p67, %s66, 0
  %s69 = scalar_lea.vmem %s4, %s68
  %s70 = sadd.s32 0, 0
  %p72 = scmp.eq.s32.totalorder 0, 0
  // Predicated region
  $region10: #{generator_forward.19} parent=0 // pred_check
    %p73 = pneg %p72
  $region11: #{generator_forward.19} parent=0 // pred_check_branch
    %75 = sbr.rel (%p73) target = $region13
  $region12: #{generator_forward.19} parent=0 // pred_region
    %76 = vst [vmem:[%s64] sm:$0x1] 0.0
    %77 = vst [vmem:[%s69] sm:$0x1] 0.0
  $region13: #{generator_forward.19} parent=0 // pred_fallthru
    _
  %v78 = vld [vmem:[%s50] sm:$0xff]
  %v79 = vld [vmem:[%s50 + $0x8] sm:$0xff]
  %v80 = vld [vmem:[%s50 + $0x10] sm:$0xff]
  %v81 = vld [vmem:[%s50 + $0x18] sm:$0xff]
  %v82 = vld [vmem:[%s50 + $0x20] sm:$0xf]
  %v83 = vld [vmem:[%s50 + $0x24] sm:$0xff]
  %v84 = vld [vmem:[%s50 + $0x2c] sm:$0xff]
  %v85 = vld [vmem:[%s50 + $0x34] sm:$0xff]
  %v86 = vld [vmem:[%s50 + $0x3c] sm:$0xff]
  %v87 = vld [vmem:[%s50 + $0x44] sm:$0xf]
  %v88 = vld [vmem:[%s50 + $0x48] sm:$0xff]
  %v89 = vld [vmem:[%s50 + $0x50] sm:$0xff]
  %v90 = vld [vmem:[%s50 + $0x58] sm:$0xff]
  %v91 = vld [vmem:[%s50 + $0x60] sm:$0xff]
  %v92 = vld [vmem:[%s50 + $0x68] sm:$0xf]
  %v93 = vld [vmem:[%s50 + $0x6c] sm:$0xff]
  %v94 = vld [vmem:[%s50 + $0x74] sm:$0xff]
  %v95 = vld [vmem:[%s50 + $0x7c] sm:$0xff]
  %v96 = vld [vmem:[%s50 + $0x84] sm:$0xff]
  %v97 = vld [vmem:[%s50 + $0x8c] sm:$0xf]
  %v98 = vld [vmem:[%s50 + $0x90] sm:$0xff]
  %v99 = vld [vmem:[%s50 + $0x98] sm:$0xff]
  %v100 = vld [vmem:[%s50 + $0xa0] sm:$0xff]
  %v101 = vld [vmem:[%s50 + $0xa8] sm:$0xff]
  %v102 = vld [vmem:[%s50 + $0xb0] sm:$0xf]
  %v103 = vld [vmem:[%s50 + $0xb4] sm:$0xff]
  %v104 = vld [vmem:[%s50 + $0xbc] sm:$0xff]
  %v105 = vld [vmem:[%s50 + $0xc4] sm:$0xff]
  %v106 = vld [vmem:[%s50 + $0xcc] sm:$0xff]
  %v107 = vld [vmem:[%s50 + $0xd4] sm:$0xf]
  %v108 = vld [vmem:[%s50 + $0xd8] sm:$0xff]
  %v109 = vld [vmem:[%s50 + $0xe0] sm:$0xff]
  %v110 = vld [vmem:[%s50 + $0xe8] sm:$0xff]
  %v111 = vld [vmem:[%s50 + $0xf0] sm:$0xff]
  %v112 = vld [vmem:[%s50 + $0xf8] sm:$0xf]
  %v113 = vld [vmem:[%s50 + $0xfc] sm:$0xff]
  %v114 = vld [vmem:[%s50 + $0x104] sm:$0xff]
  %v115 = vld [vmem:[%s50 + $0x10c] sm:$0xff]
  %v116 = vld [vmem:[%s50 + $0x114] sm:$0xff]
  %v117 = vld [vmem:[%s50 + $0x11c] sm:$0xf]
  %v118 = vld [vmem:[%s50 + $0x120] sm:$0xff]
  %v119 = vld [vmem:[%s50 + $0x128] sm:$0xff]
  %v120 = vld [vmem:[%s50 + $0x130] sm:$0xff]
  %v121 = vld [vmem:[%s50 + $0x138] sm:$0xff]
  %v122 = vld [vmem:[%s50 + $0x140] sm:$0xf]
  %v123 = vld [vmem:[%s50 + $0x144] sm:$0xff]
  %v124 = vld [vmem:[%s50 + $0x14c] sm:$0xff]
  %v125 = vld [vmem:[%s50 + $0x154] sm:$0xff]
  %v126 = vld [vmem:[%s50 + $0x15c] sm:$0xff]
  %v127 = vld [vmem:[%s50 + $0x164] sm:$0xf]
  %v128 = vld [vmem:[%s50 + $0x168] sm:$0xff]
  %v129 = vld [vmem:[%s50 + $0x170] sm:$0xff]
  %v130 = vld [vmem:[%s50 + $0x178] sm:$0xff]
  %v131 = vld [vmem:[%s50 + $0x180] sm:$0xff]
  %v132 = vld [vmem:[%s50 + $0x188] sm:$0xf]
  %v133 = vld [vmem:[%s50 + $0x18c] sm:$0xff]
  %v134 = vld [vmem:[%s50 + $0x194] sm:$0xff]
  %v135 = vld [vmem:[%s50 + $0x19c] sm:$0xff]
  %v136 = vld [vmem:[%s50 + $0x1a4] sm:$0xff]
  %v137 = vld [vmem:[%s50 + $0x1ac] sm:$0xf]
  %v138 = vld [vmem:[%s50 + $0x1b0] sm:$0xff]
  %v139 = vld [vmem:[%s50 + $0x1b8] sm:$0xff]
  %v140 = vld [vmem:[%s50 + $0x1c0] sm:$0xff]
  %v141 = vld [vmem:[%s50 + $0x1c8] sm:$0xff]
  %v142 = vld [vmem:[%s50 + $0x1d0] sm:$0xf]
  %v143 = vld [vmem:[%s50 + $0x1d4] sm:$0xff]
  %v144 = vld [vmem:[%s50 + $0x1dc] sm:$0xff]
  %v145 = vld [vmem:[%s50 + $0x1e4] sm:$0xff]
  %v146 = vld [vmem:[%s50 + $0x1ec] sm:$0xff]
  %v147 = vld [vmem:[%s50 + $0x1f4] sm:$0xf]
  %v148 = vld [vmem:[%s50 + $0x1f8] sm:$0xff]
  %v149 = vld [vmem:[%s50 + $0x200] sm:$0xff]
  %v150 = vld [vmem:[%s50 + $0x208] sm:$0xff]
  %v151 = vld [vmem:[%s50 + $0x210] sm:$0xff]
  %v152 = vld [vmem:[%s50 + $0x218] sm:$0xf]
  %v153 = vld [vmem:[%s50 + $0x21c] sm:$0xff]
  %v154 = vld [vmem:[%s50 + $0x224] sm:$0xff]
  %v155 = vld [vmem:[%s50 + $0x22c] sm:$0xff]
  %v156 = vld [vmem:[%s50 + $0x234] sm:$0xff]
  %v157 = vld [vmem:[%s50 + $0x23c] sm:$0xf]
  %v158 = vld [vmem:[%s1] sm:$0xf]
  %v159 = vld [vmem:[%s1 + $0x4] sm:$0xf]
  %v160 = vld [vmem:[%s1 + $0x8] sm:$0xf]
  %v161 = vld [vmem:[%s1 + $0xc] sm:$0xf]
  %v162 = vld [vmem:[%s1 + $0x10] sm:$0xf]
  %v163 = vld [vmem:[%s1 + $0x14] sm:$0xf]
  %v164 = vld [vmem:[%s1 + $0x18] sm:$0xf]
  %v165 = vld [vmem:[%s1 + $0x1c] sm:$0xf]
  %v166 = vld [vmem:[%s1 + $0x20] sm:$0xf]
  %v167 = vld [vmem:[%s1 + $0x24] sm:$0xf]
  %v168 = vld [vmem:[%s1 + $0x28] sm:$0xf]
  %v169 = vld [vmem:[%s1 + $0x2c] sm:$0xf]
  %v170 = vld [vmem:[%s1 + $0x30] sm:$0xf]
  %v171 = vld [vmem:[%s1 + $0x34] sm:$0xf]
  %v172 = vld [vmem:[%s1 + $0x38] sm:$0xf]
  %v173 = vld [vmem:[%s1 + $0x3c] sm:$0xf]
  %v174 = vld [vmem:[%s1 + $0x40] sm:$0xf]
  %v175 = vld [vmem:[%s1 + $0x44] sm:$0xf]
  %v176 = vld [vmem:[%s1 + $0x48] sm:$0xf]
  %v177 = vld [vmem:[%s1 + $0x4c] sm:$0xf]
  %v178 = vld [vmem:[%s1 + $0x50] sm:$0xf]
  %v179 = vld [vmem:[%s1 + $0x54] sm:$0xf]
  %v180 = vld [vmem:[%s1 + $0x58] sm:$0xf]
  %v181 = vld [vmem:[%s1 + $0x5c] sm:$0xf]
  %v182 = vld [vmem:[%s1 + $0x60] sm:$0xf]
  %v183 = vld [vmem:[%s1 + $0x64] sm:$0xf]
  %v184 = vld [vmem:[%s1 + $0x68] sm:$0xf]
  %v185 = vld [vmem:[%s1 + $0x6c] sm:$0xf]
  %v186 = vld [vmem:[%s1 + $0x70] sm:$0xf]
  %v187 = vld [vmem:[%s1 + $0x74] sm:$0xf]
  %v188 = vld [vmem:[%s1 + $0x78] sm:$0xf]
  %v189 = vld [vmem:[%s1 + $0x7c] sm:$0xf]
  %v190 = vld [vmem:[%s1 + $0x80] sm:$0xf]
  %v191 = vld [vmem:[%s1 + $0x84] sm:$0xf]
  %v192 = vld [vmem:[%s1 + $0x88] sm:$0xf]
  %v193 = vld [vmem:[%s1 + $0x8c] sm:$0xf]
  %v194 = vld [vmem:[%s1 + $0x90] sm:$0xf]
  %v195 = vld [vmem:[%s1 + $0x94] sm:$0xf]
  %v196 = vld [vmem:[%s1 + $0x98] sm:$0xf]
  %v197 = vld [vmem:[%s1 + $0x9c] sm:$0xf]
  %v198 = vld [vmem:[%s1 + $0xa0] sm:$0xf]
  %v199 = vld [vmem:[%s1 + $0xa4] sm:$0xf]
  %v200 = vld [vmem:[%s1 + $0xa8] sm:$0xf]
  %v201 = vld [vmem:[%s1 + $0xac] sm:$0xf]
  %v202 = vld [vmem:[%s1 + $0xb0] sm:$0xf]
  %v203 = vld [vmem:[%s1 + $0xb4] sm:$0xf]
  %v204 = vld [vmem:[%s1 + $0xb8] sm:$0xf]
  %v205 = vld [vmem:[%s1 + $0xbc] sm:$0xf]
  %v206 = vld [vmem:[%s1 + $0xc0] sm:$0xf]
  %v207 = vld [vmem:[%s1 + $0xc4] sm:$0xf]
  %v208 = vld [vmem:[%s1 + $0xc8] sm:$0xf]
  %v209 = vld [vmem:[%s1 + $0xcc] sm:$0xf]
  %v210 = vld [vmem:[%s1 + $0xd0] sm:$0xf]
  %v211 = vld [vmem:[%s1 + $0xd4] sm:$0xf]
  %v212 = vld [vmem:[%s1 + $0xd8] sm:$0xf]
  %v213 = vld [vmem:[%s1 + $0xdc] sm:$0xf]
  %v214 = vld [vmem:[%s1 + $0xe0] sm:$0xf]
  %v215 = vld [vmem:[%s1 + $0xe4] sm:$0xf]
  %v216 = vld [vmem:[%s1 + $0xe8] sm:$0xf]
  %v217 = vld [vmem:[%s1 + $0xec] sm:$0xf]
  %v218 = vld [vmem:[%s1 + $0xf0] sm:$0xf]
  %v219 = vld [vmem:[%s1 + $0xf4] sm:$0xf]
  %v220 = vld [vmem:[%s1 + $0xf8] sm:$0xf]
  %v221 = vld [vmem:[%s1 + $0xfc] sm:$0xf]
  %v222 = vld [vmem:[%s1 + $0x100] sm:$0xf]
  %v223 = vld [vmem:[%s1 + $0x104] sm:$0xf]
  %v224 = vld [vmem:[%s1 + $0x108] sm:$0xf]
  %v225 = vld [vmem:[%s1 + $0x10c] sm:$0xf]
  %v226 = vld [vmem:[%s1 + $0x110] sm:$0xf]
  %v227 = vld [vmem:[%s1 + $0x114] sm:$0xf]
  %v228 = vld [vmem:[%s1 + $0x118] sm:$0xf]
  %v229 = vld [vmem:[%s1 + $0x11c] sm:$0xf]
  %v230 = vld [vmem:[%s1 + $0x120] sm:$0xf]
  %v231 = vld [vmem:[%s1 + $0x124] sm:$0xf]
  %v232 = vld [vmem:[%s1 + $0x128] sm:$0xf]
  %v233 = vld [vmem:[%s1 + $0x12c] sm:$0xf]
  %v234 = vld [vmem:[%s1 + $0x130] sm:$0xf]
  %v235 = vld [vmem:[%s1 + $0x134] sm:$0xf]
  %v236 = vld [vmem:[%s1 + $0x138] sm:$0xf]
  %v237 = vld [vmem:[%s1 + $0x13c] sm:$0xf]
  %v238 = vld [vmem:[%s1 + $0x140] sm:$0xf]
  %v239 = vld [vmem:[%s1 + $0x144] sm:$0xf]
  %v240 = vld [vmem:[%s1 + $0x148] sm:$0xf]
  %v241 = vld [vmem:[%s1 + $0x14c] sm:$0xf]
  %v242 = vld [vmem:[%s1 + $0x150] sm:$0xf]
  %v243 = vld [vmem:[%s1 + $0x154] sm:$0xf]
  %v244 = vld [vmem:[%s1 + $0x158] sm:$0xf]
  %v245 = vld [vmem:[%s1 + $0x15c] sm:$0xf]
  %v246 = vld [vmem:[%s1 + $0x160] sm:$0xf]
  %v247 = vld [vmem:[%s1 + $0x164] sm:$0xf]
  %v248 = vld [vmem:[%s1 + $0x168] sm:$0xf]
  %v249 = vld [vmem:[%s1 + $0x16c] sm:$0xf]
  %v250 = vld [vmem:[%s1 + $0x170] sm:$0xf]
  %v251 = vld [vmem:[%s1 + $0x174] sm:$0xf]
  %v252 = vld [vmem:[%s1 + $0x178] sm:$0xf]
  %v253 = vld [vmem:[%s1 + $0x17c] sm:$0xf]
  %v254 = vld [vmem:[%s1 + $0x180] sm:$0xf]
  %v255 = vld [vmem:[%s1 + $0x184] sm:$0xf]
  %v256 = vld [vmem:[%s1 + $0x188] sm:$0xf]
  %v257 = vld [vmem:[%s1 + $0x18c] sm:$0xf]
  %v258 = vld [vmem:[%s1 + $0x190] sm:$0xf]
  %v259 = vld [vmem:[%s1 + $0x194] sm:$0xf]
  %v260 = vld [vmem:[%s1 + $0x198] sm:$0xf]
  %v261 = vld [vmem:[%s1 + $0x19c] sm:$0xf]
  %v262 = vld [vmem:[%s1 + $0x1a0] sm:$0xf]
  %v263 = vld [vmem:[%s1 + $0x1a4] sm:$0xf]
  %v264 = vld [vmem:[%s1 + $0x1a8] sm:$0xf]
  %v265 = vld [vmem:[%s1 + $0x1ac] sm:$0xf]
  %v266 = vld [vmem:[%s1 + $0x1b0] sm:$0xf]
  %v267 = vld [vmem:[%s1 + $0x1b4] sm:$0xf]
  %v268 = vld [vmem:[%s1 + $0x1b8] sm:$0xf]
  %v269 = vld [vmem:[%s1 + $0x1bc] sm:$0xf]
  %v270 = vld [vmem:[%s1 + $0x1c0] sm:$0xf]
  %v271 = vld [vmem:[%s1 + $0x1c4] sm:$0xf]
  %v272 = vld [vmem:[%s1 + $0x1c8] sm:$0xf]
  %v273 = vld [vmem:[%s1 + $0x1cc] sm:$0xf]
  %v274 = vld [vmem:[%s1 + $0x1d0] sm:$0xf]
  %v275 = vld [vmem:[%s1 + $0x1d4] sm:$0xf]
  %v276 = vld [vmem:[%s1 + $0x1d8] sm:$0xf]
  %v277 = vld [vmem:[%s1 + $0x1dc] sm:$0xf]
  %v278 = vld [vmem:[%s1 + $0x1e0] sm:$0xf]
  %v279 = vld [vmem:[%s1 + $0x1e4] sm:$0xf]
  %v280 = vld [vmem:[%s1 + $0x1e8] sm:$0xf]
  %v281 = vld [vmem:[%s1 + $0x1ec] sm:$0xf]
  %v282 = vld [vmem:[%s1 + $0x1f0] sm:$0xf]
  %v283 = vld [vmem:[%s1 + $0x1f4] sm:$0xf]
  %v284 = vld [vmem:[%s1 + $0x1f8] sm:$0xf]
  %v285 = vld [vmem:[%s1 + $0x1fc] sm:$0xf]
  %v286 = vld [vmem:[%s1 + $0x200] sm:$0xf]
  %v287 = vld [vmem:[%s1 + $0x204] sm:$0xf]
  %v288 = vld [vmem:[%s1 + $0x208] sm:$0xf]
  %v289 = vld [vmem:[%s1 + $0x20c] sm:$0xf]
  %v290 = vld [vmem:[%s1 + $0x210] sm:$0xf]
  %v291 = vld [vmem:[%s1 + $0x214] sm:$0xf]
  %v292 = vld [vmem:[%s1 + $0x218] sm:$0xf]
  %v293 = vld [vmem:[%s1 + $0x21c] sm:$0xf]
  %v294 = vld [vmem:[%s1 + $0x220] sm:$0xf]
  %v295 = vld [vmem:[%s1 + $0x224] sm:$0xf]
  %v296 = vld [vmem:[%s1 + $0x228] sm:$0xf]
  %v297 = vld [vmem:[%s1 + $0x22c] sm:$0xf]
  %v298 = vld [vmem:[%s1 + $0x230] sm:$0xf]
  %v299 = vld [vmem:[%s1 + $0x234] sm:$0xf]
  %v300 = vld [vmem:[%s1 + $0x238] sm:$0xf]
  %v301 = vld [vmem:[%s1 + $0x23c] sm:$0xf]
  %v382 = vunpack.c.l.b16 %v78
  %v383 = vunpack.c.h.b16 %v78
  %v384 = vunpack.c.l.b16 %v79
  %v385 = vunpack.c.h.b16 %v79
  %v386 = vunpack.c.l.b16 %v80
  %v387 = vunpack.c.h.b16 %v80
  %v388 = vunpack.c.l.b16 %v81
  %v389 = vunpack.c.h.b16 %v81
  %v390 = vunpack.c.l.b16 %v82
  %v391 = vunpack.c.l.b16 %v83
  %v392 = vunpack.c.h.b16 %v83
  %v393 = vunpack.c.l.b16 %v84
  %v394 = vunpack.c.h.b16 %v84
  %v395 = vunpack.c.l.b16 %v85
  %v396 = vunpack.c.h.b16 %v85
  %v397 = vunpack.c.l.b16 %v86
  %v398 = vunpack.c.h.b16 %v86
  %v399 = vunpack.c.l.b16 %v87
  %v400 = vunpack.c.l.b16 %v88
  %v401 = vunpack.c.h.b16 %v88
  %v402 = vunpack.c.l.b16 %v89
  %v403 = vunpack.c.h.b16 %v89
  %v404 = vunpack.c.l.b16 %v90
  %v405 = vunpack.c.h.b16 %v90
  %v406 = vunpack.c.l.b16 %v91
  %v407 = vunpack.c.h.b16 %v91
  %v408 = vunpack.c.l.b16 %v92
  %v409 = vunpack.c.l.b16 %v93
  %v410 = vunpack.c.h.b16 %v93
  %v411 = vunpack.c.l.b16 %v94
  %v412 = vunpack.c.h.b16 %v94
  %v413 = vunpack.c.l.b16 %v95
  %v414 = vunpack.c.h.b16 %v95
  %v415 = vunpack.c.l.b16 %v96
  %v416 = vunpack.c.h.b16 %v96
  %v417 = vunpack.c.l.b16 %v97
  %v418 = vunpack.c.l.b16 %v98
  %v419 = vunpack.c.h.b16 %v98
  %v420 = vunpack.c.l.b16 %v99
  %v421 = vunpack.c.h.b16 %v99
  %v422 = vunpack.c.l.b16 %v100
  %v423 = vunpack.c.h.b16 %v100
  %v424 = vunpack.c.l.b16 %v101
  %v425 = vunpack.c.h.b16 %v101
  %v426 = vunpack.c.l.b16 %v102
  %v427 = vunpack.c.l.b16 %v103
  %v428 = vunpack.c.h.b16 %v103
  %v429 = vunpack.c.l.b16 %v104
  %v430 = vunpack.c.h.b16 %v104
  %v431 = vunpack.c.l.b16 %v105
  %v432 = vunpack.c.h.b16 %v105
  %v433 = vunpack.c.l.b16 %v106
  %v434 = vunpack.c.h.b16 %v106
  %v435 = vunpack.c.l.b16 %v107
  %v436 = vunpack.c.l.b16 %v108
  %v437 = vunpack.c.h.b16 %v108
  %v438 = vunpack.c.l.b16 %v109
  %v439 = vunpack.c.h.b16 %v109
  %v440 = vunpack.c.l.b16 %v110
  %v441 = vunpack.c.h.b16 %v110
  %v442 = vunpack.c.l.b16 %v111
  %v443 = vunpack.c.h.b16 %v111
  %v444 = vunpack.c.l.b16 %v112
  %v445 = vunpack.c.l.b16 %v113
  %v446 = vunpack.c.h.b16 %v113
  %v447 = vunpack.c.l.b16 %v114
  %v448 = vunpack.c.h.b16 %v114
  %v449 = vunpack.c.l.b16 %v115
  %v450 = vunpack.c.h.b16 %v115
  %v451 = vunpack.c.l.b16 %v116
  %v452 = vunpack.c.h.b16 %v116
  %v453 = vunpack.c.l.b16 %v117
  %v454 = vunpack.c.l.b16 %v118
  %v455 = vunpack.c.h.b16 %v118
  %v456 = vunpack.c.l.b16 %v119
  %v457 = vunpack.c.h.b16 %v119
  %v458 = vunpack.c.l.b16 %v120
  %v459 = vunpack.c.h.b16 %v120
  %v460 = vunpack.c.l.b16 %v121
  %v461 = vunpack.c.h.b16 %v121
  %v462 = vunpack.c.l.b16 %v122
  %v463 = vunpack.c.l.b16 %v123
  %v464 = vunpack.c.h.b16 %v123
  %v465 = vunpack.c.l.b16 %v124
  %v466 = vunpack.c.h.b16 %v124
  %v467 = vunpack.c.l.b16 %v125
  %v468 = vunpack.c.h.b16 %v125
  %v469 = vunpack.c.l.b16 %v126
  %v470 = vunpack.c.h.b16 %v126
  %v471 = vunpack.c.l.b16 %v127
  %v472 = vunpack.c.l.b16 %v128
  %v473 = vunpack.c.h.b16 %v128
  %v474 = vunpack.c.l.b16 %v129
  %v475 = vunpack.c.h.b16 %v129
  %v476 = vunpack.c.l.b16 %v130
  %v477 = vunpack.c.h.b16 %v130
  %v478 = vunpack.c.l.b16 %v131
  %v479 = vunpack.c.h.b16 %v131
  %v480 = vunpack.c.l.b16 %v132
  %v481 = vunpack.c.l.b16 %v133
  %v482 = vunpack.c.h.b16 %v133
  %v483 = vunpack.c.l.b16 %v134
  %v484 = vunpack.c.h.b16 %v134
  %v485 = vunpack.c.l.b16 %v135
  %v486 = vunpack.c.h.b16 %v135
  %v487 = vunpack.c.l.b16 %v136
  %v488 = vunpack.c.h.b16 %v136
  %v489 = vunpack.c.l.b16 %v137
  %v490 = vunpack.c.l.b16 %v138
  %v491 = vunpack.c.h.b16 %v138
  %v492 = vunpack.c.l.b16 %v139
  %v493 = vunpack.c.h.b16 %v139
  %v494 = vunpack.c.l.b16 %v140
  %v495 = vunpack.c.h.b16 %v140
  %v496 = vunpack.c.l.b16 %v141
  %v497 = vunpack.c.h.b16 %v141
  %v498 = vunpack.c.l.b16 %v142
  %v499 = vunpack.c.l.b16 %v143
  %v500 = vunpack.c.h.b16 %v143
  %v501 = vunpack.c.l.b16 %v144
  %v502 = vunpack.c.h.b16 %v144
  %v503 = vunpack.c.l.b16 %v145
  %v504 = vunpack.c.h.b16 %v145
  %v505 = vunpack.c.l.b16 %v146
  %v506 = vunpack.c.h.b16 %v146
  %v507 = vunpack.c.l.b16 %v147
  %v508 = vunpack.c.l.b16 %v148
  %v509 = vunpack.c.h.b16 %v148
  %v510 = vunpack.c.l.b16 %v149
  %v511 = vunpack.c.h.b16 %v149
  %v512 = vunpack.c.l.b16 %v150
  %v513 = vunpack.c.h.b16 %v150
  %v514 = vunpack.c.l.b16 %v151
  %v515 = vunpack.c.h.b16 %v151
  %v516 = vunpack.c.l.b16 %v152
  %v517 = vunpack.c.l.b16 %v153
  %v518 = vunpack.c.h.b16 %v153
  %v519 = vunpack.c.l.b16 %v154
  %v520 = vunpack.c.h.b16 %v154
  %v521 = vunpack.c.l.b16 %v155
  %v522 = vunpack.c.h.b16 %v155
  %v523 = vunpack.c.l.b16 %v156
  %v524 = vunpack.c.h.b16 %v156
  %v525 = vunpack.c.l.b16 %v157
  %v526 = vpack.c.b16 %v391, %v382
  %v527 = vpack.c.b16 %v392, %v383
  %v528 = vpack.c.b16 %v393, %v384
  %v529 = vpack.c.b16 %v394, %v385
  %v530 = vpack.c.b16 %v395, %v386
  %v531 = vpack.c.b16 %v396, %v387
  %v532 = vpack.c.b16 %v397, %v388
  %v533 = vpack.c.b16 %v398, %v389
  %v534 = vpack.c.b16 %v399, %v390
  %v535 = vpack.c.b16 %v409, %v400
  %v536 = vpack.c.b16 %v410, %v401
  %v537 = vpack.c.b16 %v411, %v402
  %v538 = vpack.c.b16 %v412, %v403
  %v539 = vpack.c.b16 %v413, %v404
  %v540 = vpack.c.b16 %v414, %v405
  %v541 = vpack.c.b16 %v415, %v406
  %v542 = vpack.c.b16 %v416, %v407
  %v543 = vpack.c.b16 %v417, %v408
  %v544 = vpack.c.b16 %v427, %v418
  %v545 = vpack.c.b16 %v428, %v419
  %v546 = vpack.c.b16 %v429, %v420
  %v547 = vpack.c.b16 %v430, %v421
  %v548 = vpack.c.b16 %v431, %v422
  %v549 = vpack.c.b16 %v432, %v423
  %v550 = vpack.c.b16 %v433, %v424
  %v551 = vpack.c.b16 %v434, %v425
  %v552 = vpack.c.b16 %v435, %v426
  %v553 = vpack.c.b16 %v445, %v436
  %v554 = vpack.c.b16 %v446, %v437
  %v555 = vpack.c.b16 %v447, %v438
  %v556 = vpack.c.b16 %v448, %v439
  %v557 = vpack.c.b16 %v449, %v440
  %v558 = vpack.c.b16 %v450, %v441
  %v559 = vpack.c.b16 %v451, %v442
  %v560 = vpack.c.b16 %v452, %v443
  %v561 = vpack.c.b16 %v453, %v444
  %v562 = vpack.c.b16 %v463, %v454
  %v563 = vpack.c.b16 %v464, %v455
  %v564 = vpack.c.b16 %v465, %v456
  %v565 = vpack.c.b16 %v466, %v457
  %v566 = vpack.c.b16 %v467, %v458
  %v567 = vpack.c.b16 %v468, %v459
  %v568 = vpack.c.b16 %v469, %v460
  %v569 = vpack.c.b16 %v470, %v461
  %v570 = vpack.c.b16 %v471, %v462
  %v571 = vpack.c.b16 %v481, %v472
  %v572 = vpack.c.b16 %v482, %v473
  %v573 = vpack.c.b16 %v483, %v474
  %v574 = vpack.c.b16 %v484, %v475
  %v575 = vpack.c.b16 %v485, %v476
  %v576 = vpack.c.b16 %v486, %v477
  %v577 = vpack.c.b16 %v487, %v478
  %v578 = vpack.c.b16 %v488, %v479
  %v579 = vpack.c.b16 %v489, %v480
  %v580 = vpack.c.b16 %v499, %v490
  %v581 = vpack.c.b16 %v500, %v491
  %v582 = vpack.c.b16 %v501, %v492
  %v583 = vpack.c.b16 %v502, %v493
  %v584 = vpack.c.b16 %v503, %v494
  %v585 = vpack.c.b16 %v504, %v495
  %v586 = vpack.c.b16 %v505, %v496
  %v587 = vpack.c.b16 %v506, %v497
  %v588 = vpack.c.b16 %v507, %v498
  %v589 = vpack.c.b16 %v517, %v508
  %v590 = vpack.c.b16 %v518, %v509
  %v591 = vpack.c.b16 %v519, %v510
  %v592 = vpack.c.b16 %v520, %v511
  %v593 = vpack.c.b16 %v521, %v512
  %v594 = vpack.c.b16 %v522, %v513
  %v595 = vpack.c.b16 %v523, %v514
  %v596 = vpack.c.b16 %v524, %v515
  %v597 = vpack.c.b16 %v525, %v516
  %v814 = vunpack.c.l.b16 %v158
  %v815 = vunpack.c.l.b16 %v159
  %v816 = vunpack.c.l.b16 %v160
  %v817 = vunpack.c.l.b16 %v161
  %v818 = vunpack.c.l.b16 %v162
  %v819 = vunpack.c.l.b16 %v163
  %v820 = vunpack.c.l.b16 %v164
  %v821 = vunpack.c.l.b16 %v165
  %v822 = vunpack.c.l.b16 %v166
  %v823 = vunpack.c.l.b16 %v167
  %v824 = vunpack.c.l.b16 %v168
  %v825 = vunpack.c.l.b16 %v169
  %v826 = vunpack.c.l.b16 %v170
  %v827 = vunpack.c.l.b16 %v171
  %v828 = vunpack.c.l.b16 %v172
  %v829 = vunpack.c.l.b16 %v173
  %v830 = vunpack.c.l.b16 %v174
  %v831 = vunpack.c.l.b16 %v175
  %v832 = vunpack.c.l.b16 %v176
  %v833 = vunpack.c.l.b16 %v177
  %v834 = vunpack.c.l.b16 %v178
  %v835 = vunpack.c.l.b16 %v179
  %v836 = vunpack.c.l.b16 %v180
  %v837 = vunpack.c.l.b16 %v181
  %v838 = vunpack.c.l.b16 %v182
  %v839 = vunpack.c.l.b16 %v183
  %v840 = vunpack.c.l.b16 %v184
  %v841 = vunpack.c.l.b16 %v185
  %v842 = vunpack.c.l.b16 %v186
  %v843 = vunpack.c.l.b16 %v187
  %v844 = vunpack.c.l.b16 %v188
  %v845 = vunpack.c.l.b16 %v189
  %v846 = vunpack.c.l.b16 %v190
  %v847 = vunpack.c.l.b16 %v191
  %v848 = vunpack.c.l.b16 %v192
  %v849 = vunpack.c.l.b16 %v193
  %v850 = vunpack.c.l.b16 %v194
  %v851 = vunpack.c.l.b16 %v195
  %v852 = vunpack.c.l.b16 %v196
  %v853 = vunpack.c.l.b16 %v197
  %v854 = vunpack.c.l.b16 %v198
  %v855 = vunpack.c.l.b16 %v199
  %v856 = vunpack.c.l.b16 %v200
  %v857 = vunpack.c.l.b16 %v201
  %v858 = vunpack.c.l.b16 %v202
  %v859 = vunpack.c.l.b16 %v203
  %v860 = vunpack.c.l.b16 %v204
  %v861 = vunpack.c.l.b16 %v205
  %v862 = vunpack.c.l.b16 %v206
  %v863 = vunpack.c.l.b16 %v207
  %v864 = vunpack.c.l.b16 %v208
  %v865 = vunpack.c.l.b16 %v209
  %v866 = vunpack.c.l.b16 %v210
  %v867 = vunpack.c.l.b16 %v211
  %v868 = vunpack.c.l.b16 %v212
  %v869 = vunpack.c.l.b16 %v213
  %v870 = vunpack.c.l.b16 %v214
  %v871 = vunpack.c.l.b16 %v215
  %v872 = vunpack.c.l.b16 %v216
  %v873 = vunpack.c.l.b16 %v217
  %v874 = vunpack.c.l.b16 %v218
  %v875 = vunpack.c.l.b16 %v219
  %v876 = vunpack.c.l.b16 %v220
  %v877 = vunpack.c.l.b16 %v221
  %v878 = vunpack.c.l.b16 %v222
  %v879 = vunpack.c.l.b16 %v223
  %v880 = vunpack.c.l.b16 %v224
  %v881 = vunpack.c.l.b16 %v225
  %v882 = vunpack.c.l.b16 %v226
  %v883 = vunpack.c.l.b16 %v227
  %v884 = vunpack.c.l.b16 %v228
  %v885 = vunpack.c.l.b16 %v229
  %v886 = vunpack.c.l.b16 %v230
  %v887 = vunpack.c.l.b16 %v231
  %v888 = vunpack.c.l.b16 %v232
  %v889 = vunpack.c.l.b16 %v233
  %v890 = vunpack.c.l.b16 %v234
  %v891 = vunpack.c.l.b16 %v235
  %v892 = vunpack.c.l.b16 %v236
  %v893 = vunpack.c.l.b16 %v237
  %v894 = vunpack.c.l.b16 %v238
  %v895 = vunpack.c.l.b16 %v239
  %v896 = vunpack.c.l.b16 %v240
  %v897 = vunpack.c.l.b16 %v241
  %v898 = vunpack.c.l.b16 %v242
  %v899 = vunpack.c.l.b16 %v243
  %v900 = vunpack.c.l.b16 %v244
  %v901 = vunpack.c.l.b16 %v245
  %v902 = vunpack.c.l.b16 %v246
  %v903 = vunpack.c.l.b16 %v247
  %v904 = vunpack.c.l.b16 %v248
  %v905 = vunpack.c.l.b16 %v249
  %v906 = vunpack.c.l.b16 %v250
  %v907 = vunpack.c.l.b16 %v251
  %v908 = vunpack.c.l.b16 %v252
  %v909 = vunpack.c.l.b16 %v253
  %v910 = vunpack.c.l.b16 %v254
  %v911 = vunpack.c.l.b16 %v255
  %v912 = vunpack.c.l.b16 %v256
  %v913 = vunpack.c.l.b16 %v257
  %v914 = vunpack.c.l.b16 %v258
  %v915 = vunpack.c.l.b16 %v259
  %v916 = vunpack.c.l.b16 %v260
  %v917 = vunpack.c.l.b16 %v261
  %v918 = vunpack.c.l.b16 %v262
  %v919 = vunpack.c.l.b16 %v263
  %v920 = vunpack.c.l.b16 %v264
  %v921 = vunpack.c.l.b16 %v265
  %v922 = vunpack.c.l.b16 %v266
  %v923 = vunpack.c.l.b16 %v267
  %v924 = vunpack.c.l.b16 %v268
  %v925 = vunpack.c.l.b16 %v269
  %v926 = vunpack.c.l.b16 %v270
  %v927 = vunpack.c.l.b16 %v271
  %v928 = vunpack.c.l.b16 %v272
  %v929 = vunpack.c.l.b16 %v273
  %v930 = vunpack.c.l.b16 %v274
  %v931 = vunpack.c.l.b16 %v275
  %v932 = vunpack.c.l.b16 %v276
  %v933 = vunpack.c.l.b16 %v277
  %v934 = vunpack.c.l.b16 %v278
  %v935 = vunpack.c.l.b16 %v279
  %v936 = vunpack.c.l.b16 %v280
  %v937 = vunpack.c.l.b16 %v281
  %v938 = vunpack.c.l.b16 %v282
  %v939 = vunpack.c.l.b16 %v283
  %v940 = vunpack.c.l.b16 %v284
  %v941 = vunpack.c.l.b16 %v285
  %v942 = vunpack.c.l.b16 %v286
  %v943 = vunpack.c.l.b16 %v287
  %v944 = vunpack.c.l.b16 %v288
  %v945 = vunpack.c.l.b16 %v289
  %v946 = vunpack.c.l.b16 %v290
  %v947 = vunpack.c.l.b16 %v291
  %v948 = vunpack.c.l.b16 %v292
  %v949 = vunpack.c.l.b16 %v293
  %v950 = vunpack.c.l.b16 %v294
  %v951 = vunpack.c.l.b16 %v295
  %v952 = vunpack.c.l.b16 %v296
  %v953 = vunpack.c.l.b16 %v297
  %v954 = vunpack.c.l.b16 %v298
  %v955 = vunpack.c.l.b16 %v299
  %v956 = vunpack.c.l.b16 %v300
  %v957 = vunpack.c.l.b16 %v301
  %v958 = vpack.c.b16 %v815, %v814
  %v959 = vpack.c.b16 %v817, %v816
  %v960 = vpack.c.b16 %v819, %v818
  %v961 = vpack.c.b16 %v821, %v820
  %v962 = vpack.c.b16 %v823, %v822
  %v963 = vpack.c.b16 %v825, %v824
  %v964 = vpack.c.b16 %v827, %v826
  %v965 = vpack.c.b16 %v829, %v828
  %v966 = vpack.c.b16 %v831, %v830
  %v967 = vpack.c.b16 %v833, %v832
  %v968 = vpack.c.b16 %v835, %v834
  %v969 = vpack.c.b16 %v837, %v836
  %v970 = vpack.c.b16 %v839, %v838
  %v971 = vpack.c.b16 %v841, %v840
  %v972 = vpack.c.b16 %v843, %v842
  %v973 = vpack.c.b16 %v845, %v844
  %v974 = vpack.c.b16 %v847, %v846
  %v975 = vpack.c.b16 %v849, %v848
  %v976 = vpack.c.b16 %v851, %v850
  %v977 = vpack.c.b16 %v853, %v852
  %v978 = vpack.c.b16 %v855, %v854
  %v979 = vpack.c.b16 %v857, %v856
  %v980 = vpack.c.b16 %v859, %v858
  %v981 = vpack.c.b16 %v861, %v860
  %v982 = vpack.c.b16 %v863, %v862
  %v983 = vpack.c.b16 %v865, %v864
  %v984 = vpack.c.b16 %v867, %v866
  %v985 = vpack.c.b16 %v869, %v868
  %v986 = vpack.c.b16 %v871, %v870
  %v987 = vpack.c.b16 %v873, %v872
  %v988 = vpack.c.b16 %v875, %v874
  %v989 = vpack.c.b16 %v877, %v876
  %v990 = vpack.c.b16 %v879, %v878
  %v991 = vpack.c.b16 %v881, %v880
  %v992 = vpack.c.b16 %v883, %v882
  %v993 = vpack.c.b16 %v885, %v884
  %v994 = vpack.c.b16 %v887, %v886
  %v995 = vpack.c.b16 %v889, %v888
  %v996 = vpack.c.b16 %v891, %v890
  %v997 = vpack.c.b16 %v893, %v892
  %v998 = vpack.c.b16 %v895, %v894
  %v999 = vpack.c.b16 %v897, %v896
  %v1000 = vpack.c.b16 %v899, %v898
  %v1001 = vpack.c.b16 %v901, %v900
  %v1002 = vpack.c.b16 %v903, %v902
  %v1003 = vpack.c.b16 %v905, %v904
  %v1004 = vpack.c.b16 %v907, %v906
  %v1005 = vpack.c.b16 %v909, %v908
  %v1006 = vpack.c.b16 %v911, %v910
  %v1007 = vpack.c.b16 %v913, %v912
  %v1008 = vpack.c.b16 %v915, %v914
  %v1009 = vpack.c.b16 %v917, %v916
  %v1010 = vpack.c.b16 %v919, %v918
  %v1011 = vpack.c.b16 %v921, %v920
  %v1012 = vpack.c.b16 %v923, %v922
  %v1013 = vpack.c.b16 %v925, %v924
  %v1014 = vpack.c.b16 %v927, %v926
  %v1015 = vpack.c.b16 %v929, %v928
  %v1016 = vpack.c.b16 %v931, %v930
  %v1017 = vpack.c.b16 %v933, %v932
  %v1018 = vpack.c.b16 %v935, %v934
  %v1019 = vpack.c.b16 %v937, %v936
  %v1020 = vpack.c.b16 %v939, %v938
  %v1021 = vpack.c.b16 %v941, %v940
  %v1022 = vpack.c.b16 %v943, %v942
  %v1023 = vpack.c.b16 %v945, %v944
  %v1024 = vpack.c.b16 %v947, %v946
  %v1025 = vpack.c.b16 %v949, %v948
  %v1026 = vpack.c.b16 %v951, %v950
  %v1027 = vpack.c.b16 %v953, %v952
  %v1028 = vpack.c.b16 %v955, %v954
  %v1029 = vpack.c.b16 %v957, %v956
  %1102 = vmatprep.subr.bf16.mxu0 0
  %1103 = vmatpush1.bf16.msra.mxu0 %v958
  %1104 = vmatprep.subr.bf16.mxu0 0
  %1105 = vmatpush1.bf16.msra.mxu0 %v959
  %1106 = vmatprep.subr.bf16.mxu0 0
  %1107 = vmatpush1.bf16.msra.mxu0 %v960
  %1108 = vmatprep.subr.bf16.mxu0 0
  %1109 = vmatpush1.bf16.msra.mxu0 %v961
  %1110 = vmatprep.subr.bf16.mxu0 0
  %1111 = vmatpush1.bf16.msra.mxu0 %v962
  %1112 = vmatprep.subr.bf16.mxu0 0
  %1113 = vmatpush1.bf16.msra.mxu0 %v963
  %1114 = vmatprep.subr.bf16.mxu0 0
  %1115 = vmatpush1.bf16.msra.mxu0 %v964
  %1116 = vmatprep.subr.bf16.mxu0 0
  %1117 = vmatpush1.bf16.msra.mxu0 %v965
  %1118 = vmatprep.subr.bf16.mxu0 0
  %1119 = vmatpush1.bf16.msra.mxu0 %v966
  %1120 = vmatprep.subr.bf16.mxu0 0
  %1121 = vmatpush1.bf16.msra.mxu0 %v967
  %1122 = vmatprep.subr.bf16.mxu0 0
  %1123 = vmatpush1.bf16.msra.mxu0 %v968
  %1124 = vmatprep.subr.bf16.mxu0 0
  %1125 = vmatpush1.bf16.msra.mxu0 %v969
  %1126 = vmatprep.subr.bf16.mxu0 0
  %1127 = vmatpush1.bf16.msra.mxu0 %v970
  %1128 = vmatprep.subr.bf16.mxu0 0
  %1129 = vmatpush1.bf16.msra.mxu0 %v971
  %1130 = vmatprep.subr.bf16.mxu0 0
  %1131 = vmatpush1.bf16.msra.mxu0 %v972
  %1132 = vmatprep.subr.bf16.mxu0 0
  %1133 = vmatpush1.bf16.msra.mxu0 %v973
  %1134 = vmatprep.mubr.bf16.mxu0 %v527
  %1135 = vmatmul.mubr.bf16.gmra.mrb[0].mxu0 %v526
  %v1136 = vpop.f32.mrb[0].mxu0
  %v1137 = vadd.f32 0.0, %v1136
  %v1138 = vpop.f32.mrb[0].mxu0
  %v1139 = vpop.f32.mrb[0].mxu0
  %v1140 = vadd.f32 0.0, %v1139
  %v1141 = vpop.f32.mrb[0].mxu0
  %1142 = vmatprep.mubr.bf16.mxu0 %v536
  %1143 = vmatmul.mubr.bf16.gmra.mrb[0].mxu0 %v535
  %v1144 = vpop.f32.mrb[0].mxu0
  %v1145 = vadd.f32 0.0, %v1144
  %v1146 = vpop.f32.mrb[0].mxu0
  %v1147 = vpop.f32.mrb[0].mxu0
  %v1148 = vadd.f32 0.0, %v1147
  %v1149 = vpop.f32.mrb[0].mxu0
  %1150 = vmatprep.mubr.bf16.mxu0 %v545
  %1151 = vmatmul.mubr.bf16.gmra.mrb[0].mxu0 %v544
  %v1152 = vpop.f32.mrb[0].mxu0
  %v1153 = vadd.f32 0.0, %v1152
  %v1154 = vpop.f32.mrb[0].mxu0
  %v1155 = vpop.f32.mrb[0].mxu0
  %v1156 = vadd.f32 0.0, %v1155
  %v1157 = vpop.f32.mrb[0].mxu0
  %1158 = vmatprep.mubr.bf16.mxu0 %v554
  %1159 = vmatmul.mubr.bf16.gmra.mrb[0].mxu0 %v553
  %v1160 = vpop.f32.mrb[0].mxu0
  %v1161 = vadd.f32 0.0, %v1160
  %v1162 = vpop.f32.mrb[0].mxu0
  %v1163 = vpop.f32.mrb[0].mxu0
  %v1164 = vadd.f32 0.0, %v1163
  %v1165 = vpop.f32.mrb[0].mxu0
  %1166 = vmatprep.mubr.bf16.mxu0 %v563
  %1167 = vmatmul.mubr.bf16.gmra.mrb[0].mxu0 %v562
  %v1168 = vpop.f32.mrb[0].mxu0
  %v1169 = vadd.f32 0.0, %v1168
  %v1170 = vpop.f32.mrb[0].mxu0
  %v1171 = vpop.f32.mrb[0].mxu0
  %v1172 = vadd.f32 0.0, %v1171
  %v1173 = vpop.f32.mrb[0].mxu0
  %1174 = vmatprep.mubr.bf16.mxu0 %v572
  %1175 = vmatmul.mubr.bf16.gmra.mrb[0].mxu0 %v571
  %v1176 = vpop.f32.mrb[0].mxu0
  %v1177 = vadd.f32 0.0, %v1176
  %v1178 = vpop.f32.mrb[0].mxu0
  %v1179 = vpop.f32.mrb[0].mxu0
  %v1180 = vadd.f32 0.0, %v1179
  %v1181 = vpop.f32.mrb[0].mxu0
  %1182 = vmatprep.mubr.bf16.mxu0 %v581
  %1183 = vmatmul.mubr.bf16.gmra.mrb[0].mxu0 %v580
  %v1184 = vpop.f32.mrb[0].mxu0
  %v1185 = vadd.f32 0.0, %v1184
  %v1186 = vpop.f32.mrb[0].mxu0
  %v1187 = vpop.f32.mrb[0].mxu0
  %v1188 = vadd.f32 0.0, %v1187
  %v1189 = vpop.f32.mrb[0].mxu0
  %1190 = vmatprep.mubr.bf16.mxu0 %v590
  %1191 = vmatmul.mubr.bf16.gmra.mrb[0].mxu0 %v589
  %v1192 = vpop.f32.mrb[0].mxu0
  %v1193 = vadd.f32 0.0, %v1192
  %v1194 = vpop.f32.mrb[0].mxu0
  %v1195 = vpop.f32.mrb[0].mxu0
  %v1196 = vadd.f32 0.0, %v1195
  %v1197 = vpop.f32.mrb[0].mxu0
  %1198 = vdwg.mxu0
  %1199 = vmatprep.subr.bf16.mxu0 0
  %1200 = vmatpush1.bf16.msra.mxu0 %v974
  %1201 = vmatprep.subr.bf16.mxu0 0
  %1202 = vmatpush1.bf16.msra.mxu0 %v975
  %1203 = vmatprep.subr.bf16.mxu0 0
  %1204 = vmatpush1.bf16.msra.mxu0 %v976
  %1205 = vmatprep.subr.bf16.mxu0 0
  %1206 = vmatpush1.bf16.msra.mxu0 %v977
  %1207 = vmatprep.subr.bf16.mxu0 0
  %1208 = vmatpush1.bf16.msra.mxu0 %v978
  %1209 = vmatprep.subr.bf16.mxu0 0
  %1210 = vmatpush1.bf16.msra.mxu0 %v979
  %1211 = vmatprep.subr.bf16.mxu0 0
  %1212 = vmatpush1.bf16.msra.mxu0 %v980
  %1213 = vmatprep.subr.bf16.mxu0 0
  %1214 = vmatpush1.bf16.msra.mxu0 %v981
  %1215 = vmatprep.subr.bf16.mxu0 0
  %1216 = vmatpush1.bf16.msra.mxu0 %v982
  %1217 = vmatprep.subr.bf16.mxu0 0
  %1218 = vmatpush1.bf16.msra.mxu0 %v983
  %1219 = vmatprep.subr.bf16.mxu0 0
  %1220 = vmatpush1.bf16.msra.mxu0 %v984
  %1221 = vmatprep.subr.bf16.mxu0 0
  %1222 = vmatpush1.bf16.msra.mxu0 %v985
  %1223 = vmatprep.subr.bf16.mxu0 0
  %1224 = vmatpush1.bf16.msra.mxu0 %v986
  %1225 = vmatprep.subr.bf16.mxu0 0
  %1226 = vmatpush1.bf16.msra.mxu0 %v987
  %1227 = vmatprep.subr.bf16.mxu0 0
  %1228 = vmatpush1.bf16.msra.mxu0 %v988
  %1229 = vmatprep.subr.bf16.mxu0 0
  %1230 = vmatpush1.bf16.msra.mxu0 %v989
  %1231 = vmatprep.mubr.bf16.mxu0 %v529
  %1232 = vmatmul.mubr.bf16.gmra.mrb[0].mxu0 %v528
  %v1233 = vpop.f32.mrb[0].mxu0
  %v1234 = vadd.f32 %v1137, %v1233
  %v1235 = vpop.f32.mrb[0].mxu0
  %v1236 = vpop.f32.mrb[0].mxu0
  %v1237 = vadd.f32 %v1140, %v1236
  %v1238 = vpop.f32.mrb[0].mxu0
  %1239 = vmatprep.mubr.bf16.mxu0 %v538
  %1240 = vmatmul.mubr.bf16.gmra.mrb[0].mxu0 %v537
  %v1241 = vpop.f32.mrb[0].mxu0
  %v1242 = vadd.f32 %v1145, %v1241
  %v1243 = vpop.f32.mrb[0].mxu0
  %v1244 = vpop.f32.mrb[0].mxu0
  %v1245 = vadd.f32 %v1148, %v1244
  %v1246 = vpop.f32.mrb[0].mxu0
  %1247 = vmatprep.mubr.bf16.mxu0 %v547
  %1248 = vmatmul.mubr.bf16.gmra.mrb[0].mxu0 %v546
  %v1249 = vpop.f32.mrb[0].mxu0
  %v1250 = vadd.f32 %v1153, %v1249
  %v1251 = vpop.f32.mrb[0].mxu0
  %v1252 = vpop.f32.mrb[0].mxu0
  %v1253 = vadd.f32 %v1156, %v1252
  %v1254 = vpop.f32.mrb[0].mxu0
  %1255 = vmatprep.mubr.bf16.mxu0 %v556
  %1256 = vmatmul.mubr.bf16.gmra.mrb[0].mxu0 %v555
  %v1257 = vpop.f32.mrb[0].mxu0
  %v1258 = vadd.f32 %v1161, %v1257
  %v1259 = vpop.f32.mrb[0].mxu0
  %v1260 = vpop.f32.mrb[0].mxu0
  %v1261 = vadd.f32 %v1164, %v1260
  %v1262 = vpop.f32.mrb[0].mxu0
  %1263 = vmatprep.mubr.bf16.mxu0 %v565
  %1264 = vmatmul.mubr.bf16.gmra.mrb[0].mxu0 %v564
  %v1265 = vpop.f32.mrb[0].mxu0
  %v1266 = vadd.f32 %v1169, %v1265
  %v1267 = vpop.f32.mrb[0].mxu0
  %v1268 = vpop.f32.mrb[0].mxu0
  %v1269 = vadd.f32 %v1172, %v1268
  %v1270 = vpop.f32.mrb[0].mxu0
  %1271 = vmatprep.mubr.bf16.mxu0 %v574
  %1272 = vmatmul.mubr.bf16.gmra.mrb[0].mxu0 %v573
  %v1273 = vpop.f32.mrb[0].mxu0
  %v1274 = vadd.f32 %v1177, %v1273
  %v1275 = vpop.f32.mrb[0].mxu0
  %v1276 = vpop.f32.mrb[0].mxu0
  %v1277 = vadd.f32 %v1180, %v1276
  %v1278 = vpop.f32.mrb[0].mxu0
  %1279 = vmatprep.mubr.bf16.mxu0 %v583
  %1280 = vmatmul.mubr.bf16.gmra.mrb[0].mxu0 %v582
  %v1281 = vpop.f32.mrb[0].mxu0
  %v1282 = vadd.f32 %v1185, %v1281
  %v1283 = vpop.f32.mrb[0].mxu0
  %v1284 = vpop.f32.mrb[0].mxu0
  %v1285 = vadd.f32 %v1188, %v1284
  %v1286 = vpop.f32.mrb[0].mxu0
  %1287 = vmatprep.mubr.bf16.mxu0 %v592
  %1288 = vmatmul.mubr.bf16.gmra.mrb[0].mxu0 %v591
  %v1289 = vpop.f32.mrb[0].mxu0
  %v1290 = vadd.f32 %v1193, %v1289
  %v1291 = vpop.f32.mrb[0].mxu0
  %v1292 = vpop.f32.mrb[0].mxu0
  %v1293 = vadd.f32 %v1196, %v1292
  %v1294 = vpop.f32.mrb[0].mxu0
  %1295 = vdwg.mxu0
  %1296 = vmatprep.subr.bf16.mxu0 0
  %1297 = vmatpush1.bf16.msra.mxu0 %v990
  %1298 = vmatprep.subr.bf16.mxu0 0
  %1299 = vmatpush1.bf16.msra.mxu0 %v991
  %1300 = vmatprep.subr.bf16.mxu0 0
  %1301 = vmatpush1.bf16.msra.mxu0 %v992
  %1302 = vmatprep.subr.bf16.mxu0 0
  %1303 = vmatpush1.bf16.msra.mxu0 %v993
  %1304 = vmatprep.subr.bf16.mxu0 0
  %1305 = vmatpush1.bf16.msra.mxu0 %v994
  %1306 = vmatprep.subr.bf16.mxu0 0
  %1307 = vmatpush1.bf16.msra.mxu0 %v995
  %1308 = vmatprep.subr.bf16.mxu0 0
  %1309 = vmatpush1.bf16.msra.mxu0 %v996
  %1310 = vmatprep.subr.bf16.mxu0 0
  %1311 = vmatpush1.bf16.msra.mxu0 %v997
  %1312 = vmatprep.subr.bf16.mxu0 0
  %1313 = vmatpush1.bf16.msra.mxu0 %v998
  %1314 = vmatprep.subr.bf16.mxu0 0
  %1315 = vmatpush1.bf16.msra.mxu0 %v999
  %1316 = vmatprep.subr.bf16.mxu0 0
  %1317 = vmatpush1.bf16.msra.mxu0 %v1000
  %1318 = vmatprep.subr.bf16.mxu0 0
  %1319 = vmatpush1.bf16.msra.mxu0 %v1001
  %1320 = vmatprep.subr.bf16.mxu0 0
  %1321 = vmatpush1.bf16.msra.mxu0 %v1002
  %1322 = vmatprep.subr.bf16.mxu0 0
  %1323 = vmatpush1.bf16.msra.mxu0 %v1003
  %1324 = vmatprep.subr.bf16.mxu0 0
  %1325 = vmatpush1.bf16.msra.mxu0 %v1004
  %1326 = vmatprep.subr.bf16.mxu0 0
  %1327 = vmatpush1.bf16.msra.mxu0 %v1005
  %1328 = vmatprep.mubr.bf16.mxu0 %v531
  %1329 = vmatmul.mubr.bf16.gmra.mrb[0].mxu0 %v530
  %v1330 = vpop.f32.mrb[0].mxu0
  %v1331 = vadd.f32 %v1234, %v1330
  %v1332 = vpop.f32.mrb[0].mxu0
  %v1333 = vpop.f32.mrb[0].mxu0
  %v1334 = vadd.f32 %v1237, %v1333
  %v1335 = vpop.f32.mrb[0].mxu0
  %1336 = vmatprep.mubr.bf16.mxu0 %v540
  %1337 = vmatmul.mubr.bf16.gmra.mrb[0].mxu0 %v539
  %v1338 = vpop.f32.mrb[0].mxu0
  %v1339 = vadd.f32 %v1242, %v1338
  %v1340 = vpop.f32.mrb[0].mxu0
  %v1341 = vpop.f32.mrb[0].mxu0
  %v1342 = vadd.f32 %v1245, %v1341
  %v1343 = vpop.f32.mrb[0].mxu0
  %1344 = vmatprep.mubr.bf16.mxu0 %v549
  %1345 = vmatmul.mubr.bf16.gmra.mrb[0].mxu0 %v548
  %v1346 = vpop.f32.mrb[0].mxu0
  %v1347 = vadd.f32 %v1250, %v1346
  %v1348 = vpop.f32.mrb[0].mxu0
  %v1349 = vpop.f32.mrb[0].mxu0
  %v1350 = vadd.f32 %v1253, %v1349
  %v1351 = vpop.f32.mrb[0].mxu0
  %1352 = vmatprep.mubr.bf16.mxu0 %v558
  %1353 = vmatmul.mubr.bf16.gmra.mrb[0].mxu0 %v557
  %v1354 = vpop.f32.mrb[0].mxu0
  %v1355 = vadd.f32 %v1258, %v1354
  %v1356 = vpop.f32.mrb[0].mxu0
  %v1357 = vpop.f32.mrb[0].mxu0
  %v1358 = vadd.f32 %v1261, %v1357
  %v1359 = vpop.f32.mrb[0].mxu0
  %1360 = vmatprep.mubr.bf16.mxu0 %v567
  %1361 = vmatmul.mubr.bf16.gmra.mrb[0].mxu0 %v566
  %v1362 = vpop.f32.mrb[0].mxu0
  %v1363 = vadd.f32 %v1266, %v1362
  %v1364 = vpop.f32.mrb[0].mxu0
  %v1365 = vpop.f32.mrb[0].mxu0
  %v1366 = vadd.f32 %v1269, %v1365
  %v1367 = vpop.f32.mrb[0].mxu0
  %1368 = vmatprep.mubr.bf16.mxu0 %v576
  %1369 = vmatmul.mubr.bf16.gmra.mrb[0].mxu0 %v575
  %v1370 = vpop.f32.mrb[0].mxu0
  %v1371 = vadd.f32 %v1274, %v1370
  %v1372 = vpop.f32.mrb[0].mxu0
  %v1373 = vpop.f32.mrb[0].mxu0
  %v1374 = vadd.f32 %v1277, %v1373
  %v1375 = vpop.f32.mrb[0].mxu0
  %1376 = vmatprep.mubr.bf16.mxu0 %v585
  %1377 = vmatmul.mubr.bf16.gmra.mrb[0].mxu0 %v584
  %v1378 = vpop.f32.mrb[0].mxu0
  %v1379 = vadd.f32 %v1282, %v1378
  %v1380 = vpop.f32.mrb[0].mxu0
  %v1381 = vpop.f32.mrb[0].mxu0
  %v1382 = vadd.f32 %v1285, %v1381
  %v1383 = vpop.f32.mrb[0].mxu0
  %1384 = vmatprep.mubr.bf16.mxu0 %v594
  %1385 = vmatmul.mubr.bf16.gmra.mrb[0].mxu0 %v593
  %v1386 = vpop.f32.mrb[0].mxu0
  %v1387 = vadd.f32 %v1290, %v1386
  %v1388 = vpop.f32.mrb[0].mxu0
  %v1389 = vpop.f32.mrb[0].mxu0
  %v1390 = vadd.f32 %v1293, %v1389
  %v1391 = vpop.f32.mrb[0].mxu0
  %1392 = vdwg.mxu0
  %1393 = vmatprep.subr.bf16.mxu0 0
  %1394 = vmatpush1.bf16.msra.mxu0 %v1006
  %1395 = vmatprep.subr.bf16.mxu0 0
  %1396 = vmatpush1.bf16.msra.mxu0 %v1007
  %1397 = vmatprep.subr.bf16.mxu0 0
  %1398 = vmatpush1.bf16.msra.mxu0 %v1008
  %1399 = vmatprep.subr.bf16.mxu0 0
  %1400 = vmatpush1.bf16.msra.mxu0 %v1009
  %1401 = vmatprep.subr.bf16.mxu0 0
  %1402 = vmatpush1.bf16.msra.mxu0 %v1010
  %1403 = vmatprep.subr.bf16.mxu0 0
  %1404 = vmatpush1.bf16.msra.mxu0 %v1011
  %1405 = vmatprep.subr.bf16.mxu0 0
  %1406 = vmatpush1.bf16.msra.mxu0 %v1012
  %1407 = vmatprep.subr.bf16.mxu0 0
  %1408 = vmatpush1.bf16.msra.mxu0 %v1013
  %1409 = vmatprep.subr.bf16.mxu0 0
  %1410 = vmatpush1.bf16.msra.mxu0 %v1014
  %1411 = vmatprep.subr.bf16.mxu0 0
  %1412 = vmatpush1.bf16.msra.mxu0 %v1015
  %1413 = vmatprep.subr.bf16.mxu0 0
  %1414 = vmatpush1.bf16.msra.mxu0 %v1016
  %1415 = vmatprep.subr.bf16.mxu0 0
  %1416 = vmatpush1.bf16.msra.mxu0 %v1017
  %1417 = vmatprep.subr.bf16.mxu0 0
  %1418 = vmatpush1.bf16.msra.mxu0 %v1018
  %1419 = vmatprep.subr.bf16.mxu0 0
  %1420 = vmatpush1.bf16.msra.mxu0 %v1019
  %1421 = vmatprep.subr.bf16.mxu0 0
  %1422 = vmatpush1.bf16.msra.mxu0 %v1020
  %1423 = vmatprep.subr.bf16.mxu0 0
  %1424 = vmatpush1.bf16.msra.mxu0 %v1021
  %1425 = vmatprep.mubr.bf16.mxu0 %v533
  %1426 = vmatmul.mubr.bf16.gmra.mrb[0].mxu0 %v532
  %v1427 = vpop.f32.mrb[0].mxu0
  %v1428 = vadd.f32 %v1331, %v1427
  %v1429 = vpop.f32.mrb[0].mxu0
  %v1430 = vpop.f32.mrb[0].mxu0
  %v1431 = vadd.f32 %v1334, %v1430
  %v1432 = vpop.f32.mrb[0].mxu0
  %1433 = vmatprep.mubr.bf16.mxu0 %v542
  %1434 = vmatmul.mubr.bf16.gmra.mrb[0].mxu0 %v541
  %v1435 = vpop.f32.mrb[0].mxu0
  %v1436 = vadd.f32 %v1339, %v1435
  %v1437 = vpop.f32.mrb[0].mxu0
  %v1438 = vpop.f32.mrb[0].mxu0
  %v1439 = vadd.f32 %v1342, %v1438
  %v1440 = vpop.f32.mrb[0].mxu0
  %1441 = vmatprep.mubr.bf16.mxu0 %v551
  %1442 = vmatmul.mubr.bf16.gmra.mrb[0].mxu0 %v550
  %v1443 = vpop.f32.mrb[0].mxu0
  %v1444 = vadd.f32 %v1347, %v1443
  %v1445 = vpop.f32.mrb[0].mxu0
  %v1446 = vpop.f32.mrb[0].mxu0
  %v1447 = vadd.f32 %v1350, %v1446
  %v1448 = vpop.f32.mrb[0].mxu0
  %1449 = vmatprep.mubr.bf16.mxu0 %v560
  %1450 = vmatmul.mubr.bf16.gmra.mrb[0].mxu0 %v559
  %v1451 = vpop.f32.mrb[0].mxu0
  %v1452 = vadd.f32 %v1355, %v1451
  %v1453 = vpop.f32.mrb[0].mxu0
  %v1454 = vpop.f32.mrb[0].mxu0
  %v1455 = vadd.f32 %v1358, %v1454
  %v1456 = vpop.f32.mrb[0].mxu0
  %1457 = vmatprep.mubr.bf16.mxu0 %v569
  %1458 = vmatmul.mubr.bf16.gmra.mrb[0].mxu0 %v568
  %v1459 = vpop.f32.mrb[0].mxu0
  %v1460 = vadd.f32 %v1363, %v1459
  %v1461 = vpop.f32.mrb[0].mxu0
  %v1462 = vpop.f32.mrb[0].mxu0
  %v1463 = vadd.f32 %v1366, %v1462
  %v1464 = vpop.f32.mrb[0].mxu0
  %1465 = vmatprep.mubr.bf16.mxu0 %v578
  %1466 = vmatmul.mubr.bf16.gmra.mrb[0].mxu0 %v577
  %v1467 = vpop.f32.mrb[0].mxu0
  %v1468 = vadd.f32 %v1371, %v1467
  %v1469 = vpop.f32.mrb[0].mxu0
  %v1470 = vpop.f32.mrb[0].mxu0
  %v1471 = vadd.f32 %v1374, %v1470
  %v1472 = vpop.f32.mrb[0].mxu0
  %1473 = vmatprep.mubr.bf16.mxu0 %v587
  %1474 = vmatmul.mubr.bf16.gmra.mrb[0].mxu0 %v586
  %v1475 = vpop.f32.mrb[0].mxu0
  %v1476 = vadd.f32 %v1379, %v1475
  %v1477 = vpop.f32.mrb[0].mxu0
  %v1478 = vpop.f32.mrb[0].mxu0
  %v1479 = vadd.f32 %v1382, %v1478
  %v1480 = vpop.f32.mrb[0].mxu0
  %1481 = vmatprep.mubr.bf16.mxu0 %v596
  %1482 = vmatmul.mubr.bf16.gmra.mrb[0].mxu0 %v595
  %v1483 = vpop.f32.mrb[0].mxu0
  %v1484 = vadd.f32 %v1387, %v1483
  %v1485 = vpop.f32.mrb[0].mxu0
  %v1486 = vpop.f32.mrb[0].mxu0
  %v1487 = vadd.f32 %v1390, %v1486
  %v1488 = vpop.f32.mrb[0].mxu0
  %1489 = vdwg.mxu0
  %1490 = vmatprep.subr.bf16.mxu0 0
  %1491 = vmatpush1.bf16.msra.mxu0 %v1022
  %1492 = vmatprep.subr.bf16.mxu0 0
  %1493 = vmatpush1.bf16.msra.mxu0 %v1023
  %1494 = vmatprep.subr.bf16.mxu0 0
  %1495 = vmatpush1.bf16.msra.mxu0 %v1024
  %1496 = vmatprep.subr.bf16.mxu0 0
  %1497 = vmatpush1.bf16.msra.mxu0 %v1025
  %1498 = vmatprep.subr.bf16.mxu0 0
  %1499 = vmatpush1.bf16.msra.mxu0 %v1026
  %1500 = vmatprep.subr.bf16.mxu0 0
  %1501 = vmatpush1.bf16.msra.mxu0 %v1027
  %1502 = vmatprep.subr.bf16.mxu0 0
  %1503 = vmatpush1.bf16.msra.mxu0 %v1028
  %1504 = vmatprep.subr.bf16.mxu0 0
  %1505 = vmatpush1.bf16.msra.mxu0 %v1029
  %1506 = vmatprep.subr.bf16.mxu0 0
  %1507 = vmatpush1.bf16.msra.mxu0 0
  %1508 = vmatprep.subr.bf16.mxu0 0
  %1509 = vmatpush1.bf16.msra.mxu0 0
  %1510 = vmatprep.subr.bf16.mxu0 0
  %1511 = vmatpush1.bf16.msra.mxu0 0
  %1512 = vmatprep.subr.bf16.mxu0 0
  %1513 = vmatpush1.bf16.msra.mxu0 0
  %1514 = vmatprep.subr.bf16.mxu0 0
  %1515 = vmatpush1.bf16.msra.mxu0 0
  %1516 = vmatprep.subr.bf16.mxu0 0
  %1517 = vmatpush1.bf16.msra.mxu0 0
  %1518 = vmatprep.subr.bf16.mxu0 0
  %1519 = vmatpush1.bf16.msra.mxu0 0
  %1520 = vmatprep.subr.bf16.mxu0 0
  %1521 = vmatpush1.bf16.msra.mxu0 0
  %1522 = vmatprep.mubr.bf16.mxu0 0
  %1523 = vmatmul.mubr.bf16.gmra.mrb[0].mxu0 %v534
  %v1524 = vpop.f32.mrb[0].mxu0
  %v1525 = vadd.f32 %v1428, %v1524
  %v1526 = vpop.f32.mrb[0].mxu0
  %v1527 = vpop.f32.mrb[0].mxu0
  %v1528 = vadd.f32 %v1431, %v1527
  %v1529 = vpop.f32.mrb[0].mxu0
  %1530 = vmatprep.mubr.bf16.mxu0 0
  %1531 = vmatmul.mubr.bf16.gmra.mrb[0].mxu0 %v543
  %v1532 = vpop.f32.mrb[0].mxu0
  %v1533 = vadd.f32 %v1436, %v1532
  %v1534 = vpop.f32.mrb[0].mxu0
  %v1535 = vpop.f32.mrb[0].mxu0
  %v1536 = vadd.f32 %v1439, %v1535
  %v1537 = vpop.f32.mrb[0].mxu0
  %1538 = vmatprep.mubr.bf16.mxu0 0
  %1539 = vmatmul.mubr.bf16.gmra.mrb[0].mxu0 %v552
  %v1540 = vpop.f32.mrb[0].mxu0
  %v1541 = vadd.f32 %v1444, %v1540
  %v1542 = vpop.f32.mrb[0].mxu0
  %v1543 = vpop.f32.mrb[0].mxu0
  %v1544 = vadd.f32 %v1447, %v1543
  %v1545 = vpop.f32.mrb[0].mxu0
  %1546 = vmatprep.mubr.bf16.mxu0 0
  %1547 = vmatmul.mubr.bf16.gmra.mrb[0].mxu0 %v561
  %v1548 = vpop.f32.mrb[0].mxu0
  %v1549 = vadd.f32 %v1452, %v1548
  %v1550 = vpop.f32.mrb[0].mxu0
  %v1551 = vpop.f32.mrb[0].mxu0
  %v1552 = vadd.f32 %v1455, %v1551
  %v1553 = vpop.f32.mrb[0].mxu0
  %1554 = vmatprep.mubr.bf16.mxu0 0
  %1555 = vmatmul.mubr.bf16.gmra.mrb[0].mxu0 %v570
  %v1556 = vpop.f32.mrb[0].mxu0
  %v1557 = vadd.f32 %v1460, %v1556
  %v1558 = vpop.f32.mrb[0].mxu0
  %v1559 = vpop.f32.mrb[0].mxu0
  %v1560 = vadd.f32 %v1463, %v1559
  %v1561 = vpop.f32.mrb[0].mxu0
  %1562 = vmatprep.mubr.bf16.mxu0 0
  %1563 = vmatmul.mubr.bf16.gmra.mrb[0].mxu0 %v579
  %v1564 = vpop.f32.mrb[0].mxu0
  %v1565 = vadd.f32 %v1468, %v1564
  %v1566 = vpop.f32.mrb[0].mxu0
  %v1567 = vpop.f32.mrb[0].mxu0
  %v1568 = vadd.f32 %v1471, %v1567
  %v1569 = vpop.f32.mrb[0].mxu0
  %1570 = vmatprep.mubr.bf16.mxu0 0
  %1571 = vmatmul.mubr.bf16.gmra.mrb[0].mxu0 %v588
  %v1572 = vpop.f32.mrb[0].mxu0
  %v1573 = vadd.f32 %v1476, %v1572
  %v1574 = vpop.f32.mrb[0].mxu0
  %v1575 = vpop.f32.mrb[0].mxu0
  %v1576 = vadd.f32 %v1479, %v1575
  %v1577 = vpop.f32.mrb[0].mxu0
  %1578 = vmatprep.mubr.bf16.mxu0 0
  %1579 = vmatmul.mubr.bf16.gmra.mrb[0].mxu0 %v597
  %v1580 = vpop.f32.mrb[0].mxu0
  %v1581 = vadd.f32 %v1484, %v1580
  %v1582 = vpop.f32.mrb[0].mxu0
  %v1583 = vpop.f32.mrb[0].mxu0
  %v1584 = vadd.f32 %v1487, %v1583
  %v1585 = vpop.f32.mrb[0].mxu0
  %1586 = vdwg.mxu0
  %v1587 = vpack.c.bf16 %v1528, %v1525
  %v1588 = vpack.c.bf16 %v1536, %v1533
  %v1589 = vpack.c.bf16 %v1544, %v1541
  %v1590 = vpack.c.bf16 %v1552, %v1549
  %v1591 = vpack.c.bf16 %v1560, %v1557
  %v1592 = vpack.c.bf16 %v1568, %v1565
  %v1593 = vpack.c.bf16 %v1576, %v1573
  %v1594 = vpack.c.bf16 %v1584, %v1581
  %v1603 = vunpack.c.l.b16 %v1587
  %v1604 = vunpack.c.h.b16 %v1587
  %v1605 = vunpack.c.l.b16 %v1588
  %v1606 = vunpack.c.h.b16 %v1588
  %v1607 = vunpack.c.l.b16 %v1589
  %v1608 = vunpack.c.h.b16 %v1589
  %v1609 = vunpack.c.l.b16 %v1590
  %v1610 = vunpack.c.h.b16 %v1590
  %v1611 = vunpack.c.l.b16 %v1591
  %v1612 = vunpack.c.h.b16 %v1591
  %v1613 = vunpack.c.l.b16 %v1592
  %v1614 = vunpack.c.h.b16 %v1592
  %v1615 = vunpack.c.l.b16 %v1593
  %v1616 = vunpack.c.h.b16 %v1593
  %v1617 = vunpack.c.l.b16 %v1594
  %v1618 = vunpack.c.h.b16 %v1594
  %v1619 = vpack.c.b16 %v1603, %v1603
  %v1620 = vpack.c.b16 %v1604, %v1604
  %v1621 = vpack.c.b16 %v1605, %v1605
  %v1622 = vpack.c.b16 %v1606, %v1606
  %v1623 = vpack.c.b16 %v1607, %v1607
  %v1624 = vpack.c.b16 %v1608, %v1608
  %v1625 = vpack.c.b16 %v1609, %v1609
  %v1626 = vpack.c.b16 %v1610, %v1610
  %v1627 = vpack.c.b16 %v1611, %v1611
  %v1628 = vpack.c.b16 %v1612, %v1612
  %v1629 = vpack.c.b16 %v1613, %v1613
  %v1630 = vpack.c.b16 %v1614, %v1614
  %v1631 = vpack.c.b16 %v1615, %v1615
  %v1632 = vpack.c.b16 %v1616, %v1616
  %v1633 = vpack.c.b16 %v1617, %v1617
  %v1634 = vpack.c.b16 %v1618, %v1618
  %1651 = vst [vmem:[%s58] sm:$0xf] %v1619
  %1652 = vst [vmem:[%s58 + $0x4] sm:$0xf] %v1620
  %1653 = vst [vmem:[%s58 + $0x8] sm:$0xf] %v1621
  %1654 = vst [vmem:[%s58 + $0xc] sm:$0xf] %v1622
  %1655 = vst [vmem:[%s58 + $0x10] sm:$0xf] %v1623
  %1656 = vst [vmem:[%s58 + $0x14] sm:$0xf] %v1624
  %1657 = vst [vmem:[%s58 + $0x18] sm:$0xf] %v1625
  %1658 = vst [vmem:[%s58 + $0x1c] sm:$0xf] %v1626
  %1659 = vst [vmem:[%s58 + $0x20] sm:$0xf] %v1627
  %1660 = vst [vmem:[%s58 + $0x24] sm:$0xf] %v1628
  %1661 = vst [vmem:[%s58 + $0x28] sm:$0xf] %v1629
  %1662 = vst [vmem:[%s58 + $0x2c] sm:$0xf] %v1630
  %1663 = vst [vmem:[%s58 + $0x30] sm:$0xf] %v1631
  %1664 = vst [vmem:[%s58 + $0x34] sm:$0xf] %v1632
  %1665 = vst [vmem:[%s58 + $0x38] sm:$0xf] %v1633
  %1666 = vst [vmem:[%s58 + $0x3c] sm:$0xf] %v1634
  %v1667 = vld [vmem:[%s64] sm:$0x1]
  %v1668 = vadd.f32 %v1525, %v1528
  %v1669 = vadd.f32 %v1668, %v1533
  %v1670 = vadd.f32 %v1669, %v1536
  %v1671 = vadd.f32 %v1670, %v1541
  %v1672 = vadd.f32 %v1671, %v1544
  %v1673 = vadd.f32 %v1672, %v1549
  %v1674 = vadd.f32 %v1673, %v1552
  %v1675 = vadd.f32 %v1674, %v1557
  %v1676 = vadd.f32 %v1675, %v1560
  %v1677 = vadd.f32 %v1676, %v1565
  %v1678 = vadd.f32 %v1677, %v1568
  %v1679 = vadd.f32 %v1678, %v1573
  %v1680 = vadd.f32 %v1679, %v1576
  %v1681 = vadd.f32 %v1680, %v1581
  %v1682 = vadd.f32 %v1681, %v1584
  %v1683 = vrot.slane %v1682, 4
  %v1684 = vadd.f32 %v1682, %v1683
  %v1685 = vrot.slane %v1684, 2
  %v1686 = vadd.f32 %v1684, %v1685
  %v1687 = vrot.slane %v1686, 1
  %v1688 = vadd.f32 %v1686, %v1687
  %v1689 = vadd.f32 %v1667, %v1688
  %1690 = vst [vmem:[%s64] sm:$0x1] %v1689
  %v1691 = vld [vmem:[%s69] sm:$0x1]
  %v1692 = vmul.f32 %v1525, %v1525
  %v1693 = vmul.f32 %v1528, %v1528
  %v1694 = vmul.f32 %v1533, %v1533
  %v1695 = vmul.f32 %v1536, %v1536
  %v1696 = vmul.f32 %v1541, %v1541
  %v1697 = vmul.f32 %v1544, %v1544
  %v1698 = vmul.f32 %v1549, %v1549
  %v1699 = vmul.f32 %v1552, %v1552
  %v1700 = vmul.f32 %v1557, %v1557
  %v1701 = vmul.f32 %v1560, %v1560
  %v1702 = vmul.f32 %v1565, %v1565
  %v1703 = vmul.f32 %v1568, %v1568
  %v1704 = vmul.f32 %v1573, %v1573
  %v1705 = vmul.f32 %v1576, %v1576
  %v1706 = vmul.f32 %v1581, %v1581
  %v1707 = vmul.f32 %v1584, %v1584
  %v1708 = vadd.f32 %v1692, %v1693
  %v1709 = vadd.f32 %v1708, %v1694
  %v1710 = vadd.f32 %v1709, %v1695
  %v1711 = vadd.f32 %v1710, %v1696
  %v1712 = vadd.f32 %v1711, %v1697
  %v1713 = vadd.f32 %v1712, %v1698
  %v1714 = vadd.f32 %v1713, %v1699
  %v1715 = vadd.f32 %v1714, %v1700
  %v1716 = vadd.f32 %v1715, %v1701
  %v1717 = vadd.f32 %v1716, %v1702
  %v1718 = vadd.f32 %v1717, %v1703
  %v1719 = vadd.f32 %v1718, %v1704
  %v1720 = vadd.f32 %v1719, %v1705
  %v1721 = vadd.f32 %v1720, %v1706
  %v1722 = vadd.f32 %v1721, %v1707
  %v1723 = vrot.slane %v1722, 4
  %v1724 = vadd.f32 %v1722, %v1723
  %v1725 = vrot.slane %v1724, 2
  %v1726 = vadd.f32 %v1724, %v1725
  %v1727 = vrot.slane %v1726, 1
  %v1728 = vadd.f32 %v1726, %v1727
  %v1729 = vadd.f32 %v1691, %v1728
  %1730 = vst [vmem:[%s69] sm:$0x1] %v1729
  %s1731 = sadd.s32 0, 0
  %s1732 = smul.u32 16, %s1731
  %p1733 = scmp.lt.s32.totalorder %s1732, 15
  %s1734 = scalar_select %p1733, %s1732, 15
  %s1735 = smul.addr %s1734, 4
  %s1736 = scalar_lea.vmem %s2, %s1735
  %s1737 = sadd.s32 0, 0
  %p1738 = scmp.lt.s32.totalorder %s1737, 0
  %s1739 = scalar_select %p1738, %s1737, 0
  %s1740 = scalar_lea.vmem %s3, %s1739
  %s1741 = sadd.s32 0, 0
  %p1742 = scmp.lt.s32.totalorder %s1741, 0
  %s1743 = scalar_select %p1742, %s1741, 0
  %s1744 = scalar_lea.vmem %s4, %s1743
  // Predicated region
  $region14: #{generator_forward.19} parent=0 // pred_check
    _
  $region15: #{generator_forward.19} parent=0 // pred_check_branch
    %1746 = sbr.rel (0) target = $region17
  $region16: #{generator_forward.19} parent=0 // pred_region
    %s1747 = sadd.s32 0, 0
    %s1748 = smul.u32 16, %s1747
  $region17: #{generator_forward.19} parent=0 // pred_fallthru
    _
  // Predicated region
  $region18: #{generator_forward.19} parent=0 // pred_check
    _
  $region19: #{generator_forward.19} parent=0 // pred_check_branch
    %1750 = sbr.rel (0) target = $region21
  $region20: #{generator_forward.19} parent=0 // pred_region
    %s1751 = sadd.s32 0, 0
  $region21: #{generator_forward.19} parent=0 // pred_fallthru
    _
  // Predicated region
  $region22: #{generator_forward.19} parent=0 // pred_check
    _
  $region23: #{generator_forward.19} parent=0 // pred_check_branch
    %1753 = sbr.rel (0) target = $region25
  $region24: #{generator_forward.19} parent=0 // pred_region
    %s1754 = sadd.s32 0, 0
  $region25: #{generator_forward.19} parent=0 // pred_fallthru
    _
  // Predicated region
  $region26: #{generator_forward.19} parent=0 // pred_check
    _
  $region27: #{generator_forward.19} parent=0 // pred_check_branch
    %1756 = sbr.rel (0) target = $region29
  $region28: #{generator_forward.19} parent=0 // pred_region
    %s1757 = sadd.s32 0, 0
    %s1758 = smul.u32 16, %s1757
    %p1759 = scmp.lt.s32.totalorder %s1758, 15
    %s1760 = scalar_select %p1759, %s1758, 15
    %s1761 = smul.addr %s1760, 4
    %s1762 = scalar_lea.vmem %s2, %s1761
  $region29: #{generator_forward.19} parent=0 // pred_fallthru
    _
  // Predicated region
  $region30: #{generator_forward.19} parent=0 // pred_check
    _
  $region31: #{generator_forward.19} parent=0 // pred_check_branch
    %1764 = sbr.rel (0) target = $region33
  $region32: #{generator_forward.19} parent=0 // pred_region
    %s1765 = sadd.s32 0, 0
    %p1766 = scmp.lt.s32.totalorder %s1765, 0
    %s1767 = scalar_select %p1766, %s1765, 0
    %s1768 = scalar_lea.vmem %s3, %s1767
  $region33: #{generator_forward.19} parent=0 // pred_fallthru
    _
  // Predicated region
  $region34: #{generator_forward.19} parent=0 // pred_check
    _
  $region35: #{generator_forward.19} parent=0 // pred_check_branch
    %1770 = sbr.rel (0) target = $region37
  $region36: #{generator_forward.19} parent=0 // pred_region
    %s1771 = sadd.s32 0, 0
    %p1772 = scmp.lt.s32.totalorder %s1771, 0
    %s1773 = scalar_select %p1772, %s1771, 0
    %s1774 = scalar_lea.vmem %s4, %s1773
  $region37: #{generator_forward.19} parent=0 // pred_fallthru
    _

// kernel: generator_forward.22
$region0: #{generator_forward.22}
  #allocation0 [shape = 'u32[]', space=smem, size = 0x4, offset = 0x4, fixed_abs, tag = 'smem constant byte address 0x4 - core index']
  #allocation1 [shape = 'u32[144,128]{1,0:T(1,128)}', space=vmem, size = 0x12000, scoped, tag = 'internal scratch']
  %s0 = inlined_call_operand.vmem [shape: bf16[32,128], index: 0, kind: input, shape index: {}]
  %s1 = inlined_call_operand.vmem [shape: f32[1,1,128], index: 1, kind: input, shape index: {}]
  %s2 = inlined_call_operand.vmem [shape: f32[1,1,128], index: 2, kind: input, shape index: {}]
  %s3 = inlined_call_operand.vmem [shape: f32[1,128], index: 3, kind: input, shape index: {}]
  %s4 = inlined_call_operand.vmem [shape: f32[1,128], index: 4, kind: input, shape index: {}]
  %s5 = inlined_call_operand.vmem [shape: bf16[32,128], index: 5, kind: output, shape index: {}]
  %s6 = sld [smem:[#allocation0]]
  $region30: #{generator_forward.22} parent=0
    _
  %s8 = ssub.s32 1, %s6
  %s9 = scalar_select 0, %s8, %s6
  // Predicated region
  $region2: #{generator_forward.22} parent=0 // pred_check
    _
  $region3: #{generator_forward.22} parent=0 // pred_check_branch
    %11 = sbr.rel (0) target = $region5
  $region4: #{generator_forward.22} parent=0 // pred_region
    _
  $region5: #{generator_forward.22} parent=0 // pred_fallthru
    _
  // Predicated region
  $region6: #{generator_forward.22} parent=0 // pred_check
    _
  $region7: #{generator_forward.22} parent=0 // pred_check_branch
    %13 = sbr.rel (0) target = $region9
  $region8: #{generator_forward.22} parent=0 // pred_region
    _
  $region9: #{generator_forward.22} parent=0 // pred_fallthru
    _
  // Predicated region
  $region10: #{generator_forward.22} parent=0 // pred_check
    _
  $region11: #{generator_forward.22} parent=0 // pred_check_branch
    %15 = sbr.rel (0) target = $region13
  $region12: #{generator_forward.22} parent=0 // pred_region
    _
  $region13: #{generator_forward.22} parent=0 // pred_fallthru
    _
  // Predicated region
  $region14: #{generator_forward.22} parent=0 // pred_check
    _
  $region15: #{generator_forward.22} parent=0 // pred_check_branch
    %17 = sbr.rel (0) target = $region17
  $region16: #{generator_forward.22} parent=0 // pred_region
    _
  $region17: #{generator_forward.22} parent=0 // pred_fallthru
    _
  // Predicated region
  $region18: #{generator_forward.22} parent=0 // pred_check
    _
  $region19: #{generator_forward.22} parent=0 // pred_check_branch
    %19 = sbr.rel (0) target = $region21
  $region20: #{generator_forward.22} parent=0 // pred_region
    _
  $region21: #{generator_forward.22} parent=0 // pred_fallthru
    _
  %v20 = vld [vmem:[%s1] sm:$0x1]
  %v21 = vadd.f32 %v20, 0.0
  %v22 = vmul.f32 %v21, 0.03125
  %v23 = vld [vmem:[%s2] sm:$0x1]
  %v24 = vadd.f32 %v23, 0.0
  %v25 = vmul.f32 %v24, 0.03125
  %v26 = vmul.f32 %v22, %v22
  %v27 = vsub.f32 %v25, %v26
  %v28 = vmax.f32 %v27, 0.0
  %v29 = vld [vmem:[%s3] sm:$0x1]
  %v30 = vadd.f32 %v28, 1e-05
  %v31 = vrsqrt.pop %v30
  %v32 = vmul.f32 %v29, %v31
  %v33 = vld [vmem:[%s4] sm:$0x1]
  %v34 = vmul.f32 %v22, %v32
  %v35 = vsub.f32 %v33, %v34
  %v36 = vld [vmem:[%s0] sm:$0xf]
  %v37 = vld [vmem:[%s0 + $0x4] sm:$0xf]
  %v38 = vld [vmem:[%s0 + $0x8] sm:$0xf]
  %v39 = vld [vmem:[%s0 + $0xc] sm:$0xf]
  %v40 = vunpack.c.l.bf16 %v36
  %v41 = vunpack.c.l.bf16 %v37
  %v42 = vunpack.c.l.bf16 %v38
  %v43 = vunpack.c.l.bf16 %v39
  %v45 = vlaneseq
  %v46 = vshrl.u32 %v45, 7
  %v47 = vsub.s32 0, %v46
  %v48 = vrot.slane %v32, %v47
  %v50 = vmul.f32 %v40, %v48
  %v51 = vmul.f32 %v41, %v48
  %v52 = vmul.f32 %v42, %v48
  %v53 = vmul.f32 %v43, %v48
  %v55 = vlaneseq
  %v56 = vshrl.u32 %v55, 7
  %v57 = vsub.s32 0, %v56
  %v58 = vrot.slane %v35, %v57
  %v60 = vadd.f32 %v50, %v58
  %v61 = vadd.f32 %v51, %v58
  %v62 = vadd.f32 %v52, %v58
  %v63 = vadd.f32 %v53, %v58
  %vm64 = vcmp.gt.f32.partialorder %v60, 0.0
  %vm65 = vcmp.gt.f32.partialorder %v61, 0.0
  %vm66 = vcmp.gt.f32.partialorder %v62, 0.0
  %vm67 = vcmp.gt.f32.partialorder %v63, 0.0
  %v68 = vmul.f32 %v60, 0.2
  %v69 = vmul.f32 %v61, 0.2
  %v70 = vmul.f32 %v62, 0.2
  %v71 = vmul.f32 %v63, 0.2
  %v72 = vsel %vm64, %v60, %v68
  %v73 = vsel %vm65, %v61, %v69
  %v74 = vsel %vm66, %v62, %v70
  %v75 = vsel %vm67, %v63, %v71
  %v76 = vpack.c.bf16 %v73, %v72
  %v77 = vpack.c.bf16 %v75, %v74
  %v80 = vunpack.c.l.b16 %v76
  %v81 = vunpack.c.h.b16 %v76
  %v82 = vunpack.c.l.b16 %v77
  %v83 = vunpack.c.h.b16 %v77
  %v84 = vpack.c.b16 %v80, %v80
  %v85 = vpack.c.b16 %v81, %v81
  %v86 = vpack.c.b16 %v82, %v82
  %v87 = vpack.c.b16 %v83, %v83
  %92 = vst [vmem:[%s5] sm:$0xf] %v84
  %93 = vst [vmem:[%s5 + $0x4] sm:$0xf] %v85
  %94 = vst [vmem:[%s5 + $0x8] sm:$0xf] %v86
  %95 = vst [vmem:[%s5 + $0xc] sm:$0xf] %v87
  // Predicated region
  $region22: #{generator_forward.22} parent=0 // pred_check
    _
  $region23: #{generator_forward.22} parent=0 // pred_check_branch
    %97 = sbr.rel (0) target = $region25
  $region24: #{generator_forward.22} parent=0 // pred_region
    _
  $region25: #{generator_forward.22} parent=0 // pred_fallthru
    _
  // Predicated region
  $region26: #{generator_forward.22} parent=0 // pred_check
    _
  $region27: #{generator_forward.22} parent=0 // pred_check_branch
    %99 = sbr.rel (0) target = $region29
  $region28: #{generator_forward.22} parent=0 // pred_region
    _
  $region29: #{generator_forward.22} parent=0 // pred_fallthru
    _

// kernel: generator_forward.21
$region0: #{generator_forward.21}
  #allocation0 [shape = 'u32[]', space=smem, size = 0x4, offset = 0x4, fixed_abs, tag = 'smem constant byte address 0x4 - core index']
  #allocation1 [shape = 'u32[144,128]{1,0:T(1,128)}', space=vmem, size = 0x12000, scoped, tag = 'internal scratch']
  %s0 = inlined_call_operand.vmem [shape: bf16[1,32,1152], index: 0, kind: input, shape index: {}]
  %s1 = inlined_call_operand.vmem [shape: bf16[1,1152,128], index: 1, kind: input, shape index: {}]
  %s2 = inlined_call_operand.vmem [shape: bf16[1,32,128], index: 2, kind: output, shape index: {0}]
  %s3 = inlined_call_operand.vmem [shape: f32[1,1,128], index: 3, kind: output, shape index: {1}]
  %s4 = inlined_call_operand.vmem [shape: f32[1,1,128], index: 4, kind: output, shape index: {2}]
  %5 = xla_tuple %s2, %s3, %s4
  %s6 = sld [smem:[#allocation0]]
  $region38: #{generator_forward.21} parent=0
    _
  %s8 = ssub.s32 1, %s6
  %s9 = scalar_select 0, %s8, %s6
  // Predicated region
  $region2: #{generator_forward.21} parent=0 // pred_check
    _
  $region3: #{generator_forward.21} parent=0 // pred_check_branch
    %11 = sbr.rel (0) target = $region5
  $region4: #{generator_forward.21} parent=0 // pred_region
    %s12 = sadd.s32 0, 0
    %s13 = smul.u32 4, %s12
    %p14 = scmp.lt.s32.totalorder %s13, 3
    %s15 = scalar_select %p14, %s13, 3
    %s16 = smul.addr %s15, 9
    %s17 = smul.addr %s16, 4
    %s18 = scalar_lea.vmem %s0, %s17
    %s19 = sadd.s32 0, 0
    %s20 = smul.u32 4, %s19
  $region5: #{generator_forward.21} parent=0 // pred_fallthru
    _
  // Predicated region
  $region6: #{generator_forward.21} parent=0 // pred_check
    _
  $region7: #{generator_forward.21} parent=0 // pred_check_branch
    %22 = sbr.rel (0) target = $region9
  $region8: #{generator_forward.21} parent=0 // pred_region
    _
  $region9: #{generator_forward.21} parent=0 // pred_fallthru
    _
  %s23 = sadd.s32 0, 0
  %s24 = smul.u32 4, %s23
  %p25 = scmp.lt.s32.totalorder %s24, 3
  %s26 = scalar_select %p25, %s24, 3
  %s27 = smul.addr %s26, 9
  %s28 = smul.addr %s27, 4
  %s29 = scalar_lea.vmem %s0, %s28
  %s30 = sadd.s32 0, 0
  %s31 = smul.u32 4, %s30
  %p32 = scmp.lt.s32.totalorder %s31, 3
  %s33 = scalar_select %p32, %s31, 3
  %s34 = smul.addr %s33, 4
  %s35 = scalar_lea.vmem %s2, %s34
  %s36 = sadd.s32 0, 0
  %p37 = scmp.lt.s32.totalorder %s36, 0
  %s38 = scalar_select %p37, %s36, 0
  %s39 = scalar_lea.vmem %s3, %s38
  %s40 = sadd.s32 0, 0
  %p41 = scmp.lt.s32.totalorder %s40, 0
  %s42 = scalar_select %p41, %s40, 0
  %s43 = scalar_lea.vmem %s4, %s42
  %s44 = sadd.s32 0, 0
  %s45 = smul.u32 4, %s44
  %p46 = scmp.lt.s32.totalorder %s45, 3
  %s47 = scalar_select %p46, %s45, 3
  %s48 = smul.addr %s47, 9
  %s49 = smul.addr %s48, 4
  %s50 = scalar_lea.vmem %s0, %s49
  %s51 = sadd.s32 0, 0
  %s52 = smul.u32 4, %s51
  %s53 = sadd.s32 0, 0
  %s54 = smul.u32 4, %s53
  %p55 = scmp.lt.s32.totalorder %s54, 3
  %s56 = scalar_select %p55, %s54, 3
  %s57 = smul.addr %s56, 4
  %s58 = scalar_lea.vmem %s2, %s57
  %s59 = sadd.s32 0, 0
  %s60 = smul.u32 4, %s59
  %s61 = sadd.s32 0, 0
  %p62 = scmp.lt.s32.totalorder %s61, 0
  %s63 = scalar_select %p62, %s61, 0
  %s64 = scalar_lea.vmem %s3, %s63
  %s65 = sadd.s32 0, 0
  %s66 = sadd.s32 0, 0
  %p67 = scmp.lt.s32.totalorder %s66, 0
  %s68 = scalar_select %p67, %s66, 0
  %s69 = scalar_lea.vmem %s4, %s68
  %s70 = sadd.s32 0, 0
  %p72 = scmp.eq.s32.totalorder 0, 0
  // Predicated region
  $region10: #{generator_forward.21} parent=0 // pred_check
    %p73 = pneg %p72
  $region11: #{generator_forward.21} parent=0 // pred_check_branch
    %75 = sbr.rel (%p73) target = $region13
  $region12: #{generator_forward.21} parent=0 // pred_region
    %76 = vst [vmem:[%s64] sm:$0x1] 0.0
    %77 = vst [vmem:[%s69] sm:$0x1] 0.0
  $region13: #{generator_forward.21} parent=0 // pred_fallthru
    _
  %v78 = vld [vmem:[%s50] sm:$0xff]
  %v79 = vld [vmem:[%s50 + $0x8] sm:$0xff]
  %v80 = vld [vmem:[%s50 + $0x10] sm:$0xff]
  %v81 = vld [vmem:[%s50 + $0x18] sm:$0xff]
  %v82 = vld [vmem:[%s50 + $0x20] sm:$0xf]
  %v83 = vld [vmem:[%s50 + $0x24] sm:$0xff]
  %v84 = vld [vmem:[%s50 + $0x2c] sm:$0xff]
  %v85 = vld [vmem:[%s50 + $0x34] sm:$0xff]
  %v86 = vld [vmem:[%s50 + $0x3c] sm:$0xff]
  %v87 = vld [vmem:[%s50 + $0x44] sm:$0xf]
  %v88 = vld [vmem:[%s50 + $0x48] sm:$0xff]
  %v89 = vld [vmem:[%s50 + $0x50] sm:$0xff]
  %v90 = vld [vmem:[%s50 + $0x58] sm:$0xff]
  %v91 = vld [vmem:[%s50 + $0x60] sm:$0xff]
  %v92 = vld [vmem:[%s50 + $0x68] sm:$0xf]
  %v93 = vld [vmem:[%s50 + $0x6c] sm:$0xff]
  %v94 = vld [vmem:[%s50 + $0x74] sm:$0xff]
  %v95 = vld [vmem:[%s50 + $0x7c] sm:$0xff]
  %v96 = vld [vmem:[%s50 + $0x84] sm:$0xff]
  %v97 = vld [vmem:[%s50 + $0x8c] sm:$0xf]
  %v98 = vld [vmem:[%s1] sm:$0xf]
  %v99 = vld [vmem:[%s1 + $0x4] sm:$0xf]
  %v100 = vld [vmem:[%s1 + $0x8] sm:$0xf]
  %v101 = vld [vmem:[%s1 + $0xc] sm:$0xf]
  %v102 = vld [vmem:[%s1 + $0x10] sm:$0xf]
  %v103 = vld [vmem:[%s1 + $0x14] sm:$0xf]
  %v104 = vld [vmem:[%s1 + $0x18] sm:$0xf]
  %v105 = vld [vmem:[%s1 + $0x1c] sm:$0xf]
  %v106 = vld [vmem:[%s1 + $0x20] sm:$0xf]
  %v107 = vld [vmem:[%s1 + $0x24] sm:$0xf]
  %v108 = vld [vmem:[%s1 + $0x28] sm:$0xf]
  %v109 = vld [vmem:[%s1 + $0x2c] sm:$0xf]
  %v110 = vld [vmem:[%s1 + $0x30] sm:$0xf]
  %v111 = vld [vmem:[%s1 + $0x34] sm:$0xf]
  %v112 = vld [vmem:[%s1 + $0x38] sm:$0xf]
  %v113 = vld [vmem:[%s1 + $0x3c] sm:$0xf]
  %v114 = vld [vmem:[%s1 + $0x40] sm:$0xf]
  %v115 = vld [vmem:[%s1 + $0x44] sm:$0xf]
  %v116 = vld [vmem:[%s1 + $0x48] sm:$0xf]
  %v117 = vld [vmem:[%s1 + $0x4c] sm:$0xf]
  %v118 = vld [vmem:[%s1 + $0x50] sm:$0xf]
  %v119 = vld [vmem:[%s1 + $0x54] sm:$0xf]
  %v120 = vld [vmem:[%s1 + $0x58] sm:$0xf]
  %v121 = vld [vmem:[%s1 + $0x5c] sm:$0xf]
  %v122 = vld [vmem:[%s1 + $0x60] sm:$0xf]
  %v123 = vld [vmem:[%s1 + $0x64] sm:$0xf]
  %v124 = vld [vmem:[%s1 + $0x68] sm:$0xf]
  %v125 = vld [vmem:[%s1 + $0x6c] sm:$0xf]
  %v126 = vld [vmem:[%s1 + $0x70] sm:$0xf]
  %v127 = vld [vmem:[%s1 + $0x74] sm:$0xf]
  %v128 = vld [vmem:[%s1 + $0x78] sm:$0xf]
  %v129 = vld [vmem:[%s1 + $0x7c] sm:$0xf]
  %v130 = vld [vmem:[%s1 + $0x80] sm:$0xf]
  %v131 = vld [vmem:[%s1 + $0x84] sm:$0xf]
  %v132 = vld [vmem:[%s1 + $0x88] sm:$0xf]
  %v133 = vld [vmem:[%s1 + $0x8c] sm:$0xf]
  %v134 = vld [vmem:[%s1 + $0x90] sm:$0xf]
  %v135 = vld [vmem:[%s1 + $0x94] sm:$0xf]
  %v136 = vld [vmem:[%s1 + $0x98] sm:$0xf]
  %v137 = vld [vmem:[%s1 + $0x9c] sm:$0xf]
  %v138 = vld [vmem:[%s1 + $0xa0] sm:$0xf]
  %v139 = vld [vmem:[%s1 + $0xa4] sm:$0xf]
  %v140 = vld [vmem:[%s1 + $0xa8] sm:$0xf]
  %v141 = vld [vmem:[%s1 + $0xac] sm:$0xf]
  %v142 = vld [vmem:[%s1 + $0xb0] sm:$0xf]
  %v143 = vld [vmem:[%s1 + $0xb4] sm:$0xf]
  %v144 = vld [vmem:[%s1 + $0xb8] sm:$0xf]
  %v145 = vld [vmem:[%s1 + $0xbc] sm:$0xf]
  %v146 = vld [vmem:[%s1 + $0xc0] sm:$0xf]
  %v147 = vld [vmem:[%s1 + $0xc4] sm:$0xf]
  %v148 = vld [vmem:[%s1 + $0xc8] sm:$0xf]
  %v149 = vld [vmem:[%s1 + $0xcc] sm:$0xf]
  %v150 = vld [vmem:[%s1 + $0xd0] sm:$0xf]
  %v151 = vld [vmem:[%s1 + $0xd4] sm:$0xf]
  %v152 = vld [vmem:[%s1 + $0xd8] sm:$0xf]
  %v153 = vld [vmem:[%s1 + $0xdc] sm:$0xf]
  %v154 = vld [vmem:[%s1 + $0xe0] sm:$0xf]
  %v155 = vld [vmem:[%s1 + $0xe4] sm:$0xf]
  %v156 = vld [vmem:[%s1 + $0xe8] sm:$0xf]
  %v157 = vld [vmem:[%s1 + $0xec] sm:$0xf]
  %v158 = vld [vmem:[%s1 + $0xf0] sm:$0xf]
  %v159 = vld [vmem:[%s1 + $0xf4] sm:$0xf]
  %v160 = vld [vmem:[%s1 + $0xf8] sm:$0xf]
  %v161 = vld [vmem:[%s1 + $0xfc] sm:$0xf]
  %v162 = vld [vmem:[%s1 + $0x100] sm:$0xf]
  %v163 = vld [vmem:[%s1 + $0x104] sm:$0xf]
  %v164 = vld [vmem:[%s1 + $0x108] sm:$0xf]
  %v165 = vld [vmem:[%s1 + $0x10c] sm:$0xf]
  %v166 = vld [vmem:[%s1 + $0x110] sm:$0xf]
  %v167 = vld [vmem:[%s1 + $0x114] sm:$0xf]
  %v168 = vld [vmem:[%s1 + $0x118] sm:$0xf]
  %v169 = vld [vmem:[%s1 + $0x11c] sm:$0xf]
  %v170 = vld [vmem:[%s1 + $0x120] sm:$0xf]
  %v171 = vld [vmem:[%s1 + $0x124] sm:$0xf]
  %v172 = vld [vmem:[%s1 + $0x128] sm:$0xf]
  %v173 = vld [vmem:[%s1 + $0x12c] sm:$0xf]
  %v174 = vld [vmem:[%s1 + $0x130] sm:$0xf]
  %v175 = vld [vmem:[%s1 + $0x134] sm:$0xf]
  %v176 = vld [vmem:[%s1 + $0x138] sm:$0xf]
  %v177 = vld [vmem:[%s1 + $0x13c] sm:$0xf]
  %v178 = vld [vmem:[%s1 + $0x140] sm:$0xf]
  %v179 = vld [vmem:[%s1 + $0x144] sm:$0xf]
  %v180 = vld [vmem:[%s1 + $0x148] sm:$0xf]
  %v181 = vld [vmem:[%s1 + $0x14c] sm:$0xf]
  %v182 = vld [vmem:[%s1 + $0x150] sm:$0xf]
  %v183 = vld [vmem:[%s1 + $0x154] sm:$0xf]
  %v184 = vld [vmem:[%s1 + $0x158] sm:$0xf]
  %v185 = vld [vmem:[%s1 + $0x15c] sm:$0xf]
  %v186 = vld [vmem:[%s1 + $0x160] sm:$0xf]
  %v187 = vld [vmem:[%s1 + $0x164] sm:$0xf]
  %v188 = vld [vmem:[%s1 + $0x168] sm:$0xf]
  %v189 = vld [vmem:[%s1 + $0x16c] sm:$0xf]
  %v190 = vld [vmem:[%s1 + $0x170] sm:$0xf]
  %v191 = vld [vmem:[%s1 + $0x174] sm:$0xf]
  %v192 = vld [vmem:[%s1 + $0x178] sm:$0xf]
  %v193 = vld [vmem:[%s1 + $0x17c] sm:$0xf]
  %v194 = vld [vmem:[%s1 + $0x180] sm:$0xf]
  %v195 = vld [vmem:[%s1 + $0x184] sm:$0xf]
  %v196 = vld [vmem:[%s1 + $0x188] sm:$0xf]
  %v197 = vld [vmem:[%s1 + $0x18c] sm:$0xf]
  %v198 = vld [vmem:[%s1 + $0x190] sm:$0xf]
  %v199 = vld [vmem:[%s1 + $0x194] sm:$0xf]
  %v200 = vld [vmem:[%s1 + $0x198] sm:$0xf]
  %v201 = vld [vmem:[%s1 + $0x19c] sm:$0xf]
  %v202 = vld [vmem:[%s1 + $0x1a0] sm:$0xf]
  %v203 = vld [vmem:[%s1 + $0x1a4] sm:$0xf]
  %v204 = vld [vmem:[%s1 + $0x1a8] sm:$0xf]
  %v205 = vld [vmem:[%s1 + $0x1ac] sm:$0xf]
  %v206 = vld [vmem:[%s1 + $0x1b0] sm:$0xf]
  %v207 = vld [vmem:[%s1 + $0x1b4] sm:$0xf]
  %v208 = vld [vmem:[%s1 + $0x1b8] sm:$0xf]
  %v209 = vld [vmem:[%s1 + $0x1bc] sm:$0xf]
  %v210 = vld [vmem:[%s1 + $0x1c0] sm:$0xf]
  %v211 = vld [vmem:[%s1 + $0x1c4] sm:$0xf]
  %v212 = vld [vmem:[%s1 + $0x1c8] sm:$0xf]
  %v213 = vld [vmem:[%s1 + $0x1cc] sm:$0xf]
  %v214 = vld [vmem:[%s1 + $0x1d0] sm:$0xf]
  %v215 = vld [vmem:[%s1 + $0x1d4] sm:$0xf]
  %v216 = vld [vmem:[%s1 + $0x1d8] sm:$0xf]
  %v217 = vld [vmem:[%s1 + $0x1dc] sm:$0xf]
  %v218 = vld [vmem:[%s1 + $0x1e0] sm:$0xf]
  %v219 = vld [vmem:[%s1 + $0x1e4] sm:$0xf]
  %v220 = vld [vmem:[%s1 + $0x1e8] sm:$0xf]
  %v221 = vld [vmem:[%s1 + $0x1ec] sm:$0xf]
  %v222 = vld [vmem:[%s1 + $0x1f0] sm:$0xf]
  %v223 = vld [vmem:[%s1 + $0x1f4] sm:$0xf]
  %v224 = vld [vmem:[%s1 + $0x1f8] sm:$0xf]
  %v225 = vld [vmem:[%s1 + $0x1fc] sm:$0xf]
  %v226 = vld [vmem:[%s1 + $0x200] sm:$0xf]
  %v227 = vld [vmem:[%s1 + $0x204] sm:$0xf]
  %v228 = vld [vmem:[%s1 + $0x208] sm:$0xf]
  %v229 = vld [vmem:[%s1 + $0x20c] sm:$0xf]
  %v230 = vld [vmem:[%s1 + $0x210] sm:$0xf]
  %v231 = vld [vmem:[%s1 + $0x214] sm:$0xf]
  %v232 = vld [vmem:[%s1 + $0x218] sm:$0xf]
  %v233 = vld [vmem:[%s1 + $0x21c] sm:$0xf]
  %v234 = vld [vmem:[%s1 + $0x220] sm:$0xf]
  %v235 = vld [vmem:[%s1 + $0x224] sm:$0xf]
  %v236 = vld [vmem:[%s1 + $0x228] sm:$0xf]
  %v237 = vld [vmem:[%s1 + $0x22c] sm:$0xf]
  %v238 = vld [vmem:[%s1 + $0x230] sm:$0xf]
  %v239 = vld [vmem:[%s1 + $0x234] sm:$0xf]
  %v240 = vld [vmem:[%s1 + $0x238] sm:$0xf]
  %v241 = vld [vmem:[%s1 + $0x23c] sm:$0xf]
  %v262 = vunpack.c.l.b16 %v78
  %v263 = vunpack.c.h.b16 %v78
  %v264 = vunpack.c.l.b16 %v79
  %v265 = vunpack.c.h.b16 %v79
  %v266 = vunpack.c.l.b16 %v80
  %v267 = vunpack.c.h.b16 %v80
  %v268 = vunpack.c.l.b16 %v81
  %v269 = vunpack.c.h.b16 %v81
  %v270 = vunpack.c.l.b16 %v82
  %v271 = vunpack.c.l.b16 %v83
  %v272 = vunpack.c.h.b16 %v83
  %v273 = vunpack.c.l.b16 %v84
  %v274 = vunpack.c.h.b16 %v84
  %v275 = vunpack.c.l.b16 %v85
  %v276 = vunpack.c.h.b16 %v85
  %v277 = vunpack.c.l.b16 %v86
  %v278 = vunpack.c.h.b16 %v86
  %v279 = vunpack.c.l.b16 %v87
  %v280 = vunpack.c.l.b16 %v88
  %v281 = vunpack.c.h.b16 %v88
  %v282 = vunpack.c.l.b16 %v89
  %v283 = vunpack.c.h.b16 %v89
  %v284 = vunpack.c.l.b16 %v90
  %v285 = vunpack.c.h.b16 %v90
  %v286 = vunpack.c.l.b16 %v91
  %v287 = vunpack.c.h.b16 %v91
  %v288 = vunpack.c.l.b16 %v92
  %v289 = vunpack.c.l.b16 %v93
  %v290 = vunpack.c.h.b16 %v93
  %v291 = vunpack.c.l.b16 %v94
  %v292 = vunpack.c.h.b16 %v94
  %v293 = vunpack.c.l.b16 %v95
  %v294 = vunpack.c.h.b16 %v95
  %v295 = vunpack.c.l.b16 %v96
  %v296 = vunpack.c.h.b16 %v96
  %v297 = vunpack.c.l.b16 %v97
  %v298 = vpack.c.b16 %v271, %v262
  %v299 = vpack.c.b16 %v272, %v263
  %v300 = vpack.c.b16 %v273, %v264
  %v301 = vpack.c.b16 %v274, %v265
  %v302 = vpack.c.b16 %v275, %v266
  %v303 = vpack.c.b16 %v276, %v267
  %v304 = vpack.c.b16 %v277, %v268
  %v305 = vpack.c.b16 %v278, %v269
  %v306 = vpack.c.b16 %v279, %v270
  %v307 = vpack.c.b16 %v289, %v280
  %v308 = vpack.c.b16 %v290, %v281
  %v309 = vpack.c.b16 %v291, %v282
  %v310 = vpack.c.b16 %v292, %v283
  %v311 = vpack.c.b16 %v293, %v284
  %v312 = vpack.c.b16 %v294, %v285
  %v313 = vpack.c.b16 %v295, %v286
  %v314 = vpack.c.b16 %v296, %v287
  %v315 = vpack.c.b16 %v297, %v288
  %v478 = vunpack.c.l.b16 %v98
  %v479 = vunpack.c.l.b16 %v99
  %v480 = vunpack.c.l.b16 %v100
  %v481 = vunpack.c.l.b16 %v101
  %v482 = vunpack.c.l.b16 %v102
  %v483 = vunpack.c.l.b16 %v103
  %v484 = vunpack.c.l.b16 %v104
  %v485 = vunpack.c.l.b16 %v105
  %v486 = vunpack.c.l.b16 %v106
  %v487 = vunpack.c.l.b16 %v107
  %v488 = vunpack.c.l.b16 %v108
  %v489 = vunpack.c.l.b16 %v109
  %v490 = vunpack.c.l.b16 %v110
  %v491 = vunpack.c.l.b16 %v111
  %v492 = vunpack.c.l.b16 %v112
  %v493 = vunpack.c.l.b16 %v113
  %v494 = vunpack.c.l.b16 %v114
  %v495 = vunpack.c.l.b16 %v115
  %v496 = vunpack.c.l.b16 %v116
  %v497 = vunpack.c.l.b16 %v117
  %v498 = vunpack.c.l.b16 %v118
  %v499 = vunpack.c.l.b16 %v119
  %v500 = vunpack.c.l.b16 %v120
  %v501 = vunpack.c.l.b16 %v121
  %v502 = vunpack.c.l.b16 %v122
  %v503 = vunpack.c.l.b16 %v123
  %v504 = vunpack.c.l.b16 %v124
  %v505 = vunpack.c.l.b16 %v125
  %v506 = vunpack.c.l.b16 %v126
  %v507 = vunpack.c.l.b16 %v127
  %v508 = vunpack.c.l.b16 %v128
  %v509 = vunpack.c.l.b16 %v129
  %v510 = vunpack.c.l.b16 %v130
  %v511 = vunpack.c.l.b16 %v131
  %v512 = vunpack.c.l.b16 %v132
  %v513 = vunpack.c.l.b16 %v133
  %v514 = vunpack.c.l.b16 %v134
  %v515 = vunpack.c.l.b16 %v135
  %v516 = vunpack.c.l.b16 %v136
  %v517 = vunpack.c.l.b16 %v137
  %v518 = vunpack.c.l.b16 %v138
  %v519 = vunpack.c.l.b16 %v139
  %v520 = vunpack.c.l.b16 %v140
  %v521 = vunpack.c.l.b16 %v141
  %v522 = vunpack.c.l.b16 %v142
  %v523 = vunpack.c.l.b16 %v143
  %v524 = vunpack.c.l.b16 %v144
  %v525 = vunpack.c.l.b16 %v145
  %v526 = vunpack.c.l.b16 %v146
  %v527 = vunpack.c.l.b16 %v147
  %v528 = vunpack.c.l.b16 %v148
  %v529 = vunpack.c.l.b16 %v149
  %v530 = vunpack.c.l.b16 %v150
  %v531 = vunpack.c.l.b16 %v151
  %v532 = vunpack.c.l.b16 %v152
  %v533 = vunpack.c.l.b16 %v153
  %v534 = vunpack.c.l.b16 %v154
  %v535 = vunpack.c.l.b16 %v155
  %v536 = vunpack.c.l.b16 %v156
  %v537 = vunpack.c.l.b16 %v157
  %v538 = vunpack.c.l.b16 %v158
  %v539 = vunpack.c.l.b16 %v159
  %v540 = vunpack.c.l.b16 %v160
  %v541 = vunpack.c.l.b16 %v161
  %v542 = vunpack.c.l.b16 %v162
  %v543 = vunpack.c.l.b16 %v163
  %v544 = vunpack.c.l.b16 %v164
  %v545 = vunpack.c.l.b16 %v165
  %v546 = vunpack.c.l.b16 %v166
  %v547 = vunpack.c.l.b16 %v167
  %v548 = vunpack.c.l.b16 %v168
  %v549 = vunpack.c.l.b16 %v169
  %v550 = vunpack.c.l.b16 %v170
  %v551 = vunpack.c.l.b16 %v171
  %v552 = vunpack.c.l.b16 %v172
  %v553 = vunpack.c.l.b16 %v173
  %v554 = vunpack.c.l.b16 %v174
  %v555 = vunpack.c.l.b16 %v175
  %v556 = vunpack.c.l.b16 %v176
  %v557 = vunpack.c.l.b16 %v177
  %v558 = vunpack.c.l.b16 %v178
  %v559 = vunpack.c.l.b16 %v179
  %v560 = vunpack.c.l.b16 %v180
  %v561 = vunpack.c.l.b16 %v181
  %v562 = vunpack.c.l.b16 %v182
  %v563 = vunpack.c.l.b16 %v183
  %v564 = vunpack.c.l.b16 %v184
  %v565 = vunpack.c.l.b16 %v185
  %v566 = vunpack.c.l.b16 %v186
  %v567 = vunpack.c.l.b16 %v187
  %v568 = vunpack.c.l.b16 %v188
  %v569 = vunpack.c.l.b16 %v189
  %v570 = vunpack.c.l.b16 %v190
  %v571 = vunpack.c.l.b16 %v191
  %v572 = vunpack.c.l.b16 %v192
  %v573 = vunpack.c.l.b16 %v193
  %v574 = vunpack.c.l.b16 %v194
  %v575 = vunpack.c.l.b16 %v195
  %v576 = vunpack.c.l.b16 %v196
  %v577 = vunpack.c.l.b16 %v197
  %v578 = vunpack.c.l.b16 %v198
  %v579 = vunpack.c.l.b16 %v199
  %v580 = vunpack.c.l.b16 %v200
  %v581 = vunpack.c.l.b16 %v201
  %v582 = vunpack.c.l.b16 %v202
  %v583 = vunpack.c.l.b16 %v203
  %v584 = vunpack.c.l.b16 %v204
  %v585 = vunpack.c.l.b16 %v205
  %v586 = vunpack.c.l.b16 %v206
  %v587 = vunpack.c.l.b16 %v207
  %v588 = vunpack.c.l.b16 %v208
  %v589 = vunpack.c.l.b16 %v209
  %v590 = vunpack.c.l.b16 %v210
  %v591 = vunpack.c.l.b16 %v211
  %v592 = vunpack.c.l.b16 %v212
  %v593 = vunpack.c.l.b16 %v213
  %v594 = vunpack.c.l.b16 %v214
  %v595 = vunpack.c.l.b16 %v215
  %v596 = vunpack.c.l.b16 %v216
  %v597 = vunpack.c.l.b16 %v217
  %v598 = vunpack.c.l.b16 %v218
  %v599 = vunpack.c.l.b16 %v219
  %v600 = vunpack.c.l.b16 %v220
  %v601 = vunpack.c.l.b16 %v221
  %v602 = vunpack.c.l.b16 %v222
  %v603 = vunpack.c.l.b16 %v223
  %v604 = vunpack.c.l.b16 %v224
  %v605 = vunpack.c.l.b16 %v225
  %v606 = vunpack.c.l.b16 %v226
  %v607 = vunpack.c.l.b16 %v227
  %v608 = vunpack.c.l.b16 %v228
  %v609 = vunpack.c.l.b16 %v229
  %v610 = vunpack.c.l.b16 %v230
  %v611 = vunpack.c.l.b16 %v231
  %v612 = vunpack.c.l.b16 %v232
  %v613 = vunpack.c.l.b16 %v233
  %v614 = vunpack.c.l.b16 %v234
  %v615 = vunpack.c.l.b16 %v235
  %v616 = vunpack.c.l.b16 %v236
  %v617 = vunpack.c.l.b16 %v237
  %v618 = vunpack.c.l.b16 %v238
  %v619 = vunpack.c.l.b16 %v239
  %v620 = vunpack.c.l.b16 %v240
  %v621 = vunpack.c.l.b16 %v241
  %v622 = vpack.c.b16 %v479, %v478
  %v623 = vpack.c.b16 %v481, %v480
  %v624 = vpack.c.b16 %v483, %v482
  %v625 = vpack.c.b16 %v485, %v484
  %v626 = vpack.c.b16 %v487, %v486
  %v627 = vpack.c.b16 %v489, %v488
  %v628 = vpack.c.b16 %v491, %v490
  %v629 = vpack.c.b16 %v493, %v492
  %v630 = vpack.c.b16 %v495, %v494
  %v631 = vpack.c.b16 %v497, %v496
  %v632 = vpack.c.b16 %v499, %v498
  %v633 = vpack.c.b16 %v501, %v500
  %v634 = vpack.c.b16 %v503, %v502
  %v635 = vpack.c.b16 %v505, %v504
  %v636 = vpack.c.b16 %v507, %v506
  %v637 = vpack.c.b16 %v509, %v508
  %v638 = vpack.c.b16 %v511, %v510
  %v639 = vpack.c.b16 %v513, %v512
  %v640 = vpack.c.b16 %v515, %v514
  %v641 = vpack.c.b16 %v517, %v516
  %v642 = vpack.c.b16 %v519, %v518
  %v643 = vpack.c.b16 %v521, %v520
  %v644 = vpack.c.b16 %v523, %v522
  %v645 = vpack.c.b16 %v525, %v524
  %v646 = vpack.c.b16 %v527, %v526
  %v647 = vpack.c.b16 %v529, %v528
  %v648 = vpack.c.b16 %v531, %v530
  %v649 = vpack.c.b16 %v533, %v532
  %v650 = vpack.c.b16 %v535, %v534
  %v651 = vpack.c.b16 %v537, %v536
  %v652 = vpack.c.b16 %v539, %v538
  %v653 = vpack.c.b16 %v541, %v540
  %v654 = vpack.c.b16 %v543, %v542
  %v655 = vpack.c.b16 %v545, %v544
  %v656 = vpack.c.b16 %v547, %v546
  %v657 = vpack.c.b16 %v549, %v548
  %v658 = vpack.c.b16 %v551, %v550
  %v659 = vpack.c.b16 %v553, %v552
  %v660 = vpack.c.b16 %v555, %v554
  %v661 = vpack.c.b16 %v557, %v556
  %v662 = vpack.c.b16 %v559, %v558
  %v663 = vpack.c.b16 %v561, %v560
  %v664 = vpack.c.b16 %v563, %v562
  %v665 = vpack.c.b16 %v565, %v564
  %v666 = vpack.c.b16 %v567, %v566
  %v667 = vpack.c.b16 %v569, %v568
  %v668 = vpack.c.b16 %v571, %v570
  %v669 = vpack.c.b16 %v573, %v572
  %v670 = vpack.c.b16 %v575, %v574
  %v671 = vpack.c.b16 %v577, %v576
  %v672 = vpack.c.b16 %v579, %v578
  %v673 = vpack.c.b16 %v581, %v580
  %v674 = vpack.c.b16 %v583, %v582
  %v675 = vpack.c.b16 %v585, %v584
  %v676 = vpack.c.b16 %v587, %v586
  %v677 = vpack.c.b16 %v589, %v588
  %v678 = vpack.c.b16 %v591, %v590
  %v679 = vpack.c.b16 %v593, %v592
  %v680 = vpack.c.b16 %v595, %v594
  %v681 = vpack.c.b16 %v597, %v596
  %v682 = vpack.c.b16 %v599, %v598
  %v683 = vpack.c.b16 %v601, %v600
  %v684 = vpack.c.b16 %v603, %v602
  %v685 = vpack.c.b16 %v605, %v604
  %v686 = vpack.c.b16 %v607, %v606
  %v687 = vpack.c.b16 %v609, %v608
  %v688 = vpack.c.b16 %v611, %v610
  %v689 = vpack.c.b16 %v613, %v612
  %v690 = vpack.c.b16 %v615, %v614
  %v691 = vpack.c.b16 %v617, %v616
  %v692 = vpack.c.b16 %v619, %v618
  %v693 = vpack.c.b16 %v621, %v620
  %766 = vmatprep.subr.bf16.mxu0 0
  %767 = vmatpush1.bf16.msra.mxu0 %v622
  %768 = vmatprep.subr.bf16.mxu0 0
  %769 = vmatpush1.bf16.msra.mxu0 %v623
  %770 = vmatprep.subr.bf16.mxu0 0
  %771 = vmatpush1.bf16.msra.mxu0 %v624
  %772 = vmatprep.subr.bf16.mxu0 0
  %773 = vmatpush1.bf16.msra.mxu0 %v625
  %774 = vmatprep.subr.bf16.mxu0 0
  %775 = vmatpush1.bf16.msra.mxu0 %v626
  %776 = vmatprep.subr.bf16.mxu0 0
  %777 = vmatpush1.bf16.msra.mxu0 %v627
  %778 = vmatprep.subr.bf16.mxu0 0
  %779 = vmatpush1.bf16.msra.mxu0 %v628
  %780 = vmatprep.subr.bf16.mxu0 0
  %781 = vmatpush1.bf16.msra.mxu0 %v629
  %782 = vmatprep.subr.bf16.mxu0 0
  %783 = vmatpush1.bf16.msra.mxu0 %v630
  %784 = vmatprep.subr.bf16.mxu0 0
  %785 = vmatpush1.bf16.msra.mxu0 %v631
  %786 = vmatprep.subr.bf16.mxu0 0
  %787 = vmatpush1.bf16.msra.mxu0 %v632
  %788 = vmatprep.subr.bf16.mxu0 0
  %789 = vmatpush1.bf16.msra.mxu0 %v633
  %790 = vmatprep.subr.bf16.mxu0 0
  %791 = vmatpush1.bf16.msra.mxu0 %v634
  %792 = vmatprep.subr.bf16.mxu0 0
  %793 = vmatpush1.bf16.msra.mxu0 %v635
  %794 = vmatprep.subr.bf16.mxu0 0
  %795 = vmatpush1.bf16.msra.mxu0 %v636
  %796 = vmatprep.subr.bf16.mxu0 0
  %797 = vmatpush1.bf16.msra.mxu0 %v637
  %798 = vmatprep.mubr.bf16.mxu0 %v299
  %799 = vmatmul.mubr.bf16.gmra.mrb[0].mxu0 %v298
  %v800 = vpop.f32.mrb[0].mxu0
  %v801 = vadd.f32 0.0, %v800
  %v802 = vpop.f32.mrb[0].mxu0
  %v803 = vpop.f32.mrb[0].mxu0
  %v804 = vadd.f32 0.0, %v803
  %v805 = vpop.f32.mrb[0].mxu0
  %806 = vmatprep.mubr.bf16.mxu0 %v308
  %807 = vmatmul.mubr.bf16.gmra.mrb[0].mxu0 %v307
  %v808 = vpop.f32.mrb[0].mxu0
  %v809 = vadd.f32 0.0, %v808
  %v810 = vpop.f32.mrb[0].mxu0
  %v811 = vpop.f32.mrb[0].mxu0
  %v812 = vadd.f32 0.0, %v811
  %v813 = vpop.f32.mrb[0].mxu0
  %814 = vdwg.mxu0
  %815 = vmatprep.subr.bf16.mxu0 0
  %816 = vmatpush1.bf16.msra.mxu0 %v638
  %817 = vmatprep.subr.bf16.mxu0 0
  %818 = vmatpush1.bf16.msra.mxu0 %v639
  %819 = vmatprep.subr.bf16.mxu0 0
  %820 = vmatpush1.bf16.msra.mxu0 %v640
  %821 = vmatprep.subr.bf16.mxu0 0
  %822 = vmatpush1.bf16.msra.mxu0 %v641
  %823 = vmatprep.subr.bf16.mxu0 0
  %824 = vmatpush1.bf16.msra.mxu0 %v642
  %825 = vmatprep.subr.bf16.mxu0 0
  %826 = vmatpush1.bf16.msra.mxu0 %v643
  %827 = vmatprep.subr.bf16.mxu0 0
  %828 = vmatpush1.bf16.msra.mxu0 %v644
  %829 = vmatprep.subr.bf16.mxu0 0
  %830 = vmatpush1.bf16.msra.mxu0 %v645
  %831 = vmatprep.subr.bf16.mxu0 0
  %832 = vmatpush1.bf16.msra.mxu0 %v646
  %833 = vmatprep.subr.bf16.mxu0 0
  %834 = vmatpush1.bf16.msra.mxu0 %v647
  %835 = vmatprep.subr.bf16.mxu0 0
  %836 = vmatpush1.bf16.msra.mxu0 %v648
  %837 = vmatprep.subr.bf16.mxu0 0
  %838 = vmatpush1.bf16.msra.mxu0 %v649
  %839 = vmatprep.subr.bf16.mxu0 0
  %840 = vmatpush1.bf16.msra.mxu0 %v650
  %841 = vmatprep.subr.bf16.mxu0 0
  %842 = vmatpush1.bf16.msra.mxu0 %v651
  %843 = vmatprep.subr.bf16.mxu0 0
  %844 = vmatpush1.bf16.msra.mxu0 %v652
  %845 = vmatprep.subr.bf16.mxu0 0
  %846 = vmatpush1.bf16.msra.mxu0 %v653
  %847 = vmatprep.mubr.bf16.mxu0 %v301
  %848 = vmatmul.mubr.bf16.gmra.mrb[0].mxu0 %v300
  %v849 = vpop.f32.mrb[0].mxu0
  %v850 = vadd.f32 %v801, %v849
  %v851 = vpop.f32.mrb[0].mxu0
  %v852 = vpop.f32.mrb[0].mxu0
  %v853 = vadd.f32 %v804, %v852
  %v854 = vpop.f32.mrb[0].mxu0
  %855 = vmatprep.mubr.bf16.mxu0 %v310
  %856 = vmatmul.mubr.bf16.gmra.mrb[0].mxu0 %v309
  %v857 = vpop.f32.mrb[0].mxu0
  %v858 = vadd.f32 %v809, %v857
  %v859 = vpop.f32.mrb[0].mxu0
  %v860 = vpop.f32.mrb[0].mxu0
  %v861 = vadd.f32 %v812, %v860
  %v862 = vpop.f32.mrb[0].mxu0
  %863 = vdwg.mxu0
  %864 = vmatprep.subr.bf16.mxu0 0
  %865 = vmatpush1.bf16.msra.mxu0 %v654
  %866 = vmatprep.subr.bf16.mxu0 0
  %867 = vmatpush1.bf16.msra.mxu0 %v655
  %868 = vmatprep.subr.bf16.mxu0 0
  %869 = vmatpush1.bf16.msra.mxu0 %v656
  %870 = vmatprep.subr.bf16.mxu0 0
  %871 = vmatpush1.bf16.msra.mxu0 %v657
  %872 = vmatprep.subr.bf16.mxu0 0
  %873 = vmatpush1.bf16.msra.mxu0 %v658
  %874 = vmatprep.subr.bf16.mxu0 0
  %875 = vmatpush1.bf16.msra.mxu0 %v659
  %876 = vmatprep.subr.bf16.mxu0 0
  %877 = vmatpush1.bf16.msra.mxu0 %v660
  %878 = vmatprep.subr.bf16.mxu0 0
  %879 = vmatpush1.bf16.msra.mxu0 %v661
  %880 = vmatprep.subr.bf16.mxu0 0
  %881 = vmatpush1.bf16.msra.mxu0 %v662
  %882 = vmatprep.subr.bf16.mxu0 0
  %883 = vmatpush1.bf16.msra.mxu0 %v663
  %884 = vmatprep.subr.bf16.mxu0 0
  %885 = vmatpush1.bf16.msra.mxu0 %v664
  %886 = vmatprep.subr.bf16.mxu0 0
  %887 = vmatpush1.bf16.msra.mxu0 %v665
  %888 = vmatprep.subr.bf16.mxu0 0
  %889 = vmatpush1.bf16.msra.mxu0 %v666
  %890 = vmatprep.subr.bf16.mxu0 0
  %891 = vmatpush1.bf16.msra.mxu0 %v667
  %892 = vmatprep.subr.bf16.mxu0 0
  %893 = vmatpush1.bf16.msra.mxu0 %v668
  %894 = vmatprep.subr.bf16.mxu0 0
  %895 = vmatpush1.bf16.msra.mxu0 %v669
  %896 = vmatprep.mubr.bf16.mxu0 %v303
  %897 = vmatmul.mubr.bf16.gmra.mrb[0].mxu0 %v302
  %v898 = vpop.f32.mrb[0].mxu0
  %v899 = vadd.f32 %v850, %v898
  %v900 = vpop.f32.mrb[0].mxu0
  %v901 = vpop.f32.mrb[0].mxu0
  %v902 = vadd.f32 %v853, %v901
  %v903 = vpop.f32.mrb[0].mxu0
  %904 = vmatprep.mubr.bf16.mxu0 %v312
  %905 = vmatmul.mubr.bf16.gmra.mrb[0].mxu0 %v311
  %v906 = vpop.f32.mrb[0].mxu0
  %v907 = vadd.f32 %v858, %v906
  %v908 = vpop.f32.mrb[0].mxu0
  %v909 = vpop.f32.mrb[0].mxu0
  %v910 = vadd.f32 %v861, %v909
  %v911 = vpop.f32.mrb[0].mxu0
  %912 = vdwg.mxu0
  %913 = vmatprep.subr.bf16.mxu0 0
  %914 = vmatpush1.bf16.msra.mxu0 %v670
  %915 = vmatprep.subr.bf16.mxu0 0
  %916 = vmatpush1.bf16.msra.mxu0 %v671
  %917 = vmatprep.subr.bf16.mxu0 0
  %918 = vmatpush1.bf16.msra.mxu0 %v672
  %919 = vmatprep.subr.bf16.mxu0 0
  %920 = vmatpush1.bf16.msra.mxu0 %v673
  %921 = vmatprep.subr.bf16.mxu0 0
  %922 = vmatpush1.bf16.msra.mxu0 %v674
  %923 = vmatprep.subr.bf16.mxu0 0
  %924 = vmatpush1.bf16.msra.mxu0 %v675
  %925 = vmatprep.subr.bf16.mxu0 0
  %926 = vmatpush1.bf16.msra.mxu0 %v676
  %927 = vmatprep.subr.bf16.mxu0 0
  %928 = vmatpush1.bf16.msra.mxu0 %v677
  %929 = vmatprep.subr.bf16.mxu0 0
  %930 = vmatpush1.bf16.msra.mxu0 %v678
  %931 = vmatprep.subr.bf16.mxu0 0
  %932 = vmatpush1.bf16.msra.mxu0 %v679
  %933 = vmatprep.subr.bf16.mxu0 0
  %934 = vmatpush1.bf16.msra.mxu0 %v680
  %935 = vmatprep.subr.bf16.mxu0 0
  %936 = vmatpush1.bf16.msra.mxu0 %v681
  %937 = vmatprep.subr.bf16.mxu0 0
  %938 = vmatpush1.bf16.msra.mxu0 %v682
  %939 = vmatprep.subr.bf16.mxu0 0
  %940 = vmatpush1.bf16.msra.mxu0 %v683
  %941 = vmatprep.subr.bf16.mxu0 0
  %942 = vmatpush1.bf16.msra.mxu0 %v684
  %943 = vmatprep.subr.bf16.mxu0 0
  %944 = vmatpush1.bf16.msra.mxu0 %v685
  %945 = vmatprep.mubr.bf16.mxu0 %v305
  %946 = vmatmul.mubr.bf16.gmra.mrb[0].mxu0 %v304
  %v947 = vpop.f32.mrb[0].mxu0
  %v948 = vadd.f32 %v899, %v947
  %v949 = vpop.f32.mrb[0].mxu0
  %v950 = vpop.f32.mrb[0].mxu0
  %v951 = vadd.f32 %v902, %v950
  %v952 = vpop.f32.mrb[0].mxu0
  %953 = vmatprep.mubr.bf16.mxu0 %v314
  %954 = vmatmul.mubr.bf16.gmra.mrb[0].mxu0 %v313
  %v955 = vpop.f32.mrb[0].mxu0
  %v956 = vadd.f32 %v907, %v955
  %v957 = vpop.f32.mrb[0].mxu0
  %v958 = vpop.f32.mrb[0].mxu0
  %v959 = vadd.f32 %v910, %v958
  %v960 = vpop.f32.mrb[0].mxu0
  %961 = vdwg.mxu0
  %962 = vmatprep.subr.bf16.mxu0 0
  %963 = vmatpush1.bf16.msra.mxu0 %v686
  %964 = vmatprep.subr.bf16.mxu0 0
  %965 = vmatpush1.bf16.msra.mxu0 %v687
  %966 = vmatprep.subr.bf16.mxu0 0
  %967 = vmatpush1.bf16.msra.mxu0 %v688
  %968 = vmatprep.subr.bf16.mxu0 0
  %969 = vmatpush1.bf16.msra.mxu0 %v689
  %970 = vmatprep.subr.bf16.mxu0 0
  %971 = vmatpush1.bf16.msra.mxu0 %v690
  %972 = vmatprep.subr.bf16.mxu0 0
  %973 = vmatpush1.bf16.msra.mxu0 %v691
  %974 = vmatprep.subr.bf16.mxu0 0
  %975 = vmatpush1.bf16.msra.mxu0 %v692
  %976 = vmatprep.subr.bf16.mxu0 0
  %977 = vmatpush1.bf16.msra.mxu0 %v693
  %978 = vmatprep.subr.bf16.mxu0 0
  %979 = vmatpush1.bf16.msra.mxu0 0
  %980 = vmatprep.subr.bf16.mxu0 0
  %981 = vmatpush1.bf16.msra.mxu0 0
  %982 = vmatprep.subr.bf16.mxu0 0
  %983 = vmatpush1.bf16.msra.mxu0 0
  %984 = vmatprep.subr.bf16.mxu0 0
  %985 = vmatpush1.bf16.msra.mxu0 0
  %986 = vmatprep.subr.bf16.mxu0 0
  %987 = vmatpush1.bf16.msra.mxu0 0
  %988 = vmatprep.subr.bf16.mxu0 0
  %989 = vmatpush1.bf16.msra.mxu0 0
  %990 = vmatprep.subr.bf16.mxu0 0
  %991 = vmatpush1.bf16.msra.mxu0 0
  %992 = vmatprep.subr.bf16.mxu0 0
  %993 = vmatpush1.bf16.msra.mxu0 0
  %994 = vmatprep.mubr.bf16.mxu0 0
  %995 = vmatmul.mubr.bf16.gmra.mrb[0].mxu0 %v306
  %v996 = vpop.f32.mrb[0].mxu0
  %v997 = vadd.f32 %v948, %v996
  %v998 = vpop.f32.mrb[0].mxu0
  %v999 = vpop.f32.mrb[0].mxu0
  %v1000 = vadd.f32 %v951, %v999
  %v1001 = vpop.f32.mrb[0].mxu0
  %1002 = vmatprep.mubr.bf16.mxu0 0
  %1003 = vmatmul.mubr.bf16.gmra.mrb[0].mxu0 %v315
  %v1004 = vpop.f32.mrb[0].mxu0
  %v1005 = vadd.f32 %v956, %v1004
  %v1006 = vpop.f32.mrb[0].mxu0
  %v1007 = vpop.f32.mrb[0].mxu0
  %v1008 = vadd.f32 %v959, %v1007
  %v1009 = vpop.f32.mrb[0].mxu0
  %1010 = vdwg.mxu0
  %v1011 = vpack.c.bf16 %v1000, %v997
  %v1012 = vpack.c.bf16 %v1008, %v1005
  %v1015 = vunpack.c.l.b16 %v1011
  %v1016 = vunpack.c.h.b16 %v1011
  %v1017 = vunpack.c.l.b16 %v1012
  %v1018 = vunpack.c.h.b16 %v1012
  %v1019 = vpack.c.b16 %v1015, %v1015
  %v1020 = vpack.c.b16 %v1016, %v1016
  %v1021 = vpack.c.b16 %v1017, %v1017
  %v1022 = vpack.c.b16 %v1018, %v1018
  %1027 = vst [vmem:[%s58] sm:$0xf] %v1019
  %1028 = vst [vmem:[%s58 + $0x4] sm:$0xf] %v1020
  %1029 = vst [vmem:[%s58 + $0x8] sm:$0xf] %v1021
  %1030 = vst [vmem:[%s58 + $0xc] sm:$0xf] %v1022
  %v1031 = vld [vmem:[%s64] sm:$0x1]
  %v1032 = vadd.f32 %v997, %v1000
  %v1033 = vadd.f32 %v1032, %v1005
  %v1034 = vadd.f32 %v1033, %v1008
  %v1035 = vrot.slane %v1034, 4
  %v1036 = vadd.f32 %v1034, %v1035
  %v1037 = vrot.slane %v1036, 2
  %v1038 = vadd.f32 %v1036, %v1037
  %v1039 = vrot.slane %v1038, 1
  %v1040 = vadd.f32 %v1038, %v1039
  %v1041 = vadd.f32 %v1031, %v1040
  %1042 = vst [vmem:[%s64] sm:$0x1] %v1041
  %v1043 = vld [vmem:[%s69] sm:$0x1]
  %v1044 = vmul.f32 %v997, %v997
  %v1045 = vmul.f32 %v1000, %v1000
  %v1046 = vmul.f32 %v1005, %v1005
  %v1047 = vmul.f32 %v1008, %v1008
  %v1048 = vadd.f32 %v1044, %v1045
  %v1049 = vadd.f32 %v1048, %v1046
  %v1050 = vadd.f32 %v1049, %v1047
  %v1051 = vrot.slane %v1050, 4
  %v1052 = vadd.f32 %v1050, %v1051
  %v1053 = vrot.slane %v1052, 2
  %v1054 = vadd.f32 %v1052, %v1053
  %v1055 = vrot.slane %v1054, 1
  %v1056 = vadd.f32 %v1054, %v1055
  %v1057 = vadd.f32 %v1043, %v1056
  %1058 = vst [vmem:[%s69] sm:$0x1] %v1057
  %s1059 = sadd.s32 0, 0
  %s1060 = smul.u32 4, %s1059
  %p1061 = scmp.lt.s32.totalorder %s1060, 3
  %s1062 = scalar_select %p1061, %s1060, 3
  %s1063 = smul.addr %s1062, 4
  %s1064 = scalar_lea.vmem %s2, %s1063
  %s1065 = sadd.s32 0, 0
  %p1066 = scmp.lt.s32.totalorder %s1065, 0
  %s1067 = scalar_select %p1066, %s1065, 0
  %s1068 = scalar_lea.vmem %s3, %s1067
  %s1069 = sadd.s32 0, 0
  %p1070 = scmp.lt.s32.totalorder %s1069, 0
  %s1071 = scalar_select %p1070, %s1069, 0
  %s1072 = scalar_lea.vmem %s4, %s1071
  // Predicated region
  $region14: #{generator_forward.21} parent=0 // pred_check
    _
  $region15: #{generator_forward.21} parent=0 // pred_check_branch
    %1074 = sbr.rel (0) target = $region17
  $region16: #{generator_forward.21} parent=0 // pred_region
    %s1075 = sadd.s32 0, 0
    %s1076 = smul.u32 4, %s1075
  $region17: #{generator_forward.21} parent=0 // pred_fallthru
    _
  // Predicated region
  $region18: #{generator_forward.21} parent=0 // pred_check
    _
  $region19: #{generator_forward.21} parent=0 // pred_check_branch
    %1078 = sbr.rel (0) target = $region21
  $region20: #{generator_forward.21} parent=0 // pred_region
    %s1079 = sadd.s32 0, 0
  $region21: #{generator_forward.21} parent=0 // pred_fallthru
    _
  // Predicated region
  $region22: #{generator_forward.21} parent=0 // pred_check
    _
  $region23: #{generator_forward.21} parent=0 // pred_check_branch
    %1081 = sbr.rel (0) target = $region25
  $region24: #{generator_forward.21} parent=0 // pred_region
    %s1082 = sadd.s32 0, 0
  $region25: #{generator_forward.21} parent=0 // pred_fallthru
    _
  // Predicated region
  $region26: #{generator_forward.21} parent=0 // pred_check
    _
  $region27: #{generator_forward.21} parent=0 // pred_check_branch
    %1084 = sbr.rel (0) target = $region29
  $region28: #{generator_forward.21} parent=0 // pred_region
    %s1085 = sadd.s32 0, 0
    %s1086 = smul.u32 4, %s1085
    %p1087 = scmp.lt.s32.totalorder %s1086, 3
    %s1088 = scalar_select %p1087, %s1086, 3
    %s1089 = smul.addr %s1088, 4
    %s1090 = scalar_lea.vmem %s2, %s1089
  $region29: #{generator_forward.21} parent=0 // pred_fallthru
    _
  // Predicated region
  $region30: #{generator_forward.21} parent=0 // pred_check
    _
  $region31: #{generator_forward.21} parent=0 // pred_check_branch
    %1092 = sbr.rel (0) target = $region33
  $region32: #{generator_forward.21} parent=0 // pred_region
    %s1093 = sadd.s32 0, 0
    %p1094 = scmp.lt.s32.totalorder %s1093, 0
    %s1095 = scalar_select %p1094, %s1093, 0
    %s1096 = scalar_lea.vmem %s3, %s1095
  $region33: #{generator_forward.21} parent=0 // pred_fallthru
    _
  // Predicated region
  $region34: #{generator_forward.21} parent=0 // pred_check
    _
  $region35: #{generator_forward.21} parent=0 // pred_check_branch
    %1098 = sbr.rel (0) target = $region37
  $region36: #{generator_forward.21} parent=0 // pred_region
    %s1099 = sadd.s32 0, 0
    %p1100 = scmp.lt.s32.totalorder %s1099, 0
    %s1101 = scalar_select %p1100, %s1099, 0
    %s1102 = scalar_lea.vmem %s4, %s1101
  $region37: #{generator_forward.21} parent=0 // pred_fallthru
    _

// kernel: generator_forward.26
$region0: #{generator_forward.26}
  #allocation0 [shape = 'u32[]', space=smem, size = 0x4, offset = 0x4, fixed_abs, tag = 'smem constant byte address 0x4 - core index']
  #allocation1 [shape = 'u32[144,128]{1,0:T(1,128)}', space=vmem, size = 0x12000, scoped, tag = 'internal scratch']
  %s0 = inlined_call_operand.vmem [shape: bf16[32,128], index: 0, kind: input, shape index: {}]
  %s1 = inlined_call_operand.vmem [shape: f32[1,1,128], index: 1, kind: input, shape index: {}]
  %s2 = inlined_call_operand.vmem [shape: f32[1,1,128], index: 2, kind: input, shape index: {}]
  %s3 = inlined_call_operand.vmem [shape: f32[1,128], index: 3, kind: input, shape index: {}]
  %s4 = inlined_call_operand.vmem [shape: f32[1,128], index: 4, kind: input, shape index: {}]
  %s5 = inlined_call_operand.vmem [shape: bf16[32,128], index: 5, kind: output, shape index: {}]
  %s6 = sld [smem:[#allocation0]]
  $region30: #{generator_forward.26} parent=0
    _
  %s8 = ssub.s32 1, %s6
  %s9 = scalar_select 0, %s8, %s6
  // Predicated region
  $region2: #{generator_forward.26} parent=0 // pred_check
    _
  $region3: #{generator_forward.26} parent=0 // pred_check_branch
    %11 = sbr.rel (0) target = $region5
  $region4: #{generator_forward.26} parent=0 // pred_region
    _
  $region5: #{generator_forward.26} parent=0 // pred_fallthru
    _
  // Predicated region
  $region6: #{generator_forward.26} parent=0 // pred_check
    _
  $region7: #{generator_forward.26} parent=0 // pred_check_branch
    %13 = sbr.rel (0) target = $region9
  $region8: #{generator_forward.26} parent=0 // pred_region
    _
  $region9: #{generator_forward.26} parent=0 // pred_fallthru
    _
  // Predicated region
  $region10: #{generator_forward.26} parent=0 // pred_check
    _
  $region11: #{generator_forward.26} parent=0 // pred_check_branch
    %15 = sbr.rel (0) target = $region13
  $region12: #{generator_forward.26} parent=0 // pred_region
    _
  $region13: #{generator_forward.26} parent=0 // pred_fallthru
    _
  // Predicated region
  $region14: #{generator_forward.26} parent=0 // pred_check
    _
  $region15: #{generator_forward.26} parent=0 // pred_check_branch
    %17 = sbr.rel (0) target = $region17
  $region16: #{generator_forward.26} parent=0 // pred_region
    _
  $region17: #{generator_forward.26} parent=0 // pred_fallthru
    _
  // Predicated region
  $region18: #{generator_forward.26} parent=0 // pred_check
    _
  $region19: #{generator_forward.26} parent=0 // pred_check_branch
    %19 = sbr.rel (0) target = $region21
  $region20: #{generator_forward.26} parent=0 // pred_region
    _
  $region21: #{generator_forward.26} parent=0 // pred_fallthru
    _
  %v20 = vld [vmem:[%s1] sm:$0x1]
  %v21 = vadd.f32 %v20, 0.0
  %v22 = vmul.f32 %v21, 0.03125
  %v23 = vld [vmem:[%s2] sm:$0x1]
  %v24 = vadd.f32 %v23, 0.0
  %v25 = vmul.f32 %v24, 0.03125
  %v26 = vmul.f32 %v22, %v22
  %v27 = vsub.f32 %v25, %v26
  %v28 = vmax.f32 %v27, 0.0
  %v29 = vld [vmem:[%s3] sm:$0x1]
  %v30 = vadd.f32 %v28, 1e-05
  %v31 = vrsqrt.pop %v30
  %v32 = vmul.f32 %v29, %v31
  %v33 = vld [vmem:[%s4] sm:$0x1]
  %v34 = vmul.f32 %v22, %v32
  %v35 = vsub.f32 %v33, %v34
  %v36 = vld [vmem:[%s0] sm:$0xf]
  %v37 = vld [vmem:[%s0 + $0x4] sm:$0xf]
  %v38 = vld [vmem:[%s0 + $0x8] sm:$0xf]
  %v39 = vld [vmem:[%s0 + $0xc] sm:$0xf]
  %v40 = vunpack.c.l.bf16 %v36
  %v41 = vunpack.c.l.bf16 %v37
  %v42 = vunpack.c.l.bf16 %v38
  %v43 = vunpack.c.l.bf16 %v39
  %v45 = vlaneseq
  %v46 = vshrl.u32 %v45, 7
  %v47 = vsub.s32 0, %v46
  %v48 = vrot.slane %v32, %v47
  %v50 = vmul.f32 %v40, %v48
  %v51 = vmul.f32 %v41, %v48
  %v52 = vmul.f32 %v42, %v48
  %v53 = vmul.f32 %v43, %v48
  %v55 = vlaneseq
  %v56 = vshrl.u32 %v55, 7
  %v57 = vsub.s32 0, %v56
  %v58 = vrot.slane %v35, %v57
  %v60 = vadd.f32 %v50, %v58
  %v61 = vadd.f32 %v51, %v58
  %v62 = vadd.f32 %v52, %v58
  %v63 = vadd.f32 %v53, %v58
  %v64 = vpack.c.bf16 %v61, %v60
  %v65 = vpack.c.bf16 %v63, %v62
  %v68 = vunpack.c.l.b16 %v64
  %v69 = vunpack.c.h.b16 %v64
  %v70 = vunpack.c.l.b16 %v65
  %v71 = vunpack.c.h.b16 %v65
  %v72 = vpack.c.b16 %v68, %v68
  %v73 = vpack.c.b16 %v69, %v69
  %v74 = vpack.c.b16 %v70, %v70
  %v75 = vpack.c.b16 %v71, %v71
  %80 = vst [vmem:[%s5] sm:$0xf] %v72
  %81 = vst [vmem:[%s5 + $0x4] sm:$0xf] %v73
  %82 = vst [vmem:[%s5 + $0x8] sm:$0xf] %v74
  %83 = vst [vmem:[%s5 + $0xc] sm:$0xf] %v75
  // Predicated region
  $region22: #{generator_forward.26} parent=0 // pred_check
    _
  $region23: #{generator_forward.26} parent=0 // pred_check_branch
    %85 = sbr.rel (0) target = $region25
  $region24: #{generator_forward.26} parent=0 // pred_region
    _
  $region25: #{generator_forward.26} parent=0 // pred_fallthru
    _
  // Predicated region
  $region26: #{generator_forward.26} parent=0 // pred_check
    _
  $region27: #{generator_forward.26} parent=0 // pred_check_branch
    %87 = sbr.rel (0) target = $region29
  $region28: #{generator_forward.26} parent=0 // pred_region
    _
  $region29: #{generator_forward.26} parent=0 // pred_fallthru
    _

// kernel: generator_forward.24
$region0: #{generator_forward.24}
  #allocation0 [shape = 'u32[]', space=smem, size = 0x4, offset = 0x4, fixed_abs, tag = 'smem constant byte address 0x4 - core index']
  #allocation1 [shape = 'u32[144,128]{1,0:T(1,128)}', space=vmem, size = 0x12000, scoped, tag = 'internal scratch']
  %s0 = inlined_call_operand.vmem [shape: bf16[32,128], index: 0, kind: input, shape index: {}]
  %s1 = inlined_call_operand.vmem [shape: f32[1,1,128], index: 1, kind: input, shape index: {}]
  %s2 = inlined_call_operand.vmem [shape: f32[1,1,128], index: 2, kind: input, shape index: {}]
  %s3 = inlined_call_operand.vmem [shape: f32[1,128], index: 3, kind: input, shape index: {}]
  %s4 = inlined_call_operand.vmem [shape: f32[1,128], index: 4, kind: input, shape index: {}]
  %s5 = inlined_call_operand.vmem [shape: bf16[32,128], index: 5, kind: output, shape index: {}]
  %s6 = sld [smem:[#allocation0]]
  $region30: #{generator_forward.24} parent=0
    _
  %s8 = ssub.s32 1, %s6
  %s9 = scalar_select 0, %s8, %s6
  // Predicated region
  $region2: #{generator_forward.24} parent=0 // pred_check
    _
  $region3: #{generator_forward.24} parent=0 // pred_check_branch
    %11 = sbr.rel (0) target = $region5
  $region4: #{generator_forward.24} parent=0 // pred_region
    _
  $region5: #{generator_forward.24} parent=0 // pred_fallthru
    _
  // Predicated region
  $region6: #{generator_forward.24} parent=0 // pred_check
    _
  $region7: #{generator_forward.24} parent=0 // pred_check_branch
    %13 = sbr.rel (0) target = $region9
  $region8: #{generator_forward.24} parent=0 // pred_region
    _
  $region9: #{generator_forward.24} parent=0 // pred_fallthru
    _
  // Predicated region
  $region10: #{generator_forward.24} parent=0 // pred_check
    _
  $region11: #{generator_forward.24} parent=0 // pred_check_branch
    %15 = sbr.rel (0) target = $region13
  $region12: #{generator_forward.24} parent=0 // pred_region
    _
  $region13: #{generator_forward.24} parent=0 // pred_fallthru
    _
  // Predicated region
  $region14: #{generator_forward.24} parent=0 // pred_check
    _
  $region15: #{generator_forward.24} parent=0 // pred_check_branch
    %17 = sbr.rel (0) target = $region17
  $region16: #{generator_forward.24} parent=0 // pred_region
    _
  $region17: #{generator_forward.24} parent=0 // pred_fallthru
    _
  // Predicated region
  $region18: #{generator_forward.24} parent=0 // pred_check
    _
  $region19: #{generator_forward.24} parent=0 // pred_check_branch
    %19 = sbr.rel (0) target = $region21
  $region20: #{generator_forward.24} parent=0 // pred_region
    _
  $region21: #{generator_forward.24} parent=0 // pred_fallthru
    _
  %v20 = vld [vmem:[%s1] sm:$0x1]
  %v21 = vadd.f32 %v20, 0.0
  %v22 = vmul.f32 %v21, 0.03125
  %v23 = vld [vmem:[%s2] sm:$0x1]
  %v24 = vadd.f32 %v23, 0.0
  %v25 = vmul.f32 %v24, 0.03125
  %v26 = vmul.f32 %v22, %v22
  %v27 = vsub.f32 %v25, %v26
  %v28 = vmax.f32 %v27, 0.0
  %v29 = vld [vmem:[%s3] sm:$0x1]
  %v30 = vadd.f32 %v28, 1e-05
  %v31 = vrsqrt.pop %v30
  %v32 = vmul.f32 %v29, %v31
  %v33 = vld [vmem:[%s4] sm:$0x1]
  %v34 = vmul.f32 %v22, %v32
  %v35 = vsub.f32 %v33, %v34
  %v36 = vld [vmem:[%s0] sm:$0xf]
  %v37 = vld [vmem:[%s0 + $0x4] sm:$0xf]
  %v38 = vld [vmem:[%s0 + $0x8] sm:$0xf]
  %v39 = vld [vmem:[%s0 + $0xc] sm:$0xf]
  %v40 = vunpack.c.l.bf16 %v36
  %v41 = vunpack.c.l.bf16 %v37
  %v42 = vunpack.c.l.bf16 %v38
  %v43 = vunpack.c.l.bf16 %v39
  %v45 = vlaneseq
  %v46 = vshrl.u32 %v45, 7
  %v47 = vsub.s32 0, %v46
  %v48 = vrot.slane %v32, %v47
  %v50 = vmul.f32 %v40, %v48
  %v51 = vmul.f32 %v41, %v48
  %v52 = vmul.f32 %v42, %v48
  %v53 = vmul.f32 %v43, %v48
  %v55 = vlaneseq
  %v56 = vshrl.u32 %v55, 7
  %v57 = vsub.s32 0, %v56
  %v58 = vrot.slane %v35, %v57
  %v60 = vadd.f32 %v50, %v58
  %v61 = vadd.f32 %v51, %v58
  %v62 = vadd.f32 %v52, %v58
  %v63 = vadd.f32 %v53, %v58
  %v64 = vmax.f32 %v60, 0.0
  %v65 = vmax.f32 %v61, 0.0
  %v66 = vmax.f32 %v62, 0.0
  %v67 = vmax.f32 %v63, 0.0
  %v68 = vpack.c.bf16 %v65, %v64
  %v69 = vpack.c.bf16 %v67, %v66
  %v72 = vunpack.c.l.b16 %v68
  %v73 = vunpack.c.h.b16 %v68
  %v74 = vunpack.c.l.b16 %v69
  %v75 = vunpack.c.h.b16 %v69
  %v76 = vpack.c.b16 %v72, %v72
  %v77 = vpack.c.b16 %v73, %v73
  %v78 = vpack.c.b16 %v74, %v74
  %v79 = vpack.c.b16 %v75, %v75
  %84 = vst [vmem:[%s5] sm:$0xf] %v76
  %85 = vst [vmem:[%s5 + $0x4] sm:$0xf] %v77
  %86 = vst [vmem:[%s5 + $0x8] sm:$0xf] %v78
  %87 = vst [vmem:[%s5 + $0xc] sm:$0xf] %v79
  // Predicated region
  $region22: #{generator_forward.24} parent=0 // pred_check
    _
  $region23: #{generator_forward.24} parent=0 // pred_check_branch
    %89 = sbr.rel (0) target = $region25
  $region24: #{generator_forward.24} parent=0 // pred_region
    _
  $region25: #{generator_forward.24} parent=0 // pred_fallthru
    _
  // Predicated region
  $region26: #{generator_forward.24} parent=0 // pred_check
    _
  $region27: #{generator_forward.24} parent=0 // pred_check_branch
    %91 = sbr.rel (0) target = $region29
  $region28: #{generator_forward.24} parent=0 // pred_region
    _
  $region29: #{generator_forward.24} parent=0 // pred_fallthru
    _

// kernel: generator_forward.32
$region0: #{generator_forward.32}
  #allocation0 [shape = 'u32[]', space=smem, size = 0x4, offset = 0x4, fixed_abs, tag = 'smem constant byte address 0x4 - core index']
  #allocation1 [shape = 'u32[144,128]{1,0:T(1,128)}', space=vmem, size = 0x12000, scoped, tag = 'internal scratch']
  %s0 = inlined_call_operand.vmem [shape: bf16[128,128], index: 0, kind: input, shape index: {}]
  %s1 = inlined_call_operand.vmem [shape: f32[4,1,128], index: 1, kind: input, shape index: {}]
  %s2 = inlined_call_operand.vmem [shape: f32[4,1,128], index: 2, kind: input, shape index: {}]
  %s3 = inlined_call_operand.vmem [shape: f32[1,128], index: 3, kind: input, shape index: {}]
  %s4 = inlined_call_operand.vmem [shape: f32[1,128], index: 4, kind: input, shape index: {}]
  %s5 = inlined_call_operand.vmem [shape: bf16[128,128], index: 5, kind: output, shape index: {}]
  %s6 = sld [smem:[#allocation0]]
  $region30: #{generator_forward.32} parent=0
    _
  %s8 = ssub.s32 1, %s6
  %s9 = scalar_select 0, %s8, %s6
  // Predicated region
  $region2: #{generator_forward.32} parent=0 // pred_check
    _
  $region3: #{generator_forward.32} parent=0 // pred_check_branch
    %11 = sbr.rel (0) target = $region5
  $region4: #{generator_forward.32} parent=0 // pred_region
    _
  $region5: #{generator_forward.32} parent=0 // pred_fallthru
    _
  // Predicated region
  $region6: #{generator_forward.32} parent=0 // pred_check
    _
  $region7: #{generator_forward.32} parent=0 // pred_check_branch
    %13 = sbr.rel (0) target = $region9
  $region8: #{generator_forward.32} parent=0 // pred_region
    _
  $region9: #{generator_forward.32} parent=0 // pred_fallthru
    _
  // Predicated region
  $region10: #{generator_forward.32} parent=0 // pred_check
    _
  $region11: #{generator_forward.32} parent=0 // pred_check_branch
    %15 = sbr.rel (0) target = $region13
  $region12: #{generator_forward.32} parent=0 // pred_region
    _
  $region13: #{generator_forward.32} parent=0 // pred_fallthru
    _
  // Predicated region
  $region14: #{generator_forward.32} parent=0 // pred_check
    _
  $region15: #{generator_forward.32} parent=0 // pred_check_branch
    %17 = sbr.rel (0) target = $region17
  $region16: #{generator_forward.32} parent=0 // pred_region
    _
  $region17: #{generator_forward.32} parent=0 // pred_fallthru
    _
  // Predicated region
  $region18: #{generator_forward.32} parent=0 // pred_check
    _
  $region19: #{generator_forward.32} parent=0 // pred_check_branch
    %19 = sbr.rel (0) target = $region21
  $region20: #{generator_forward.32} parent=0 // pred_region
    _
  $region21: #{generator_forward.32} parent=0 // pred_fallthru
    _
  %v20 = vld [vmem:[%s1] sm:$0x1]
  %v21 = vld [vmem:[%s1 + $0x1] sm:$0x1]
  %v22 = vld [vmem:[%s1 + $0x2] sm:$0x1]
  %v23 = vld [vmem:[%s1 + $0x3] sm:$0x1]
  %vm24 = vcmask 1040384
  %v25 = vsel %vm24, %v20, 0.0
  %v26 = vsel %vm24, %v21, 0.0
  %v27 = vadd.f32 %v25, %v26
  %v28 = vsel %vm24, %v22, 0.0
  %v29 = vadd.f32 %v27, %v28
  %v30 = vsel %vm24, %v23, 0.0
  %v31 = vadd.f32 %v29, %v30
  %v32 = vmul.f32 %v31, 0.0078125
  %v33 = vld [vmem:[%s2] sm:$0x1]
  %v34 = vld [vmem:[%s2 + $0x1] sm:$0x1]
  %v35 = vld [vmem:[%s2 + $0x2] sm:$0x1]
  %v36 = vld [vmem:[%s2 + $0x3] sm:$0x1]
  %v37 = vsel %vm24, %v33, 0.0
  %v38 = vsel %vm24, %v34, 0.0
  %v39 = vadd.f32 %v37, %v38
  %v40 = vsel %vm24, %v35, 0.0
  %v41 = vadd.f32 %v39, %v40
  %v42 = vsel %vm24, %v36, 0.0
  %v43 = vadd.f32 %v41, %v42
  %v44 = vmul.f32 %v43, 0.0078125
  %v45 = vmul.f32 %v32, %v32
  %v46 = vsub.f32 %v44, %v45
  %v47 = vmax.f32 %v46, 0.0
  %v48 = vld [vmem:[%s3] sm:$0x1]
  %v49 = vadd.f32 %v47, 1e-05
  %v50 = vrsqrt.pop %v49
  %v51 = vmul.f32 %v48, %v50
  %v52 = vld [vmem:[%s4] sm:$0x1]
  %v53 = vmul.f32 %v32, %v51
  %v54 = vsub.f32 %v52, %v53
  %v55 = vld [vmem:[%s0] sm:$0xf]
  %v56 = vld [vmem:[%s0 + $0x4] sm:$0xf]
  %v57 = vld [vmem:[%s0 + $0x8] sm:$0xf]
  %v58 = vld [vmem:[%s0 + $0xc] sm:$0xf]
  %v59 = vld [vmem:[%s0 + $0x10] sm:$0xf]
  %v60 = vld [vmem:[%s0 + $0x14] sm:$0xf]
  %v61 = vld [vmem:[%s0 + $0x18] sm:$0xf]
  %v62 = vld [vmem:[%s0 + $0x1c] sm:$0xf]
  %v63 = vld [vmem:[%s0 + $0x20] sm:$0xf]
  %v64 = vld [vmem:[%s0 + $0x24] sm:$0xf]
  %v65 = vld [vmem:[%s0 + $0x28] sm:$0xf]
  %v66 = vld [vmem:[%s0 + $0x2c] sm:$0xf]
  %v67 = vld [vmem:[%s0 + $0x30] sm:$0xf]
  %v68 = vld [vmem:[%s0 + $0x34] sm:$0xf]
  %v69 = vld [vmem:[%s0 + $0x38] sm:$0xf]
  %v70 = vld [vmem:[%s0 + $0x3c] sm:$0xf]
  %v71 = vunpack.c.l.bf16 %v55
  %v72 = vunpack.c.l.bf16 %v56
  %v73 = vunpack.c.l.bf16 %v57
  %v74 = vunpack.c.l.bf16 %v58
  %v75 = vunpack.c.l.bf16 %v59
  %v76 = vunpack.c.l.bf16 %v60
  %v77 = vunpack.c.l.bf16 %v61
  %v78 = vunpack.c.l.bf16 %v62
  %v79 = vunpack.c.l.bf16 %v63
  %v80 = vunpack.c.l.bf16 %v64
  %v81 = vunpack.c.l.bf16 %v65
  %v82 = vunpack.c.l.bf16 %v66
  %v83 = vunpack.c.l.bf16 %v67
  %v84 = vunpack.c.l.bf16 %v68
  %v85 = vunpack.c.l.bf16 %v69
  %v86 = vunpack.c.l.bf16 %v70
  %v88 = vlaneseq
  %v89 = vshrl.u32 %v88, 7
  %v90 = vsub.s32 0, %v89
  %v91 = vrot.slane %v51, %v90
  %v93 = vmul.f32 %v71, %v91
  %v94 = vmul.f32 %v72, %v91
  %v95 = vmul.f32 %v73, %v91
  %v96 = vmul.f32 %v74, %v91
  %v97 = vmul.f32 %v75, %v91
  %v98 = vmul.f32 %v76, %v91
  %v99 = vmul.f32 %v77, %v91
  %v100 = vmul.f32 %v78, %v91
  %v101 = vmul.f32 %v79, %v91
  %v102 = vmul.f32 %v80, %v91
  %v103 = vmul.f32 %v81, %v91
  %v104 = vmul.f32 %v82, %v91
  %v105 = vmul.f32 %v83, %v91
  %v106 = vmul.f32 %v84, %v91
  %v107 = vmul.f32 %v85, %v91
  %v108 = vmul.f32 %v86, %v91
  %v110 = vlaneseq
  %v111 = vshrl.u32 %v110, 7
  %v112 = vsub.s32 0, %v111
  %v113 = vrot.slane %v54, %v112
  %v115 = vadd.f32 %v93, %v113
  %v116 = vadd.f32 %v94, %v113
  %v117 = vadd.f32 %v95, %v113
  %v118 = vadd.f32 %v96, %v113
  %v119 = vadd.f32 %v97, %v113
  %v120 = vadd.f32 %v98, %v113
  %v121 = vadd.f32 %v99, %v113
  %v122 = vadd.f32 %v100, %v113
  %v123 = vadd.f32 %v101, %v113
  %v124 = vadd.f32 %v102, %v113
  %v125 = vadd.f32 %v103, %v113
  %v126 = vadd.f32 %v104, %v113
  %v127 = vadd.f32 %v105, %v113
  %v128 = vadd.f32 %v106, %v113
  %v129 = vadd.f32 %v107, %v113
  %v130 = vadd.f32 %v108, %v113
  %v131 = vmax.f32 %v115, 0.0
  %v132 = vmax.f32 %v116, 0.0
  %v133 = vmax.f32 %v117, 0.0
  %v134 = vmax.f32 %v118, 0.0
  %v135 = vmax.f32 %v119, 0.0
  %v136 = vmax.f32 %v120, 0.0
  %v137 = vmax.f32 %v121, 0.0
  %v138 = vmax.f32 %v122, 0.0
  %v139 = vmax.f32 %v123, 0.0
  %v140 = vmax.f32 %v124, 0.0
  %v141 = vmax.f32 %v125, 0.0
  %v142 = vmax.f32 %v126, 0.0
  %v143 = vmax.f32 %v127, 0.0
  %v144 = vmax.f32 %v128, 0.0
  %v145 = vmax.f32 %v129, 0.0
  %v146 = vmax.f32 %v130, 0.0
  %v147 = vpack.c.bf16 %v132, %v131
  %v148 = vpack.c.bf16 %v134, %v133
  %v149 = vpack.c.bf16 %v136, %v135
  %v150 = vpack.c.bf16 %v138, %v137
  %v151 = vpack.c.bf16 %v140, %v139
  %v152 = vpack.c.bf16 %v142, %v141
  %v153 = vpack.c.bf16 %v144, %v143
  %v154 = vpack.c.bf16 %v146, %v145
  %v163 = vunpack.c.l.b16 %v147
  %v164 = vunpack.c.h.b16 %v147
  %v165 = vunpack.c.l.b16 %v148
  %v166 = vunpack.c.h.b16 %v148
  %v167 = vunpack.c.l.b16 %v149
  %v168 = vunpack.c.h.b16 %v149
  %v169 = vunpack.c.l.b16 %v150
  %v170 = vunpack.c.h.b16 %v150
  %v171 = vunpack.c.l.b16 %v151
  %v172 = vunpack.c.h.b16 %v151
  %v173 = vunpack.c.l.b16 %v152
  %v174 = vunpack.c.h.b16 %v152
  %v175 = vunpack.c.l.b16 %v153
  %v176 = vunpack.c.h.b16 %v153
  %v177 = vunpack.c.l.b16 %v154
  %v178 = vunpack.c.h.b16 %v154
  %v179 = vpack.c.b16 %v163, %v163
  %v180 = vpack.c.b16 %v164, %v164
  %v181 = vpack.c.b16 %v165, %v165
  %v182 = vpack.c.b16 %v166, %v166
  %v183 = vpack.c.b16 %v167, %v167
  %v184 = vpack.c.b16 %v168, %v168
  %v185 = vpack.c.b16 %v169, %v169
  %v186 = vpack.c.b16 %v170, %v170
  %v187 = vpack.c.b16 %v171, %v171
  %v188 = vpack.c.b16 %v172, %v172
  %v189 = vpack.c.b16 %v173, %v173
  %v190 = vpack.c.b16 %v174, %v174
  %v191 = vpack.c.b16 %v175, %v175
  %v192 = vpack.c.b16 %v176, %v176
  %v193 = vpack.c.b16 %v177, %v177
  %v194 = vpack.c.b16 %v178, %v178
  %211 = vst [vmem:[%s5] sm:$0xf] %v179
  %212 = vst [vmem:[%s5 + $0x4] sm:$0xf] %v180
  %213 = vst [vmem:[%s5 + $0x8] sm:$0xf] %v181
  %214 = vst [vmem:[%s5 + $0xc] sm:$0xf] %v182
  %215 = vst [vmem:[%s5 + $0x10] sm:$0xf] %v183
  %216 = vst [vmem:[%s5 + $0x14] sm:$0xf] %v184
  %217 = vst [vmem:[%s5 + $0x18] sm:$0xf] %v185
  %218 = vst [vmem:[%s5 + $0x1c] sm:$0xf] %v186
  %219 = vst [vmem:[%s5 + $0x20] sm:$0xf] %v187
  %220 = vst [vmem:[%s5 + $0x24] sm:$0xf] %v188
  %221 = vst [vmem:[%s5 + $0x28] sm:$0xf] %v189
  %222 = vst [vmem:[%s5 + $0x2c] sm:$0xf] %v190
  %223 = vst [vmem:[%s5 + $0x30] sm:$0xf] %v191
  %224 = vst [vmem:[%s5 + $0x34] sm:$0xf] %v192
  %225 = vst [vmem:[%s5 + $0x38] sm:$0xf] %v193
  %226 = vst [vmem:[%s5 + $0x3c] sm:$0xf] %v194
  // Predicated region
  $region22: #{generator_forward.32} parent=0 // pred_check
    _
  $region23: #{generator_forward.32} parent=0 // pred_check_branch
    %228 = sbr.rel (0) target = $region25
  $region24: #{generator_forward.32} parent=0 // pred_region
    _
  $region25: #{generator_forward.32} parent=0 // pred_fallthru
    _
  // Predicated region
  $region26: #{generator_forward.32} parent=0 // pred_check
    _
  $region27: #{generator_forward.32} parent=0 // pred_check_branch
    %230 = sbr.rel (0) target = $region29
  $region28: #{generator_forward.32} parent=0 // pred_region
    _
  $region29: #{generator_forward.32} parent=0 // pred_fallthru
    _

// kernel: generator_forward.31
$region0: #{generator_forward.31}
  #allocation0 [shape = 'u32[]', space=smem, size = 0x4, offset = 0x4, fixed_abs, tag = 'smem constant byte address 0x4 - core index']
  #allocation1 [shape = 'u32[144,128]{1,0:T(1,128)}', space=vmem, size = 0x12000, scoped, tag = 'internal scratch']
  %s0 = inlined_call_operand.vmem [shape: bf16[4,32,512], index: 0, kind: input, shape index: {}]
  %s1 = inlined_call_operand.vmem [shape: bf16[4,512,128], index: 1, kind: input, shape index: {}]
  %s2 = inlined_call_operand.vmem [shape: bf16[4,32,128], index: 2, kind: output, shape index: {0}]
  %s3 = inlined_call_operand.vmem [shape: f32[4,1,128], index: 3, kind: output, shape index: {1}]
  %s4 = inlined_call_operand.vmem [shape: f32[4,1,128], index: 4, kind: output, shape index: {2}]
  %5 = xla_tuple %s2, %s3, %s4
  %s6 = sld [smem:[#allocation0]]
  $region61: #{generator_forward.31} parent=0
    _
  %s8 = ssub.s32 1, %s6
  %s9 = scalar_select 0, %s8, %s6
  loop: start=0, step=1, limit=6
  $region2: #{generator_forward.31} parent=0 // loop_pre_header
    _
  $region3: #{generator_forward.31} parent=0 // loop_header
    %s11 = sphi 0, %s15
    %p12 = scmp.ge.s32.totalorder %s11, 6
    %s18 = sphi 0, %s44
    %s19 = sphi 0, %s40
    %s20 = sphi 0, %s36
    %s21 = sphi 0, %s32
    %s22 = sphi 0, %s18
    %s23 = sphi 0, %s19
    %s24 = sphi 0, %s20
    %s25 = sphi 0, %s21
    %s26 = sphi 0, %s22
    %s27 = sphi 0, %s23
    %s28 = sphi 0, %s24
    %s29 = sphi 0, %s25
    %s51 = sphi 0, %s53
    %s54 = sphi 0, %s51
    %s55 = sphi 0, %s54
    %s71 = sphi 0, %s55
    %s79 = sphi 0, %s81
    %s82 = sphi 0, %s79
    %s83 = sphi 0, %s82
    %s99 = sphi 0, %s83
    %s111 = sphi 0, %s113
    %s114 = sphi 0, %s111
    %s115 = sphi 0, %s114
    %s131 = sphi 0, %s115
    %s141 = sphi 0, %s143
    %s144 = sphi 0, %s141
    %s145 = sphi 0, %s144
    %s161 = sphi 0, %s145
    %s171 = sphi 0, %s173
    %s174 = sphi 0, %s171
    %s175 = sphi 0, %s174
    %s191 = sphi 0, %s175
  $region4: #{generator_forward.31} parent=0 // loop_header_branch
    %14 = sbr.rel (%p12) target = $region8
  $region5: #{generator_forward.31} parent=0 // loop_body
    %s16 = ssub.s32 %s11, 1
    %s17 = ssub.s32 %s11, 2
    %s30 = sadd.s32 1, %s21
    %p31 = scmp.ge.s32.totalorder %s30, 1
    %s32 = scalar_select %p31, 0, %s30
    %s33 = sadd.s32 1, %s20
    %s34 = scalar_select %p31, %s33, %s20
    %p35 = scmp.ge.s32.totalorder %s34, 1
    %s36 = scalar_select %p35, 0, %s34
    %s37 = sadd.s32 1, %s19
    %s38 = scalar_select %p35, %s37, %s19
    %p39 = scmp.ge.s32.totalorder %s38, 1
    %s40 = scalar_select %p39, 0, %s38
    %s41 = sadd.s32 1, %s18
    %s42 = scalar_select %p39, %s41, %s18
    %p43 = scmp.ge.s32.totalorder %s42, 4
    %s44 = scalar_select %p43, 0, %s42
    %s45 = sadd.s32 %s19, %s21
    %s46 = sadd.s32 %s40, %s32
    %s47 = ssub.s32 %s18, %s44
    %s48 = ssub.s32 %s45, %s46
    %s49 = sor.u32 %s47, %s48
    %p50 = scmp.eq.s32.totalorder %s49, 0
    %s52 = sadd.s32 %s51, 1
    %s53 = scalar_select %p50, %s51, %s52
    %p56 = pneg %p50
    %p57 = scmp.eq.s32.totalorder %s11, 3
    %p58 = por %p56, %p57
    %p59 = scmp.ne.s32.totalorder %s51, %s54
    %p60 = scmp.eq.s32.totalorder %s11, 0
    %p61 = por %p59, %p60
    %p62 = scmp.ne.s32.totalorder %s51, %s54
    %p63 = scmp.eq.s32.totalorder %s16, 3
    %p64 = por %p62, %p63
    %p65 = scmp.ne.s32.totalorder %s54, %s55
    %p66 = scmp.eq.s32.totalorder %s16, 0
    %p67 = por %p65, %p66
    %p68 = scmp.ne.s32.totalorder %s54, %s55
    %p69 = scmp.eq.s32.totalorder %s17, 3
    %p70 = por %p68, %p69
    %p72 = scmp.ne.s32.totalorder %s55, %s71
    %p73 = scmp.eq.s32.totalorder %s17, 0
    %p74 = por %p72, %p73
    %s75 = ssub.s32 %s18, %s44
    %s76 = ssub.s32 %s20, %s36
    %s77 = sor.u32 %s75, %s76
    %p78 = scmp.eq.s32.totalorder %s77, 0
    %s80 = sadd.s32 %s79, 1
    %s81 = scalar_select %p78, %s79, %s80
    %p84 = pneg %p78
    %p85 = scmp.eq.s32.totalorder %s11, 3
    %p86 = por %p84, %p85
    %p87 = scmp.ne.s32.totalorder %s79, %s82
    %p88 = scmp.eq.s32.totalorder %s11, 0
    %p89 = por %p87, %p88
    %p90 = scmp.ne.s32.totalorder %s79, %s82
    %p91 = scmp.eq.s32.totalorder %s16, 3
    %p92 = por %p90, %p91
    %p93 = scmp.ne.s32.totalorder %s82, %s83
    %p94 = scmp.eq.s32.totalorder %s16, 0
    %p95 = por %p93, %p94
    %p96 = scmp.ne.s32.totalorder %s82, %s83
    %p97 = scmp.eq.s32.totalorder %s17, 3
    %p98 = por %p96, %p97
    %p100 = scmp.ne.s32.totalorder %s83, %s99
    %p101 = scmp.eq.s32.totalorder %s17, 0
    %p102 = por %p100, %p101
    %s103 = sadd.s32 %s19, %s21
    %s104 = sadd.s32 %s40, %s32
    %s105 = ssub.s32 %s18, %s44
    %s106 = ssub.s32 %s103, %s104
    %s107 = sor.u32 %s105, %s106
    %s108 = ssub.s32 %s20, %s36
    %s109 = sor.u32 %s107, %s108
    %p110 = scmp.eq.s32.totalorder %s109, 0
    %s112 = sadd.s32 %s111, 1
    %s113 = scalar_select %p110, %s111, %s112
    %p116 = pneg %p110
    %p117 = scmp.eq.s32.totalorder %s11, 3
    %p118 = por %p116, %p117
    %p119 = scmp.ne.s32.totalorder %s111, %s114
    %p120 = scmp.eq.s32.totalorder %s11, 0
    %p121 = por %p119, %p120
    %p122 = scmp.ne.s32.totalorder %s111, %s114
    %p123 = scmp.eq.s32.totalorder %s16, 3
    %p124 = por %p122, %p123
    %p125 = scmp.ne.s32.totalorder %s114, %s115
    %p126 = scmp.eq.s32.totalorder %s16, 0
    %p127 = por %p125, %p126
    %p128 = scmp.ne.s32.totalorder %s114, %s115
    %p129 = scmp.eq.s32.totalorder %s17, 3
    %p130 = por %p128, %p129
    %p132 = scmp.ne.s32.totalorder %s115, %s131
    %p133 = scmp.eq.s32.totalorder %s17, 0
    %p134 = por %p132, %p133
    %s135 = sadd.s32 %s18, %s19
    %s136 = sadd.s32 %s44, %s40
    %s137 = ssub.s32 %s135, %s136
    %s138 = ssub.s32 %s20, %s36
    %s139 = sor.u32 %s137, %s138
    %p140 = scmp.eq.s32.totalorder %s139, 0
    %s142 = sadd.s32 %s141, 1
    %s143 = scalar_select %p140, %s141, %s142
    %p146 = pneg %p140
    %p147 = scmp.eq.s32.totalorder %s11, 3
    %p148 = por %p146, %p147
    %p149 = scmp.ne.s32.totalorder %s141, %s144
    %p150 = scmp.eq.s32.totalorder %s11, 0
    %p151 = por %p149, %p150
    %p152 = scmp.ne.s32.totalorder %s141, %s144
    %p153 = scmp.eq.s32.totalorder %s16, 3
    %p154 = por %p152, %p153
    %p155 = scmp.ne.s32.totalorder %s144, %s145
    %p156 = scmp.eq.s32.totalorder %s16, 0
    %p157 = por %p155, %p156
    %p158 = scmp.ne.s32.totalorder %s144, %s145
    %p159 = scmp.eq.s32.totalorder %s17, 3
    %p160 = por %p158, %p159
    %p162 = scmp.ne.s32.totalorder %s145, %s161
    %p163 = scmp.eq.s32.totalorder %s17, 0
    %p164 = por %p162, %p163
    %s165 = sadd.s32 %s18, %s19
    %s166 = sadd.s32 %s44, %s40
    %s167 = ssub.s32 %s165, %s166
    %s168 = ssub.s32 %s20, %s36
    %s169 = sor.u32 %s167, %s168
    %p170 = scmp.eq.s32.totalorder %s169, 0
    %s172 = sadd.s32 %s171, 1
    %s173 = scalar_select %p170, %s171, %s172
    %p176 = pneg %p170
    %p177 = scmp.eq.s32.totalorder %s11, 3
    %p178 = por %p176, %p177
    %p179 = scmp.ne.s32.totalorder %s171, %s174
    %p180 = scmp.eq.s32.totalorder %s11, 0
    %p181 = por %p179, %p180
    %p182 = scmp.ne.s32.totalorder %s171, %s174
    %p183 = scmp.eq.s32.totalorder %s16, 3
    %p184 = por %p182, %p183
    %p185 = scmp.ne.s32.totalorder %s174, %s175
    %p186 = scmp.eq.s32.totalorder %s16, 0
    %p187 = por %p185, %p186
    %p188 = scmp.ne.s32.totalorder %s174, %s175
    %p189 = scmp.eq.s32.totalorder %s17, 3
    %p190 = por %p188, %p189
    %p192 = scmp.ne.s32.totalorder %s175, %s191
    %p193 = scmp.eq.s32.totalorder %s17, 0
    %p194 = por %p192, %p193
    %p195 = scmp.le.s32.totalorder 1, %s11
    %p196 = scmp.lt.s32.totalorder %s11, 5
    %p197 = pnand %p195, %p196
    %p198 = pneg %p197
    // Predicated region
    $region9: #{generator_forward.31} parent=5 // pred_check
      _
    $region10: #{generator_forward.31} parent=5 // pred_check_branch
      %200 = sbr.rel (%p197) target = $region12
    $region11: #{generator_forward.31} parent=5 // pred_region
      %s201 = ssub.s32 %s11, 1
    $region12: #{generator_forward.31} parent=5 // pred_fallthru
      _
    %p202 = scmp.lt.s32.totalorder %s11, 4
    // Predicated region
    $region13: #{generator_forward.31} parent=5 // pred_check
      %p203 = pneg %p202
    $region14: #{generator_forward.31} parent=5 // pred_check_branch
      %205 = sbr.rel (%p203) target = $region16
    $region15: #{generator_forward.31} parent=5 // pred_region
      // Predicated region
      $region17: #{generator_forward.31} parent=15 // pred_check
        %p206 = pneg %p61
      $region18: #{generator_forward.31} parent=15 // pred_check_branch
        %208 = sbr.rel (%p206) target = $region20
      $region19: #{generator_forward.31} parent=15 // pred_region
        %s209 = sadd.s32 %s19, %s21
        %s210 = smul.u32 4, %s209
        %p211 = scmp.lt.s32.totalorder %s18, 3
        %s212 = scalar_select %p211, %s18, 3
        %p213 = scmp.lt.s32.totalorder %s210, 3
        %s214 = scalar_select %p213, %s210, 3
        %s215 = smul.addr %s214, 4
        %s216 = smul.addr %s212, 16
        %s217 = sadd.s32 %s215, %s216
        %s218 = smul.addr %s217, 4
        %s219 = scalar_lea.vmem %s0, %s218
        %s220 = sadd.s32 %s19, %s21
        %s221 = smul.u32 4, %s220
      $region20: #{generator_forward.31} parent=15 // pred_fallthru
        _
      // Predicated region
      $region21: #{generator_forward.31} parent=15 // pred_check
        %p222 = pneg %p89
      $region22: #{generator_forward.31} parent=15 // pred_check_branch
        %224 = sbr.rel (%p222) target = $region24
      $region23: #{generator_forward.31} parent=15 // pred_region
        %p225 = scmp.lt.s32.totalorder %s18, 3
        %s226 = scalar_select %p225, %s18, 3
        %p227 = scmp.lt.s32.totalorder %s20, 0
        %s228 = scalar_select %p227, %s20, 0
        %s229 = smul.addr %s226, 64
        %s230 = sadd.s32 %s228, %s229
        %s231 = smul.addr %s230, 4
        %s232 = scalar_lea.vmem %s1, %s231
      $region24: #{generator_forward.31} parent=15 // pred_fallthru
        _
    $region16: #{generator_forward.31} parent=5 // pred_fallthru
      _
    %p233 = scmp.le.s32.totalorder 1, %s11
    %p234 = scmp.lt.s32.totalorder %s11, 5
    %p235 = pnand %p233, %p234
    %p236 = pneg %p235
    // Predicated region
    $region25: #{generator_forward.31} parent=5 // pred_check
      _
    $region26: #{generator_forward.31} parent=5 // pred_check_branch
      %238 = sbr.rel (%p235) target = $region28
    $region27: #{generator_forward.31} parent=5 // pred_region
      %s239 = ssub.s32 %s11, 1
      %s240 = sadd.s32 %s23, %s25
      %s241 = smul.u32 4, %s240
      %p242 = scmp.lt.s32.totalorder %s22, 3
      %s243 = scalar_select %p242, %s22, 3
      %p244 = scmp.lt.s32.totalorder %s241, 3
      %s245 = scalar_select %p244, %s241, 3
      %s246 = smul.addr %s245, 4
      %s247 = smul.addr %s243, 16
      %s248 = sadd.s32 %s246, %s247
      %s249 = smul.addr %s248, 4
      %s250 = scalar_lea.vmem %s0, %s249
      %p251 = pneg %p67
      %p252 = pneg %p64
      %p253 = scmp.lt.s32.totalorder %s22, 3
      %s254 = scalar_select %p253, %s22, 3
      %p255 = scmp.lt.s32.totalorder %s24, 0
      %s256 = scalar_select %p255, %s24, 0
      %s257 = smul.addr %s254, 64
      %s258 = sadd.s32 %s256, %s257
      %s259 = smul.addr %s258, 4
      %s260 = scalar_lea.vmem %s1, %s259
      %p261 = pneg %p95
      %p262 = pneg %p92
      %p263 = pneg %p127
      %p264 = pneg %p124
      %s265 = sadd.s32 %s23, %s25
      %s266 = smul.u32 4, %s265
      %p267 = scmp.lt.s32.totalorder %s22, 3
      %s268 = scalar_select %p267, %s22, 3
      %p269 = scmp.lt.s32.totalorder %s266, 3
      %s270 = scalar_select %p269, %s266, 3
      %p271 = scmp.lt.s32.totalorder %s24, 0
      %s272 = scalar_select %p271, %s24, 0
      %s273 = sadd.s32 %s272, %s270
      %s274 = smul.addr %s268, 4
      %s275 = sadd.s32 %s273, %s274
      %s276 = smul.addr %s275, 4
      %s277 = scalar_lea.vmem %s2, %s276
      %p278 = pneg %p157
      %p279 = pneg %p154
      %s280 = sadd.s32 %s22, %s23
      %p281 = scmp.lt.s32.totalorder %s280, 3
      %s282 = scalar_select %p281, %s280, 3
      %p283 = scmp.lt.s32.totalorder %s24, 0
      %s284 = scalar_select %p283, %s24, 0
      %s285 = sadd.s32 %s284, %s282
      %s286 = scalar_lea.vmem %s3, %s285
      %p287 = pneg %p187
      %p288 = pneg %p184
      %s289 = sadd.s32 %s22, %s23
      %p290 = scmp.lt.s32.totalorder %s289, 3
      %s291 = scalar_select %p290, %s289, 3
      %p292 = scmp.lt.s32.totalorder %s24, 0
      %s293 = scalar_select %p292, %s24, 0
      %s294 = sadd.s32 %s293, %s291
      %s295 = scalar_lea.vmem %s4, %s294
      %s296 = sadd.s32 %s23, %s25
      %s297 = smul.u32 4, %s296
      %p298 = scmp.lt.s32.totalorder %s22, 3
      %s299 = scalar_select %p298, %s22, 3
      %p300 = scmp.lt.s32.totalorder %s297, 3
      %s301 = scalar_select %p300, %s297, 3
      %s302 = smul.addr %s301, 4
      %s303 = smul.addr %s299, 16
      %s304 = sadd.s32 %s302, %s303
      %s305 = smul.addr %s304, 4
      %s306 = scalar_lea.vmem %s0, %s305
      %s307 = sadd.s32 %s23, %s25
      %s308 = smul.u32 4, %s307
      %p309 = scmp.lt.s32.totalorder %s22, 3
      %s310 = scalar_select %p309, %s22, 3
      %p311 = scmp.lt.s32.totalorder %s24, 0
      %s312 = scalar_select %p311, %s24, 0
      %s313 = smul.addr %s310, 64
      %s314 = sadd.s32 %s312, %s313
      %s315 = smul.addr %s314, 4
      %s316 = scalar_lea.vmem %s1, %s315
      %s317 = sadd.s32 %s23, %s25
      %s318 = smul.u32 4, %s317
      %p319 = scmp.lt.s32.totalorder %s22, 3
      %s320 = scalar_select %p319, %s22, 3
      %p321 = scmp.lt.s32.totalorder %s318, 3
      %s322 = scalar_select %p321, %s318, 3
      %p323 = scmp.lt.s32.totalorder %s24, 0
      %s324 = scalar_select %p323, %s24, 0
      %s325 = sadd.s32 %s324, %s322
      %s326 = smul.addr %s320, 4
      %s327 = sadd.s32 %s325, %s326
      %s328 = smul.addr %s327, 4
      %s329 = scalar_lea.vmem %s2, %s328
      %s330 = sadd.s32 %s23, %s25
      %s331 = smul.u32 4, %s330
      %s332 = sadd.s32 %s22, %s23
      %p333 = scmp.lt.s32.totalorder %s332, 3
      %s334 = scalar_select %p333, %s332, 3
      %p335 = scmp.lt.s32.totalorder %s24, 0
      %s336 = scalar_select %p335, %s24, 0
      %s337 = sadd.s32 %s336, %s334
      %s338 = scalar_lea.vmem %s3, %s337
      %s339 = sadd.s32 %s22, %s23
      %s340 = sadd.s32 %s22, %s23
      %p341 = scmp.lt.s32.totalorder %s340, 3
      %s342 = scalar_select %p341, %s340, 3
      %p343 = scmp.lt.s32.totalorder %s24, 0
      %s344 = scalar_select %p343, %s24, 0
      %s345 = sadd.s32 %s344, %s342
      %s346 = scalar_lea.vmem %s4, %s345
      %s347 = sadd.s32 %s22, %s23
      %p349 = scmp.eq.s32.totalorder %s25, 0
      // Predicated region
      $region29: #{generator_forward.31} parent=27 // pred_check
        %p350 = pneg %p349
      $region30: #{generator_forward.31} parent=27 // pred_check_branch
        %352 = sbr.rel (%p350) target = $region32
      $region31: #{generator_forward.31} parent=27 // pred_region
        %353 = vst [vmem:[%s338] sm:$0x1] 0.0
        %354 = vst [vmem:[%s346] sm:$0x1] 0.0
      $region32: #{generator_forward.31} parent=27 // pred_fallthru
        _
      %v355 = vld [vmem:[%s306] sm:$0xff]
      %v356 = vld [vmem:[%s306 + $0x8] sm:$0xff]
      %v357 = vld [vmem:[%s306 + $0x10] sm:$0xff]
      %v358 = vld [vmem:[%s306 + $0x18] sm:$0xff]
      %v359 = vld [vmem:[%s306 + $0x20] sm:$0xff]
      %v360 = vld [vmem:[%s306 + $0x28] sm:$0xff]
      %v361 = vld [vmem:[%s306 + $0x30] sm:$0xff]
      %v362 = vld [vmem:[%s306 + $0x38] sm:$0xff]
      %v363 = vld [vmem:[%s316] sm:$0xf]
      %v364 = vld [vmem:[%s316 + $0x4] sm:$0xf]
      %v365 = vld [vmem:[%s316 + $0x8] sm:$0xf]
      %v366 = vld [vmem:[%s316 + $0xc] sm:$0xf]
      %v367 = vld [vmem:[%s316 + $0x10] sm:$0xf]
      %v368 = vld [vmem:[%s316 + $0x14] sm:$0xf]
      %v369 = vld [vmem:[%s316 + $0x18] sm:$0xf]
      %v370 = vld [vmem:[%s316 + $0x1c] sm:$0xf]
      %v371 = vld [vmem:[%s316 + $0x20] sm:$0xf]
      %v372 = vld [vmem:[%s316 + $0x24] sm:$0xf]
      %v373 = vld [vmem:[%s316 + $0x28] sm:$0xf]
      %v374 = vld [vmem:[%s316 + $0x2c] sm:$0xf]
      %v375 = vld [vmem:[%s316 + $0x30] sm:$0xf]
      %v376 = vld [vmem:[%s316 + $0x34] sm:$0xf]
      %v377 = vld [vmem:[%s316 + $0x38] sm:$0xf]
      %v378 = vld [vmem:[%s316 + $0x3c] sm:$0xf]
      %v379 = vld [vmem:[%s316 + $0x40] sm:$0xf]
      %v380 = vld [vmem:[%s316 + $0x44] sm:$0xf]
      %v381 = vld [vmem:[%s316 + $0x48] sm:$0xf]
      %v382 = vld [vmem:[%s316 + $0x4c] sm:$0xf]
      %v383 = vld [vmem:[%s316 + $0x50] sm:$0xf]
      %v384 = vld [vmem:[%s316 + $0x54] sm:$0xf]
      %v385 = vld [vmem:[%s316 + $0x58] sm:$0xf]
      %v386 = vld [vmem:[%s316 + $0x5c] sm:$0xf]
      %v387 = vld [vmem:[%s316 + $0x60] sm:$0xf]
      %v388 = vld [vmem:[%s316 + $0x64] sm:$0xf]
      %v389 = vld [vmem:[%s316 + $0x68] sm:$0xf]
      %v390 = vld [vmem:[%s316 + $0x6c] sm:$0xf]
      %v391 = vld [vmem:[%s316 + $0x70] sm:$0xf]
      %v392 = vld [vmem:[%s316 + $0x74] sm:$0xf]
      %v393 = vld [vmem:[%s316 + $0x78] sm:$0xf]
      %v394 = vld [vmem:[%s316 + $0x7c] sm:$0xf]
      %v395 = vld [vmem:[%s316 + $0x80] sm:$0xf]
      %v396 = vld [vmem:[%s316 + $0x84] sm:$0xf]
      %v397 = vld [vmem:[%s316 + $0x88] sm:$0xf]
      %v398 = vld [vmem:[%s316 + $0x8c] sm:$0xf]
      %v399 = vld [vmem:[%s316 + $0x90] sm:$0xf]
      %v400 = vld [vmem:[%s316 + $0x94] sm:$0xf]
      %v401 = vld [vmem:[%s316 + $0x98] sm:$0xf]
      %v402 = vld [vmem:[%s316 + $0x9c] sm:$0xf]
      %v403 = vld [vmem:[%s316 + $0xa0] sm:$0xf]
      %v404 = vld [vmem:[%s316 + $0xa4] sm:$0xf]
      %v405 = vld [vmem:[%s316 + $0xa8] sm:$0xf]
      %v406 = vld [vmem:[%s316 + $0xac] sm:$0xf]
      %v407 = vld [vmem:[%s316 + $0xb0] sm:$0xf]
      %v408 = vld [vmem:[%s316 + $0xb4] sm:$0xf]
      %v409 = vld [vmem:[%s316 + $0xb8] sm:$0xf]
      %v410 = vld [vmem:[%s316 + $0xbc] sm:$0xf]
      %v411 = vld [vmem:[%s316 + $0xc0] sm:$0xf]
      %v412 = vld [vmem:[%s316 + $0xc4] sm:$0xf]
      %v413 = vld [vmem:[%s316 + $0xc8] sm:$0xf]
      %v414 = vld [vmem:[%s316 + $0xcc] sm:$0xf]
      %v415 = vld [vmem:[%s316 + $0xd0] sm:$0xf]
      %v416 = vld [vmem:[%s316 + $0xd4] sm:$0xf]
      %v417 = vld [vmem:[%s316 + $0xd8] sm:$0xf]
      %v418 = vld [vmem:[%s316 + $0xdc] sm:$0xf]
      %v419 = vld [vmem:[%s316 + $0xe0] sm:$0xf]
      %v420 = vld [vmem:[%s316 + $0xe4] sm:$0xf]
      %v421 = vld [vmem:[%s316 + $0xe8] sm:$0xf]
      %v422 = vld [vmem:[%s316 + $0xec] sm:$0xf]
      %v423 = vld [vmem:[%s316 + $0xf0] sm:$0xf]
      %v424 = vld [vmem:[%s316 + $0xf4] sm:$0xf]
      %v425 = vld [vmem:[%s316 + $0xf8] sm:$0xf]
      %v426 = vld [vmem:[%s316 + $0xfc] sm:$0xf]
      %v435 = vunpack.c.l.b16 %v355
      %v436 = vunpack.c.h.b16 %v355
      %v437 = vunpack.c.l.b16 %v356
      %v438 = vunpack.c.h.b16 %v356
      %v439 = vunpack.c.l.b16 %v357
      %v440 = vunpack.c.h.b16 %v357
      %v441 = vunpack.c.l.b16 %v358
      %v442 = vunpack.c.h.b16 %v358
      %v443 = vunpack.c.l.b16 %v359
      %v444 = vunpack.c.h.b16 %v359
      %v445 = vunpack.c.l.b16 %v360
      %v446 = vunpack.c.h.b16 %v360
      %v447 = vunpack.c.l.b16 %v361
      %v448 = vunpack.c.h.b16 %v361
      %v449 = vunpack.c.l.b16 %v362
      %v450 = vunpack.c.h.b16 %v362
      %v451 = vpack.c.b16 %v439, %v435
      %v452 = vpack.c.b16 %v440, %v436
      %v453 = vpack.c.b16 %v441, %v437
      %v454 = vpack.c.b16 %v442, %v438
      %v455 = vpack.c.b16 %v447, %v443
      %v456 = vpack.c.b16 %v448, %v444
      %v457 = vpack.c.b16 %v449, %v445
      %v458 = vpack.c.b16 %v450, %v446
      %v531 = vunpack.c.l.b16 %v363
      %v532 = vunpack.c.l.b16 %v364
      %v533 = vunpack.c.l.b16 %v365
      %v534 = vunpack.c.l.b16 %v366
      %v535 = vunpack.c.l.b16 %v367
      %v536 = vunpack.c.l.b16 %v368
      %v537 = vunpack.c.l.b16 %v369
      %v538 = vunpack.c.l.b16 %v370
      %v539 = vunpack.c.l.b16 %v371
      %v540 = vunpack.c.l.b16 %v372
      %v541 = vunpack.c.l.b16 %v373
      %v542 = vunpack.c.l.b16 %v374
      %v543 = vunpack.c.l.b16 %v375
      %v544 = vunpack.c.l.b16 %v376
      %v545 = vunpack.c.l.b16 %v377
      %v546 = vunpack.c.l.b16 %v378
      %v547 = vunpack.c.l.b16 %v379
      %v548 = vunpack.c.l.b16 %v380
      %v549 = vunpack.c.l.b16 %v381
      %v550 = vunpack.c.l.b16 %v382
      %v551 = vunpack.c.l.b16 %v383
      %v552 = vunpack.c.l.b16 %v384
      %v553 = vunpack.c.l.b16 %v385
      %v554 = vunpack.c.l.b16 %v386
      %v555 = vunpack.c.l.b16 %v387
      %v556 = vunpack.c.l.b16 %v388
      %v557 = vunpack.c.l.b16 %v389
      %v558 = vunpack.c.l.b16 %v390
      %v559 = vunpack.c.l.b16 %v391
      %v560 = vunpack.c.l.b16 %v392
      %v561 = vunpack.c.l.b16 %v393
      %v562 = vunpack.c.l.b16 %v394
      %v563 = vunpack.c.l.b16 %v395
      %v564 = vunpack.c.l.b16 %v396
      %v565 = vunpack.c.l.b16 %v397
      %v566 = vunpack.c.l.b16 %v398
      %v567 = vunpack.c.l.b16 %v399
      %v568 = vunpack.c.l.b16 %v400
      %v569 = vunpack.c.l.b16 %v401
      %v570 = vunpack.c.l.b16 %v402
      %v571 = vunpack.c.l.b16 %v403
      %v572 = vunpack.c.l.b16 %v404
      %v573 = vunpack.c.l.b16 %v405
      %v574 = vunpack.c.l.b16 %v406
      %v575 = vunpack.c.l.b16 %v407
      %v576 = vunpack.c.l.b16 %v408
      %v577 = vunpack.c.l.b16 %v409
      %v578 = vunpack.c.l.b16 %v410
      %v579 = vunpack.c.l.b16 %v411
      %v580 = vunpack.c.l.b16 %v412
      %v581 = vunpack.c.l.b16 %v413
      %v582 = vunpack.c.l.b16 %v414
      %v583 = vunpack.c.l.b16 %v415
      %v584 = vunpack.c.l.b16 %v416
      %v585 = vunpack.c.l.b16 %v417
      %v586 = vunpack.c.l.b16 %v418
      %v587 = vunpack.c.l.b16 %v419
      %v588 = vunpack.c.l.b16 %v420
      %v589 = vunpack.c.l.b16 %v421
      %v590 = vunpack.c.l.b16 %v422
      %v591 = vunpack.c.l.b16 %v423
      %v592 = vunpack.c.l.b16 %v424
      %v593 = vunpack.c.l.b16 %v425
      %v594 = vunpack.c.l.b16 %v426
      %v595 = vpack.c.b16 %v532, %v531
      %v596 = vpack.c.b16 %v534, %v533
      %v597 = vpack.c.b16 %v536, %v535
      %v598 = vpack.c.b16 %v538, %v537
      %v599 = vpack.c.b16 %v540, %v539
      %v600 = vpack.c.b16 %v542, %v541
      %v601 = vpack.c.b16 %v544, %v543
      %v602 = vpack.c.b16 %v546, %v545
      %v603 = vpack.c.b16 %v548, %v547
      %v604 = vpack.c.b16 %v550, %v549
      %v605 = vpack.c.b16 %v552, %v551
      %v606 = vpack.c.b16 %v554, %v553
      %v607 = vpack.c.b16 %v556, %v555
      %v608 = vpack.c.b16 %v558, %v557
      %v609 = vpack.c.b16 %v560, %v559
      %v610 = vpack.c.b16 %v562, %v561
      %v611 = vpack.c.b16 %v564, %v563
      %v612 = vpack.c.b16 %v566, %v565
      %v613 = vpack.c.b16 %v568, %v567
      %v614 = vpack.c.b16 %v570, %v569
      %v615 = vpack.c.b16 %v572, %v571
      %v616 = vpack.c.b16 %v574, %v573
      %v617 = vpack.c.b16 %v576, %v575
      %v618 = vpack.c.b16 %v578, %v577
      %v619 = vpack.c.b16 %v580, %v579
      %v620 = vpack.c.b16 %v582, %v581
      %v621 = vpack.c.b16 %v584, %v583
      %v622 = vpack.c.b16 %v586, %v585
      %v623 = vpack.c.b16 %v588, %v587
      %v624 = vpack.c.b16 %v590, %v589
      %v625 = vpack.c.b16 %v592, %v591
      %v626 = vpack.c.b16 %v594, %v593
      %659 = vmatprep.subr.bf16.mxu0 0
      %660 = vmatpush1.bf16.msra.mxu0 %v595
      %661 = vmatprep.subr.bf16.mxu0 0
      %662 = vmatpush1.bf16.msra.mxu0 %v596
      %663 = vmatprep.subr.bf16.mxu0 0
      %664 = vmatpush1.bf16.msra.mxu0 %v597
      %665 = vmatprep.subr.bf16.mxu0 0
      %666 = vmatpush1.bf16.msra.mxu0 %v598
      %667 = vmatprep.subr.bf16.mxu0 0
      %668 = vmatpush1.bf16.msra.mxu0 %v599
      %669 = vmatprep.subr.bf16.mxu0 0
      %670 = vmatpush1.bf16.msra.mxu0 %v600
      %671 = vmatprep.subr.bf16.mxu0 0
      %672 = vmatpush1.bf16.msra.mxu0 %v601
      %673 = vmatprep.subr.bf16.mxu0 0
      %674 = vmatpush1.bf16.msra.mxu0 %v602
      %675 = vmatprep.subr.bf16.mxu0 0
      %676 = vmatpush1.bf16.msra.mxu0 %v603
      %677 = vmatprep.subr.bf16.mxu0 0
      %678 = vmatpush1.bf16.msra.mxu0 %v604
      %679 = vmatprep.subr.bf16.mxu0 0
      %680 = vmatpush1.bf16.msra.mxu0 %v605
      %681 = vmatprep.subr.bf16.mxu0 0
      %682 = vmatpush1.bf16.msra.mxu0 %v606
      %683 = vmatprep.subr.bf16.mxu0 0
      %684 = vmatpush1.bf16.msra.mxu0 %v607
      %685 = vmatprep.subr.bf16.mxu0 0
      %686 = vmatpush1.bf16.msra.mxu0 %v608
      %687 = vmatprep.subr.bf16.mxu0 0
      %688 = vmatpush1.bf16.msra.mxu0 %v609
      %689 = vmatprep.subr.bf16.mxu0 0
      %690 = vmatpush1.bf16.msra.mxu0 %v610
      %691 = vmatprep.mubr.bf16.mxu0 %v452
      %692 = vmatmul.mubr.bf16.gmra.mrb[0].mxu0 %v451
      %v693 = vpop.f32.mrb[0].mxu0
      %v694 = vadd.f32 0.0, %v693
      %v695 = vpop.f32.mrb[0].mxu0
      %v696 = vpop.f32.mrb[0].mxu0
      %v697 = vadd.f32 0.0, %v696
      %v698 = vpop.f32.mrb[0].mxu0
      %699 = vmatprep.mubr.bf16.mxu0 %v456
      %700 = vmatmul.mubr.bf16.gmra.mrb[0].mxu0 %v455
      %v701 = vpop.f32.mrb[0].mxu0
      %v702 = vadd.f32 0.0, %v701
      %v703 = vpop.f32.mrb[0].mxu0
      %v704 = vpop.f32.mrb[0].mxu0
      %v705 = vadd.f32 0.0, %v704
      %v706 = vpop.f32.mrb[0].mxu0
      %707 = vdwg.mxu0
      %708 = vmatprep.subr.bf16.mxu0 0
      %709 = vmatpush1.bf16.msra.mxu0 %v611
      %710 = vmatprep.subr.bf16.mxu0 0
      %711 = vmatpush1.bf16.msra.mxu0 %v612
      %712 = vmatprep.subr.bf16.mxu0 0
      %713 = vmatpush1.bf16.msra.mxu0 %v613
      %714 = vmatprep.subr.bf16.mxu0 0
      %715 = vmatpush1.bf16.msra.mxu0 %v614
      %716 = vmatprep.subr.bf16.mxu0 0
      %717 = vmatpush1.bf16.msra.mxu0 %v615
      %718 = vmatprep.subr.bf16.mxu0 0
      %719 = vmatpush1.bf16.msra.mxu0 %v616
      %720 = vmatprep.subr.bf16.mxu0 0
      %721 = vmatpush1.bf16.msra.mxu0 %v617
      %722 = vmatprep.subr.bf16.mxu0 0
      %723 = vmatpush1.bf16.msra.mxu0 %v618
      %724 = vmatprep.subr.bf16.mxu0 0
      %725 = vmatpush1.bf16.msra.mxu0 %v619
      %726 = vmatprep.subr.bf16.mxu0 0
      %727 = vmatpush1.bf16.msra.mxu0 %v620
      %728 = vmatprep.subr.bf16.mxu0 0
      %729 = vmatpush1.bf16.msra.mxu0 %v621
      %730 = vmatprep.subr.bf16.mxu0 0
      %731 = vmatpush1.bf16.msra.mxu0 %v622
      %732 = vmatprep.subr.bf16.mxu0 0
      %733 = vmatpush1.bf16.msra.mxu0 %v623
      %734 = vmatprep.subr.bf16.mxu0 0
      %735 = vmatpush1.bf16.msra.mxu0 %v624
      %736 = vmatprep.subr.bf16.mxu0 0
      %737 = vmatpush1.bf16.msra.mxu0 %v625
      %738 = vmatprep.subr.bf16.mxu0 0
      %739 = vmatpush1.bf16.msra.mxu0 %v626
      %740 = vmatprep.mubr.bf16.mxu0 %v454
      %741 = vmatmul.mubr.bf16.gmra.mrb[0].mxu0 %v453
      %v742 = vpop.f32.mrb[0].mxu0
      %v743 = vadd.f32 %v694, %v742
      %v744 = vpop.f32.mrb[0].mxu0
      %v745 = vpop.f32.mrb[0].mxu0
      %v746 = vadd.f32 %v697, %v745
      %v747 = vpop.f32.mrb[0].mxu0
      %748 = vmatprep.mubr.bf16.mxu0 %v458
      %749 = vmatmul.mubr.bf16.gmra.mrb[0].mxu0 %v457
      %v750 = vpop.f32.mrb[0].mxu0
      %v751 = vadd.f32 %v702, %v750
      %v752 = vpop.f32.mrb[0].mxu0
      %v753 = vpop.f32.mrb[0].mxu0
      %v754 = vadd.f32 %v705, %v753
      %v755 = vpop.f32.mrb[0].mxu0
      %756 = vdwg.mxu0
      %v757 = vpack.c.bf16 %v746, %v743
      %v758 = vpack.c.bf16 %v754, %v751
      %v761 = vunpack.c.l.b16 %v757
      %v762 = vunpack.c.h.b16 %v757
      %v763 = vunpack.c.l.b16 %v758
      %v764 = vunpack.c.h.b16 %v758
      %v765 = vpack.c.b16 %v761, %v761
      %v766 = vpack.c.b16 %v762, %v762
      %v767 = vpack.c.b16 %v763, %v763
      %v768 = vpack.c.b16 %v764, %v764
      %773 = vst [vmem:[%s329] sm:$0xf] %v765
      %774 = vst [vmem:[%s329 + $0x4] sm:$0xf] %v766
      %775 = vst [vmem:[%s329 + $0x8] sm:$0xf] %v767
      %776 = vst [vmem:[%s329 + $0xc] sm:$0xf] %v768
      %v777 = vld [vmem:[%s338] sm:$0x1]
      %v778 = vadd.f32 %v743, %v746
      %v779 = vadd.f32 %v778, %v751
      %v780 = vadd.f32 %v779, %v754
      %v781 = vrot.slane %v780, 4
      %v782 = vadd.f32 %v780, %v781
      %v783 = vrot.slane %v782, 2
      %v784 = vadd.f32 %v782, %v783
      %v785 = vrot.slane %v784, 1
      %v786 = vadd.f32 %v784, %v785
      %v787 = vadd.f32 %v777, %v786
      %788 = vst [vmem:[%s338] sm:$0x1] %v787
      %v789 = vld [vmem:[%s346] sm:$0x1]
      %v790 = vmul.f32 %v743, %v743
      %v791 = vmul.f32 %v746, %v746
      %v792 = vmul.f32 %v751, %v751
      %v793 = vmul.f32 %v754, %v754
      %v794 = vadd.f32 %v790, %v791
      %v795 = vadd.f32 %v794, %v792
      %v796 = vadd.f32 %v795, %v793
      %v797 = vrot.slane %v796, 4
      %v798 = vadd.f32 %v796, %v797
      %v799 = vrot.slane %v798, 2
      %v800 = vadd.f32 %v798, %v799
      %v801 = vrot.slane %v800, 1
      %v802 = vadd.f32 %v800, %v801
      %v803 = vadd.f32 %v789, %v802
      %804 = vst [vmem:[%s346] sm:$0x1] %v803
      %s805 = sadd.s32 %s23, %s25
      %s806 = smul.u32 4, %s805
      %p807 = scmp.lt.s32.totalorder %s22, 3
      %s808 = scalar_select %p807, %s22, 3
      %p809 = scmp.lt.s32.totalorder %s806, 3
      %s810 = scalar_select %p809, %s806, 3
      %p811 = scmp.lt.s32.totalorder %s24, 0
      %s812 = scalar_select %p811, %s24, 0
      %s813 = sadd.s32 %s812, %s810
      %s814 = smul.addr %s808, 4
      %s815 = sadd.s32 %s813, %s814
      %s816 = smul.addr %s815, 4
      %s817 = scalar_lea.vmem %s2, %s816
      %s818 = sadd.s32 %s22, %s23
      %p819 = scmp.lt.s32.totalorder %s818, 3
      %s820 = scalar_select %p819, %s818, 3
      %p821 = scmp.lt.s32.totalorder %s24, 0
      %s822 = scalar_select %p821, %s24, 0
      %s823 = sadd.s32 %s822, %s820
      %s824 = scalar_lea.vmem %s3, %s823
      %s825 = sadd.s32 %s22, %s23
      %p826 = scmp.lt.s32.totalorder %s825, 3
      %s827 = scalar_select %p826, %s825, 3
      %p828 = scmp.lt.s32.totalorder %s24, 0
      %s829 = scalar_select %p828, %s24, 0
      %s830 = sadd.s32 %s829, %s827
      %s831 = scalar_lea.vmem %s4, %s830
      // Predicated region
      $region33: #{generator_forward.31} parent=27 // pred_check
        %p832 = pneg %p124
      $region34: #{generator_forward.31} parent=27 // pred_check_branch
        %834 = sbr.rel (%p832) target = $region36
      $region35: #{generator_forward.31} parent=27 // pred_region
        %s835 = sadd.s32 %s23, %s25
        %s836 = smul.u32 4, %s835
      $region36: #{generator_forward.31} parent=27 // pred_fallthru
        _
      // Predicated region
      $region37: #{generator_forward.31} parent=27 // pred_check
        %p837 = pneg %p154
      $region38: #{generator_forward.31} parent=27 // pred_check_branch
        %839 = sbr.rel (%p837) target = $region40
      $region39: #{generator_forward.31} parent=27 // pred_region
        %s840 = sadd.s32 %s22, %s23
      $region40: #{generator_forward.31} parent=27 // pred_fallthru
        _
      // Predicated region
      $region41: #{generator_forward.31} parent=27 // pred_check
        %p841 = pneg %p184
      $region42: #{generator_forward.31} parent=27 // pred_check_branch
        %843 = sbr.rel (%p841) target = $region44
      $region43: #{generator_forward.31} parent=27 // pred_region
        %s844 = sadd.s32 %s22, %s23
      $region44: #{generator_forward.31} parent=27 // pred_fallthru
        _
    $region28: #{generator_forward.31} parent=5 // pred_fallthru
      _
    %p845 = scmp.le.s32.totalorder 2, %s11
    // Predicated region
    $region45: #{generator_forward.31} parent=5 // pred_check
      %p846 = pneg %p845
    $region46: #{generator_forward.31} parent=5 // pred_check_branch
      %848 = sbr.rel (%p846) target = $region48
    $region47: #{generator_forward.31} parent=5 // pred_region
      %s849 = ssub.s32 %s11, 2
      // Predicated region
      $region49: #{generator_forward.31} parent=47 // pred_check
        %p850 = pneg %p130
      $region50: #{generator_forward.31} parent=47 // pred_check_branch
        %852 = sbr.rel (%p850) target = $region52
      $region51: #{generator_forward.31} parent=47 // pred_region
        %s853 = sadd.s32 %s27, %s29
        %s854 = smul.u32 4, %s853
        %p855 = scmp.lt.s32.totalorder %s26, 3
        %s856 = scalar_select %p855, %s26, 3
        %p857 = scmp.lt.s32.totalorder %s854, 3
        %s858 = scalar_select %p857, %s854, 3
        %p859 = scmp.lt.s32.totalorder %s28, 0
        %s860 = scalar_select %p859, %s28, 0
        %s861 = sadd.s32 %s860, %s858
        %s862 = smul.addr %s856, 4
        %s863 = sadd.s32 %s861, %s862
        %s864 = smul.addr %s863, 4
        %s865 = scalar_lea.vmem %s2, %s864
      $region52: #{generator_forward.31} parent=47 // pred_fallthru
        _
      // Predicated region
      $region53: #{generator_forward.31} parent=47 // pred_check
        %p866 = pneg %p160
      $region54: #{generator_forward.31} parent=47 // pred_check_branch
        %868 = sbr.rel (%p866) target = $region56
      $region55: #{generator_forward.31} parent=47 // pred_region
        %s869 = sadd.s32 %s26, %s27
        %p870 = scmp.lt.s32.totalorder %s869, 3
        %s871 = scalar_select %p870, %s869, 3
        %p872 = scmp.lt.s32.totalorder %s28, 0
        %s873 = scalar_select %p872, %s28, 0
        %s874 = sadd.s32 %s873, %s871
        %s875 = scalar_lea.vmem %s3, %s874
      $region56: #{generator_forward.31} parent=47 // pred_fallthru
        _
      // Predicated region
      $region57: #{generator_forward.31} parent=47 // pred_check
        %p876 = pneg %p190
      $region58: #{generator_forward.31} parent=47 // pred_check_branch
        %878 = sbr.rel (%p876) target = $region60
      $region59: #{generator_forward.31} parent=47 // pred_region
        %s879 = sadd.s32 %s26, %s27
        %p880 = scmp.lt.s32.totalorder %s879, 3
        %s881 = scalar_select %p880, %s879, 3
        %p882 = scmp.lt.s32.totalorder %s28, 0
        %s883 = scalar_select %p882, %s28, 0
        %s884 = sadd.s32 %s883, %s881
        %s885 = scalar_lea.vmem %s4, %s884
      $region60: #{generator_forward.31} parent=47 // pred_fallthru
        _
    $region48: #{generator_forward.31} parent=5 // pred_fallthru
      _
  $region6: #{generator_forward.31} parent=0 // loop_footer
    %s15 = sadd.s32 1, %s11
  $region7: #{generator_forward.31} parent=0 // loop_footer_branch
    %10 = sbr.rel target = $region3
  $region8: #{generator_forward.31} parent=0 // loop_exit
    _

// kernel: generator_forward.33
$region0: #{generator_forward.33}
  #allocation0 [shape = 'u32[]', space=smem, size = 0x4, offset = 0x4, fixed_abs, tag = 'smem constant byte address 0x4 - core index']
  #allocation1 [shape = 'u32[144,128]{1,0:T(1,128)}', space=vmem, size = 0x12000, scoped, tag = 'internal scratch']
  %s0 = inlined_call_operand.vmem [shape: bf16[4,128,512], index: 0, kind: input, shape index: {}]
  %s1 = inlined_call_operand.vmem [shape: bf16[4,512,128], index: 1, kind: input, shape index: {}]
  %s2 = inlined_call_operand.vmem [shape: bf16[4,128,128], index: 2, kind: output, shape index: {0}]
  %s3 = inlined_call_operand.vmem [shape: f32[4,1,128], index: 3, kind: output, shape index: {1}]
  %s4 = inlined_call_operand.vmem [shape: f32[4,1,128], index: 4, kind: output, shape index: {2}]
  %5 = xla_tuple %s2, %s3, %s4
  %s6 = sld [smem:[#allocation0]]
  $region61: #{generator_forward.33} parent=0
    _
  %s8 = ssub.s32 1, %s6
  %s9 = scalar_select 0, %s8, %s6
  loop: start=0, step=1, limit=6
  $region2: #{generator_forward.33} parent=0 // loop_pre_header
    _
  $region3: #{generator_forward.33} parent=0 // loop_header
    %s11 = sphi 0, %s15
    %p12 = scmp.ge.s32.totalorder %s11, 6
    %s18 = sphi 0, %s44
    %s19 = sphi 0, %s40
    %s20 = sphi 0, %s36
    %s21 = sphi 0, %s32
    %s22 = sphi 0, %s18
    %s23 = sphi 0, %s19
    %s24 = sphi 0, %s20
    %s25 = sphi 0, %s21
    %s26 = sphi 0, %s22
    %s27 = sphi 0, %s23
    %s28 = sphi 0, %s24
    %s29 = sphi 0, %s25
    %s51 = sphi 0, %s53
    %s54 = sphi 0, %s51
    %s55 = sphi 0, %s54
    %s71 = sphi 0, %s55
    %s79 = sphi 0, %s81
    %s82 = sphi 0, %s79
    %s83 = sphi 0, %s82
    %s99 = sphi 0, %s83
    %s111 = sphi 0, %s113
    %s114 = sphi 0, %s111
    %s115 = sphi 0, %s114
    %s131 = sphi 0, %s115
    %s141 = sphi 0, %s143
    %s144 = sphi 0, %s141
    %s145 = sphi 0, %s144
    %s161 = sphi 0, %s145
    %s171 = sphi 0, %s173
    %s174 = sphi 0, %s171
    %s175 = sphi 0, %s174
    %s191 = sphi 0, %s175
  $region4: #{generator_forward.33} parent=0 // loop_header_branch
    %14 = sbr.rel (%p12) target = $region8
  $region5: #{generator_forward.33} parent=0 // loop_body
    %s16 = ssub.s32 %s11, 1
    %s17 = ssub.s32 %s11, 2
    %s30 = sadd.s32 1, %s21
    %p31 = scmp.ge.s32.totalorder %s30, 1
    %s32 = scalar_select %p31, 0, %s30
    %s33 = sadd.s32 1, %s20
    %s34 = scalar_select %p31, %s33, %s20
    %p35 = scmp.ge.s32.totalorder %s34, 1
    %s36 = scalar_select %p35, 0, %s34
    %s37 = sadd.s32 1, %s19
    %s38 = scalar_select %p35, %s37, %s19
    %p39 = scmp.ge.s32.totalorder %s38, 1
    %s40 = scalar_select %p39, 0, %s38
    %s41 = sadd.s32 1, %s18
    %s42 = scalar_select %p39, %s41, %s18
    %p43 = scmp.ge.s32.totalorder %s42, 4
    %s44 = scalar_select %p43, 0, %s42
    %s45 = sadd.s32 %s19, %s21
    %s46 = sadd.s32 %s40, %s32
    %s47 = ssub.s32 %s18, %s44
    %s48 = ssub.s32 %s45, %s46
    %s49 = sor.u32 %s47, %s48
    %p50 = scmp.eq.s32.totalorder %s49, 0
    %s52 = sadd.s32 %s51, 1
    %s53 = scalar_select %p50, %s51, %s52
    %p56 = pneg %p50
    %p57 = scmp.eq.s32.totalorder %s11, 3
    %p58 = por %p56, %p57
    %p59 = scmp.ne.s32.totalorder %s51, %s54
    %p60 = scmp.eq.s32.totalorder %s11, 0
    %p61 = por %p59, %p60
    %p62 = scmp.ne.s32.totalorder %s51, %s54
    %p63 = scmp.eq.s32.totalorder %s16, 3
    %p64 = por %p62, %p63
    %p65 = scmp.ne.s32.totalorder %s54, %s55
    %p66 = scmp.eq.s32.totalorder %s16, 0
    %p67 = por %p65, %p66
    %p68 = scmp.ne.s32.totalorder %s54, %s55
    %p69 = scmp.eq.s32.totalorder %s17, 3
    %p70 = por %p68, %p69
    %p72 = scmp.ne.s32.totalorder %s55, %s71
    %p73 = scmp.eq.s32.totalorder %s17, 0
    %p74 = por %p72, %p73
    %s75 = ssub.s32 %s18, %s44
    %s76 = ssub.s32 %s20, %s36
    %s77 = sor.u32 %s75, %s76
    %p78 = scmp.eq.s32.totalorder %s77, 0
    %s80 = sadd.s32 %s79, 1
    %s81 = scalar_select %p78, %s79, %s80
    %p84 = pneg %p78
    %p85 = scmp.eq.s32.totalorder %s11, 3
    %p86 = por %p84, %p85
    %p87 = scmp.ne.s32.totalorder %s79, %s82
    %p88 = scmp.eq.s32.totalorder %s11, 0
    %p89 = por %p87, %p88
    %p90 = scmp.ne.s32.totalorder %s79, %s82
    %p91 = scmp.eq.s32.totalorder %s16, 3
    %p92 = por %p90, %p91
    %p93 = scmp.ne.s32.totalorder %s82, %s83
    %p94 = scmp.eq.s32.totalorder %s16, 0
    %p95 = por %p93, %p94
    %p96 = scmp.ne.s32.totalorder %s82, %s83
    %p97 = scmp.eq.s32.totalorder %s17, 3
    %p98 = por %p96, %p97
    %p100 = scmp.ne.s32.totalorder %s83, %s99
    %p101 = scmp.eq.s32.totalorder %s17, 0
    %p102 = por %p100, %p101
    %s103 = sadd.s32 %s19, %s21
    %s104 = sadd.s32 %s40, %s32
    %s105 = ssub.s32 %s18, %s44
    %s106 = ssub.s32 %s103, %s104
    %s107 = sor.u32 %s105, %s106
    %s108 = ssub.s32 %s20, %s36
    %s109 = sor.u32 %s107, %s108
    %p110 = scmp.eq.s32.totalorder %s109, 0
    %s112 = sadd.s32 %s111, 1
    %s113 = scalar_select %p110, %s111, %s112
    %p116 = pneg %p110
    %p117 = scmp.eq.s32.totalorder %s11, 3
    %p118 = por %p116, %p117
    %p119 = scmp.ne.s32.totalorder %s111, %s114
    %p120 = scmp.eq.s32.totalorder %s11, 0
    %p121 = por %p119, %p120
    %p122 = scmp.ne.s32.totalorder %s111, %s114
    %p123 = scmp.eq.s32.totalorder %s16, 3
    %p124 = por %p122, %p123
    %p125 = scmp.ne.s32.totalorder %s114, %s115
    %p126 = scmp.eq.s32.totalorder %s16, 0
    %p127 = por %p125, %p126
    %p128 = scmp.ne.s32.totalorder %s114, %s115
    %p129 = scmp.eq.s32.totalorder %s17, 3
    %p130 = por %p128, %p129
    %p132 = scmp.ne.s32.totalorder %s115, %s131
    %p133 = scmp.eq.s32.totalorder %s17, 0
    %p134 = por %p132, %p133
    %s135 = sadd.s32 %s18, %s19
    %s136 = sadd.s32 %s44, %s40
    %s137 = ssub.s32 %s135, %s136
    %s138 = ssub.s32 %s20, %s36
    %s139 = sor.u32 %s137, %s138
    %p140 = scmp.eq.s32.totalorder %s139, 0
    %s142 = sadd.s32 %s141, 1
    %s143 = scalar_select %p140, %s141, %s142
    %p146 = pneg %p140
    %p147 = scmp.eq.s32.totalorder %s11, 3
    %p148 = por %p146, %p147
    %p149 = scmp.ne.s32.totalorder %s141, %s144
    %p150 = scmp.eq.s32.totalorder %s11, 0
    %p151 = por %p149, %p150
    %p152 = scmp.ne.s32.totalorder %s141, %s144
    %p153 = scmp.eq.s32.totalorder %s16, 3
    %p154 = por %p152, %p153
    %p155 = scmp.ne.s32.totalorder %s144, %s145
    %p156 = scmp.eq.s32.totalorder %s16, 0
    %p157 = por %p155, %p156
    %p158 = scmp.ne.s32.totalorder %s144, %s145
    %p159 = scmp.eq.s32.totalorder %s17, 3
    %p160 = por %p158, %p159
    %p162 = scmp.ne.s32.totalorder %s145, %s161
    %p163 = scmp.eq.s32.totalorder %s17, 0
    %p164 = por %p162, %p163
    %s165 = sadd.s32 %s18, %s19
    %s166 = sadd.s32 %s44, %s40
    %s167 = ssub.s32 %s165, %s166
    %s168 = ssub.s32 %s20, %s36
    %s169 = sor.u32 %s167, %s168
    %p170 = scmp.eq.s32.totalorder %s169, 0
    %s172 = sadd.s32 %s171, 1
    %s173 = scalar_select %p170, %s171, %s172
    %p176 = pneg %p170
    %p177 = scmp.eq.s32.totalorder %s11, 3
    %p178 = por %p176, %p177
    %p179 = scmp.ne.s32.totalorder %s171, %s174
    %p180 = scmp.eq.s32.totalorder %s11, 0
    %p181 = por %p179, %p180
    %p182 = scmp.ne.s32.totalorder %s171, %s174
    %p183 = scmp.eq.s32.totalorder %s16, 3
    %p184 = por %p182, %p183
    %p185 = scmp.ne.s32.totalorder %s174, %s175
    %p186 = scmp.eq.s32.totalorder %s16, 0
    %p187 = por %p185, %p186
    %p188 = scmp.ne.s32.totalorder %s174, %s175
    %p189 = scmp.eq.s32.totalorder %s17, 3
    %p190 = por %p188, %p189
    %p192 = scmp.ne.s32.totalorder %s175, %s191
    %p193 = scmp.eq.s32.totalorder %s17, 0
    %p194 = por %p192, %p193
    %p195 = scmp.le.s32.totalorder 1, %s11
    %p196 = scmp.lt.s32.totalorder %s11, 5
    %p197 = pnand %p195, %p196
    %p198 = pneg %p197
    // Predicated region
    $region9: #{generator_forward.33} parent=5 // pred_check
      _
    $region10: #{generator_forward.33} parent=5 // pred_check_branch
      %200 = sbr.rel (%p197) target = $region12
    $region11: #{generator_forward.33} parent=5 // pred_region
      %s201 = ssub.s32 %s11, 1
    $region12: #{generator_forward.33} parent=5 // pred_fallthru
      _
    %p202 = scmp.lt.s32.totalorder %s11, 4
    // Predicated region
    $region13: #{generator_forward.33} parent=5 // pred_check
      %p203 = pneg %p202
    $region14: #{generator_forward.33} parent=5 // pred_check_branch
      %205 = sbr.rel (%p203) target = $region16
    $region15: #{generator_forward.33} parent=5 // pred_region
      // Predicated region
      $region17: #{generator_forward.33} parent=15 // pred_check
        %p206 = pneg %p61
      $region18: #{generator_forward.33} parent=15 // pred_check_branch
        %208 = sbr.rel (%p206) target = $region20
      $region19: #{generator_forward.33} parent=15 // pred_region
        %s209 = sadd.s32 %s19, %s21
        %s210 = smul.u32 16, %s209
        %p211 = scmp.lt.s32.totalorder %s18, 3
        %s212 = scalar_select %p211, %s18, 3
        %p213 = scmp.lt.s32.totalorder %s210, 15
        %s214 = scalar_select %p213, %s210, 15
        %s215 = smul.addr %s214, 4
        %s216 = smul.addr %s212, 64
        %s217 = sadd.s32 %s215, %s216
        %s218 = smul.addr %s217, 4
        %s219 = scalar_lea.vmem %s0, %s218
        %s220 = sadd.s32 %s19, %s21
        %s221 = smul.u32 16, %s220
      $region20: #{generator_forward.33} parent=15 // pred_fallthru
        _
      // Predicated region
      $region21: #{generator_forward.33} parent=15 // pred_check
        %p222 = pneg %p89
      $region22: #{generator_forward.33} parent=15 // pred_check_branch
        %224 = sbr.rel (%p222) target = $region24
      $region23: #{generator_forward.33} parent=15 // pred_region
        %p225 = scmp.lt.s32.totalorder %s18, 3
        %s226 = scalar_select %p225, %s18, 3
        %p227 = scmp.lt.s32.totalorder %s20, 0
        %s228 = scalar_select %p227, %s20, 0
        %s229 = smul.addr %s226, 64
        %s230 = sadd.s32 %s228, %s229
        %s231 = smul.addr %s230, 4
        %s232 = scalar_lea.vmem %s1, %s231
      $region24: #{generator_forward.33} parent=15 // pred_fallthru
        _
    $region16: #{generator_forward.33} parent=5 // pred_fallthru
      _
    %p233 = scmp.le.s32.totalorder 1, %s11
    %p234 = scmp.lt.s32.totalorder %s11, 5
    %p235 = pnand %p233, %p234
    %p236 = pneg %p235
    // Predicated region
    $region25: #{generator_forward.33} parent=5 // pred_check
      _
    $region26: #{generator_forward.33} parent=5 // pred_check_branch
      %238 = sbr.rel (%p235) target = $region28
    $region27: #{generator_forward.33} parent=5 // pred_region
      %s239 = ssub.s32 %s11, 1
      %s240 = sadd.s32 %s23, %s25
      %s241 = smul.u32 16, %s240
      %p242 = scmp.lt.s32.totalorder %s22, 3
      %s243 = scalar_select %p242, %s22, 3
      %p244 = scmp.lt.s32.totalorder %s241, 15
      %s245 = scalar_select %p244, %s241, 15
      %s246 = smul.addr %s245, 4
      %s247 = smul.addr %s243, 64
      %s248 = sadd.s32 %s246, %s247
      %s249 = smul.addr %s248, 4
      %s250 = scalar_lea.vmem %s0, %s249
      %p251 = pneg %p67
      %p252 = pneg %p64
      %p253 = scmp.lt.s32.totalorder %s22, 3
      %s254 = scalar_select %p253, %s22, 3
      %p255 = scmp.lt.s32.totalorder %s24, 0
      %s256 = scalar_select %p255, %s24, 0
      %s257 = smul.addr %s254, 64
      %s258 = sadd.s32 %s256, %s257
      %s259 = smul.addr %s258, 4
      %s260 = scalar_lea.vmem %s1, %s259
      %p261 = pneg %p95
      %p262 = pneg %p92
      %p263 = pneg %p127
      %p264 = pneg %p124
      %s265 = sadd.s32 %s23, %s25
      %s266 = smul.u32 16, %s265
      %p267 = scmp.lt.s32.totalorder %s22, 3
      %s268 = scalar_select %p267, %s22, 3
      %p269 = scmp.lt.s32.totalorder %s266, 15
      %s270 = scalar_select %p269, %s266, 15
      %p271 = scmp.lt.s32.totalorder %s24, 0
      %s272 = scalar_select %p271, %s24, 0
      %s273 = sadd.s32 %s272, %s270
      %s274 = smul.addr %s268, 16
      %s275 = sadd.s32 %s273, %s274
      %s276 = smul.addr %s275, 4
      %s277 = scalar_lea.vmem %s2, %s276
      %p278 = pneg %p157
      %p279 = pneg %p154
      %s280 = sadd.s32 %s22, %s23
      %p281 = scmp.lt.s32.totalorder %s280, 3
      %s282 = scalar_select %p281, %s280, 3
      %p283 = scmp.lt.s32.totalorder %s24, 0
      %s284 = scalar_select %p283, %s24, 0
      %s285 = sadd.s32 %s284, %s282
      %s286 = scalar_lea.vmem %s3, %s285
      %p287 = pneg %p187
      %p288 = pneg %p184
      %s289 = sadd.s32 %s22, %s23
      %p290 = scmp.lt.s32.totalorder %s289, 3
      %s291 = scalar_select %p290, %s289, 3
      %p292 = scmp.lt.s32.totalorder %s24, 0
      %s293 = scalar_select %p292, %s24, 0
      %s294 = sadd.s32 %s293, %s291
      %s295 = scalar_lea.vmem %s4, %s294
      %s296 = sadd.s32 %s23, %s25
      %s297 = smul.u32 16, %s296
      %p298 = scmp.lt.s32.totalorder %s22, 3
      %s299 = scalar_select %p298, %s22, 3
      %p300 = scmp.lt.s32.totalorder %s297, 15
      %s301 = scalar_select %p300, %s297, 15
      %s302 = smul.addr %s301, 4
      %s303 = smul.addr %s299, 64
      %s304 = sadd.s32 %s302, %s303
      %s305 = smul.addr %s304, 4
      %s306 = scalar_lea.vmem %s0, %s305
      %s307 = sadd.s32 %s23, %s25
      %s308 = smul.u32 16, %s307
      %p309 = scmp.lt.s32.totalorder %s22, 3
      %s310 = scalar_select %p309, %s22, 3
      %p311 = scmp.lt.s32.totalorder %s24, 0
      %s312 = scalar_select %p311, %s24, 0
      %s313 = smul.addr %s310, 64
      %s314 = sadd.s32 %s312, %s313
      %s315 = smul.addr %s314, 4
      %s316 = scalar_lea.vmem %s1, %s315
      %s317 = sadd.s32 %s23, %s25
      %s318 = smul.u32 16, %s317
      %p319 = scmp.lt.s32.totalorder %s22, 3
      %s320 = scalar_select %p319, %s22, 3
      %p321 = scmp.lt.s32.totalorder %s318, 15
      %s322 = scalar_select %p321, %s318, 15
      %p323 = scmp.lt.s32.totalorder %s24, 0
      %s324 = scalar_select %p323, %s24, 0
      %s325 = sadd.s32 %s324, %s322
      %s326 = smul.addr %s320, 16
      %s327 = sadd.s32 %s325, %s326
      %s328 = smul.addr %s327, 4
      %s329 = scalar_lea.vmem %s2, %s328
      %s330 = sadd.s32 %s23, %s25
      %s331 = smul.u32 16, %s330
      %s332 = sadd.s32 %s22, %s23
      %p333 = scmp.lt.s32.totalorder %s332, 3
      %s334 = scalar_select %p333, %s332, 3
      %p335 = scmp.lt.s32.totalorder %s24, 0
      %s336 = scalar_select %p335, %s24, 0
      %s337 = sadd.s32 %s336, %s334
      %s338 = scalar_lea.vmem %s3, %s337
      %s339 = sadd.s32 %s22, %s23
      %s340 = sadd.s32 %s22, %s23
      %p341 = scmp.lt.s32.totalorder %s340, 3
      %s342 = scalar_select %p341, %s340, 3
      %p343 = scmp.lt.s32.totalorder %s24, 0
      %s344 = scalar_select %p343, %s24, 0
      %s345 = sadd.s32 %s344, %s342
      %s346 = scalar_lea.vmem %s4, %s345
      %s347 = sadd.s32 %s22, %s23
      %p349 = scmp.eq.s32.totalorder %s25, 0
      // Predicated region
      $region29: #{generator_forward.33} parent=27 // pred_check
        %p350 = pneg %p349
      $region30: #{generator_forward.33} parent=27 // pred_check_branch
        %352 = sbr.rel (%p350) target = $region32
      $region31: #{generator_forward.33} parent=27 // pred_region
        %353 = vst [vmem:[%s338] sm:$0x1] 0.0
        %354 = vst [vmem:[%s346] sm:$0x1] 0.0
      $region32: #{generator_forward.33} parent=27 // pred_fallthru
        _
      %v355 = vld [vmem:[%s306] sm:$0xff]
      %v356 = vld [vmem:[%s306 + $0x8] sm:$0xff]
      %v357 = vld [vmem:[%s306 + $0x10] sm:$0xff]
      %v358 = vld [vmem:[%s306 + $0x18] sm:$0xff]
      %v359 = vld [vmem:[%s306 + $0x20] sm:$0xff]
      %v360 = vld [vmem:[%s306 + $0x28] sm:$0xff]
      %v361 = vld [vmem:[%s306 + $0x30] sm:$0xff]
      %v362 = vld [vmem:[%s306 + $0x38] sm:$0xff]
      %v363 = vld [vmem:[%s306 + $0x40] sm:$0xff]
      %v364 = vld [vmem:[%s306 + $0x48] sm:$0xff]
      %v365 = vld [vmem:[%s306 + $0x50] sm:$0xff]
      %v366 = vld [vmem:[%s306 + $0x58] sm:$0xff]
      %v367 = vld [vmem:[%s306 + $0x60] sm:$0xff]
      %v368 = vld [vmem:[%s306 + $0x68] sm:$0xff]
      %v369 = vld [vmem:[%s306 + $0x70] sm:$0xff]
      %v370 = vld [vmem:[%s306 + $0x78] sm:$0xff]
      %v371 = vld [vmem:[%s306 + $0x80] sm:$0xff]
      %v372 = vld [vmem:[%s306 + $0x88] sm:$0xff]
      %v373 = vld [vmem:[%s306 + $0x90] sm:$0xff]
      %v374 = vld [vmem:[%s306 + $0x98] sm:$0xff]
      %v375 = vld [vmem:[%s306 + $0xa0] sm:$0xff]
      %v376 = vld [vmem:[%s306 + $0xa8] sm:$0xff]
      %v377 = vld [vmem:[%s306 + $0xb0] sm:$0xff]
      %v378 = vld [vmem:[%s306 + $0xb8] sm:$0xff]
      %v379 = vld [vmem:[%s306 + $0xc0] sm:$0xff]
      %v380 = vld [vmem:[%s306 + $0xc8] sm:$0xff]
      %v381 = vld [vmem:[%s306 + $0xd0] sm:$0xff]
      %v382 = vld [vmem:[%s306 + $0xd8] sm:$0xff]
      %v383 = vld [vmem:[%s306 + $0xe0] sm:$0xff]
      %v384 = vld [vmem:[%s306 + $0xe8] sm:$0xff]
      %v385 = vld [vmem:[%s306 + $0xf0] sm:$0xff]
      %v386 = vld [vmem:[%s306 + $0xf8] sm:$0xff]
      %v387 = vld [vmem:[%s316] sm:$0xf]
      %v388 = vld [vmem:[%s316 + $0x4] sm:$0xf]
      %v389 = vld [vmem:[%s316 + $0x8] sm:$0xf]
      %v390 = vld [vmem:[%s316 + $0xc] sm:$0xf]
      %v391 = vld [vmem:[%s316 + $0x10] sm:$0xf]
      %v392 = vld [vmem:[%s316 + $0x14] sm:$0xf]
      %v393 = vld [vmem:[%s316 + $0x18] sm:$0xf]
      %v394 = vld [vmem:[%s316 + $0x1c] sm:$0xf]
      %v395 = vld [vmem:[%s316 + $0x20] sm:$0xf]
      %v396 = vld [vmem:[%s316 + $0x24] sm:$0xf]
      %v397 = vld [vmem:[%s316 + $0x28] sm:$0xf]
      %v398 = vld [vmem:[%s316 + $0x2c] sm:$0xf]
      %v399 = vld [vmem:[%s316 + $0x30] sm:$0xf]
      %v400 = vld [vmem:[%s316 + $0x34] sm:$0xf]
      %v401 = vld [vmem:[%s316 + $0x38] sm:$0xf]
      %v402 = vld [vmem:[%s316 + $0x3c] sm:$0xf]
      %v403 = vld [vmem:[%s316 + $0x40] sm:$0xf]
      %v404 = vld [vmem:[%s316 + $0x44] sm:$0xf]
      %v405 = vld [vmem:[%s316 + $0x48] sm:$0xf]
      %v406 = vld [vmem:[%s316 + $0x4c] sm:$0xf]
      %v407 = vld [vmem:[%s316 + $0x50] sm:$0xf]
      %v408 = vld [vmem:[%s316 + $0x54] sm:$0xf]
      %v409 = vld [vmem:[%s316 + $0x58] sm:$0xf]
      %v410 = vld [vmem:[%s316 + $0x5c] sm:$0xf]
      %v411 = vld [vmem:[%s316 + $0x60] sm:$0xf]
      %v412 = vld [vmem:[%s316 + $0x64] sm:$0xf]
      %v413 = vld [vmem:[%s316 + $0x68] sm:$0xf]
      %v414 = vld [vmem:[%s316 + $0x6c] sm:$0xf]
      %v415 = vld [vmem:[%s316 + $0x70] sm:$0xf]
      %v416 = vld [vmem:[%s316 + $0x74] sm:$0xf]
      %v417 = vld [vmem:[%s316 + $0x78] sm:$0xf]
      %v418 = vld [vmem:[%s316 + $0x7c] sm:$0xf]
      %v419 = vld [vmem:[%s316 + $0x80] sm:$0xf]
      %v420 = vld [vmem:[%s316 + $0x84] sm:$0xf]
      %v421 = vld [vmem:[%s316 + $0x88] sm:$0xf]
      %v422 = vld [vmem:[%s316 + $0x8c] sm:$0xf]
      %v423 = vld [vmem:[%s316 + $0x90] sm:$0xf]
      %v424 = vld [vmem:[%s316 + $0x94] sm:$0xf]
      %v425 = vld [vmem:[%s316 + $0x98] sm:$0xf]
      %v426 = vld [vmem:[%s316 + $0x9c] sm:$0xf]
      %v427 = vld [vmem:[%s316 + $0xa0] sm:$0xf]
      %v428 = vld [vmem:[%s316 + $0xa4] sm:$0xf]
      %v429 = vld [vmem:[%s316 + $0xa8] sm:$0xf]
      %v430 = vld [vmem:[%s316 + $0xac] sm:$0xf]
      %v431 = vld [vmem:[%s316 + $0xb0] sm:$0xf]
      %v432 = vld [vmem:[%s316 + $0xb4] sm:$0xf]
      %v433 = vld [vmem:[%s316 + $0xb8] sm:$0xf]
      %v434 = vld [vmem:[%s316 + $0xbc] sm:$0xf]
      %v435 = vld [vmem:[%s316 + $0xc0] sm:$0xf]
      %v436 = vld [vmem:[%s316 + $0xc4] sm:$0xf]
      %v437 = vld [vmem:[%s316 + $0xc8] sm:$0xf]
      %v438 = vld [vmem:[%s316 + $0xcc] sm:$0xf]
      %v439 = vld [vmem:[%s316 + $0xd0] sm:$0xf]
      %v440 = vld [vmem:[%s316 + $0xd4] sm:$0xf]
      %v441 = vld [vmem:[%s316 + $0xd8] sm:$0xf]
      %v442 = vld [vmem:[%s316 + $0xdc] sm:$0xf]
      %v443 = vld [vmem:[%s316 + $0xe0] sm:$0xf]
      %v444 = vld [vmem:[%s316 + $0xe4] sm:$0xf]
      %v445 = vld [vmem:[%s316 + $0xe8] sm:$0xf]
      %v446 = vld [vmem:[%s316 + $0xec] sm:$0xf]
      %v447 = vld [vmem:[%s316 + $0xf0] sm:$0xf]
      %v448 = vld [vmem:[%s316 + $0xf4] sm:$0xf]
      %v449 = vld [vmem:[%s316 + $0xf8] sm:$0xf]
      %v450 = vld [vmem:[%s316 + $0xfc] sm:$0xf]
      %v483 = vunpack.c.l.b16 %v355
      %v484 = vunpack.c.h.b16 %v355
      %v485 = vunpack.c.l.b16 %v356
      %v486 = vunpack.c.h.b16 %v356
      %v487 = vunpack.c.l.b16 %v357
      %v488 = vunpack.c.h.b16 %v357
      %v489 = vunpack.c.l.b16 %v358
      %v490 = vunpack.c.h.b16 %v358
      %v491 = vunpack.c.l.b16 %v359
      %v492 = vunpack.c.h.b16 %v359
      %v493 = vunpack.c.l.b16 %v360
      %v494 = vunpack.c.h.b16 %v360
      %v495 = vunpack.c.l.b16 %v361
      %v496 = vunpack.c.h.b16 %v361
      %v497 = vunpack.c.l.b16 %v362
      %v498 = vunpack.c.h.b16 %v362
      %v499 = vunpack.c.l.b16 %v363
      %v500 = vunpack.c.h.b16 %v363
      %v501 = vunpack.c.l.b16 %v364
      %v502 = vunpack.c.h.b16 %v364
      %v503 = vunpack.c.l.b16 %v365
      %v504 = vunpack.c.h.b16 %v365
      %v505 = vunpack.c.l.b16 %v366
      %v506 = vunpack.c.h.b16 %v366
      %v507 = vunpack.c.l.b16 %v367
      %v508 = vunpack.c.h.b16 %v367
      %v509 = vunpack.c.l.b16 %v368
      %v510 = vunpack.c.h.b16 %v368
      %v511 = vunpack.c.l.b16 %v369
      %v512 = vunpack.c.h.b16 %v369
      %v513 = vunpack.c.l.b16 %v370
      %v514 = vunpack.c.h.b16 %v370
      %v515 = vunpack.c.l.b16 %v371
      %v516 = vunpack.c.h.b16 %v371
      %v517 = vunpack.c.l.b16 %v372
      %v518 = vunpack.c.h.b16 %v372
      %v519 = vunpack.c.l.b16 %v373
      %v520 = vunpack.c.h.b16 %v373
      %v521 = vunpack.c.l.b16 %v374
      %v522 = vunpack.c.h.b16 %v374
      %v523 = vunpack.c.l.b16 %v375
      %v524 = vunpack.c.h.b16 %v375
      %v525 = vunpack.c.l.b16 %v376
      %v526 = vunpack.c.h.b16 %v376
      %v527 = vunpack.c.l.b16 %v377
      %v528 = vunpack.c.h.b16 %v377
      %v529 = vunpack.c.l.b16 %v378
      %v530 = vunpack.c.h.b16 %v378
      %v531 = vunpack.c.l.b16 %v379
      %v532 = vunpack.c.h.b16 %v379
      %v533 = vunpack.c.l.b16 %v380
      %v534 = vunpack.c.h.b16 %v380
      %v535 = vunpack.c.l.b16 %v381
      %v536 = vunpack.c.h.b16 %v381
      %v537 = vunpack.c.l.b16 %v382
      %v538 = vunpack.c.h.b16 %v382
      %v539 = vunpack.c.l.b16 %v383
      %v540 = vunpack.c.h.b16 %v383
      %v541 = vunpack.c.l.b16 %v384
      %v542 = vunpack.c.h.b16 %v384
      %v543 = vunpack.c.l.b16 %v385
      %v544 = vunpack.c.h.b16 %v385
      %v545 = vunpack.c.l.b16 %v386
      %v546 = vunpack.c.h.b16 %v386
      %v547 = vpack.c.b16 %v487, %v483
      %v548 = vpack.c.b16 %v488, %v484
      %v549 = vpack.c.b16 %v489, %v485
      %v550 = vpack.c.b16 %v490, %v486
      %v551 = vpack.c.b16 %v495, %v491
      %v552 = vpack.c.b16 %v496, %v492
      %v553 = vpack.c.b16 %v497, %v493
      %v554 = vpack.c.b16 %v498, %v494
      %v555 = vpack.c.b16 %v503, %v499
      %v556 = vpack.c.b16 %v504, %v500
      %v557 = vpack.c.b16 %v505, %v501
      %v558 = vpack.c.b16 %v506, %v502
      %v559 = vpack.c.b16 %v511, %v507
      %v560 = vpack.c.b16 %v512, %v508
      %v561 = vpack.c.b16 %v513, %v509
      %v562 = vpack.c.b16 %v514, %v510
      %v563 = vpack.c.b16 %v519, %v515
      %v564 = vpack.c.b16 %v520, %v516
      %v565 = vpack.c.b16 %v521, %v517
      %v566 = vpack.c.b16 %v522, %v518
      %v567 = vpack.c.b16 %v527, %v523
      %v568 = vpack.c.b16 %v528, %v524
      %v569 = vpack.c.b16 %v529, %v525
      %v570 = vpack.c.b16 %v530, %v526
      %v571 = vpack.c.b16 %v535, %v531
      %v572 = vpack.c.b16 %v536, %v532
      %v573 = vpack.c.b16 %v537, %v533
      %v574 = vpack.c.b16 %v538, %v534
      %v575 = vpack.c.b16 %v543, %v539
      %v576 = vpack.c.b16 %v544, %v540
      %v577 = vpack.c.b16 %v545, %v541
      %v578 = vpack.c.b16 %v546, %v542
      %v675 = vunpack.c.l.b16 %v387
      %v676 = vunpack.c.l.b16 %v388
      %v677 = vunpack.c.l.b16 %v389
      %v678 = vunpack.c.l.b16 %v390
      %v679 = vunpack.c.l.b16 %v391
      %v680 = vunpack.c.l.b16 %v392
      %v681 = vunpack.c.l.b16 %v393
      %v682 = vunpack.c.l.b16 %v394
      %v683 = vunpack.c.l.b16 %v395
      %v684 = vunpack.c.l.b16 %v396
      %v685 = vunpack.c.l.b16 %v397
      %v686 = vunpack.c.l.b16 %v398
      %v687 = vunpack.c.l.b16 %v399
      %v688 = vunpack.c.l.b16 %v400
      %v689 = vunpack.c.l.b16 %v401
      %v690 = vunpack.c.l.b16 %v402
      %v691 = vunpack.c.l.b16 %v403
      %v692 = vunpack.c.l.b16 %v404
      %v693 = vunpack.c.l.b16 %v405
      %v694 = vunpack.c.l.b16 %v406
      %v695 = vunpack.c.l.b16 %v407
      %v696 = vunpack.c.l.b16 %v408
      %v697 = vunpack.c.l.b16 %v409
      %v698 = vunpack.c.l.b16 %v410
      %v699 = vunpack.c.l.b16 %v411
      %v700 = vunpack.c.l.b16 %v412
      %v701 = vunpack.c.l.b16 %v413
      %v702 = vunpack.c.l.b16 %v414
      %v703 = vunpack.c.l.b16 %v415
      %v704 = vunpack.c.l.b16 %v416
      %v705 = vunpack.c.l.b16 %v417
      %v706 = vunpack.c.l.b16 %v418
      %v707 = vunpack.c.l.b16 %v419
      %v708 = vunpack.c.l.b16 %v420
      %v709 = vunpack.c.l.b16 %v421
      %v710 = vunpack.c.l.b16 %v422
      %v711 = vunpack.c.l.b16 %v423
      %v712 = vunpack.c.l.b16 %v424
      %v713 = vunpack.c.l.b16 %v425
      %v714 = vunpack.c.l.b16 %v426
      %v715 = vunpack.c.l.b16 %v427
      %v716 = vunpack.c.l.b16 %v428
      %v717 = vunpack.c.l.b16 %v429
      %v718 = vunpack.c.l.b16 %v430
      %v719 = vunpack.c.l.b16 %v431
      %v720 = vunpack.c.l.b16 %v432
      %v721 = vunpack.c.l.b16 %v433
      %v722 = vunpack.c.l.b16 %v434
      %v723 = vunpack.c.l.b16 %v435
      %v724 = vunpack.c.l.b16 %v436
      %v725 = vunpack.c.l.b16 %v437
      %v726 = vunpack.c.l.b16 %v438
      %v727 = vunpack.c.l.b16 %v439
      %v728 = vunpack.c.l.b16 %v440
      %v729 = vunpack.c.l.b16 %v441
      %v730 = vunpack.c.l.b16 %v442
      %v731 = vunpack.c.l.b16 %v443
      %v732 = vunpack.c.l.b16 %v444
      %v733 = vunpack.c.l.b16 %v445
      %v734 = vunpack.c.l.b16 %v446
      %v735 = vunpack.c.l.b16 %v447
      %v736 = vunpack.c.l.b16 %v448
      %v737 = vunpack.c.l.b16 %v449
      %v738 = vunpack.c.l.b16 %v450
      %v739 = vpack.c.b16 %v676, %v675
      %v740 = vpack.c.b16 %v678, %v677
      %v741 = vpack.c.b16 %v680, %v679
      %v742 = vpack.c.b16 %v682, %v681
      %v743 = vpack.c.b16 %v684, %v683
      %v744 = vpack.c.b16 %v686, %v685
      %v745 = vpack.c.b16 %v688, %v687
      %v746 = vpack.c.b16 %v690, %v689
      %v747 = vpack.c.b16 %v692, %v691
      %v748 = vpack.c.b16 %v694, %v693
      %v749 = vpack.c.b16 %v696, %v695
      %v750 = vpack.c.b16 %v698, %v697
      %v751 = vpack.c.b16 %v700, %v699
      %v752 = vpack.c.b16 %v702, %v701
      %v753 = vpack.c.b16 %v704, %v703
      %v754 = vpack.c.b16 %v706, %v705
      %v755 = vpack.c.b16 %v708, %v707
      %v756 = vpack.c.b16 %v710, %v709
      %v757 = vpack.c.b16 %v712, %v711
      %v758 = vpack.c.b16 %v714, %v713
      %v759 = vpack.c.b16 %v716, %v715
      %v760 = vpack.c.b16 %v718, %v717
      %v761 = vpack.c.b16 %v720, %v719
      %v762 = vpack.c.b16 %v722, %v721
      %v763 = vpack.c.b16 %v724, %v723
      %v764 = vpack.c.b16 %v726, %v725
      %v765 = vpack.c.b16 %v728, %v727
      %v766 = vpack.c.b16 %v730, %v729
      %v767 = vpack.c.b16 %v732, %v731
      %v768 = vpack.c.b16 %v734, %v733
      %v769 = vpack.c.b16 %v736, %v735
      %v770 = vpack.c.b16 %v738, %v737
      %803 = vmatprep.subr.bf16.mxu0 0
      %804 = vmatpush1.bf16.msra.mxu0 %v739
      %805 = vmatprep.subr.bf16.mxu0 0
      %806 = vmatpush1.bf16.msra.mxu0 %v740
      %807 = vmatprep.subr.bf16.mxu0 0
      %808 = vmatpush1.bf16.msra.mxu0 %v741
      %809 = vmatprep.subr.bf16.mxu0 0
      %810 = vmatpush1.bf16.msra.mxu0 %v742
      %811 = vmatprep.subr.bf16.mxu0 0
      %812 = vmatpush1.bf16.msra.mxu0 %v743
      %813 = vmatprep.subr.bf16.mxu0 0
      %814 = vmatpush1.bf16.msra.mxu0 %v744
      %815 = vmatprep.subr.bf16.mxu0 0
      %816 = vmatpush1.bf16.msra.mxu0 %v745
      %817 = vmatprep.subr.bf16.mxu0 0
      %818 = vmatpush1.bf16.msra.mxu0 %v746
      %819 = vmatprep.subr.bf16.mxu0 0
      %820 = vmatpush1.bf16.msra.mxu0 %v747
      %821 = vmatprep.subr.bf16.mxu0 0
      %822 = vmatpush1.bf16.msra.mxu0 %v748
      %823 = vmatprep.subr.bf16.mxu0 0
      %824 = vmatpush1.bf16.msra.mxu0 %v749
      %825 = vmatprep.subr.bf16.mxu0 0
      %826 = vmatpush1.bf16.msra.mxu0 %v750
      %827 = vmatprep.subr.bf16.mxu0 0
      %828 = vmatpush1.bf16.msra.mxu0 %v751
      %829 = vmatprep.subr.bf16.mxu0 0
      %830 = vmatpush1.bf16.msra.mxu0 %v752
      %831 = vmatprep.subr.bf16.mxu0 0
      %832 = vmatpush1.bf16.msra.mxu0 %v753
      %833 = vmatprep.subr.bf16.mxu0 0
      %834 = vmatpush1.bf16.msra.mxu0 %v754
      %835 = vmatprep.mubr.bf16.mxu0 %v548
      %836 = vmatmul.mubr.bf16.gmra.mrb[0].mxu0 %v547
      %v837 = vpop.f32.mrb[0].mxu0
      %v838 = vadd.f32 0.0, %v837
      %v839 = vpop.f32.mrb[0].mxu0
      %v840 = vpop.f32.mrb[0].mxu0
      %v841 = vadd.f32 0.0, %v840
      %v842 = vpop.f32.mrb[0].mxu0
      %843 = vmatprep.mubr.bf16.mxu0 %v552
      %844 = vmatmul.mubr.bf16.gmra.mrb[0].mxu0 %v551
      %v845 = vpop.f32.mrb[0].mxu0
      %v846 = vadd.f32 0.0, %v845
      %v847 = vpop.f32.mrb[0].mxu0
      %v848 = vpop.f32.mrb[0].mxu0
      %v849 = vadd.f32 0.0, %v848
      %v850 = vpop.f32.mrb[0].mxu0
      %851 = vmatprep.mubr.bf16.mxu0 %v556
      %852 = vmatmul.mubr.bf16.gmra.mrb[0].mxu0 %v555
      %v853 = vpop.f32.mrb[0].mxu0
      %v854 = vadd.f32 0.0, %v853
      %v855 = vpop.f32.mrb[0].mxu0
      %v856 = vpop.f32.mrb[0].mxu0
      %v857 = vadd.f32 0.0, %v856
      %v858 = vpop.f32.mrb[0].mxu0
      %859 = vmatprep.mubr.bf16.mxu0 %v560
      %860 = vmatmul.mubr.bf16.gmra.mrb[0].mxu0 %v559
      %v861 = vpop.f32.mrb[0].mxu0
      %v862 = vadd.f32 0.0, %v861
      %v863 = vpop.f32.mrb[0].mxu0
      %v864 = vpop.f32.mrb[0].mxu0
      %v865 = vadd.f32 0.0, %v864
      %v866 = vpop.f32.mrb[0].mxu0
      %867 = vmatprep.mubr.bf16.mxu0 %v564
      %868 = vmatmul.mubr.bf16.gmra.mrb[0].mxu0 %v563
      %v869 = vpop.f32.mrb[0].mxu0
      %v870 = vadd.f32 0.0, %v869
      %v871 = vpop.f32.mrb[0].mxu0
      %v872 = vpop.f32.mrb[0].mxu0
      %v873 = vadd.f32 0.0, %v872
      %v874 = vpop.f32.mrb[0].mxu0
      %875 = vmatprep.mubr.bf16.mxu0 %v568
      %876 = vmatmul.mubr.bf16.gmra.mrb[0].mxu0 %v567
      %v877 = vpop.f32.mrb[0].mxu0
      %v878 = vadd.f32 0.0, %v877
      %v879 = vpop.f32.mrb[0].mxu0
      %v880 = vpop.f32.mrb[0].mxu0
      %v881 = vadd.f32 0.0, %v880
      %v882 = vpop.f32.mrb[0].mxu0
      %883 = vmatprep.mubr.bf16.mxu0 %v572
      %884 = vmatmul.mubr.bf16.gmra.mrb[0].mxu0 %v571
      %v885 = vpop.f32.mrb[0].mxu0
      %v886 = vadd.f32 0.0, %v885
      %v887 = vpop.f32.mrb[0].mxu0
      %v888 = vpop.f32.mrb[0].mxu0
      %v889 = vadd.f32 0.0, %v888
      %v890 = vpop.f32.mrb[0].mxu0
      %891 = vmatprep.mubr.bf16.mxu0 %v576
      %892 = vmatmul.mubr.bf16.gmra.mrb[0].mxu0 %v575
      %v893 = vpop.f32.mrb[0].mxu0
      %v894 = vadd.f32 0.0, %v893
      %v895 = vpop.f32.mrb[0].mxu0
      %v896 = vpop.f32.mrb[0].mxu0
      %v897 = vadd.f32 0.0, %v896
      %v898 = vpop.f32.mrb[0].mxu0
      %899 = vdwg.mxu0
      %900 = vmatprep.subr.bf16.mxu0 0
      %901 = vmatpush1.bf16.msra.mxu0 %v755
      %902 = vmatprep.subr.bf16.mxu0 0
      %903 = vmatpush1.bf16.msra.mxu0 %v756
      %904 = vmatprep.subr.bf16.mxu0 0
      %905 = vmatpush1.bf16.msra.mxu0 %v757
      %906 = vmatprep.subr.bf16.mxu0 0
      %907 = vmatpush1.bf16.msra.mxu0 %v758
      %908 = vmatprep.subr.bf16.mxu0 0
      %909 = vmatpush1.bf16.msra.mxu0 %v759
      %910 = vmatprep.subr.bf16.mxu0 0
      %911 = vmatpush1.bf16.msra.mxu0 %v760
      %912 = vmatprep.subr.bf16.mxu0 0
      %913 = vmatpush1.bf16.msra.mxu0 %v761
      %914 = vmatprep.subr.bf16.mxu0 0
      %915 = vmatpush1.bf16.msra.mxu0 %v762
      %916 = vmatprep.subr.bf16.mxu0 0
      %917 = vmatpush1.bf16.msra.mxu0 %v763
      %918 = vmatprep.subr.bf16.mxu0 0
      %919 = vmatpush1.bf16.msra.mxu0 %v764
      %920 = vmatprep.subr.bf16.mxu0 0
      %921 = vmatpush1.bf16.msra.mxu0 %v765
      %922 = vmatprep.subr.bf16.mxu0 0
      %923 = vmatpush1.bf16.msra.mxu0 %v766
      %924 = vmatprep.subr.bf16.mxu0 0
      %925 = vmatpush1.bf16.msra.mxu0 %v767
      %926 = vmatprep.subr.bf16.mxu0 0
      %927 = vmatpush1.bf16.msra.mxu0 %v768
      %928 = vmatprep.subr.bf16.mxu0 0
      %929 = vmatpush1.bf16.msra.mxu0 %v769
      %930 = vmatprep.subr.bf16.mxu0 0
      %931 = vmatpush1.bf16.msra.mxu0 %v770
      %932 = vmatprep.mubr.bf16.mxu0 %v550
      %933 = vmatmul.mubr.bf16.gmra.mrb[0].mxu0 %v549
      %v934 = vpop.f32.mrb[0].mxu0
      %v935 = vadd.f32 %v838, %v934
      %v936 = vpop.f32.mrb[0].mxu0
      %v937 = vpop.f32.mrb[0].mxu0
      %v938 = vadd.f32 %v841, %v937
      %v939 = vpop.f32.mrb[0].mxu0
      %940 = vmatprep.mubr.bf16.mxu0 %v554
      %941 = vmatmul.mubr.bf16.gmra.mrb[0].mxu0 %v553
      %v942 = vpop.f32.mrb[0].mxu0
      %v943 = vadd.f32 %v846, %v942
      %v944 = vpop.f32.mrb[0].mxu0
      %v945 = vpop.f32.mrb[0].mxu0
      %v946 = vadd.f32 %v849, %v945
      %v947 = vpop.f32.mrb[0].mxu0
      %948 = vmatprep.mubr.bf16.mxu0 %v558
      %949 = vmatmul.mubr.bf16.gmra.mrb[0].mxu0 %v557
      %v950 = vpop.f32.mrb[0].mxu0
      %v951 = vadd.f32 %v854, %v950
      %v952 = vpop.f32.mrb[0].mxu0
      %v953 = vpop.f32.mrb[0].mxu0
      %v954 = vadd.f32 %v857, %v953
      %v955 = vpop.f32.mrb[0].mxu0
      %956 = vmatprep.mubr.bf16.mxu0 %v562
      %957 = vmatmul.mubr.bf16.gmra.mrb[0].mxu0 %v561
      %v958 = vpop.f32.mrb[0].mxu0
      %v959 = vadd.f32 %v862, %v958
      %v960 = vpop.f32.mrb[0].mxu0
      %v961 = vpop.f32.mrb[0].mxu0
      %v962 = vadd.f32 %v865, %v961
      %v963 = vpop.f32.mrb[0].mxu0
      %964 = vmatprep.mubr.bf16.mxu0 %v566
      %965 = vmatmul.mubr.bf16.gmra.mrb[0].mxu0 %v565
      %v966 = vpop.f32.mrb[0].mxu0
      %v967 = vadd.f32 %v870, %v966
      %v968 = vpop.f32.mrb[0].mxu0
      %v969 = vpop.f32.mrb[0].mxu0
      %v970 = vadd.f32 %v873, %v969
      %v971 = vpop.f32.mrb[0].mxu0
      %972 = vmatprep.mubr.bf16.mxu0 %v570
      %973 = vmatmul.mubr.bf16.gmra.mrb[0].mxu0 %v569
      %v974 = vpop.f32.mrb[0].mxu0
      %v975 = vadd.f32 %v878, %v974
      %v976 = vpop.f32.mrb[0].mxu0
      %v977 = vpop.f32.mrb[0].mxu0
      %v978 = vadd.f32 %v881, %v977
      %v979 = vpop.f32.mrb[0].mxu0
      %980 = vmatprep.mubr.bf16.mxu0 %v574
      %981 = vmatmul.mubr.bf16.gmra.mrb[0].mxu0 %v573
      %v982 = vpop.f32.mrb[0].mxu0
      %v983 = vadd.f32 %v886, %v982
      %v984 = vpop.f32.mrb[0].mxu0
      %v985 = vpop.f32.mrb[0].mxu0
      %v986 = vadd.f32 %v889, %v985
      %v987 = vpop.f32.mrb[0].mxu0
      %988 = vmatprep.mubr.bf16.mxu0 %v578
      %989 = vmatmul.mubr.bf16.gmra.mrb[0].mxu0 %v577
      %v990 = vpop.f32.mrb[0].mxu0
      %v991 = vadd.f32 %v894, %v990
      %v992 = vpop.f32.mrb[0].mxu0
      %v993 = vpop.f32.mrb[0].mxu0
      %v994 = vadd.f32 %v897, %v993
      %v995 = vpop.f32.mrb[0].mxu0
      %996 = vdwg.mxu0
      %v997 = vpack.c.bf16 %v938, %v935
      %v998 = vpack.c.bf16 %v946, %v943
      %v999 = vpack.c.bf16 %v954, %v951
      %v1000 = vpack.c.bf16 %v962, %v959
      %v1001 = vpack.c.bf16 %v970, %v967
      %v1002 = vpack.c.bf16 %v978, %v975
      %v1003 = vpack.c.bf16 %v986, %v983
      %v1004 = vpack.c.bf16 %v994, %v991
      %v1013 = vunpack.c.l.b16 %v997
      %v1014 = vunpack.c.h.b16 %v997
      %v1015 = vunpack.c.l.b16 %v998
      %v1016 = vunpack.c.h.b16 %v998
      %v1017 = vunpack.c.l.b16 %v999
      %v1018 = vunpack.c.h.b16 %v999
      %v1019 = vunpack.c.l.b16 %v1000
      %v1020 = vunpack.c.h.b16 %v1000
      %v1021 = vunpack.c.l.b16 %v1001
      %v1022 = vunpack.c.h.b16 %v1001
      %v1023 = vunpack.c.l.b16 %v1002
      %v1024 = vunpack.c.h.b16 %v1002
      %v1025 = vunpack.c.l.b16 %v1003
      %v1026 = vunpack.c.h.b16 %v1003
      %v1027 = vunpack.c.l.b16 %v1004
      %v1028 = vunpack.c.h.b16 %v1004
      %v1029 = vpack.c.b16 %v1013, %v1013
      %v1030 = vpack.c.b16 %v1014, %v1014
      %v1031 = vpack.c.b16 %v1015, %v1015
      %v1032 = vpack.c.b16 %v1016, %v1016
      %v1033 = vpack.c.b16 %v1017, %v1017
      %v1034 = vpack.c.b16 %v1018, %v1018
      %v1035 = vpack.c.b16 %v1019, %v1019
      %v1036 = vpack.c.b16 %v1020, %v1020
      %v1037 = vpack.c.b16 %v1021, %v1021
      %v1038 = vpack.c.b16 %v1022, %v1022
      %v1039 = vpack.c.b16 %v1023, %v1023
      %v1040 = vpack.c.b16 %v1024, %v1024
      %v1041 = vpack.c.b16 %v1025, %v1025
      %v1042 = vpack.c.b16 %v1026, %v1026
      %v1043 = vpack.c.b16 %v1027, %v1027
      %v1044 = vpack.c.b16 %v1028, %v1028
      %1061 = vst [vmem:[%s329] sm:$0xf] %v1029
      %1062 = vst [vmem:[%s329 + $0x4] sm:$0xf] %v1030
      %1063 = vst [vmem:[%s329 + $0x8] sm:$0xf] %v1031
      %1064 = vst [vmem:[%s329 + $0xc] sm:$0xf] %v1032
      %1065 = vst [vmem:[%s329 + $0x10] sm:$0xf] %v1033
      %1066 = vst [vmem:[%s329 + $0x14] sm:$0xf] %v1034
      %1067 = vst [vmem:[%s329 + $0x18] sm:$0xf] %v1035
      %1068 = vst [vmem:[%s329 + $0x1c] sm:$0xf] %v1036
      %1069 = vst [vmem:[%s329 + $0x20] sm:$0xf] %v1037
      %1070 = vst [vmem:[%s329 + $0x24] sm:$0xf] %v1038
      %1071 = vst [vmem:[%s329 + $0x28] sm:$0xf] %v1039
      %1072 = vst [vmem:[%s329 + $0x2c] sm:$0xf] %v1040
      %1073 = vst [vmem:[%s329 + $0x30] sm:$0xf] %v1041
      %1074 = vst [vmem:[%s329 + $0x34] sm:$0xf] %v1042
      %1075 = vst [vmem:[%s329 + $0x38] sm:$0xf] %v1043
      %1076 = vst [vmem:[%s329 + $0x3c] sm:$0xf] %v1044
      %v1077 = vld [vmem:[%s338] sm:$0x1]
      %v1078 = vadd.f32 %v935, %v938
      %v1079 = vadd.f32 %v1078, %v943
      %v1080 = vadd.f32 %v1079, %v946
      %v1081 = vadd.f32 %v1080, %v951
      %v1082 = vadd.f32 %v1081, %v954
      %v1083 = vadd.f32 %v1082, %v959
      %v1084 = vadd.f32 %v1083, %v962
      %v1085 = vadd.f32 %v1084, %v967
      %v1086 = vadd.f32 %v1085, %v970
      %v1087 = vadd.f32 %v1086, %v975
      %v1088 = vadd.f32 %v1087, %v978
      %v1089 = vadd.f32 %v1088, %v983
      %v1090 = vadd.f32 %v1089, %v986
      %v1091 = vadd.f32 %v1090, %v991
      %v1092 = vadd.f32 %v1091, %v994
      %v1093 = vrot.slane %v1092, 4
      %v1094 = vadd.f32 %v1092, %v1093
      %v1095 = vrot.slane %v1094, 2
      %v1096 = vadd.f32 %v1094, %v1095
      %v1097 = vrot.slane %v1096, 1
      %v1098 = vadd.f32 %v1096, %v1097
      %v1099 = vadd.f32 %v1077, %v1098
      %1100 = vst [vmem:[%s338] sm:$0x1] %v1099
      %v1101 = vld [vmem:[%s346] sm:$0x1]
      %v1102 = vmul.f32 %v935, %v935
      %v1103 = vmul.f32 %v938, %v938
      %v1104 = vmul.f32 %v943, %v943
      %v1105 = vmul.f32 %v946, %v946
      %v1106 = vmul.f32 %v951, %v951
      %v1107 = vmul.f32 %v954, %v954
      %v1108 = vmul.f32 %v959, %v959
      %v1109 = vmul.f32 %v962, %v962
      %v1110 = vmul.f32 %v967, %v967
      %v1111 = vmul.f32 %v970, %v970
      %v1112 = vmul.f32 %v975, %v975
      %v1113 = vmul.f32 %v978, %v978
      %v1114 = vmul.f32 %v983, %v983
      %v1115 = vmul.f32 %v986, %v986
      %v1116 = vmul.f32 %v991, %v991
      %v1117 = vmul.f32 %v994, %v994
      %v1118 = vadd.f32 %v1102, %v1103
      %v1119 = vadd.f32 %v1118, %v1104
      %v1120 = vadd.f32 %v1119, %v1105
      %v1121 = vadd.f32 %v1120, %v1106
      %v1122 = vadd.f32 %v1121, %v1107
      %v1123 = vadd.f32 %v1122, %v1108
      %v1124 = vadd.f32 %v1123, %v1109
      %v1125 = vadd.f32 %v1124, %v1110
      %v1126 = vadd.f32 %v1125, %v1111
      %v1127 = vadd.f32 %v1126, %v1112
      %v1128 = vadd.f32 %v1127, %v1113
      %v1129 = vadd.f32 %v1128, %v1114
      %v1130 = vadd.f32 %v1129, %v1115
      %v1131 = vadd.f32 %v1130, %v1116
      %v1132 = vadd.f32 %v1131, %v1117
      %v1133 = vrot.slane %v1132, 4
      %v1134 = vadd.f32 %v1132, %v1133
      %v1135 = vrot.slane %v1134, 2
      %v1136 = vadd.f32 %v1134, %v1135
      %v1137 = vrot.slane %v1136, 1
      %v1138 = vadd.f32 %v1136, %v1137
      %v1139 = vadd.f32 %v1101, %v1138
      %1140 = vst [vmem:[%s346] sm:$0x1] %v1139
      %s1141 = sadd.s32 %s23, %s25
      %s1142 = smul.u32 16, %s1141
      %p1143 = scmp.lt.s32.totalorder %s22, 3
      %s1144 = scalar_select %p1143, %s22, 3
      %p1145 = scmp.lt.s32.totalorder %s1142, 15
      %s1146 = scalar_select %p1145, %s1142, 15
      %p1147 = scmp.lt.s32.totalorder %s24, 0
      %s1148 = scalar_select %p1147, %s24, 0
      %s1149 = sadd.s32 %s1148, %s1146
      %s1150 = smul.addr %s1144, 16
      %s1151 = sadd.s32 %s1149, %s1150
      %s1152 = smul.addr %s1151, 4
      %s1153 = scalar_lea.vmem %s2, %s1152
      %s1154 = sadd.s32 %s22, %s23
      %p1155 = scmp.lt.s32.totalorder %s1154, 3
      %s1156 = scalar_select %p1155, %s1154, 3
      %p1157 = scmp.lt.s32.totalorder %s24, 0
      %s1158 = scalar_select %p1157, %s24, 0
      %s1159 = sadd.s32 %s1158, %s1156
      %s1160 = scalar_lea.vmem %s3, %s1159
      %s1161 = sadd.s32 %s22, %s23
      %p1162 = scmp.lt.s32.totalorder %s1161, 3
      %s1163 = scalar_select %p1162, %s1161, 3
      %p1164 = scmp.lt.s32.totalorder %s24, 0
      %s1165 = scalar_select %p1164, %s24, 0
      %s1166 = sadd.s32 %s1165, %s1163
      %s1167 = scalar_lea.vmem %s4, %s1166
      // Predicated region
      $region33: #{generator_forward.33} parent=27 // pred_check
        %p1168 = pneg %p124
      $region34: #{generator_forward.33} parent=27 // pred_check_branch
        %1170 = sbr.rel (%p1168) target = $region36
      $region35: #{generator_forward.33} parent=27 // pred_region
        %s1171 = sadd.s32 %s23, %s25
        %s1172 = smul.u32 16, %s1171
      $region36: #{generator_forward.33} parent=27 // pred_fallthru
        _
      // Predicated region
      $region37: #{generator_forward.33} parent=27 // pred_check
        %p1173 = pneg %p154
      $region38: #{generator_forward.33} parent=27 // pred_check_branch
        %1175 = sbr.rel (%p1173) target = $region40
      $region39: #{generator_forward.33} parent=27 // pred_region
        %s1176 = sadd.s32 %s22, %s23
      $region40: #{generator_forward.33} parent=27 // pred_fallthru
        _
      // Predicated region
      $region41: #{generator_forward.33} parent=27 // pred_check
        %p1177 = pneg %p184
      $region42: #{generator_forward.33} parent=27 // pred_check_branch
        %1179 = sbr.rel (%p1177) target = $region44
      $region43: #{generator_forward.33} parent=27 // pred_region
        %s1180 = sadd.s32 %s22, %s23
      $region44: #{generator_forward.33} parent=27 // pred_fallthru
        _
    $region28: #{generator_forward.33} parent=5 // pred_fallthru
      _
    %p1181 = scmp.le.s32.totalorder 2, %s11
    // Predicated region
    $region45: #{generator_forward.33} parent=5 // pred_check
      %p1182 = pneg %p1181
    $region46: #{generator_forward.33} parent=5 // pred_check_branch
      %1184 = sbr.rel (%p1182) target = $region48
    $region47: #{generator_forward.33} parent=5 // pred_region
      %s1185 = ssub.s32 %s11, 2
      // Predicated region
      $region49: #{generator_forward.33} parent=47 // pred_check
        %p1186 = pneg %p130
      $region50: #{generator_forward.33} parent=47 // pred_check_branch
        %1188 = sbr.rel (%p1186) target = $region52
      $region51: #{generator_forward.33} parent=47 // pred_region
        %s1189 = sadd.s32 %s27, %s29
        %s1190 = smul.u32 16, %s1189
        %p1191 = scmp.lt.s32.totalorder %s26, 3
        %s1192 = scalar_select %p1191, %s26, 3
        %p1193 = scmp.lt.s32.totalorder %s1190, 15
        %s1194 = scalar_select %p1193, %s1190, 15
        %p1195 = scmp.lt.s32.totalorder %s28, 0
        %s1196 = scalar_select %p1195, %s28, 0
        %s1197 = sadd.s32 %s1196, %s1194
        %s1198 = smul.addr %s1192, 16
        %s1199 = sadd.s32 %s1197, %s1198
        %s1200 = smul.addr %s1199, 4
        %s1201 = scalar_lea.vmem %s2, %s1200
      $region52: #{generator_forward.33} parent=47 // pred_fallthru
        _
      // Predicated region
      $region53: #{generator_forward.33} parent=47 // pred_check
        %p1202 = pneg %p160
      $region54: #{generator_forward.33} parent=47 // pred_check_branch
        %1204 = sbr.rel (%p1202) target = $region56
      $region55: #{generator_forward.33} parent=47 // pred_region
        %s1205 = sadd.s32 %s26, %s27
        %p1206 = scmp.lt.s32.totalorder %s1205, 3
        %s1207 = scalar_select %p1206, %s1205, 3
        %p1208 = scmp.lt.s32.totalorder %s28, 0
        %s1209 = scalar_select %p1208, %s28, 0
        %s1210 = sadd.s32 %s1209, %s1207
        %s1211 = scalar_lea.vmem %s3, %s1210
      $region56: #{generator_forward.33} parent=47 // pred_fallthru
        _
      // Predicated region
      $region57: #{generator_forward.33} parent=47 // pred_check
        %p1212 = pneg %p190
      $region58: #{generator_forward.33} parent=47 // pred_check_branch
        %1214 = sbr.rel (%p1212) target = $region60
      $region59: #{generator_forward.33} parent=47 // pred_region
        %s1215 = sadd.s32 %s26, %s27
        %p1216 = scmp.lt.s32.totalorder %s1215, 3
        %s1217 = scalar_select %p1216, %s1215, 3
        %p1218 = scmp.lt.s32.totalorder %s28, 0
        %s1219 = scalar_select %p1218, %s28, 0
        %s1220 = sadd.s32 %s1219, %s1217
        %s1221 = scalar_lea.vmem %s4, %s1220
      $region60: #{generator_forward.33} parent=47 // pred_fallthru
        _
    $region48: #{generator_forward.33} parent=5 // pred_fallthru
      _
  $region6: #{generator_forward.33} parent=0 // loop_footer
    %s15 = sadd.s32 1, %s11
  $region7: #{generator_forward.33} parent=0 // loop_footer_branch
    %10 = sbr.rel target = $region3
  $region8: #{generator_forward.33} parent=0 // loop_exit
    _

// kernel: generator_forward.34
$region0: #{generator_forward.34}
  #allocation0 [shape = 'u32[]', space=smem, size = 0x4, offset = 0x4, fixed_abs, tag = 'smem constant byte address 0x4 - core index']
  #allocation1 [shape = 'u32[144,128]{1,0:T(1,128)}', space=vmem, size = 0x12000, scoped, tag = 'internal scratch']
  %s0 = inlined_call_operand.vmem [shape: bf16[512,128], index: 0, kind: input, shape index: {}]
  %s1 = inlined_call_operand.vmem [shape: f32[4,1,128], index: 1, kind: input, shape index: {}]
  %s2 = inlined_call_operand.vmem [shape: f32[4,1,128], index: 2, kind: input, shape index: {}]
  %s3 = inlined_call_operand.vmem [shape: f32[1,128], index: 3, kind: input, shape index: {}]
  %s4 = inlined_call_operand.vmem [shape: f32[1,128], index: 4, kind: input, shape index: {}]
  %s5 = inlined_call_operand.vmem [shape: bf16[512,128], index: 5, kind: output, shape index: {}]
  %s6 = sld [smem:[#allocation0]]
  $region30: #{generator_forward.34} parent=0
    _
  %s8 = ssub.s32 1, %s6
  %s9 = scalar_select 0, %s8, %s6
  // Predicated region
  $region2: #{generator_forward.34} parent=0 // pred_check
    _
  $region3: #{generator_forward.34} parent=0 // pred_check_branch
    %11 = sbr.rel (0) target = $region5
  $region4: #{generator_forward.34} parent=0 // pred_region
    _
  $region5: #{generator_forward.34} parent=0 // pred_fallthru
    _
  // Predicated region
  $region6: #{generator_forward.34} parent=0 // pred_check
    _
  $region7: #{generator_forward.34} parent=0 // pred_check_branch
    %13 = sbr.rel (0) target = $region9
  $region8: #{generator_forward.34} parent=0 // pred_region
    _
  $region9: #{generator_forward.34} parent=0 // pred_fallthru
    _
  // Predicated region
  $region10: #{generator_forward.34} parent=0 // pred_check
    _
  $region11: #{generator_forward.34} parent=0 // pred_check_branch
    %15 = sbr.rel (0) target = $region13
  $region12: #{generator_forward.34} parent=0 // pred_region
    _
  $region13: #{generator_forward.34} parent=0 // pred_fallthru
    _
  // Predicated region
  $region14: #{generator_forward.34} parent=0 // pred_check
    _
  $region15: #{generator_forward.34} parent=0 // pred_check_branch
    %17 = sbr.rel (0) target = $region17
  $region16: #{generator_forward.34} parent=0 // pred_region
    _
  $region17: #{generator_forward.34} parent=0 // pred_fallthru
    _
  // Predicated region
  $region18: #{generator_forward.34} parent=0 // pred_check
    _
  $region19: #{generator_forward.34} parent=0 // pred_check_branch
    %19 = sbr.rel (0) target = $region21
  $region20: #{generator_forward.34} parent=0 // pred_region
    _
  $region21: #{generator_forward.34} parent=0 // pred_fallthru
    _
  %v20 = vld [vmem:[%s1] sm:$0x1]
  %v21 = vld [vmem:[%s1 + $0x1] sm:$0x1]
  %v22 = vld [vmem:[%s1 + $0x2] sm:$0x1]
  %v23 = vld [vmem:[%s1 + $0x3] sm:$0x1]
  %vm24 = vcmask 1040384
  %v25 = vsel %vm24, %v20, 0.0
  %v26 = vsel %vm24, %v21, 0.0
  %v27 = vadd.f32 %v25, %v26
  %v28 = vsel %vm24, %v22, 0.0
  %v29 = vadd.f32 %v27, %v28
  %v30 = vsel %vm24, %v23, 0.0
  %v31 = vadd.f32 %v29, %v30
  %v32 = vmul.f32 %v31, 0.001953125
  %v33 = vld [vmem:[%s2] sm:$0x1]
  %v34 = vld [vmem:[%s2 + $0x1] sm:$0x1]
  %v35 = vld [vmem:[%s2 + $0x2] sm:$0x1]
  %v36 = vld [vmem:[%s2 + $0x3] sm:$0x1]
  %v37 = vsel %vm24, %v33, 0.0
  %v38 = vsel %vm24, %v34, 0.0
  %v39 = vadd.f32 %v37, %v38
  %v40 = vsel %vm24, %v35, 0.0
  %v41 = vadd.f32 %v39, %v40
  %v42 = vsel %vm24, %v36, 0.0
  %v43 = vadd.f32 %v41, %v42
  %v44 = vmul.f32 %v43, 0.001953125
  %v45 = vmul.f32 %v32, %v32
  %v46 = vsub.f32 %v44, %v45
  %v47 = vmax.f32 %v46, 0.0
  %v48 = vld [vmem:[%s3] sm:$0x1]
  %v49 = vadd.f32 %v47, 1e-05
  %v50 = vrsqrt.pop %v49
  %v51 = vmul.f32 %v48, %v50
  %v52 = vld [vmem:[%s4] sm:$0x1]
  %v53 = vmul.f32 %v32, %v51
  %v54 = vsub.f32 %v52, %v53
  %v55 = vld [vmem:[%s0] sm:$0xf]
  %v56 = vld [vmem:[%s0 + $0x4] sm:$0xf]
  %v57 = vld [vmem:[%s0 + $0x8] sm:$0xf]
  %v58 = vld [vmem:[%s0 + $0xc] sm:$0xf]
  %v59 = vld [vmem:[%s0 + $0x10] sm:$0xf]
  %v60 = vld [vmem:[%s0 + $0x14] sm:$0xf]
  %v61 = vld [vmem:[%s0 + $0x18] sm:$0xf]
  %v62 = vld [vmem:[%s0 + $0x1c] sm:$0xf]
  %v63 = vld [vmem:[%s0 + $0x20] sm:$0xf]
  %v64 = vld [vmem:[%s0 + $0x24] sm:$0xf]
  %v65 = vld [vmem:[%s0 + $0x28] sm:$0xf]
  %v66 = vld [vmem:[%s0 + $0x2c] sm:$0xf]
  %v67 = vld [vmem:[%s0 + $0x30] sm:$0xf]
  %v68 = vld [vmem:[%s0 + $0x34] sm:$0xf]
  %v69 = vld [vmem:[%s0 + $0x38] sm:$0xf]
  %v70 = vld [vmem:[%s0 + $0x3c] sm:$0xf]
  %v71 = vld [vmem:[%s0 + $0x40] sm:$0xf]
  %v72 = vld [vmem:[%s0 + $0x44] sm:$0xf]
  %v73 = vld [vmem:[%s0 + $0x48] sm:$0xf]
  %v74 = vld [vmem:[%s0 + $0x4c] sm:$0xf]
  %v75 = vld [vmem:[%s0 + $0x50] sm:$0xf]
  %v76 = vld [vmem:[%s0 + $0x54] sm:$0xf]
  %v77 = vld [vmem:[%s0 + $0x58] sm:$0xf]
  %v78 = vld [vmem:[%s0 + $0x5c] sm:$0xf]
  %v79 = vld [vmem:[%s0 + $0x60] sm:$0xf]
  %v80 = vld [vmem:[%s0 + $0x64] sm:$0xf]
  %v81 = vld [vmem:[%s0 + $0x68] sm:$0xf]
  %v82 = vld [vmem:[%s0 + $0x6c] sm:$0xf]
  %v83 = vld [vmem:[%s0 + $0x70] sm:$0xf]
  %v84 = vld [vmem:[%s0 + $0x74] sm:$0xf]
  %v85 = vld [vmem:[%s0 + $0x78] sm:$0xf]
  %v86 = vld [vmem:[%s0 + $0x7c] sm:$0xf]
  %v87 = vld [vmem:[%s0 + $0x80] sm:$0xf]
  %v88 = vld [vmem:[%s0 + $0x84] sm:$0xf]
  %v89 = vld [vmem:[%s0 + $0x88] sm:$0xf]
  %v90 = vld [vmem:[%s0 + $0x8c] sm:$0xf]
  %v91 = vld [vmem:[%s0 + $0x90] sm:$0xf]
  %v92 = vld [vmem:[%s0 + $0x94] sm:$0xf]
  %v93 = vld [vmem:[%s0 + $0x98] sm:$0xf]
  %v94 = vld [vmem:[%s0 + $0x9c] sm:$0xf]
  %v95 = vld [vmem:[%s0 + $0xa0] sm:$0xf]
  %v96 = vld [vmem:[%s0 + $0xa4] sm:$0xf]
  %v97 = vld [vmem:[%s0 + $0xa8] sm:$0xf]
  %v98 = vld [vmem:[%s0 + $0xac] sm:$0xf]
  %v99 = vld [vmem:[%s0 + $0xb0] sm:$0xf]
  %v100 = vld [vmem:[%s0 + $0xb4] sm:$0xf]
  %v101 = vld [vmem:[%s0 + $0xb8] sm:$0xf]
  %v102 = vld [vmem:[%s0 + $0xbc] sm:$0xf]
  %v103 = vld [vmem:[%s0 + $0xc0] sm:$0xf]
  %v104 = vld [vmem:[%s0 + $0xc4] sm:$0xf]
  %v105 = vld [vmem:[%s0 + $0xc8] sm:$0xf]
  %v106 = vld [vmem:[%s0 + $0xcc] sm:$0xf]
  %v107 = vld [vmem:[%s0 + $0xd0] sm:$0xf]
  %v108 = vld [vmem:[%s0 + $0xd4] sm:$0xf]
  %v109 = vld [vmem:[%s0 + $0xd8] sm:$0xf]
  %v110 = vld [vmem:[%s0 + $0xdc] sm:$0xf]
  %v111 = vld [vmem:[%s0 + $0xe0] sm:$0xf]
  %v112 = vld [vmem:[%s0 + $0xe4] sm:$0xf]
  %v113 = vld [vmem:[%s0 + $0xe8] sm:$0xf]
  %v114 = vld [vmem:[%s0 + $0xec] sm:$0xf]
  %v115 = vld [vmem:[%s0 + $0xf0] sm:$0xf]
  %v116 = vld [vmem:[%s0 + $0xf4] sm:$0xf]
  %v117 = vld [vmem:[%s0 + $0xf8] sm:$0xf]
  %v118 = vld [vmem:[%s0 + $0xfc] sm:$0xf]
  %v119 = vunpack.c.l.bf16 %v55
  %v120 = vunpack.c.l.bf16 %v56
  %v121 = vunpack.c.l.bf16 %v57
  %v122 = vunpack.c.l.bf16 %v58
  %v123 = vunpack.c.l.bf16 %v59
  %v124 = vunpack.c.l.bf16 %v60
  %v125 = vunpack.c.l.bf16 %v61
  %v126 = vunpack.c.l.bf16 %v62
  %v127 = vunpack.c.l.bf16 %v63
  %v128 = vunpack.c.l.bf16 %v64
  %v129 = vunpack.c.l.bf16 %v65
  %v130 = vunpack.c.l.bf16 %v66
  %v131 = vunpack.c.l.bf16 %v67
  %v132 = vunpack.c.l.bf16 %v68
  %v133 = vunpack.c.l.bf16 %v69
  %v134 = vunpack.c.l.bf16 %v70
  %v135 = vunpack.c.l.bf16 %v71
  %v136 = vunpack.c.l.bf16 %v72
  %v137 = vunpack.c.l.bf16 %v73
  %v138 = vunpack.c.l.bf16 %v74
  %v139 = vunpack.c.l.bf16 %v75
  %v140 = vunpack.c.l.bf16 %v76
  %v141 = vunpack.c.l.bf16 %v77
  %v142 = vunpack.c.l.bf16 %v78
  %v143 = vunpack.c.l.bf16 %v79
  %v144 = vunpack.c.l.bf16 %v80
  %v145 = vunpack.c.l.bf16 %v81
  %v146 = vunpack.c.l.bf16 %v82
  %v147 = vunpack.c.l.bf16 %v83
  %v148 = vunpack.c.l.bf16 %v84
  %v149 = vunpack.c.l.bf16 %v85
  %v150 = vunpack.c.l.bf16 %v86
  %v151 = vunpack.c.l.bf16 %v87
  %v152 = vunpack.c.l.bf16 %v88
  %v153 = vunpack.c.l.bf16 %v89
  %v154 = vunpack.c.l.bf16 %v90
  %v155 = vunpack.c.l.bf16 %v91
  %v156 = vunpack.c.l.bf16 %v92
  %v157 = vunpack.c.l.bf16 %v93
  %v158 = vunpack.c.l.bf16 %v94
  %v159 = vunpack.c.l.bf16 %v95
  %v160 = vunpack.c.l.bf16 %v96
  %v161 = vunpack.c.l.bf16 %v97
  %v162 = vunpack.c.l.bf16 %v98
  %v163 = vunpack.c.l.bf16 %v99
  %v164 = vunpack.c.l.bf16 %v100
  %v165 = vunpack.c.l.bf16 %v101
  %v166 = vunpack.c.l.bf16 %v102
  %v167 = vunpack.c.l.bf16 %v103
  %v168 = vunpack.c.l.bf16 %v104
  %v169 = vunpack.c.l.bf16 %v105
  %v170 = vunpack.c.l.bf16 %v106
  %v171 = vunpack.c.l.bf16 %v107
  %v172 = vunpack.c.l.bf16 %v108
  %v173 = vunpack.c.l.bf16 %v109
  %v174 = vunpack.c.l.bf16 %v110
  %v175 = vunpack.c.l.bf16 %v111
  %v176 = vunpack.c.l.bf16 %v112
  %v177 = vunpack.c.l.bf16 %v113
  %v178 = vunpack.c.l.bf16 %v114
  %v179 = vunpack.c.l.bf16 %v115
  %v180 = vunpack.c.l.bf16 %v116
  %v181 = vunpack.c.l.bf16 %v117
  %v182 = vunpack.c.l.bf16 %v118
  %v184 = vlaneseq
  %v185 = vshrl.u32 %v184, 7
  %v186 = vsub.s32 0, %v185
  %v187 = vrot.slane %v51, %v186
  %v189 = vmul.f32 %v119, %v187
  %v190 = vmul.f32 %v120, %v187
  %v191 = vmul.f32 %v121, %v187
  %v192 = vmul.f32 %v122, %v187
  %v193 = vmul.f32 %v123, %v187
  %v194 = vmul.f32 %v124, %v187
  %v195 = vmul.f32 %v125, %v187
  %v196 = vmul.f32 %v126, %v187
  %v197 = vmul.f32 %v127, %v187
  %v198 = vmul.f32 %v128, %v187
  %v199 = vmul.f32 %v129, %v187
  %v200 = vmul.f32 %v130, %v187
  %v201 = vmul.f32 %v131, %v187
  %v202 = vmul.f32 %v132, %v187
  %v203 = vmul.f32 %v133, %v187
  %v204 = vmul.f32 %v134, %v187
  %v205 = vmul.f32 %v135, %v187
  %v206 = vmul.f32 %v136, %v187
  %v207 = vmul.f32 %v137, %v187
  %v208 = vmul.f32 %v138, %v187
  %v209 = vmul.f32 %v139, %v187
  %v210 = vmul.f32 %v140, %v187
  %v211 = vmul.f32 %v141, %v187
  %v212 = vmul.f32 %v142, %v187
  %v213 = vmul.f32 %v143, %v187
  %v214 = vmul.f32 %v144, %v187
  %v215 = vmul.f32 %v145, %v187
  %v216 = vmul.f32 %v146, %v187
  %v217 = vmul.f32 %v147, %v187
  %v218 = vmul.f32 %v148, %v187
  %v219 = vmul.f32 %v149, %v187
  %v220 = vmul.f32 %v150, %v187
  %v221 = vmul.f32 %v151, %v187
  %v222 = vmul.f32 %v152, %v187
  %v223 = vmul.f32 %v153, %v187
  %v224 = vmul.f32 %v154, %v187
  %v225 = vmul.f32 %v155, %v187
  %v226 = vmul.f32 %v156, %v187
  %v227 = vmul.f32 %v157, %v187
  %v228 = vmul.f32 %v158, %v187
  %v229 = vmul.f32 %v159, %v187
  %v230 = vmul.f32 %v160, %v187
  %v231 = vmul.f32 %v161, %v187
  %v232 = vmul.f32 %v162, %v187
  %v233 = vmul.f32 %v163, %v187
  %v234 = vmul.f32 %v164, %v187
  %v235 = vmul.f32 %v165, %v187
  %v236 = vmul.f32 %v166, %v187
  %v237 = vmul.f32 %v167, %v187
  %v238 = vmul.f32 %v168, %v187
  %v239 = vmul.f32 %v169, %v187
  %v240 = vmul.f32 %v170, %v187
  %v241 = vmul.f32 %v171, %v187
  %v242 = vmul.f32 %v172, %v187
  %v243 = vmul.f32 %v173, %v187
  %v244 = vmul.f32 %v174, %v187
  %v245 = vmul.f32 %v175, %v187
  %v246 = vmul.f32 %v176, %v187
  %v247 = vmul.f32 %v177, %v187
  %v248 = vmul.f32 %v178, %v187
  %v249 = vmul.f32 %v179, %v187
  %v250 = vmul.f32 %v180, %v187
  %v251 = vmul.f32 %v181, %v187
  %v252 = vmul.f32 %v182, %v187
  %v254 = vlaneseq
  %v255 = vshrl.u32 %v254, 7
  %v256 = vsub.s32 0, %v255
  %v257 = vrot.slane %v54, %v256
  %v259 = vadd.f32 %v189, %v257
  %v260 = vadd.f32 %v190, %v257
  %v261 = vadd.f32 %v191, %v257
  %v262 = vadd.f32 %v192, %v257
  %v263 = vadd.f32 %v193, %v257
  %v264 = vadd.f32 %v194, %v257
  %v265 = vadd.f32 %v195, %v257
  %v266 = vadd.f32 %v196, %v257
  %v267 = vadd.f32 %v197, %v257
  %v268 = vadd.f32 %v198, %v257
  %v269 = vadd.f32 %v199, %v257
  %v270 = vadd.f32 %v200, %v257
  %v271 = vadd.f32 %v201, %v257
  %v272 = vadd.f32 %v202, %v257
  %v273 = vadd.f32 %v203, %v257
  %v274 = vadd.f32 %v204, %v257
  %v275 = vadd.f32 %v205, %v257
  %v276 = vadd.f32 %v206, %v257
  %v277 = vadd.f32 %v207, %v257
  %v278 = vadd.f32 %v208, %v257
  %v279 = vadd.f32 %v209, %v257
  %v280 = vadd.f32 %v210, %v257
  %v281 = vadd.f32 %v211, %v257
  %v282 = vadd.f32 %v212, %v257
  %v283 = vadd.f32 %v213, %v257
  %v284 = vadd.f32 %v214, %v257
  %v285 = vadd.f32 %v215, %v257
  %v286 = vadd.f32 %v216, %v257
  %v287 = vadd.f32 %v217, %v257
  %v288 = vadd.f32 %v218, %v257
  %v289 = vadd.f32 %v219, %v257
  %v290 = vadd.f32 %v220, %v257
  %v291 = vadd.f32 %v221, %v257
  %v292 = vadd.f32 %v222, %v257
  %v293 = vadd.f32 %v223, %v257
  %v294 = vadd.f32 %v224, %v257
  %v295 = vadd.f32 %v225, %v257
  %v296 = vadd.f32 %v226, %v257
  %v297 = vadd.f32 %v227, %v257
  %v298 = vadd.f32 %v228, %v257
  %v299 = vadd.f32 %v229, %v257
  %v300 = vadd.f32 %v230, %v257
  %v301 = vadd.f32 %v231, %v257
  %v302 = vadd.f32 %v232, %v257
  %v303 = vadd.f32 %v233, %v257
  %v304 = vadd.f32 %v234, %v257
  %v305 = vadd.f32 %v235, %v257
  %v306 = vadd.f32 %v236, %v257
  %v307 = vadd.f32 %v237, %v257
  %v308 = vadd.f32 %v238, %v257
  %v309 = vadd.f32 %v239, %v257
  %v310 = vadd.f32 %v240, %v257
  %v311 = vadd.f32 %v241, %v257
  %v312 = vadd.f32 %v242, %v257
  %v313 = vadd.f32 %v243, %v257
  %v314 = vadd.f32 %v244, %v257
  %v315 = vadd.f32 %v245, %v257
  %v316 = vadd.f32 %v246, %v257
  %v317 = vadd.f32 %v247, %v257
  %v318 = vadd.f32 %v248, %v257
  %v319 = vadd.f32 %v249, %v257
  %v320 = vadd.f32 %v250, %v257
  %v321 = vadd.f32 %v251, %v257
  %v322 = vadd.f32 %v252, %v257
  %v323 = vmax.f32 %v259, 0.0
  %v324 = vmax.f32 %v260, 0.0
  %v325 = vmax.f32 %v261, 0.0
  %v326 = vmax.f32 %v262, 0.0
  %v327 = vmax.f32 %v263, 0.0
  %v328 = vmax.f32 %v264, 0.0
  %v329 = vmax.f32 %v265, 0.0
  %v330 = vmax.f32 %v266, 0.0
  %v331 = vmax.f32 %v267, 0.0
  %v332 = vmax.f32 %v268, 0.0
  %v333 = vmax.f32 %v269, 0.0
  %v334 = vmax.f32 %v270, 0.0
  %v335 = vmax.f32 %v271, 0.0
  %v336 = vmax.f32 %v272, 0.0
  %v337 = vmax.f32 %v273, 0.0
  %v338 = vmax.f32 %v274, 0.0
  %v339 = vmax.f32 %v275, 0.0
  %v340 = vmax.f32 %v276, 0.0
  %v341 = vmax.f32 %v277, 0.0
  %v342 = vmax.f32 %v278, 0.0
  %v343 = vmax.f32 %v279, 0.0
  %v344 = vmax.f32 %v280, 0.0
  %v345 = vmax.f32 %v281, 0.0
  %v346 = vmax.f32 %v282, 0.0
  %v347 = vmax.f32 %v283, 0.0
  %v348 = vmax.f32 %v284, 0.0
  %v349 = vmax.f32 %v285, 0.0
  %v350 = vmax.f32 %v286, 0.0
  %v351 = vmax.f32 %v287, 0.0
  %v352 = vmax.f32 %v288, 0.0
  %v353 = vmax.f32 %v289, 0.0
  %v354 = vmax.f32 %v290, 0.0
  %v355 = vmax.f32 %v291, 0.0
  %v356 = vmax.f32 %v292, 0.0
  %v357 = vmax.f32 %v293, 0.0
  %v358 = vmax.f32 %v294, 0.0
  %v359 = vmax.f32 %v295, 0.0
  %v360 = vmax.f32 %v296, 0.0
  %v361 = vmax.f32 %v297, 0.0
  %v362 = vmax.f32 %v298, 0.0
  %v363 = vmax.f32 %v299, 0.0
  %v364 = vmax.f32 %v300, 0.0
  %v365 = vmax.f32 %v301, 0.0
  %v366 = vmax.f32 %v302, 0.0
  %v367 = vmax.f32 %v303, 0.0
  %v368 = vmax.f32 %v304, 0.0
  %v369 = vmax.f32 %v305, 0.0
  %v370 = vmax.f32 %v306, 0.0
  %v371 = vmax.f32 %v307, 0.0
  %v372 = vmax.f32 %v308, 0.0
  %v373 = vmax.f32 %v309, 0.0
  %v374 = vmax.f32 %v310, 0.0
  %v375 = vmax.f32 %v311, 0.0
  %v376 = vmax.f32 %v312, 0.0
  %v377 = vmax.f32 %v313, 0.0
  %v378 = vmax.f32 %v314, 0.0
  %v379 = vmax.f32 %v315, 0.0
  %v380 = vmax.f32 %v316, 0.0
  %v381 = vmax.f32 %v317, 0.0
  %v382 = vmax.f32 %v318, 0.0
  %v383 = vmax.f32 %v319, 0.0
  %v384 = vmax.f32 %v320, 0.0
  %v385 = vmax.f32 %v321, 0.0
  %v386 = vmax.f32 %v322, 0.0
  %v387 = vpack.c.bf16 %v324, %v323
  %v388 = vpack.c.bf16 %v326, %v325
  %v389 = vpack.c.bf16 %v328, %v327
  %v390 = vpack.c.bf16 %v330, %v329
  %v391 = vpack.c.bf16 %v332, %v331
  %v392 = vpack.c.bf16 %v334, %v333
  %v393 = vpack.c.bf16 %v336, %v335
  %v394 = vpack.c.bf16 %v338, %v337
  %v395 = vpack.c.bf16 %v340, %v339
  %v396 = vpack.c.bf16 %v342, %v341
  %v397 = vpack.c.bf16 %v344, %v343
  %v398 = vpack.c.bf16 %v346, %v345
  %v399 = vpack.c.bf16 %v348, %v347
  %v400 = vpack.c.bf16 %v350, %v349
  %v401 = vpack.c.bf16 %v352, %v351
  %v402 = vpack.c.bf16 %v354, %v353
  %v403 = vpack.c.bf16 %v356, %v355
  %v404 = vpack.c.bf16 %v358, %v357
  %v405 = vpack.c.bf16 %v360, %v359
  %v406 = vpack.c.bf16 %v362, %v361
  %v407 = vpack.c.bf16 %v364, %v363
  %v408 = vpack.c.bf16 %v366, %v365
  %v409 = vpack.c.bf16 %v368, %v367
  %v410 = vpack.c.bf16 %v370, %v369
  %v411 = vpack.c.bf16 %v372, %v371
  %v412 = vpack.c.bf16 %v374, %v373
  %v413 = vpack.c.bf16 %v376, %v375
  %v414 = vpack.c.bf16 %v378, %v377
  %v415 = vpack.c.bf16 %v380, %v379
  %v416 = vpack.c.bf16 %v382, %v381
  %v417 = vpack.c.bf16 %v384, %v383
  %v418 = vpack.c.bf16 %v386, %v385
  %v451 = vunpack.c.l.b16 %v387
  %v452 = vunpack.c.h.b16 %v387
  %v453 = vunpack.c.l.b16 %v388
  %v454 = vunpack.c.h.b16 %v388
  %v455 = vunpack.c.l.b16 %v389
  %v456 = vunpack.c.h.b16 %v389
  %v457 = vunpack.c.l.b16 %v390
  %v458 = vunpack.c.h.b16 %v390
  %v459 = vunpack.c.l.b16 %v391
  %v460 = vunpack.c.h.b16 %v391
  %v461 = vunpack.c.l.b16 %v392
  %v462 = vunpack.c.h.b16 %v392
  %v463 = vunpack.c.l.b16 %v393
  %v464 = vunpack.c.h.b16 %v393
  %v465 = vunpack.c.l.b16 %v394
  %v466 = vunpack.c.h.b16 %v394
  %v467 = vunpack.c.l.b16 %v395
  %v468 = vunpack.c.h.b16 %v395
  %v469 = vunpack.c.l.b16 %v396
  %v470 = vunpack.c.h.b16 %v396
  %v471 = vunpack.c.l.b16 %v397
  %v472 = vunpack.c.h.b16 %v397
  %v473 = vunpack.c.l.b16 %v398
  %v474 = vunpack.c.h.b16 %v398
  %v475 = vunpack.c.l.b16 %v399
  %v476 = vunpack.c.h.b16 %v399
  %v477 = vunpack.c.l.b16 %v400
  %v478 = vunpack.c.h.b16 %v400
  %v479 = vunpack.c.l.b16 %v401
  %v480 = vunpack.c.h.b16 %v401
  %v481 = vunpack.c.l.b16 %v402
  %v482 = vunpack.c.h.b16 %v402
  %v483 = vunpack.c.l.b16 %v403
  %v484 = vunpack.c.h.b16 %v403
  %v485 = vunpack.c.l.b16 %v404
  %v486 = vunpack.c.h.b16 %v404
  %v487 = vunpack.c.l.b16 %v405
  %v488 = vunpack.c.h.b16 %v405
  %v489 = vunpack.c.l.b16 %v406
  %v490 = vunpack.c.h.b16 %v406
  %v491 = vunpack.c.l.b16 %v407
  %v492 = vunpack.c.h.b16 %v407
  %v493 = vunpack.c.l.b16 %v408
  %v494 = vunpack.c.h.b16 %v408
  %v495 = vunpack.c.l.b16 %v409
  %v496 = vunpack.c.h.b16 %v409
  %v497 = vunpack.c.l.b16 %v410
  %v498 = vunpack.c.h.b16 %v410
  %v499 = vunpack.c.l.b16 %v411
  %v500 = vunpack.c.h.b16 %v411
  %v501 = vunpack.c.l.b16 %v412
  %v502 = vunpack.c.h.b16 %v412
  %v503 = vunpack.c.l.b16 %v413
  %v504 = vunpack.c.h.b16 %v413
  %v505 = vunpack.c.l.b16 %v414
  %v506 = vunpack.c.h.b16 %v414
  %v507 = vunpack.c.l.b16 %v415
  %v508 = vunpack.c.h.b16 %v415
  %v509 = vunpack.c.l.b16 %v416
  %v510 = vunpack.c.h.b16 %v416
  %v511 = vunpack.c.l.b16 %v417
  %v512 = vunpack.c.h.b16 %v417
  %v513 = vunpack.c.l.b16 %v418
  %v514 = vunpack.c.h.b16 %v418
  %v515 = vpack.c.b16 %v451, %v451
  %v516 = vpack.c.b16 %v452, %v452
  %v517 = vpack.c.b16 %v453, %v453
  %v518 = vpack.c.b16 %v454, %v454
  %v519 = vpack.c.b16 %v455, %v455
  %v520 = vpack.c.b16 %v456, %v456
  %v521 = vpack.c.b16 %v457, %v457
  %v522 = vpack.c.b16 %v458, %v458
  %v523 = vpack.c.b16 %v459, %v459
  %v524 = vpack.c.b16 %v460, %v460
  %v525 = vpack.c.b16 %v461, %v461
  %v526 = vpack.c.b16 %v462, %v462
  %v527 = vpack.c.b16 %v463, %v463
  %v528 = vpack.c.b16 %v464, %v464
  %v529 = vpack.c.b16 %v465, %v465
  %v530 = vpack.c.b16 %v466, %v466
  %v531 = vpack.c.b16 %v467, %v467
  %v532 = vpack.c.b16 %v468, %v468
  %v533 = vpack.c.b16 %v469, %v469
  %v534 = vpack.c.b16 %v470, %v470
  %v535 = vpack.c.b16 %v471, %v471
  %v536 = vpack.c.b16 %v472, %v472
  %v537 = vpack.c.b16 %v473, %v473
  %v538 = vpack.c.b16 %v474, %v474
  %v539 = vpack.c.b16 %v475, %v475
  %v540 = vpack.c.b16 %v476, %v476
  %v541 = vpack.c.b16 %v477, %v477
  %v542 = vpack.c.b16 %v478, %v478
  %v543 = vpack.c.b16 %v479, %v479
  %v544 = vpack.c.b16 %v480, %v480
  %v545 = vpack.c.b16 %v481, %v481
  %v546 = vpack.c.b16 %v482, %v482
  %v547 = vpack.c.b16 %v483, %v483
  %v548 = vpack.c.b16 %v484, %v484
  %v549 = vpack.c.b16 %v485, %v485
  %v550 = vpack.c.b16 %v486, %v486
  %v551 = vpack.c.b16 %v487, %v487
  %v552 = vpack.c.b16 %v488, %v488
  %v553 = vpack.c.b16 %v489, %v489
  %v554 = vpack.c.b16 %v490, %v490
  %v555 = vpack.c.b16 %v491, %v491
  %v556 = vpack.c.b16 %v492, %v492
  %v557 = vpack.c.b16 %v493, %v493
  %v558 = vpack.c.b16 %v494, %v494
  %v559 = vpack.c.b16 %v495, %v495
  %v560 = vpack.c.b16 %v496, %v496
  %v561 = vpack.c.b16 %v497, %v497
  %v562 = vpack.c.b16 %v498, %v498
  %v563 = vpack.c.b16 %v499, %v499
  %v564 = vpack.c.b16 %v500, %v500
  %v565 = vpack.c.b16 %v501, %v501
  %v566 = vpack.c.b16 %v502, %v502
  %v567 = vpack.c.b16 %v503, %v503
  %v568 = vpack.c.b16 %v504, %v504
  %v569 = vpack.c.b16 %v505, %v505
  %v570 = vpack.c.b16 %v506, %v506
  %v571 = vpack.c.b16 %v507, %v507
  %v572 = vpack.c.b16 %v508, %v508
  %v573 = vpack.c.b16 %v509, %v509
  %v574 = vpack.c.b16 %v510, %v510
  %v575 = vpack.c.b16 %v511, %v511
  %v576 = vpack.c.b16 %v512, %v512
  %v577 = vpack.c.b16 %v513, %v513
  %v578 = vpack.c.b16 %v514, %v514
  %643 = vst [vmem:[%s5] sm:$0xf] %v515
  %644 = vst [vmem:[%s5 + $0x4] sm:$0xf] %v516
  %645 = vst [vmem:[%s5 + $0x8] sm:$0xf] %v517
  %646 = vst [vmem:[%s5 + $0xc] sm:$0xf] %v518
  %647 = vst [vmem:[%s5 + $0x10] sm:$0xf] %v519
  %648 = vst [vmem:[%s5 + $0x14] sm:$0xf] %v520
  %649 = vst [vmem:[%s5 + $0x18] sm:$0xf] %v521
  %650 = vst [vmem:[%s5 + $0x1c] sm:$0xf] %v522
  %651 = vst [vmem:[%s5 + $0x20] sm:$0xf] %v523
  %652 = vst [vmem:[%s5 + $0x24] sm:$0xf] %v524
  %653 = vst [vmem:[%s5 + $0x28] sm:$0xf] %v525
  %654 = vst [vmem:[%s5 + $0x2c] sm:$0xf] %v526
  %655 = vst [vmem:[%s5 + $0x30] sm:$0xf] %v527
  %656 = vst [vmem:[%s5 + $0x34] sm:$0xf] %v528
  %657 = vst [vmem:[%s5 + $0x38] sm:$0xf] %v529
  %658 = vst [vmem:[%s5 + $0x3c] sm:$0xf] %v530
  %659 = vst [vmem:[%s5 + $0x40] sm:$0xf] %v531
  %660 = vst [vmem:[%s5 + $0x44] sm:$0xf] %v532
  %661 = vst [vmem:[%s5 + $0x48] sm:$0xf] %v533
  %662 = vst [vmem:[%s5 + $0x4c] sm:$0xf] %v534
  %663 = vst [vmem:[%s5 + $0x50] sm:$0xf] %v535
  %664 = vst [vmem:[%s5 + $0x54] sm:$0xf] %v536
  %665 = vst [vmem:[%s5 + $0x58] sm:$0xf] %v537
  %666 = vst [vmem:[%s5 + $0x5c] sm:$0xf] %v538
  %667 = vst [vmem:[%s5 + $0x60] sm:$0xf] %v539
  %668 = vst [vmem:[%s5 + $0x64] sm:$0xf] %v540
  %669 = vst [vmem:[%s5 + $0x68] sm:$0xf] %v541
  %670 = vst [vmem:[%s5 + $0x6c] sm:$0xf] %v542
  %671 = vst [vmem:[%s5 + $0x70] sm:$0xf] %v543
  %672 = vst [vmem:[%s5 + $0x74] sm:$0xf] %v544
  %673 = vst [vmem:[%s5 + $0x78] sm:$0xf] %v545
  %674 = vst [vmem:[%s5 + $0x7c] sm:$0xf] %v546
  %675 = vst [vmem:[%s5 + $0x80] sm:$0xf] %v547
  %676 = vst [vmem:[%s5 + $0x84] sm:$0xf] %v548
  %677 = vst [vmem:[%s5 + $0x88] sm:$0xf] %v549
  %678 = vst [vmem:[%s5 + $0x8c] sm:$0xf] %v550
  %679 = vst [vmem:[%s5 + $0x90] sm:$0xf] %v551
  %680 = vst [vmem:[%s5 + $0x94] sm:$0xf] %v552
  %681 = vst [vmem:[%s5 + $0x98] sm:$0xf] %v553
  %682 = vst [vmem:[%s5 + $0x9c] sm:$0xf] %v554
  %683 = vst [vmem:[%s5 + $0xa0] sm:$0xf] %v555
  %684 = vst [vmem:[%s5 + $0xa4] sm:$0xf] %v556
  %685 = vst [vmem:[%s5 + $0xa8] sm:$0xf] %v557
  %686 = vst [vmem:[%s5 + $0xac] sm:$0xf] %v558
  %687 = vst [vmem:[%s5 + $0xb0] sm:$0xf] %v559
  %688 = vst [vmem:[%s5 + $0xb4] sm:$0xf] %v560
  %689 = vst [vmem:[%s5 + $0xb8] sm:$0xf] %v561
  %690 = vst [vmem:[%s5 + $0xbc] sm:$0xf] %v562
  %691 = vst [vmem:[%s5 + $0xc0] sm:$0xf] %v563
  %692 = vst [vmem:[%s5 + $0xc4] sm:$0xf] %v564
  %693 = vst [vmem:[%s5 + $0xc8] sm:$0xf] %v565
  %694 = vst [vmem:[%s5 + $0xcc] sm:$0xf] %v566
  %695 = vst [vmem:[%s5 + $0xd0] sm:$0xf] %v567
  %696 = vst [vmem:[%s5 + $0xd4] sm:$0xf] %v568
  %697 = vst [vmem:[%s5 + $0xd8] sm:$0xf] %v569
  %698 = vst [vmem:[%s5 + $0xdc] sm:$0xf] %v570
  %699 = vst [vmem:[%s5 + $0xe0] sm:$0xf] %v571
  %700 = vst [vmem:[%s5 + $0xe4] sm:$0xf] %v572
  %701 = vst [vmem:[%s5 + $0xe8] sm:$0xf] %v573
  %702 = vst [vmem:[%s5 + $0xec] sm:$0xf] %v574
  %703 = vst [vmem:[%s5 + $0xf0] sm:$0xf] %v575
  %704 = vst [vmem:[%s5 + $0xf4] sm:$0xf] %v576
  %705 = vst [vmem:[%s5 + $0xf8] sm:$0xf] %v577
  %706 = vst [vmem:[%s5 + $0xfc] sm:$0xf] %v578
  // Predicated region
  $region22: #{generator_forward.34} parent=0 // pred_check
    _
  $region23: #{generator_forward.34} parent=0 // pred_check_branch
    %708 = sbr.rel (0) target = $region25
  $region24: #{generator_forward.34} parent=0 // pred_region
    _
  $region25: #{generator_forward.34} parent=0 // pred_fallthru
    _
  // Predicated region
  $region26: #{generator_forward.34} parent=0 // pred_check
    _
  $region27: #{generator_forward.34} parent=0 // pred_check_branch
    %710 = sbr.rel (0) target = $region29
  $region28: #{generator_forward.34} parent=0 // pred_region
    _
  $region29: #{generator_forward.34} parent=0 // pred_fallthru
    _

// kernel: generator_forward.35
$region0: #{generator_forward.35}
  #allocation0 [shape = 'u32[]', space=smem, size = 0x4, offset = 0x4, fixed_abs, tag = 'smem constant byte address 0x4 - core index']
  #allocation1 [shape = 'u32[144,128]{1,0:T(1,128)}', space=vmem, size = 0x12000, scoped, tag = 'internal scratch']
  %s0 = inlined_call_operand.vmem [shape: bf16[1,512,1152], index: 0, kind: input, shape index: {}]
  %s1 = inlined_call_operand.vmem [shape: bf16[1,1152,128], index: 1, kind: input, shape index: {}]
  %s2 = inlined_call_operand.vmem [shape: f32[1,128], index: 2, kind: input, shape index: {}]
  %s3 = inlined_call_operand.vmem [shape: bf16[1,512,128], index: 3, kind: output, shape index: {}]
  %s4 = sld [smem:[#allocation0]]
  $region22: #{generator_forward.35} parent=0
    _
  %s6 = ssub.s32 1, %s4
  %s7 = scalar_select 0, %s6, %s4
  // Predicated region
  $region2: #{generator_forward.35} parent=0 // pred_check
    _
  $region3: #{generator_forward.35} parent=0 // pred_check_branch
    %9 = sbr.rel (0) target = $region5
  $region4: #{generator_forward.35} parent=0 // pred_region
    _
  $region5: #{generator_forward.35} parent=0 // pred_fallthru
    _
  // Predicated region
  $region6: #{generator_forward.35} parent=0 // pred_check
    _
  $region7: #{generator_forward.35} parent=0 // pred_check_branch
    %11 = sbr.rel (0) target = $region9
  $region8: #{generator_forward.35} parent=0 // pred_region
    _
  $region9: #{generator_forward.35} parent=0 // pred_fallthru
    _
  // Predicated region
  $region10: #{generator_forward.35} parent=0 // pred_check
    _
  $region11: #{generator_forward.35} parent=0 // pred_check_branch
    %13 = sbr.rel (0) target = $region13
  $region12: #{generator_forward.35} parent=0 // pred_region
    _
  $region13: #{generator_forward.35} parent=0 // pred_fallthru
    _
  %v15 = vld [vmem:[%s0] sm:$0xff]
  %v16 = vld [vmem:[%s0 + $0x8] sm:$0xff]
  %v17 = vld [vmem:[%s0 + $0x10] sm:$0xff]
  %v18 = vld [vmem:[%s0 + $0x18] sm:$0xff]
  %v19 = vld [vmem:[%s0 + $0x20] sm:$0xf]
  %v20 = vld [vmem:[%s0 + $0x24] sm:$0xff]
  %v21 = vld [vmem:[%s0 + $0x2c] sm:$0xff]
  %v22 = vld [vmem:[%s0 + $0x34] sm:$0xff]
  %v23 = vld [vmem:[%s0 + $0x3c] sm:$0xff]
  %v24 = vld [vmem:[%s0 + $0x44] sm:$0xf]
  %v25 = vld [vmem:[%s0 + $0x48] sm:$0xff]
  %v26 = vld [vmem:[%s0 + $0x50] sm:$0xff]
  %v27 = vld [vmem:[%s0 + $0x58] sm:$0xff]
  %v28 = vld [vmem:[%s0 + $0x60] sm:$0xff]
  %v29 = vld [vmem:[%s0 + $0x68] sm:$0xf]
  %v30 = vld [vmem:[%s0 + $0x6c] sm:$0xff]
  %v31 = vld [vmem:[%s0 + $0x74] sm:$0xff]
  %v32 = vld [vmem:[%s0 + $0x7c] sm:$0xff]
  %v33 = vld [vmem:[%s0 + $0x84] sm:$0xff]
  %v34 = vld [vmem:[%s0 + $0x8c] sm:$0xf]
  %v35 = vld [vmem:[%s0 + $0x90] sm:$0xff]
  %v36 = vld [vmem:[%s0 + $0x98] sm:$0xff]
  %v37 = vld [vmem:[%s0 + $0xa0] sm:$0xff]
  %v38 = vld [vmem:[%s0 + $0xa8] sm:$0xff]
  %v39 = vld [vmem:[%s0 + $0xb0] sm:$0xf]
  %v40 = vld [vmem:[%s0 + $0xb4] sm:$0xff]
  %v41 = vld [vmem:[%s0 + $0xbc] sm:$0xff]
  %v42 = vld [vmem:[%s0 + $0xc4] sm:$0xff]
  %v43 = vld [vmem:[%s0 + $0xcc] sm:$0xff]
  %v44 = vld [vmem:[%s0 + $0xd4] sm:$0xf]
  %v45 = vld [vmem:[%s0 + $0xd8] sm:$0xff]
  %v46 = vld [vmem:[%s0 + $0xe0] sm:$0xff]
  %v47 = vld [vmem:[%s0 + $0xe8] sm:$0xff]
  %v48 = vld [vmem:[%s0 + $0xf0] sm:$0xff]
  %v49 = vld [vmem:[%s0 + $0xf8] sm:$0xf]
  %v50 = vld [vmem:[%s0 + $0xfc] sm:$0xff]
  %v51 = vld [vmem:[%s0 + $0x104] sm:$0xff]
  %v52 = vld [vmem:[%s0 + $0x10c] sm:$0xff]
  %v53 = vld [vmem:[%s0 + $0x114] sm:$0xff]
  %v54 = vld [vmem:[%s0 + $0x11c] sm:$0xf]
  %v55 = vld [vmem:[%s0 + $0x120] sm:$0xff]
  %v56 = vld [vmem:[%s0 + $0x128] sm:$0xff]
  %v57 = vld [vmem:[%s0 + $0x130] sm:$0xff]
  %v58 = vld [vmem:[%s0 + $0x138] sm:$0xff]
  %v59 = vld [vmem:[%s0 + $0x140] sm:$0xf]
  %v60 = vld [vmem:[%s0 + $0x144] sm:$0xff]
  %v61 = vld [vmem:[%s0 + $0x14c] sm:$0xff]
  %v62 = vld [vmem:[%s0 + $0x154] sm:$0xff]
  %v63 = vld [vmem:[%s0 + $0x15c] sm:$0xff]
  %v64 = vld [vmem:[%s0 + $0x164] sm:$0xf]
  %v65 = vld [vmem:[%s0 + $0x168] sm:$0xff]
  %v66 = vld [vmem:[%s0 + $0x170] sm:$0xff]
  %v67 = vld [vmem:[%s0 + $0x178] sm:$0xff]
  %v68 = vld [vmem:[%s0 + $0x180] sm:$0xff]
  %v69 = vld [vmem:[%s0 + $0x188] sm:$0xf]
  %v70 = vld [vmem:[%s0 + $0x18c] sm:$0xff]
  %v71 = vld [vmem:[%s0 + $0x194] sm:$0xff]
  %v72 = vld [vmem:[%s0 + $0x19c] sm:$0xff]
  %v73 = vld [vmem:[%s0 + $0x1a4] sm:$0xff]
  %v74 = vld [vmem:[%s0 + $0x1ac] sm:$0xf]
  %v75 = vld [vmem:[%s0 + $0x1b0] sm:$0xff]
  %v76 = vld [vmem:[%s0 + $0x1b8] sm:$0xff]
  %v77 = vld [vmem:[%s0 + $0x1c0] sm:$0xff]
  %v78 = vld [vmem:[%s0 + $0x1c8] sm:$0xff]
  %v79 = vld [vmem:[%s0 + $0x1d0] sm:$0xf]
  %v80 = vld [vmem:[%s0 + $0x1d4] sm:$0xff]
  %v81 = vld [vmem:[%s0 + $0x1dc] sm:$0xff]
  %v82 = vld [vmem:[%s0 + $0x1e4] sm:$0xff]
  %v83 = vld [vmem:[%s0 + $0x1ec] sm:$0xff]
  %v84 = vld [vmem:[%s0 + $0x1f4] sm:$0xf]
  %v85 = vld [vmem:[%s0 + $0x1f8] sm:$0xff]
  %v86 = vld [vmem:[%s0 + $0x200] sm:$0xff]
  %v87 = vld [vmem:[%s0 + $0x208] sm:$0xff]
  %v88 = vld [vmem:[%s0 + $0x210] sm:$0xff]
  %v89 = vld [vmem:[%s0 + $0x218] sm:$0xf]
  %v90 = vld [vmem:[%s0 + $0x21c] sm:$0xff]
  %v91 = vld [vmem:[%s0 + $0x224] sm:$0xff]
  %v92 = vld [vmem:[%s0 + $0x22c] sm:$0xff]
  %v93 = vld [vmem:[%s0 + $0x234] sm:$0xff]
  %v94 = vld [vmem:[%s0 + $0x23c] sm:$0xf]
  %v95 = vld [vmem:[%s0 + $0x240] sm:$0xff]
  %v96 = vld [vmem:[%s0 + $0x248] sm:$0xff]
  %v97 = vld [vmem:[%s0 + $0x250] sm:$0xff]
  %v98 = vld [vmem:[%s0 + $0x258] sm:$0xff]
  %v99 = vld [vmem:[%s0 + $0x260] sm:$0xf]
  %v100 = vld [vmem:[%s0 + $0x264] sm:$0xff]
  %v101 = vld [vmem:[%s0 + $0x26c] sm:$0xff]
  %v102 = vld [vmem:[%s0 + $0x274] sm:$0xff]
  %v103 = vld [vmem:[%s0 + $0x27c] sm:$0xff]
  %v104 = vld [vmem:[%s0 + $0x284] sm:$0xf]
  %v105 = vld [vmem:[%s0 + $0x288] sm:$0xff]
  %v106 = vld [vmem:[%s0 + $0x290] sm:$0xff]
  %v107 = vld [vmem:[%s0 + $0x298] sm:$0xff]
  %v108 = vld [vmem:[%s0 + $0x2a0] sm:$0xff]
  %v109 = vld [vmem:[%s0 + $0x2a8] sm:$0xf]
  %v110 = vld [vmem:[%s0 + $0x2ac] sm:$0xff]
  %v111 = vld [vmem:[%s0 + $0x2b4] sm:$0xff]
  %v112 = vld [vmem:[%s0 + $0x2bc] sm:$0xff]
  %v113 = vld [vmem:[%s0 + $0x2c4] sm:$0xff]
  %v114 = vld [vmem:[%s0 + $0x2cc] sm:$0xf]
  %v115 = vld [vmem:[%s0 + $0x2d0] sm:$0xff]
  %v116 = vld [vmem:[%s0 + $0x2d8] sm:$0xff]
  %v117 = vld [vmem:[%s0 + $0x2e0] sm:$0xff]
  %v118 = vld [vmem:[%s0 + $0x2e8] sm:$0xff]
  %v119 = vld [vmem:[%s0 + $0x2f0] sm:$0xf]
  %v120 = vld [vmem:[%s0 + $0x2f4] sm:$0xff]
  %v121 = vld [vmem:[%s0 + $0x2fc] sm:$0xff]
  %v122 = vld [vmem:[%s0 + $0x304] sm:$0xff]
  %v123 = vld [vmem:[%s0 + $0x30c] sm:$0xff]
  %v124 = vld [vmem:[%s0 + $0x314] sm:$0xf]
  %v125 = vld [vmem:[%s0 + $0x318] sm:$0xff]
  %v126 = vld [vmem:[%s0 + $0x320] sm:$0xff]
  %v127 = vld [vmem:[%s0 + $0x328] sm:$0xff]
  %v128 = vld [vmem:[%s0 + $0x330] sm:$0xff]
  %v129 = vld [vmem:[%s0 + $0x338] sm:$0xf]
  %v130 = vld [vmem:[%s0 + $0x33c] sm:$0xff]
  %v131 = vld [vmem:[%s0 + $0x344] sm:$0xff]
  %v132 = vld [vmem:[%s0 + $0x34c] sm:$0xff]
  %v133 = vld [vmem:[%s0 + $0x354] sm:$0xff]
  %v134 = vld [vmem:[%s0 + $0x35c] sm:$0xf]
  %v135 = vld [vmem:[%s0 + $0x360] sm:$0xff]
  %v136 = vld [vmem:[%s0 + $0x368] sm:$0xff]
  %v137 = vld [vmem:[%s0 + $0x370] sm:$0xff]
  %v138 = vld [vmem:[%s0 + $0x378] sm:$0xff]
  %v139 = vld [vmem:[%s0 + $0x380] sm:$0xf]
  %v140 = vld [vmem:[%s0 + $0x384] sm:$0xff]
  %v141 = vld [vmem:[%s0 + $0x38c] sm:$0xff]
  %v142 = vld [vmem:[%s0 + $0x394] sm:$0xff]
  %v143 = vld [vmem:[%s0 + $0x39c] sm:$0xff]
  %v144 = vld [vmem:[%s0 + $0x3a4] sm:$0xf]
  %v145 = vld [vmem:[%s0 + $0x3a8] sm:$0xff]
  %v146 = vld [vmem:[%s0 + $0x3b0] sm:$0xff]
  %v147 = vld [vmem:[%s0 + $0x3b8] sm:$0xff]
  %v148 = vld [vmem:[%s0 + $0x3c0] sm:$0xff]
  %v149 = vld [vmem:[%s0 + $0x3c8] sm:$0xf]
  %v150 = vld [vmem:[%s0 + $0x3cc] sm:$0xff]
  %v151 = vld [vmem:[%s0 + $0x3d4] sm:$0xff]
  %v152 = vld [vmem:[%s0 + $0x3dc] sm:$0xff]
  %v153 = vld [vmem:[%s0 + $0x3e4] sm:$0xff]
  %v154 = vld [vmem:[%s0 + $0x3ec] sm:$0xf]
  %v155 = vld [vmem:[%s0 + $0x3f0] sm:$0xff]
  %v156 = vld [vmem:[%s0 + $0x3f8] sm:$0xff]
  %v157 = vld [vmem:[%s0 + $0x400] sm:$0xff]
  %v158 = vld [vmem:[%s0 + $0x408] sm:$0xff]
  %v159 = vld [vmem:[%s0 + $0x410] sm:$0xf]
  %v160 = vld [vmem:[%s0 + $0x414] sm:$0xff]
  %v161 = vld [vmem:[%s0 + $0x41c] sm:$0xff]
  %v162 = vld [vmem:[%s0 + $0x424] sm:$0xff]
  %v163 = vld [vmem:[%s0 + $0x42c] sm:$0xff]
  %v164 = vld [vmem:[%s0 + $0x434] sm:$0xf]
  %v165 = vld [vmem:[%s0 + $0x438] sm:$0xff]
  %v166 = vld [vmem:[%s0 + $0x440] sm:$0xff]
  %v167 = vld [vmem:[%s0 + $0x448] sm:$0xff]
  %v168 = vld [vmem:[%s0 + $0x450] sm:$0xff]
  %v169 = vld [vmem:[%s0 + $0x458] sm:$0xf]
  %v170 = vld [vmem:[%s0 + $0x45c] sm:$0xff]
  %v171 = vld [vmem:[%s0 + $0x464] sm:$0xff]
  %v172 = vld [vmem:[%s0 + $0x46c] sm:$0xff]
  %v173 = vld [vmem:[%s0 + $0x474] sm:$0xff]
  %v174 = vld [vmem:[%s0 + $0x47c] sm:$0xf]
  %v175 = vld [vmem:[%s0 + $0x480] sm:$0xff]
  %v176 = vld [vmem:[%s0 + $0x488] sm:$0xff]
  %v177 = vld [vmem:[%s0 + $0x490] sm:$0xff]
  %v178 = vld [vmem:[%s0 + $0x498] sm:$0xff]
  %v179 = vld [vmem:[%s0 + $0x4a0] sm:$0xf]
  %v180 = vld [vmem:[%s0 + $0x4a4] sm:$0xff]
  %v181 = vld [vmem:[%s0 + $0x4ac] sm:$0xff]
  %v182 = vld [vmem:[%s0 + $0x4b4] sm:$0xff]
  %v183 = vld [vmem:[%s0 + $0x4bc] sm:$0xff]
  %v184 = vld [vmem:[%s0 + $0x4c4] sm:$0xf]
  %v185 = vld [vmem:[%s0 + $0x4c8] sm:$0xff]
  %v186 = vld [vmem:[%s0 + $0x4d0] sm:$0xff]
  %v187 = vld [vmem:[%s0 + $0x4d8] sm:$0xff]
  %v188 = vld [vmem:[%s0 + $0x4e0] sm:$0xff]
  %v189 = vld [vmem:[%s0 + $0x4e8] sm:$0xf]
  %v190 = vld [vmem:[%s0 + $0x4ec] sm:$0xff]
  %v191 = vld [vmem:[%s0 + $0x4f4] sm:$0xff]
  %v192 = vld [vmem:[%s0 + $0x4fc] sm:$0xff]
  %v193 = vld [vmem:[%s0 + $0x504] sm:$0xff]
  %v194 = vld [vmem:[%s0 + $0x50c] sm:$0xf]
  %v195 = vld [vmem:[%s0 + $0x510] sm:$0xff]
  %v196 = vld [vmem:[%s0 + $0x518] sm:$0xff]
  %v197 = vld [vmem:[%s0 + $0x520] sm:$0xff]
  %v198 = vld [vmem:[%s0 + $0x528] sm:$0xff]
  %v199 = vld [vmem:[%s0 + $0x530] sm:$0xf]
  %v200 = vld [vmem:[%s0 + $0x534] sm:$0xff]
  %v201 = vld [vmem:[%s0 + $0x53c] sm:$0xff]
  %v202 = vld [vmem:[%s0 + $0x544] sm:$0xff]
  %v203 = vld [vmem:[%s0 + $0x54c] sm:$0xff]
  %v204 = vld [vmem:[%s0 + $0x554] sm:$0xf]
  %v205 = vld [vmem:[%s0 + $0x558] sm:$0xff]
  %v206 = vld [vmem:[%s0 + $0x560] sm:$0xff]
  %v207 = vld [vmem:[%s0 + $0x568] sm:$0xff]
  %v208 = vld [vmem:[%s0 + $0x570] sm:$0xff]
  %v209 = vld [vmem:[%s0 + $0x578] sm:$0xf]
  %v210 = vld [vmem:[%s0 + $0x57c] sm:$0xff]
  %v211 = vld [vmem:[%s0 + $0x584] sm:$0xff]
  %v212 = vld [vmem:[%s0 + $0x58c] sm:$0xff]
  %v213 = vld [vmem:[%s0 + $0x594] sm:$0xff]
  %v214 = vld [vmem:[%s0 + $0x59c] sm:$0xf]
  %v215 = vld [vmem:[%s0 + $0x5a0] sm:$0xff]
  %v216 = vld [vmem:[%s0 + $0x5a8] sm:$0xff]
  %v217 = vld [vmem:[%s0 + $0x5b0] sm:$0xff]
  %v218 = vld [vmem:[%s0 + $0x5b8] sm:$0xff]
  %v219 = vld [vmem:[%s0 + $0x5c0] sm:$0xf]
  %v220 = vld [vmem:[%s0 + $0x5c4] sm:$0xff]
  %v221 = vld [vmem:[%s0 + $0x5cc] sm:$0xff]
  %v222 = vld [vmem:[%s0 + $0x5d4] sm:$0xff]
  %v223 = vld [vmem:[%s0 + $0x5dc] sm:$0xff]
  %v224 = vld [vmem:[%s0 + $0x5e4] sm:$0xf]
  %v225 = vld [vmem:[%s0 + $0x5e8] sm:$0xff]
  %v226 = vld [vmem:[%s0 + $0x5f0] sm:$0xff]
  %v227 = vld [vmem:[%s0 + $0x5f8] sm:$0xff]
  %v228 = vld [vmem:[%s0 + $0x600] sm:$0xff]
  %v229 = vld [vmem:[%s0 + $0x608] sm:$0xf]
  %v230 = vld [vmem:[%s0 + $0x60c] sm:$0xff]
  %v231 = vld [vmem:[%s0 + $0x614] sm:$0xff]
  %v232 = vld [vmem:[%s0 + $0x61c] sm:$0xff]
  %v233 = vld [vmem:[%s0 + $0x624] sm:$0xff]
  %v234 = vld [vmem:[%s0 + $0x62c] sm:$0xf]
  %v235 = vld [vmem:[%s0 + $0x630] sm:$0xff]
  %v236 = vld [vmem:[%s0 + $0x638] sm:$0xff]
  %v237 = vld [vmem:[%s0 + $0x640] sm:$0xff]
  %v238 = vld [vmem:[%s0 + $0x648] sm:$0xff]
  %v239 = vld [vmem:[%s0 + $0x650] sm:$0xf]
  %v240 = vld [vmem:[%s0 + $0x654] sm:$0xff]
  %v241 = vld [vmem:[%s0 + $0x65c] sm:$0xff]
  %v242 = vld [vmem:[%s0 + $0x664] sm:$0xff]
  %v243 = vld [vmem:[%s0 + $0x66c] sm:$0xff]
  %v244 = vld [vmem:[%s0 + $0x674] sm:$0xf]
  %v245 = vld [vmem:[%s0 + $0x678] sm:$0xff]
  %v246 = vld [vmem:[%s0 + $0x680] sm:$0xff]
  %v247 = vld [vmem:[%s0 + $0x688] sm:$0xff]
  %v248 = vld [vmem:[%s0 + $0x690] sm:$0xff]
  %v249 = vld [vmem:[%s0 + $0x698] sm:$0xf]
  %v250 = vld [vmem:[%s0 + $0x69c] sm:$0xff]
  %v251 = vld [vmem:[%s0 + $0x6a4] sm:$0xff]
  %v252 = vld [vmem:[%s0 + $0x6ac] sm:$0xff]
  %v253 = vld [vmem:[%s0 + $0x6b4] sm:$0xff]
  %v254 = vld [vmem:[%s0 + $0x6bc] sm:$0xf]
  %v255 = vld [vmem:[%s0 + $0x6c0] sm:$0xff]
  %v256 = vld [vmem:[%s0 + $0x6c8] sm:$0xff]
  %v257 = vld [vmem:[%s0 + $0x6d0] sm:$0xff]
  %v258 = vld [vmem:[%s0 + $0x6d8] sm:$0xff]
  %v259 = vld [vmem:[%s0 + $0x6e0] sm:$0xf]
  %v260 = vld [vmem:[%s0 + $0x6e4] sm:$0xff]
  %v261 = vld [vmem:[%s0 + $0x6ec] sm:$0xff]
  %v262 = vld [vmem:[%s0 + $0x6f4] sm:$0xff]
  %v263 = vld [vmem:[%s0 + $0x6fc] sm:$0xff]
  %v264 = vld [vmem:[%s0 + $0x704] sm:$0xf]
  %v265 = vld [vmem:[%s0 + $0x708] sm:$0xff]
  %v266 = vld [vmem:[%s0 + $0x710] sm:$0xff]
  %v267 = vld [vmem:[%s0 + $0x718] sm:$0xff]
  %v268 = vld [vmem:[%s0 + $0x720] sm:$0xff]
  %v269 = vld [vmem:[%s0 + $0x728] sm:$0xf]
  %v270 = vld [vmem:[%s0 + $0x72c] sm:$0xff]
  %v271 = vld [vmem:[%s0 + $0x734] sm:$0xff]
  %v272 = vld [vmem:[%s0 + $0x73c] sm:$0xff]
  %v273 = vld [vmem:[%s0 + $0x744] sm:$0xff]
  %v274 = vld [vmem:[%s0 + $0x74c] sm:$0xf]
  %v275 = vld [vmem:[%s0 + $0x750] sm:$0xff]
  %v276 = vld [vmem:[%s0 + $0x758] sm:$0xff]
  %v277 = vld [vmem:[%s0 + $0x760] sm:$0xff]
  %v278 = vld [vmem:[%s0 + $0x768] sm:$0xff]
  %v279 = vld [vmem:[%s0 + $0x770] sm:$0xf]
  %v280 = vld [vmem:[%s0 + $0x774] sm:$0xff]
  %v281 = vld [vmem:[%s0 + $0x77c] sm:$0xff]
  %v282 = vld [vmem:[%s0 + $0x784] sm:$0xff]
  %v283 = vld [vmem:[%s0 + $0x78c] sm:$0xff]
  %v284 = vld [vmem:[%s0 + $0x794] sm:$0xf]
  %v285 = vld [vmem:[%s0 + $0x798] sm:$0xff]
  %v286 = vld [vmem:[%s0 + $0x7a0] sm:$0xff]
  %v287 = vld [vmem:[%s0 + $0x7a8] sm:$0xff]
  %v288 = vld [vmem:[%s0 + $0x7b0] sm:$0xff]
  %v289 = vld [vmem:[%s0 + $0x7b8] sm:$0xf]
  %v290 = vld [vmem:[%s0 + $0x7bc] sm:$0xff]
  %v291 = vld [vmem:[%s0 + $0x7c4] sm:$0xff]
  %v292 = vld [vmem:[%s0 + $0x7cc] sm:$0xff]
  %v293 = vld [vmem:[%s0 + $0x7d4] sm:$0xff]
  %v294 = vld [vmem:[%s0 + $0x7dc] sm:$0xf]
  %v295 = vld [vmem:[%s0 + $0x7e0] sm:$0xff]
  %v296 = vld [vmem:[%s0 + $0x7e8] sm:$0xff]
  %v297 = vld [vmem:[%s0 + $0x7f0] sm:$0xff]
  %v298 = vld [vmem:[%s0 + $0x7f8] sm:$0xff]
  %v299 = vld [vmem:[%s0 + $0x800] sm:$0xf]
  %v300 = vld [vmem:[%s0 + $0x804] sm:$0xff]
  %v301 = vld [vmem:[%s0 + $0x80c] sm:$0xff]
  %v302 = vld [vmem:[%s0 + $0x814] sm:$0xff]
  %v303 = vld [vmem:[%s0 + $0x81c] sm:$0xff]
  %v304 = vld [vmem:[%s0 + $0x824] sm:$0xf]
  %v305 = vld [vmem:[%s0 + $0x828] sm:$0xff]
  %v306 = vld [vmem:[%s0 + $0x830] sm:$0xff]
  %v307 = vld [vmem:[%s0 + $0x838] sm:$0xff]
  %v308 = vld [vmem:[%s0 + $0x840] sm:$0xff]
  %v309 = vld [vmem:[%s0 + $0x848] sm:$0xf]
  %v310 = vld [vmem:[%s0 + $0x84c] sm:$0xff]
  %v311 = vld [vmem:[%s0 + $0x854] sm:$0xff]
  %v312 = vld [vmem:[%s0 + $0x85c] sm:$0xff]
  %v313 = vld [vmem:[%s0 + $0x864] sm:$0xff]
  %v314 = vld [vmem:[%s0 + $0x86c] sm:$0xf]
  %v315 = vld [vmem:[%s0 + $0x870] sm:$0xff]
  %v316 = vld [vmem:[%s0 + $0x878] sm:$0xff]
  %v317 = vld [vmem:[%s0 + $0x880] sm:$0xff]
  %v318 = vld [vmem:[%s0 + $0x888] sm:$0xff]
  %v319 = vld [vmem:[%s0 + $0x890] sm:$0xf]
  %v320 = vld [vmem:[%s0 + $0x894] sm:$0xff]
  %v321 = vld [vmem:[%s0 + $0x89c] sm:$0xff]
  %v322 = vld [vmem:[%s0 + $0x8a4] sm:$0xff]
  %v323 = vld [vmem:[%s0 + $0x8ac] sm:$0xff]
  %v324 = vld [vmem:[%s0 + $0x8b4] sm:$0xf]
  %v325 = vld [vmem:[%s0 + $0x8b8] sm:$0xff]
  %v326 = vld [vmem:[%s0 + $0x8c0] sm:$0xff]
  %v327 = vld [vmem:[%s0 + $0x8c8] sm:$0xff]
  %v328 = vld [vmem:[%s0 + $0x8d0] sm:$0xff]
  %v329 = vld [vmem:[%s0 + $0x8d8] sm:$0xf]
  %v330 = vld [vmem:[%s0 + $0x8dc] sm:$0xff]
  %v331 = vld [vmem:[%s0 + $0x8e4] sm:$0xff]
  %v332 = vld [vmem:[%s0 + $0x8ec] sm:$0xff]
  %v333 = vld [vmem:[%s0 + $0x8f4] sm:$0xff]
  %v334 = vld [vmem:[%s0 + $0x8fc] sm:$0xf]
  %v335 = vld [vmem:[%s1] sm:$0xf]
  %v336 = vld [vmem:[%s1 + $0x4] sm:$0xf]
  %v337 = vld [vmem:[%s1 + $0x8] sm:$0xf]
  %v338 = vld [vmem:[%s1 + $0xc] sm:$0xf]
  %v339 = vld [vmem:[%s1 + $0x10] sm:$0xf]
  %v340 = vld [vmem:[%s1 + $0x14] sm:$0xf]
  %v341 = vld [vmem:[%s1 + $0x18] sm:$0xf]
  %v342 = vld [vmem:[%s1 + $0x1c] sm:$0xf]
  %v343 = vld [vmem:[%s1 + $0x20] sm:$0xf]
  %v344 = vld [vmem:[%s1 + $0x24] sm:$0xf]
  %v345 = vld [vmem:[%s1 + $0x28] sm:$0xf]
  %v346 = vld [vmem:[%s1 + $0x2c] sm:$0xf]
  %v347 = vld [vmem:[%s1 + $0x30] sm:$0xf]
  %v348 = vld [vmem:[%s1 + $0x34] sm:$0xf]
  %v349 = vld [vmem:[%s1 + $0x38] sm:$0xf]
  %v350 = vld [vmem:[%s1 + $0x3c] sm:$0xf]
  %v351 = vld [vmem:[%s1 + $0x40] sm:$0xf]
  %v352 = vld [vmem:[%s1 + $0x44] sm:$0xf]
  %v353 = vld [vmem:[%s1 + $0x48] sm:$0xf]
  %v354 = vld [vmem:[%s1 + $0x4c] sm:$0xf]
  %v355 = vld [vmem:[%s1 + $0x50] sm:$0xf]
  %v356 = vld [vmem:[%s1 + $0x54] sm:$0xf]
  %v357 = vld [vmem:[%s1 + $0x58] sm:$0xf]
  %v358 = vld [vmem:[%s1 + $0x5c] sm:$0xf]
  %v359 = vld [vmem:[%s1 + $0x60] sm:$0xf]
  %v360 = vld [vmem:[%s1 + $0x64] sm:$0xf]
  %v361 = vld [vmem:[%s1 + $0x68] sm:$0xf]
  %v362 = vld [vmem:[%s1 + $0x6c] sm:$0xf]
  %v363 = vld [vmem:[%s1 + $0x70] sm:$0xf]
  %v364 = vld [vmem:[%s1 + $0x74] sm:$0xf]
  %v365 = vld [vmem:[%s1 + $0x78] sm:$0xf]
  %v366 = vld [vmem:[%s1 + $0x7c] sm:$0xf]
  %v367 = vld [vmem:[%s1 + $0x80] sm:$0xf]
  %v368 = vld [vmem:[%s1 + $0x84] sm:$0xf]
  %v369 = vld [vmem:[%s1 + $0x88] sm:$0xf]
  %v370 = vld [vmem:[%s1 + $0x8c] sm:$0xf]
  %v371 = vld [vmem:[%s1 + $0x90] sm:$0xf]
  %v372 = vld [vmem:[%s1 + $0x94] sm:$0xf]
  %v373 = vld [vmem:[%s1 + $0x98] sm:$0xf]
  %v374 = vld [vmem:[%s1 + $0x9c] sm:$0xf]
  %v375 = vld [vmem:[%s1 + $0xa0] sm:$0xf]
  %v376 = vld [vmem:[%s1 + $0xa4] sm:$0xf]
  %v377 = vld [vmem:[%s1 + $0xa8] sm:$0xf]
  %v378 = vld [vmem:[%s1 + $0xac] sm:$0xf]
  %v379 = vld [vmem:[%s1 + $0xb0] sm:$0xf]
  %v380 = vld [vmem:[%s1 + $0xb4] sm:$0xf]
  %v381 = vld [vmem:[%s1 + $0xb8] sm:$0xf]
  %v382 = vld [vmem:[%s1 + $0xbc] sm:$0xf]
  %v383 = vld [vmem:[%s1 + $0xc0] sm:$0xf]
  %v384 = vld [vmem:[%s1 + $0xc4] sm:$0xf]
  %v385 = vld [vmem:[%s1 + $0xc8] sm:$0xf]
  %v386 = vld [vmem:[%s1 + $0xcc] sm:$0xf]
  %v387 = vld [vmem:[%s1 + $0xd0] sm:$0xf]
  %v388 = vld [vmem:[%s1 + $0xd4] sm:$0xf]
  %v389 = vld [vmem:[%s1 + $0xd8] sm:$0xf]
  %v390 = vld [vmem:[%s1 + $0xdc] sm:$0xf]
  %v391 = vld [vmem:[%s1 + $0xe0] sm:$0xf]
  %v392 = vld [vmem:[%s1 + $0xe4] sm:$0xf]
  %v393 = vld [vmem:[%s1 + $0xe8] sm:$0xf]
  %v394 = vld [vmem:[%s1 + $0xec] sm:$0xf]
  %v395 = vld [vmem:[%s1 + $0xf0] sm:$0xf]
  %v396 = vld [vmem:[%s1 + $0xf4] sm:$0xf]
  %v397 = vld [vmem:[%s1 + $0xf8] sm:$0xf]
  %v398 = vld [vmem:[%s1 + $0xfc] sm:$0xf]
  %v399 = vld [vmem:[%s1 + $0x100] sm:$0xf]
  %v400 = vld [vmem:[%s1 + $0x104] sm:$0xf]
  %v401 = vld [vmem:[%s1 + $0x108] sm:$0xf]
  %v402 = vld [vmem:[%s1 + $0x10c] sm:$0xf]
  %v403 = vld [vmem:[%s1 + $0x110] sm:$0xf]
  %v404 = vld [vmem:[%s1 + $0x114] sm:$0xf]
  %v405 = vld [vmem:[%s1 + $0x118] sm:$0xf]
  %v406 = vld [vmem:[%s1 + $0x11c] sm:$0xf]
  %v407 = vld [vmem:[%s1 + $0x120] sm:$0xf]
  %v408 = vld [vmem:[%s1 + $0x124] sm:$0xf]
  %v409 = vld [vmem:[%s1 + $0x128] sm:$0xf]
  %v410 = vld [vmem:[%s1 + $0x12c] sm:$0xf]
  %v411 = vld [vmem:[%s1 + $0x130] sm:$0xf]
  %v412 = vld [vmem:[%s1 + $0x134] sm:$0xf]
  %v413 = vld [vmem:[%s1 + $0x138] sm:$0xf]
  %v414 = vld [vmem:[%s1 + $0x13c] sm:$0xf]
  %v415 = vld [vmem:[%s1 + $0x140] sm:$0xf]
  %v416 = vld [vmem:[%s1 + $0x144] sm:$0xf]
  %v417 = vld [vmem:[%s1 + $0x148] sm:$0xf]
  %v418 = vld [vmem:[%s1 + $0x14c] sm:$0xf]
  %v419 = vld [vmem:[%s1 + $0x150] sm:$0xf]
  %v420 = vld [vmem:[%s1 + $0x154] sm:$0xf]
  %v421 = vld [vmem:[%s1 + $0x158] sm:$0xf]
  %v422 = vld [vmem:[%s1 + $0x15c] sm:$0xf]
  %v423 = vld [vmem:[%s1 + $0x160] sm:$0xf]
  %v424 = vld [vmem:[%s1 + $0x164] sm:$0xf]
  %v425 = vld [vmem:[%s1 + $0x168] sm:$0xf]
  %v426 = vld [vmem:[%s1 + $0x16c] sm:$0xf]
  %v427 = vld [vmem:[%s1 + $0x170] sm:$0xf]
  %v428 = vld [vmem:[%s1 + $0x174] sm:$0xf]
  %v429 = vld [vmem:[%s1 + $0x178] sm:$0xf]
  %v430 = vld [vmem:[%s1 + $0x17c] sm:$0xf]
  %v431 = vld [vmem:[%s1 + $0x180] sm:$0xf]
  %v432 = vld [vmem:[%s1 + $0x184] sm:$0xf]
  %v433 = vld [vmem:[%s1 + $0x188] sm:$0xf]
  %v434 = vld [vmem:[%s1 + $0x18c] sm:$0xf]
  %v435 = vld [vmem:[%s1 + $0x190] sm:$0xf]
  %v436 = vld [vmem:[%s1 + $0x194] sm:$0xf]
  %v437 = vld [vmem:[%s1 + $0x198] sm:$0xf]
  %v438 = vld [vmem:[%s1 + $0x19c] sm:$0xf]
  %v439 = vld [vmem:[%s1 + $0x1a0] sm:$0xf]
  %v440 = vld [vmem:[%s1 + $0x1a4] sm:$0xf]
  %v441 = vld [vmem:[%s1 + $0x1a8] sm:$0xf]
  %v442 = vld [vmem:[%s1 + $0x1ac] sm:$0xf]
  %v443 = vld [vmem:[%s1 + $0x1b0] sm:$0xf]
  %v444 = vld [vmem:[%s1 + $0x1b4] sm:$0xf]
  %v445 = vld [vmem:[%s1 + $0x1b8] sm:$0xf]
  %v446 = vld [vmem:[%s1 + $0x1bc] sm:$0xf]
  %v447 = vld [vmem:[%s1 + $0x1c0] sm:$0xf]
  %v448 = vld [vmem:[%s1 + $0x1c4] sm:$0xf]
  %v449 = vld [vmem:[%s1 + $0x1c8] sm:$0xf]
  %v450 = vld [vmem:[%s1 + $0x1cc] sm:$0xf]
  %v451 = vld [vmem:[%s1 + $0x1d0] sm:$0xf]
  %v452 = vld [vmem:[%s1 + $0x1d4] sm:$0xf]
  %v453 = vld [vmem:[%s1 + $0x1d8] sm:$0xf]
  %v454 = vld [vmem:[%s1 + $0x1dc] sm:$0xf]
  %v455 = vld [vmem:[%s1 + $0x1e0] sm:$0xf]
  %v456 = vld [vmem:[%s1 + $0x1e4] sm:$0xf]
  %v457 = vld [vmem:[%s1 + $0x1e8] sm:$0xf]
  %v458 = vld [vmem:[%s1 + $0x1ec] sm:$0xf]
  %v459 = vld [vmem:[%s1 + $0x1f0] sm:$0xf]
  %v460 = vld [vmem:[%s1 + $0x1f4] sm:$0xf]
  %v461 = vld [vmem:[%s1 + $0x1f8] sm:$0xf]
  %v462 = vld [vmem:[%s1 + $0x1fc] sm:$0xf]
  %v463 = vld [vmem:[%s1 + $0x200] sm:$0xf]
  %v464 = vld [vmem:[%s1 + $0x204] sm:$0xf]
  %v465 = vld [vmem:[%s1 + $0x208] sm:$0xf]
  %v466 = vld [vmem:[%s1 + $0x20c] sm:$0xf]
  %v467 = vld [vmem:[%s1 + $0x210] sm:$0xf]
  %v468 = vld [vmem:[%s1 + $0x214] sm:$0xf]
  %v469 = vld [vmem:[%s1 + $0x218] sm:$0xf]
  %v470 = vld [vmem:[%s1 + $0x21c] sm:$0xf]
  %v471 = vld [vmem:[%s1 + $0x220] sm:$0xf]
  %v472 = vld [vmem:[%s1 + $0x224] sm:$0xf]
  %v473 = vld [vmem:[%s1 + $0x228] sm:$0xf]
  %v474 = vld [vmem:[%s1 + $0x22c] sm:$0xf]
  %v475 = vld [vmem:[%s1 + $0x230] sm:$0xf]
  %v476 = vld [vmem:[%s1 + $0x234] sm:$0xf]
  %v477 = vld [vmem:[%s1 + $0x238] sm:$0xf]
  %v478 = vld [vmem:[%s1 + $0x23c] sm:$0xf]
  %v479 = vld [vmem:[%s2] sm:$0x1]
  %v481 = vlaneseq
  %v482 = vshrl.u32 %v481, 7
  %v483 = vsub.s32 0, %v482
  %v484 = vrot.slane %v479, %v483
  %v806 = vunpack.c.l.b16 %v15
  %v807 = vunpack.c.h.b16 %v15
  %v808 = vunpack.c.l.b16 %v16
  %v809 = vunpack.c.h.b16 %v16
  %v810 = vunpack.c.l.b16 %v17
  %v811 = vunpack.c.h.b16 %v17
  %v812 = vunpack.c.l.b16 %v18
  %v813 = vunpack.c.h.b16 %v18
  %v814 = vunpack.c.l.b16 %v19
  %v815 = vunpack.c.l.b16 %v20
  %v816 = vunpack.c.h.b16 %v20
  %v817 = vunpack.c.l.b16 %v21
  %v818 = vunpack.c.h.b16 %v21
  %v819 = vunpack.c.l.b16 %v22
  %v820 = vunpack.c.h.b16 %v22
  %v821 = vunpack.c.l.b16 %v23
  %v822 = vunpack.c.h.b16 %v23
  %v823 = vunpack.c.l.b16 %v24
  %v824 = vunpack.c.l.b16 %v25
  %v825 = vunpack.c.h.b16 %v25
  %v826 = vunpack.c.l.b16 %v26
  %v827 = vunpack.c.h.b16 %v26
  %v828 = vunpack.c.l.b16 %v27
  %v829 = vunpack.c.h.b16 %v27
  %v830 = vunpack.c.l.b16 %v28
  %v831 = vunpack.c.h.b16 %v28
  %v832 = vunpack.c.l.b16 %v29
  %v833 = vunpack.c.l.b16 %v30
  %v834 = vunpack.c.h.b16 %v30
  %v835 = vunpack.c.l.b16 %v31
  %v836 = vunpack.c.h.b16 %v31
  %v837 = vunpack.c.l.b16 %v32
  %v838 = vunpack.c.h.b16 %v32
  %v839 = vunpack.c.l.b16 %v33
  %v840 = vunpack.c.h.b16 %v33
  %v841 = vunpack.c.l.b16 %v34
  %v842 = vunpack.c.l.b16 %v35
  %v843 = vunpack.c.h.b16 %v35
  %v844 = vunpack.c.l.b16 %v36
  %v845 = vunpack.c.h.b16 %v36
  %v846 = vunpack.c.l.b16 %v37
  %v847 = vunpack.c.h.b16 %v37
  %v848 = vunpack.c.l.b16 %v38
  %v849 = vunpack.c.h.b16 %v38
  %v850 = vunpack.c.l.b16 %v39
  %v851 = vunpack.c.l.b16 %v40
  %v852 = vunpack.c.h.b16 %v40
  %v853 = vunpack.c.l.b16 %v41
  %v854 = vunpack.c.h.b16 %v41
  %v855 = vunpack.c.l.b16 %v42
  %v856 = vunpack.c.h.b16 %v42
  %v857 = vunpack.c.l.b16 %v43
  %v858 = vunpack.c.h.b16 %v43
  %v859 = vunpack.c.l.b16 %v44
  %v860 = vunpack.c.l.b16 %v45
  %v861 = vunpack.c.h.b16 %v45
  %v862 = vunpack.c.l.b16 %v46
  %v863 = vunpack.c.h.b16 %v46
  %v864 = vunpack.c.l.b16 %v47
  %v865 = vunpack.c.h.b16 %v47
  %v866 = vunpack.c.l.b16 %v48
  %v867 = vunpack.c.h.b16 %v48
  %v868 = vunpack.c.l.b16 %v49
  %v869 = vunpack.c.l.b16 %v50
  %v870 = vunpack.c.h.b16 %v50
  %v871 = vunpack.c.l.b16 %v51
  %v872 = vunpack.c.h.b16 %v51
  %v873 = vunpack.c.l.b16 %v52
  %v874 = vunpack.c.h.b16 %v52
  %v875 = vunpack.c.l.b16 %v53
  %v876 = vunpack.c.h.b16 %v53
  %v877 = vunpack.c.l.b16 %v54
  %v878 = vunpack.c.l.b16 %v55
  %v879 = vunpack.c.h.b16 %v55
  %v880 = vunpack.c.l.b16 %v56
  %v881 = vunpack.c.h.b16 %v56
  %v882 = vunpack.c.l.b16 %v57
  %v883 = vunpack.c.h.b16 %v57
  %v884 = vunpack.c.l.b16 %v58
  %v885 = vunpack.c.h.b16 %v58
  %v886 = vunpack.c.l.b16 %v59
  %v887 = vunpack.c.l.b16 %v60
  %v888 = vunpack.c.h.b16 %v60
  %v889 = vunpack.c.l.b16 %v61
  %v890 = vunpack.c.h.b16 %v61
  %v891 = vunpack.c.l.b16 %v62
  %v892 = vunpack.c.h.b16 %v62
  %v893 = vunpack.c.l.b16 %v63
  %v894 = vunpack.c.h.b16 %v63
  %v895 = vunpack.c.l.b16 %v64
  %v896 = vunpack.c.l.b16 %v65
  %v897 = vunpack.c.h.b16 %v65
  %v898 = vunpack.c.l.b16 %v66
  %v899 = vunpack.c.h.b16 %v66
  %v900 = vunpack.c.l.b16 %v67
  %v901 = vunpack.c.h.b16 %v67
  %v902 = vunpack.c.l.b16 %v68
  %v903 = vunpack.c.h.b16 %v68
  %v904 = vunpack.c.l.b16 %v69
  %v905 = vunpack.c.l.b16 %v70
  %v906 = vunpack.c.h.b16 %v70
  %v907 = vunpack.c.l.b16 %v71
  %v908 = vunpack.c.h.b16 %v71
  %v909 = vunpack.c.l.b16 %v72
  %v910 = vunpack.c.h.b16 %v72
  %v911 = vunpack.c.l.b16 %v73
  %v912 = vunpack.c.h.b16 %v73
  %v913 = vunpack.c.l.b16 %v74
  %v914 = vunpack.c.l.b16 %v75
  %v915 = vunpack.c.h.b16 %v75
  %v916 = vunpack.c.l.b16 %v76
  %v917 = vunpack.c.h.b16 %v76
  %v918 = vunpack.c.l.b16 %v77
  %v919 = vunpack.c.h.b16 %v77
  %v920 = vunpack.c.l.b16 %v78
  %v921 = vunpack.c.h.b16 %v78
  %v922 = vunpack.c.l.b16 %v79
  %v923 = vunpack.c.l.b16 %v80
  %v924 = vunpack.c.h.b16 %v80
  %v925 = vunpack.c.l.b16 %v81
  %v926 = vunpack.c.h.b16 %v81
  %v927 = vunpack.c.l.b16 %v82
  %v928 = vunpack.c.h.b16 %v82
  %v929 = vunpack.c.l.b16 %v83
  %v930 = vunpack.c.h.b16 %v83
  %v931 = vunpack.c.l.b16 %v84
  %v932 = vunpack.c.l.b16 %v85
  %v933 = vunpack.c.h.b16 %v85
  %v934 = vunpack.c.l.b16 %v86
  %v935 = vunpack.c.h.b16 %v86
  %v936 = vunpack.c.l.b16 %v87
  %v937 = vunpack.c.h.b16 %v87
  %v938 = vunpack.c.l.b16 %v88
  %v939 = vunpack.c.h.b16 %v88
  %v940 = vunpack.c.l.b16 %v89
  %v941 = vunpack.c.l.b16 %v90
  %v942 = vunpack.c.h.b16 %v90
  %v943 = vunpack.c.l.b16 %v91
  %v944 = vunpack.c.h.b16 %v91
  %v945 = vunpack.c.l.b16 %v92
  %v946 = vunpack.c.h.b16 %v92
  %v947 = vunpack.c.l.b16 %v93
  %v948 = vunpack.c.h.b16 %v93
  %v949 = vunpack.c.l.b16 %v94
  %v950 = vunpack.c.l.b16 %v95
  %v951 = vunpack.c.h.b16 %v95
  %v952 = vunpack.c.l.b16 %v96
  %v953 = vunpack.c.h.b16 %v96
  %v954 = vunpack.c.l.b16 %v97
  %v955 = vunpack.c.h.b16 %v97
  %v956 = vunpack.c.l.b16 %v98
  %v957 = vunpack.c.h.b16 %v98
  %v958 = vunpack.c.l.b16 %v99
  %v959 = vunpack.c.l.b16 %v100
  %v960 = vunpack.c.h.b16 %v100
  %v961 = vunpack.c.l.b16 %v101
  %v962 = vunpack.c.h.b16 %v101
  %v963 = vunpack.c.l.b16 %v102
  %v964 = vunpack.c.h.b16 %v102
  %v965 = vunpack.c.l.b16 %v103
  %v966 = vunpack.c.h.b16 %v103
  %v967 = vunpack.c.l.b16 %v104
  %v968 = vunpack.c.l.b16 %v105
  %v969 = vunpack.c.h.b16 %v105
  %v970 = vunpack.c.l.b16 %v106
  %v971 = vunpack.c.h.b16 %v106
  %v972 = vunpack.c.l.b16 %v107
  %v973 = vunpack.c.h.b16 %v107
  %v974 = vunpack.c.l.b16 %v108
  %v975 = vunpack.c.h.b16 %v108
  %v976 = vunpack.c.l.b16 %v109
  %v977 = vunpack.c.l.b16 %v110
  %v978 = vunpack.c.h.b16 %v110
  %v979 = vunpack.c.l.b16 %v111
  %v980 = vunpack.c.h.b16 %v111
  %v981 = vunpack.c.l.b16 %v112
  %v982 = vunpack.c.h.b16 %v112
  %v983 = vunpack.c.l.b16 %v113
  %v984 = vunpack.c.h.b16 %v113
  %v985 = vunpack.c.l.b16 %v114
  %v986 = vunpack.c.l.b16 %v115
  %v987 = vunpack.c.h.b16 %v115
  %v988 = vunpack.c.l.b16 %v116
  %v989 = vunpack.c.h.b16 %v116
  %v990 = vunpack.c.l.b16 %v117
  %v991 = vunpack.c.h.b16 %v117
  %v992 = vunpack.c.l.b16 %v118
  %v993 = vunpack.c.h.b16 %v118
  %v994 = vunpack.c.l.b16 %v119
  %v995 = vunpack.c.l.b16 %v120
  %v996 = vunpack.c.h.b16 %v120
  %v997 = vunpack.c.l.b16 %v121
  %v998 = vunpack.c.h.b16 %v121
  %v999 = vunpack.c.l.b16 %v122
  %v1000 = vunpack.c.h.b16 %v122
  %v1001 = vunpack.c.l.b16 %v123
  %v1002 = vunpack.c.h.b16 %v123
  %v1003 = vunpack.c.l.b16 %v124
  %v1004 = vunpack.c.l.b16 %v125
  %v1005 = vunpack.c.h.b16 %v125
  %v1006 = vunpack.c.l.b16 %v126
  %v1007 = vunpack.c.h.b16 %v126
  %v1008 = vunpack.c.l.b16 %v127
  %v1009 = vunpack.c.h.b16 %v127
  %v1010 = vunpack.c.l.b16 %v128
  %v1011 = vunpack.c.h.b16 %v128
  %v1012 = vunpack.c.l.b16 %v129
  %v1013 = vunpack.c.l.b16 %v130
  %v1014 = vunpack.c.h.b16 %v130
  %v1015 = vunpack.c.l.b16 %v131
  %v1016 = vunpack.c.h.b16 %v131
  %v1017 = vunpack.c.l.b16 %v132
  %v1018 = vunpack.c.h.b16 %v132
  %v1019 = vunpack.c.l.b16 %v133
  %v1020 = vunpack.c.h.b16 %v133
  %v1021 = vunpack.c.l.b16 %v134
  %v1022 = vunpack.c.l.b16 %v135
  %v1023 = vunpack.c.h.b16 %v135
  %v1024 = vunpack.c.l.b16 %v136
  %v1025 = vunpack.c.h.b16 %v136
  %v1026 = vunpack.c.l.b16 %v137
  %v1027 = vunpack.c.h.b16 %v137
  %v1028 = vunpack.c.l.b16 %v138
  %v1029 = vunpack.c.h.b16 %v138
  %v1030 = vunpack.c.l.b16 %v139
  %v1031 = vunpack.c.l.b16 %v140
  %v1032 = vunpack.c.h.b16 %v140
  %v1033 = vunpack.c.l.b16 %v141
  %v1034 = vunpack.c.h.b16 %v141
  %v1035 = vunpack.c.l.b16 %v142
  %v1036 = vunpack.c.h.b16 %v142
  %v1037 = vunpack.c.l.b16 %v143
  %v1038 = vunpack.c.h.b16 %v143
  %v1039 = vunpack.c.l.b16 %v144
  %v1040 = vunpack.c.l.b16 %v145
  %v1041 = vunpack.c.h.b16 %v145
  %v1042 = vunpack.c.l.b16 %v146
  %v1043 = vunpack.c.h.b16 %v146
  %v1044 = vunpack.c.l.b16 %v147
  %v1045 = vunpack.c.h.b16 %v147
  %v1046 = vunpack.c.l.b16 %v148
  %v1047 = vunpack.c.h.b16 %v148
  %v1048 = vunpack.c.l.b16 %v149
  %v1049 = vunpack.c.l.b16 %v150
  %v1050 = vunpack.c.h.b16 %v150
  %v1051 = vunpack.c.l.b16 %v151
  %v1052 = vunpack.c.h.b16 %v151
  %v1053 = vunpack.c.l.b16 %v152
  %v1054 = vunpack.c.h.b16 %v152
  %v1055 = vunpack.c.l.b16 %v153
  %v1056 = vunpack.c.h.b16 %v153
  %v1057 = vunpack.c.l.b16 %v154
  %v1058 = vunpack.c.l.b16 %v155
  %v1059 = vunpack.c.h.b16 %v155
  %v1060 = vunpack.c.l.b16 %v156
  %v1061 = vunpack.c.h.b16 %v156
  %v1062 = vunpack.c.l.b16 %v157
  %v1063 = vunpack.c.h.b16 %v157
  %v1064 = vunpack.c.l.b16 %v158
  %v1065 = vunpack.c.h.b16 %v158
  %v1066 = vunpack.c.l.b16 %v159
  %v1067 = vunpack.c.l.b16 %v160
  %v1068 = vunpack.c.h.b16 %v160
  %v1069 = vunpack.c.l.b16 %v161
  %v1070 = vunpack.c.h.b16 %v161
  %v1071 = vunpack.c.l.b16 %v162
  %v1072 = vunpack.c.h.b16 %v162
  %v1073 = vunpack.c.l.b16 %v163
  %v1074 = vunpack.c.h.b16 %v163
  %v1075 = vunpack.c.l.b16 %v164
  %v1076 = vunpack.c.l.b16 %v165
  %v1077 = vunpack.c.h.b16 %v165
  %v1078 = vunpack.c.l.b16 %v166
  %v1079 = vunpack.c.h.b16 %v166
  %v1080 = vunpack.c.l.b16 %v167
  %v1081 = vunpack.c.h.b16 %v167
  %v1082 = vunpack.c.l.b16 %v168
  %v1083 = vunpack.c.h.b16 %v168
  %v1084 = vunpack.c.l.b16 %v169
  %v1085 = vunpack.c.l.b16 %v170
  %v1086 = vunpack.c.h.b16 %v170
  %v1087 = vunpack.c.l.b16 %v171
  %v1088 = vunpack.c.h.b16 %v171
  %v1089 = vunpack.c.l.b16 %v172
  %v1090 = vunpack.c.h.b16 %v172
  %v1091 = vunpack.c.l.b16 %v173
  %v1092 = vunpack.c.h.b16 %v173
  %v1093 = vunpack.c.l.b16 %v174
  %v1094 = vunpack.c.l.b16 %v175
  %v1095 = vunpack.c.h.b16 %v175
  %v1096 = vunpack.c.l.b16 %v176
  %v1097 = vunpack.c.h.b16 %v176
  %v1098 = vunpack.c.l.b16 %v177
  %v1099 = vunpack.c.h.b16 %v177
  %v1100 = vunpack.c.l.b16 %v178
  %v1101 = vunpack.c.h.b16 %v178
  %v1102 = vunpack.c.l.b16 %v179
  %v1103 = vunpack.c.l.b16 %v180
  %v1104 = vunpack.c.h.b16 %v180
  %v1105 = vunpack.c.l.b16 %v181
  %v1106 = vunpack.c.h.b16 %v181
  %v1107 = vunpack.c.l.b16 %v182
  %v1108 = vunpack.c.h.b16 %v182
  %v1109 = vunpack.c.l.b16 %v183
  %v1110 = vunpack.c.h.b16 %v183
  %v1111 = vunpack.c.l.b16 %v184
  %v1112 = vunpack.c.l.b16 %v185
  %v1113 = vunpack.c.h.b16 %v185
  %v1114 = vunpack.c.l.b16 %v186
  %v1115 = vunpack.c.h.b16 %v186
  %v1116 = vunpack.c.l.b16 %v187
  %v1117 = vunpack.c.h.b16 %v187
  %v1118 = vunpack.c.l.b16 %v188
  %v1119 = vunpack.c.h.b16 %v188
  %v1120 = vunpack.c.l.b16 %v189
  %v1121 = vunpack.c.l.b16 %v190
  %v1122 = vunpack.c.h.b16 %v190
  %v1123 = vunpack.c.l.b16 %v191
  %v1124 = vunpack.c.h.b16 %v191
  %v1125 = vunpack.c.l.b16 %v192
  %v1126 = vunpack.c.h.b16 %v192
  %v1127 = vunpack.c.l.b16 %v193
  %v1128 = vunpack.c.h.b16 %v193
  %v1129 = vunpack.c.l.b16 %v194
  %v1130 = vunpack.c.l.b16 %v195
  %v1131 = vunpack.c.h.b16 %v195
  %v1132 = vunpack.c.l.b16 %v196
  %v1133 = vunpack.c.h.b16 %v196
  %v1134 = vunpack.c.l.b16 %v197
  %v1135 = vunpack.c.h.b16 %v197
  %v1136 = vunpack.c.l.b16 %v198
  %v1137 = vunpack.c.h.b16 %v198
  %v1138 = vunpack.c.l.b16 %v199
  %v1139 = vunpack.c.l.b16 %v200
  %v1140 = vunpack.c.h.b16 %v200
  %v1141 = vunpack.c.l.b16 %v201
  %v1142 = vunpack.c.h.b16 %v201
  %v1143 = vunpack.c.l.b16 %v202
  %v1144 = vunpack.c.h.b16 %v202
  %v1145 = vunpack.c.l.b16 %v203
  %v1146 = vunpack.c.h.b16 %v203
  %v1147 = vunpack.c.l.b16 %v204
  %v1148 = vunpack.c.l.b16 %v205
  %v1149 = vunpack.c.h.b16 %v205
  %v1150 = vunpack.c.l.b16 %v206
  %v1151 = vunpack.c.h.b16 %v206
  %v1152 = vunpack.c.l.b16 %v207
  %v1153 = vunpack.c.h.b16 %v207
  %v1154 = vunpack.c.l.b16 %v208
  %v1155 = vunpack.c.h.b16 %v208
  %v1156 = vunpack.c.l.b16 %v209
  %v1157 = vunpack.c.l.b16 %v210
  %v1158 = vunpack.c.h.b16 %v210
  %v1159 = vunpack.c.l.b16 %v211
  %v1160 = vunpack.c.h.b16 %v211
  %v1161 = vunpack.c.l.b16 %v212
  %v1162 = vunpack.c.h.b16 %v212
  %v1163 = vunpack.c.l.b16 %v213
  %v1164 = vunpack.c.h.b16 %v213
  %v1165 = vunpack.c.l.b16 %v214
  %v1166 = vunpack.c.l.b16 %v215
  %v1167 = vunpack.c.h.b16 %v215
  %v1168 = vunpack.c.l.b16 %v216
  %v1169 = vunpack.c.h.b16 %v216
  %v1170 = vunpack.c.l.b16 %v217
  %v1171 = vunpack.c.h.b16 %v217
  %v1172 = vunpack.c.l.b16 %v218
  %v1173 = vunpack.c.h.b16 %v218
  %v1174 = vunpack.c.l.b16 %v219
  %v1175 = vunpack.c.l.b16 %v220
  %v1176 = vunpack.c.h.b16 %v220
  %v1177 = vunpack.c.l.b16 %v221
  %v1178 = vunpack.c.h.b16 %v221
  %v1179 = vunpack.c.l.b16 %v222
  %v1180 = vunpack.c.h.b16 %v222
  %v1181 = vunpack.c.l.b16 %v223
  %v1182 = vunpack.c.h.b16 %v223
  %v1183 = vunpack.c.l.b16 %v224
  %v1184 = vunpack.c.l.b16 %v225
  %v1185 = vunpack.c.h.b16 %v225
  %v1186 = vunpack.c.l.b16 %v226
  %v1187 = vunpack.c.h.b16 %v226
  %v1188 = vunpack.c.l.b16 %v227
  %v1189 = vunpack.c.h.b16 %v227
  %v1190 = vunpack.c.l.b16 %v228
  %v1191 = vunpack.c.h.b16 %v228
  %v1192 = vunpack.c.l.b16 %v229
  %v1193 = vunpack.c.l.b16 %v230
  %v1194 = vunpack.c.h.b16 %v230
  %v1195 = vunpack.c.l.b16 %v231
  %v1196 = vunpack.c.h.b16 %v231
  %v1197 = vunpack.c.l.b16 %v232
  %v1198 = vunpack.c.h.b16 %v232
  %v1199 = vunpack.c.l.b16 %v233
  %v1200 = vunpack.c.h.b16 %v233
  %v1201 = vunpack.c.l.b16 %v234
  %v1202 = vunpack.c.l.b16 %v235
  %v1203 = vunpack.c.h.b16 %v235
  %v1204 = vunpack.c.l.b16 %v236
  %v1205 = vunpack.c.h.b16 %v236
  %v1206 = vunpack.c.l.b16 %v237
  %v1207 = vunpack.c.h.b16 %v237
  %v1208 = vunpack.c.l.b16 %v238
  %v1209 = vunpack.c.h.b16 %v238
  %v1210 = vunpack.c.l.b16 %v239
  %v1211 = vunpack.c.l.b16 %v240
  %v1212 = vunpack.c.h.b16 %v240
  %v1213 = vunpack.c.l.b16 %v241
  %v1214 = vunpack.c.h.b16 %v241
  %v1215 = vunpack.c.l.b16 %v242
  %v1216 = vunpack.c.h.b16 %v242
  %v1217 = vunpack.c.l.b16 %v243
  %v1218 = vunpack.c.h.b16 %v243
  %v1219 = vunpack.c.l.b16 %v244
  %v1220 = vunpack.c.l.b16 %v245
  %v1221 = vunpack.c.h.b16 %v245
  %v1222 = vunpack.c.l.b16 %v246
  %v1223 = vunpack.c.h.b16 %v246
  %v1224 = vunpack.c.l.b16 %v247
  %v1225 = vunpack.c.h.b16 %v247
  %v1226 = vunpack.c.l.b16 %v248
  %v1227 = vunpack.c.h.b16 %v248
  %v1228 = vunpack.c.l.b16 %v249
  %v1229 = vunpack.c.l.b16 %v250
  %v1230 = vunpack.c.h.b16 %v250
  %v1231 = vunpack.c.l.b16 %v251
  %v1232 = vunpack.c.h.b16 %v251
  %v1233 = vunpack.c.l.b16 %v252
  %v1234 = vunpack.c.h.b16 %v252
  %v1235 = vunpack.c.l.b16 %v253
  %v1236 = vunpack.c.h.b16 %v253
  %v1237 = vunpack.c.l.b16 %v254
  %v1238 = vunpack.c.l.b16 %v255
  %v1239 = vunpack.c.h.b16 %v255
  %v1240 = vunpack.c.l.b16 %v256
  %v1241 = vunpack.c.h.b16 %v256
  %v1242 = vunpack.c.l.b16 %v257
  %v1243 = vunpack.c.h.b16 %v257
  %v1244 = vunpack.c.l.b16 %v258
  %v1245 = vunpack.c.h.b16 %v258
  %v1246 = vunpack.c.l.b16 %v259
  %v1247 = vunpack.c.l.b16 %v260
  %v1248 = vunpack.c.h.b16 %v260
  %v1249 = vunpack.c.l.b16 %v261
  %v1250 = vunpack.c.h.b16 %v261
  %v1251 = vunpack.c.l.b16 %v262
  %v1252 = vunpack.c.h.b16 %v262
  %v1253 = vunpack.c.l.b16 %v263
  %v1254 = vunpack.c.h.b16 %v263
  %v1255 = vunpack.c.l.b16 %v264
  %v1256 = vunpack.c.l.b16 %v265
  %v1257 = vunpack.c.h.b16 %v265
  %v1258 = vunpack.c.l.b16 %v266
  %v1259 = vunpack.c.h.b16 %v266
  %v1260 = vunpack.c.l.b16 %v267
  %v1261 = vunpack.c.h.b16 %v267
  %v1262 = vunpack.c.l.b16 %v268
  %v1263 = vunpack.c.h.b16 %v268
  %v1264 = vunpack.c.l.b16 %v269
  %v1265 = vunpack.c.l.b16 %v270
  %v1266 = vunpack.c.h.b16 %v270
  %v1267 = vunpack.c.l.b16 %v271
  %v1268 = vunpack.c.h.b16 %v271
  %v1269 = vunpack.c.l.b16 %v272
  %v1270 = vunpack.c.h.b16 %v272
  %v1271 = vunpack.c.l.b16 %v273
  %v1272 = vunpack.c.h.b16 %v273
  %v1273 = vunpack.c.l.b16 %v274
  %v1274 = vunpack.c.l.b16 %v275
  %v1275 = vunpack.c.h.b16 %v275
  %v1276 = vunpack.c.l.b16 %v276
  %v1277 = vunpack.c.h.b16 %v276
  %v1278 = vunpack.c.l.b16 %v277
  %v1279 = vunpack.c.h.b16 %v277
  %v1280 = vunpack.c.l.b16 %v278
  %v1281 = vunpack.c.h.b16 %v278
  %v1282 = vunpack.c.l.b16 %v279
  %v1283 = vunpack.c.l.b16 %v280
  %v1284 = vunpack.c.h.b16 %v280
  %v1285 = vunpack.c.l.b16 %v281
  %v1286 = vunpack.c.h.b16 %v281
  %v1287 = vunpack.c.l.b16 %v282
  %v1288 = vunpack.c.h.b16 %v282
  %v1289 = vunpack.c.l.b16 %v283
  %v1290 = vunpack.c.h.b16 %v283
  %v1291 = vunpack.c.l.b16 %v284
  %v1292 = vunpack.c.l.b16 %v285
  %v1293 = vunpack.c.h.b16 %v285
  %v1294 = vunpack.c.l.b16 %v286
  %v1295 = vunpack.c.h.b16 %v286
  %v1296 = vunpack.c.l.b16 %v287
  %v1297 = vunpack.c.h.b16 %v287
  %v1298 = vunpack.c.l.b16 %v288
  %v1299 = vunpack.c.h.b16 %v288
  %v1300 = vunpack.c.l.b16 %v289
  %v1301 = vunpack.c.l.b16 %v290
  %v1302 = vunpack.c.h.b16 %v290
  %v1303 = vunpack.c.l.b16 %v291
  %v1304 = vunpack.c.h.b16 %v291
  %v1305 = vunpack.c.l.b16 %v292
  %v1306 = vunpack.c.h.b16 %v292
  %v1307 = vunpack.c.l.b16 %v293
  %v1308 = vunpack.c.h.b16 %v293
  %v1309 = vunpack.c.l.b16 %v294
  %v1310 = vunpack.c.l.b16 %v295
  %v1311 = vunpack.c.h.b16 %v295
  %v1312 = vunpack.c.l.b16 %v296
  %v1313 = vunpack.c.h.b16 %v296
  %v1314 = vunpack.c.l.b16 %v297
  %v1315 = vunpack.c.h.b16 %v297
  %v1316 = vunpack.c.l.b16 %v298
  %v1317 = vunpack.c.h.b16 %v298
  %v1318 = vunpack.c.l.b16 %v299
  %v1319 = vunpack.c.l.b16 %v300
  %v1320 = vunpack.c.h.b16 %v300
  %v1321 = vunpack.c.l.b16 %v301
  %v1322 = vunpack.c.h.b16 %v301
  %v1323 = vunpack.c.l.b16 %v302
  %v1324 = vunpack.c.h.b16 %v302
  %v1325 = vunpack.c.l.b16 %v303
  %v1326 = vunpack.c.h.b16 %v303
  %v1327 = vunpack.c.l.b16 %v304
  %v1328 = vunpack.c.l.b16 %v305
  %v1329 = vunpack.c.h.b16 %v305
  %v1330 = vunpack.c.l.b16 %v306
  %v1331 = vunpack.c.h.b16 %v306
  %v1332 = vunpack.c.l.b16 %v307
  %v1333 = vunpack.c.h.b16 %v307
  %v1334 = vunpack.c.l.b16 %v308
  %v1335 = vunpack.c.h.b16 %v308
  %v1336 = vunpack.c.l.b16 %v309
  %v1337 = vunpack.c.l.b16 %v310
  %v1338 = vunpack.c.h.b16 %v310
  %v1339 = vunpack.c.l.b16 %v311
  %v1340 = vunpack.c.h.b16 %v311
  %v1341 = vunpack.c.l.b16 %v312
  %v1342 = vunpack.c.h.b16 %v312
  %v1343 = vunpack.c.l.b16 %v313
  %v1344 = vunpack.c.h.b16 %v313
  %v1345 = vunpack.c.l.b16 %v314
  %v1346 = vunpack.c.l.b16 %v315
  %v1347 = vunpack.c.h.b16 %v315
  %v1348 = vunpack.c.l.b16 %v316
  %v1349 = vunpack.c.h.b16 %v316
  %v1350 = vunpack.c.l.b16 %v317
  %v1351 = vunpack.c.h.b16 %v317
  %v1352 = vunpack.c.l.b16 %v318
  %v1353 = vunpack.c.h.b16 %v318
  %v1354 = vunpack.c.l.b16 %v319
  %v1355 = vunpack.c.l.b16 %v320
  %v1356 = vunpack.c.h.b16 %v320
  %v1357 = vunpack.c.l.b16 %v321
  %v1358 = vunpack.c.h.b16 %v321
  %v1359 = vunpack.c.l.b16 %v322
  %v1360 = vunpack.c.h.b16 %v322
  %v1361 = vunpack.c.l.b16 %v323
  %v1362 = vunpack.c.h.b16 %v323
  %v1363 = vunpack.c.l.b16 %v324
  %v1364 = vunpack.c.l.b16 %v325
  %v1365 = vunpack.c.h.b16 %v325
  %v1366 = vunpack.c.l.b16 %v326
  %v1367 = vunpack.c.h.b16 %v326
  %v1368 = vunpack.c.l.b16 %v327
  %v1369 = vunpack.c.h.b16 %v327
  %v1370 = vunpack.c.l.b16 %v328
  %v1371 = vunpack.c.h.b16 %v328
  %v1372 = vunpack.c.l.b16 %v329
  %v1373 = vunpack.c.l.b16 %v330
  %v1374 = vunpack.c.h.b16 %v330
  %v1375 = vunpack.c.l.b16 %v331
  %v1376 = vunpack.c.h.b16 %v331
  %v1377 = vunpack.c.l.b16 %v332
  %v1378 = vunpack.c.h.b16 %v332
  %v1379 = vunpack.c.l.b16 %v333
  %v1380 = vunpack.c.h.b16 %v333
  %v1381 = vunpack.c.l.b16 %v334
  %v1382 = vpack.c.b16 %v815, %v806
  %v1383 = vpack.c.b16 %v816, %v807
  %v1384 = vpack.c.b16 %v817, %v808
  %v1385 = vpack.c.b16 %v818, %v809
  %v1386 = vpack.c.b16 %v819, %v810
  %v1387 = vpack.c.b16 %v820, %v811
  %v1388 = vpack.c.b16 %v821, %v812
  %v1389 = vpack.c.b16 %v822, %v813
  %v1390 = vpack.c.b16 %v823, %v814
  %v1391 = vpack.c.b16 %v833, %v824
  %v1392 = vpack.c.b16 %v834, %v825
  %v1393 = vpack.c.b16 %v835, %v826
  %v1394 = vpack.c.b16 %v836, %v827
  %v1395 = vpack.c.b16 %v837, %v828
  %v1396 = vpack.c.b16 %v838, %v829
  %v1397 = vpack.c.b16 %v839, %v830
  %v1398 = vpack.c.b16 %v840, %v831
  %v1399 = vpack.c.b16 %v841, %v832
  %v1400 = vpack.c.b16 %v851, %v842
  %v1401 = vpack.c.b16 %v852, %v843
  %v1402 = vpack.c.b16 %v853, %v844
  %v1403 = vpack.c.b16 %v854, %v845
  %v1404 = vpack.c.b16 %v855, %v846
  %v1405 = vpack.c.b16 %v856, %v847
  %v1406 = vpack.c.b16 %v857, %v848
  %v1407 = vpack.c.b16 %v858, %v849
  %v1408 = vpack.c.b16 %v859, %v850
  %v1409 = vpack.c.b16 %v869, %v860
  %v1410 = vpack.c.b16 %v870, %v861
  %v1411 = vpack.c.b16 %v871, %v862
  %v1412 = vpack.c.b16 %v872, %v863
  %v1413 = vpack.c.b16 %v873, %v864
  %v1414 = vpack.c.b16 %v874, %v865
  %v1415 = vpack.c.b16 %v875, %v866
  %v1416 = vpack.c.b16 %v876, %v867
  %v1417 = vpack.c.b16 %v877, %v868
  %v1418 = vpack.c.b16 %v887, %v878
  %v1419 = vpack.c.b16 %v888, %v879
  %v1420 = vpack.c.b16 %v889, %v880
  %v1421 = vpack.c.b16 %v890, %v881
  %v1422 = vpack.c.b16 %v891, %v882
  %v1423 = vpack.c.b16 %v892, %v883
  %v1424 = vpack.c.b16 %v893, %v884
  %v1425 = vpack.c.b16 %v894, %v885
  %v1426 = vpack.c.b16 %v895, %v886
  %v1427 = vpack.c.b16 %v905, %v896
  %v1428 = vpack.c.b16 %v906, %v897
  %v1429 = vpack.c.b16 %v907, %v898
  %v1430 = vpack.c.b16 %v908, %v899
  %v1431 = vpack.c.b16 %v909, %v900
  %v1432 = vpack.c.b16 %v910, %v901
  %v1433 = vpack.c.b16 %v911, %v902
  %v1434 = vpack.c.b16 %v912, %v903
  %v1435 = vpack.c.b16 %v913, %v904
  %v1436 = vpack.c.b16 %v923, %v914
  %v1437 = vpack.c.b16 %v924, %v915
  %v1438 = vpack.c.b16 %v925, %v916
  %v1439 = vpack.c.b16 %v926, %v917
  %v1440 = vpack.c.b16 %v927, %v918
  %v1441 = vpack.c.b16 %v928, %v919
  %v1442 = vpack.c.b16 %v929, %v920
  %v1443 = vpack.c.b16 %v930, %v921
  %v1444 = vpack.c.b16 %v931, %v922
  %v1445 = vpack.c.b16 %v941, %v932
  %v1446 = vpack.c.b16 %v942, %v933
  %v1447 = vpack.c.b16 %v943, %v934
  %v1448 = vpack.c.b16 %v944, %v935
  %v1449 = vpack.c.b16 %v945, %v936
  %v1450 = vpack.c.b16 %v946, %v937
  %v1451 = vpack.c.b16 %v947, %v938
  %v1452 = vpack.c.b16 %v948, %v939
  %v1453 = vpack.c.b16 %v949, %v940
  %v1454 = vpack.c.b16 %v959, %v950
  %v1455 = vpack.c.b16 %v960, %v951
  %v1456 = vpack.c.b16 %v961, %v952
  %v1457 = vpack.c.b16 %v962, %v953
  %v1458 = vpack.c.b16 %v963, %v954
  %v1459 = vpack.c.b16 %v964, %v955
  %v1460 = vpack.c.b16 %v965, %v956
  %v1461 = vpack.c.b16 %v966, %v957
  %v1462 = vpack.c.b16 %v967, %v958
  %v1463 = vpack.c.b16 %v977, %v968
  %v1464 = vpack.c.b16 %v978, %v969
  %v1465 = vpack.c.b16 %v979, %v970
  %v1466 = vpack.c.b16 %v980, %v971
  %v1467 = vpack.c.b16 %v981, %v972
  %v1468 = vpack.c.b16 %v982, %v973
  %v1469 = vpack.c.b16 %v983, %v974
  %v1470 = vpack.c.b16 %v984, %v975
  %v1471 = vpack.c.b16 %v985, %v976
  %v1472 = vpack.c.b16 %v995, %v986
  %v1473 = vpack.c.b16 %v996, %v987
  %v1474 = vpack.c.b16 %v997, %v988
  %v1475 = vpack.c.b16 %v998, %v989
  %v1476 = vpack.c.b16 %v999, %v990
  %v1477 = vpack.c.b16 %v1000, %v991
  %v1478 = vpack.c.b16 %v1001, %v992
  %v1479 = vpack.c.b16 %v1002, %v993
  %v1480 = vpack.c.b16 %v1003, %v994
  %v1481 = vpack.c.b16 %v1013, %v1004
  %v1482 = vpack.c.b16 %v1014, %v1005
  %v1483 = vpack.c.b16 %v1015, %v1006
  %v1484 = vpack.c.b16 %v1016, %v1007
  %v1485 = vpack.c.b16 %v1017, %v1008
  %v1486 = vpack.c.b16 %v1018, %v1009
  %v1487 = vpack.c.b16 %v1019, %v1010
  %v1488 = vpack.c.b16 %v1020, %v1011
  %v1489 = vpack.c.b16 %v1021, %v1012
  %v1490 = vpack.c.b16 %v1031, %v1022
  %v1491 = vpack.c.b16 %v1032, %v1023
  %v1492 = vpack.c.b16 %v1033, %v1024
  %v1493 = vpack.c.b16 %v1034, %v1025
  %v1494 = vpack.c.b16 %v1035, %v1026
  %v1495 = vpack.c.b16 %v1036, %v1027
  %v1496 = vpack.c.b16 %v1037, %v1028
  %v1497 = vpack.c.b16 %v1038, %v1029
  %v1498 = vpack.c.b16 %v1039, %v1030
  %v1499 = vpack.c.b16 %v1049, %v1040
  %v1500 = vpack.c.b16 %v1050, %v1041
  %v1501 = vpack.c.b16 %v1051, %v1042
  %v1502 = vpack.c.b16 %v1052, %v1043
  %v1503 = vpack.c.b16 %v1053, %v1044
  %v1504 = vpack.c.b16 %v1054, %v1045
  %v1505 = vpack.c.b16 %v1055, %v1046
  %v1506 = vpack.c.b16 %v1056, %v1047
  %v1507 = vpack.c.b16 %v1057, %v1048
  %v1508 = vpack.c.b16 %v1067, %v1058
  %v1509 = vpack.c.b16 %v1068, %v1059
  %v1510 = vpack.c.b16 %v1069, %v1060
  %v1511 = vpack.c.b16 %v1070, %v1061
  %v1512 = vpack.c.b16 %v1071, %v1062
  %v1513 = vpack.c.b16 %v1072, %v1063
  %v1514 = vpack.c.b16 %v1073, %v1064
  %v1515 = vpack.c.b16 %v1074, %v1065
  %v1516 = vpack.c.b16 %v1075, %v1066
  %v1517 = vpack.c.b16 %v1085, %v1076
  %v1518 = vpack.c.b16 %v1086, %v1077
  %v1519 = vpack.c.b16 %v1087, %v1078
  %v1520 = vpack.c.b16 %v1088, %v1079
  %v1521 = vpack.c.b16 %v1089, %v1080
  %v1522 = vpack.c.b16 %v1090, %v1081
  %v1523 = vpack.c.b16 %v1091, %v1082
  %v1524 = vpack.c.b16 %v1092, %v1083
  %v1525 = vpack.c.b16 %v1093, %v1084
  %v1526 = vpack.c.b16 %v1103, %v1094
  %v1527 = vpack.c.b16 %v1104, %v1095
  %v1528 = vpack.c.b16 %v1105, %v1096
  %v1529 = vpack.c.b16 %v1106, %v1097
  %v1530 = vpack.c.b16 %v1107, %v1098
  %v1531 = vpack.c.b16 %v1108, %v1099
  %v1532 = vpack.c.b16 %v1109, %v1100
  %v1533 = vpack.c.b16 %v1110, %v1101
  %v1534 = vpack.c.b16 %v1111, %v1102
  %v1535 = vpack.c.b16 %v1121, %v1112
  %v1536 = vpack.c.b16 %v1122, %v1113
  %v1537 = vpack.c.b16 %v1123, %v1114
  %v1538 = vpack.c.b16 %v1124, %v1115
  %v1539 = vpack.c.b16 %v1125, %v1116
  %v1540 = vpack.c.b16 %v1126, %v1117
  %v1541 = vpack.c.b16 %v1127, %v1118
  %v1542 = vpack.c.b16 %v1128, %v1119
  %v1543 = vpack.c.b16 %v1129, %v1120
  %v1544 = vpack.c.b16 %v1139, %v1130
  %v1545 = vpack.c.b16 %v1140, %v1131
  %v1546 = vpack.c.b16 %v1141, %v1132
  %v1547 = vpack.c.b16 %v1142, %v1133
  %v1548 = vpack.c.b16 %v1143, %v1134
  %v1549 = vpack.c.b16 %v1144, %v1135
  %v1550 = vpack.c.b16 %v1145, %v1136
  %v1551 = vpack.c.b16 %v1146, %v1137
  %v1552 = vpack.c.b16 %v1147, %v1138
  %v1553 = vpack.c.b16 %v1157, %v1148
  %v1554 = vpack.c.b16 %v1158, %v1149
  %v1555 = vpack.c.b16 %v1159, %v1150
  %v1556 = vpack.c.b16 %v1160, %v1151
  %v1557 = vpack.c.b16 %v1161, %v1152
  %v1558 = vpack.c.b16 %v1162, %v1153
  %v1559 = vpack.c.b16 %v1163, %v1154
  %v1560 = vpack.c.b16 %v1164, %v1155
  %v1561 = vpack.c.b16 %v1165, %v1156
  %v1562 = vpack.c.b16 %v1175, %v1166
  %v1563 = vpack.c.b16 %v1176, %v1167
  %v1564 = vpack.c.b16 %v1177, %v1168
  %v1565 = vpack.c.b16 %v1178, %v1169
  %v1566 = vpack.c.b16 %v1179, %v1170
  %v1567 = vpack.c.b16 %v1180, %v1171
  %v1568 = vpack.c.b16 %v1181, %v1172
  %v1569 = vpack.c.b16 %v1182, %v1173
  %v1570 = vpack.c.b16 %v1183, %v1174
  %v1571 = vpack.c.b16 %v1193, %v1184
  %v1572 = vpack.c.b16 %v1194, %v1185
  %v1573 = vpack.c.b16 %v1195, %v1186
  %v1574 = vpack.c.b16 %v1196, %v1187
  %v1575 = vpack.c.b16 %v1197, %v1188
  %v1576 = vpack.c.b16 %v1198, %v1189
  %v1577 = vpack.c.b16 %v1199, %v1190
  %v1578 = vpack.c.b16 %v1200, %v1191
  %v1579 = vpack.c.b16 %v1201, %v1192
  %v1580 = vpack.c.b16 %v1211, %v1202
  %v1581 = vpack.c.b16 %v1212, %v1203
  %v1582 = vpack.c.b16 %v1213, %v1204
  %v1583 = vpack.c.b16 %v1214, %v1205
  %v1584 = vpack.c.b16 %v1215, %v1206
  %v1585 = vpack.c.b16 %v1216, %v1207
  %v1586 = vpack.c.b16 %v1217, %v1208
  %v1587 = vpack.c.b16 %v1218, %v1209
  %v1588 = vpack.c.b16 %v1219, %v1210
  %v1589 = vpack.c.b16 %v1229, %v1220
  %v1590 = vpack.c.b16 %v1230, %v1221
  %v1591 = vpack.c.b16 %v1231, %v1222
  %v1592 = vpack.c.b16 %v1232, %v1223
  %v1593 = vpack.c.b16 %v1233, %v1224
  %v1594 = vpack.c.b16 %v1234, %v1225
  %v1595 = vpack.c.b16 %v1235, %v1226
  %v1596 = vpack.c.b16 %v1236, %v1227
  %v1597 = vpack.c.b16 %v1237, %v1228
  %v1598 = vpack.c.b16 %v1247, %v1238
  %v1599 = vpack.c.b16 %v1248, %v1239
  %v1600 = vpack.c.b16 %v1249, %v1240
  %v1601 = vpack.c.b16 %v1250, %v1241
  %v1602 = vpack.c.b16 %v1251, %v1242
  %v1603 = vpack.c.b16 %v1252, %v1243
  %v1604 = vpack.c.b16 %v1253, %v1244
  %v1605 = vpack.c.b16 %v1254, %v1245
  %v1606 = vpack.c.b16 %v1255, %v1246
  %v1607 = vpack.c.b16 %v1265, %v1256
  %v1608 = vpack.c.b16 %v1266, %v1257
  %v1609 = vpack.c.b16 %v1267, %v1258
  %v1610 = vpack.c.b16 %v1268, %v1259
  %v1611 = vpack.c.b16 %v1269, %v1260
  %v1612 = vpack.c.b16 %v1270, %v1261
  %v1613 = vpack.c.b16 %v1271, %v1262
  %v1614 = vpack.c.b16 %v1272, %v1263
  %v1615 = vpack.c.b16 %v1273, %v1264
  %v1616 = vpack.c.b16 %v1283, %v1274
  %v1617 = vpack.c.b16 %v1284, %v1275
  %v1618 = vpack.c.b16 %v1285, %v1276
  %v1619 = vpack.c.b16 %v1286, %v1277
  %v1620 = vpack.c.b16 %v1287, %v1278
  %v1621 = vpack.c.b16 %v1288, %v1279
  %v1622 = vpack.c.b16 %v1289, %v1280
  %v1623 = vpack.c.b16 %v1290, %v1281
  %v1624 = vpack.c.b16 %v1291, %v1282
  %v1625 = vpack.c.b16 %v1301, %v1292
  %v1626 = vpack.c.b16 %v1302, %v1293
  %v1627 = vpack.c.b16 %v1303, %v1294
  %v1628 = vpack.c.b16 %v1304, %v1295
  %v1629 = vpack.c.b16 %v1305, %v1296
  %v1630 = vpack.c.b16 %v1306, %v1297
  %v1631 = vpack.c.b16 %v1307, %v1298
  %v1632 = vpack.c.b16 %v1308, %v1299
  %v1633 = vpack.c.b16 %v1309, %v1300
  %v1634 = vpack.c.b16 %v1319, %v1310
  %v1635 = vpack.c.b16 %v1320, %v1311
  %v1636 = vpack.c.b16 %v1321, %v1312
  %v1637 = vpack.c.b16 %v1322, %v1313
  %v1638 = vpack.c.b16 %v1323, %v1314
  %v1639 = vpack.c.b16 %v1324, %v1315
  %v1640 = vpack.c.b16 %v1325, %v1316
  %v1641 = vpack.c.b16 %v1326, %v1317
  %v1642 = vpack.c.b16 %v1327, %v1318
  %v1643 = vpack.c.b16 %v1337, %v1328
  %v1644 = vpack.c.b16 %v1338, %v1329
  %v1645 = vpack.c.b16 %v1339, %v1330
  %v1646 = vpack.c.b16 %v1340, %v1331
  %v1647 = vpack.c.b16 %v1341, %v1332
  %v1648 = vpack.c.b16 %v1342, %v1333
  %v1649 = vpack.c.b16 %v1343, %v1334
  %v1650 = vpack.c.b16 %v1344, %v1335
  %v1651 = vpack.c.b16 %v1345, %v1336
  %v1652 = vpack.c.b16 %v1355, %v1346
  %v1653 = vpack.c.b16 %v1356, %v1347
  %v1654 = vpack.c.b16 %v1357, %v1348
  %v1655 = vpack.c.b16 %v1358, %v1349
  %v1656 = vpack.c.b16 %v1359, %v1350
  %v1657 = vpack.c.b16 %v1360, %v1351
  %v1658 = vpack.c.b16 %v1361, %v1352
  %v1659 = vpack.c.b16 %v1362, %v1353
  %v1660 = vpack.c.b16 %v1363, %v1354
  %v1661 = vpack.c.b16 %v1373, %v1364
  %v1662 = vpack.c.b16 %v1374, %v1365
  %v1663 = vpack.c.b16 %v1375, %v1366
  %v1664 = vpack.c.b16 %v1376, %v1367
  %v1665 = vpack.c.b16 %v1377, %v1368
  %v1666 = vpack.c.b16 %v1378, %v1369
  %v1667 = vpack.c.b16 %v1379, %v1370
  %v1668 = vpack.c.b16 %v1380, %v1371
  %v1669 = vpack.c.b16 %v1381, %v1372
  %v2102 = vunpack.c.l.b16 %v335
  %v2103 = vunpack.c.l.b16 %v336
  %v2104 = vunpack.c.l.b16 %v337
  %v2105 = vunpack.c.l.b16 %v338
  %v2106 = vunpack.c.l.b16 %v339
  %v2107 = vunpack.c.l.b16 %v340
  %v2108 = vunpack.c.l.b16 %v341
  %v2109 = vunpack.c.l.b16 %v342
  %v2110 = vunpack.c.l.b16 %v343
  %v2111 = vunpack.c.l.b16 %v344
  %v2112 = vunpack.c.l.b16 %v345
  %v2113 = vunpack.c.l.b16 %v346
  %v2114 = vunpack.c.l.b16 %v347
  %v2115 = vunpack.c.l.b16 %v348
  %v2116 = vunpack.c.l.b16 %v349
  %v2117 = vunpack.c.l.b16 %v350
  %v2118 = vunpack.c.l.b16 %v351
  %v2119 = vunpack.c.l.b16 %v352
  %v2120 = vunpack.c.l.b16 %v353
  %v2121 = vunpack.c.l.b16 %v354
  %v2122 = vunpack.c.l.b16 %v355
  %v2123 = vunpack.c.l.b16 %v356
  %v2124 = vunpack.c.l.b16 %v357
  %v2125 = vunpack.c.l.b16 %v358
  %v2126 = vunpack.c.l.b16 %v359
  %v2127 = vunpack.c.l.b16 %v360
  %v2128 = vunpack.c.l.b16 %v361
  %v2129 = vunpack.c.l.b16 %v362
  %v2130 = vunpack.c.l.b16 %v363
  %v2131 = vunpack.c.l.b16 %v364
  %v2132 = vunpack.c.l.b16 %v365
  %v2133 = vunpack.c.l.b16 %v366
  %v2134 = vunpack.c.l.b16 %v367
  %v2135 = vunpack.c.l.b16 %v368
  %v2136 = vunpack.c.l.b16 %v369
  %v2137 = vunpack.c.l.b16 %v370
  %v2138 = vunpack.c.l.b16 %v371
  %v2139 = vunpack.c.l.b16 %v372
  %v2140 = vunpack.c.l.b16 %v373
  %v2141 = vunpack.c.l.b16 %v374
  %v2142 = vunpack.c.l.b16 %v375
  %v2143 = vunpack.c.l.b16 %v376
  %v2144 = vunpack.c.l.b16 %v377
  %v2145 = vunpack.c.l.b16 %v378
  %v2146 = vunpack.c.l.b16 %v379
  %v2147 = vunpack.c.l.b16 %v380
  %v2148 = vunpack.c.l.b16 %v381
  %v2149 = vunpack.c.l.b16 %v382
  %v2150 = vunpack.c.l.b16 %v383
  %v2151 = vunpack.c.l.b16 %v384
  %v2152 = vunpack.c.l.b16 %v385
  %v2153 = vunpack.c.l.b16 %v386
  %v2154 = vunpack.c.l.b16 %v387
  %v2155 = vunpack.c.l.b16 %v388
  %v2156 = vunpack.c.l.b16 %v389
  %v2157 = vunpack.c.l.b16 %v390
  %v2158 = vunpack.c.l.b16 %v391
  %v2159 = vunpack.c.l.b16 %v392
  %v2160 = vunpack.c.l.b16 %v393
  %v2161 = vunpack.c.l.b16 %v394
  %v2162 = vunpack.c.l.b16 %v395
  %v2163 = vunpack.c.l.b16 %v396
  %v2164 = vunpack.c.l.b16 %v397
  %v2165 = vunpack.c.l.b16 %v398
  %v2166 = vunpack.c.l.b16 %v399
  %v2167 = vunpack.c.l.b16 %v400
  %v2168 = vunpack.c.l.b16 %v401
  %v2169 = vunpack.c.l.b16 %v402
  %v2170 = vunpack.c.l.b16 %v403
  %v2171 = vunpack.c.l.b16 %v404
  %v2172 = vunpack.c.l.b16 %v405
  %v2173 = vunpack.c.l.b16 %v406
  %v2174 = vunpack.c.l.b16 %v407
  %v2175 = vunpack.c.l.b16 %v408
  %v2176 = vunpack.c.l.b16 %v409
  %v2177 = vunpack.c.l.b16 %v410
  %v2178 = vunpack.c.l.b16 %v411
  %v2179 = vunpack.c.l.b16 %v412
  %v2180 = vunpack.c.l.b16 %v413
  %v2181 = vunpack.c.l.b16 %v414
  %v2182 = vunpack.c.l.b16 %v415
  %v2183 = vunpack.c.l.b16 %v416
  %v2184 = vunpack.c.l.b16 %v417
  %v2185 = vunpack.c.l.b16 %v418
  %v2186 = vunpack.c.l.b16 %v419
  %v2187 = vunpack.c.l.b16 %v420
  %v2188 = vunpack.c.l.b16 %v421
  %v2189 = vunpack.c.l.b16 %v422
  %v2190 = vunpack.c.l.b16 %v423
  %v2191 = vunpack.c.l.b16 %v424
  %v2192 = vunpack.c.l.b16 %v425
  %v2193 = vunpack.c.l.b16 %v426
  %v2194 = vunpack.c.l.b16 %v427
  %v2195 = vunpack.c.l.b16 %v428
  %v2196 = vunpack.c.l.b16 %v429
  %v2197 = vunpack.c.l.b16 %v430
  %v2198 = vunpack.c.l.b16 %v431
  %v2199 = vunpack.c.l.b16 %v432
  %v2200 = vunpack.c.l.b16 %v433
  %v2201 = vunpack.c.l.b16 %v434
  %v2202 = vunpack.c.l.b16 %v435
  %v2203 = vunpack.c.l.b16 %v436
  %v2204 = vunpack.c.l.b16 %v437
  %v2205 = vunpack.c.l.b16 %v438
  %v2206 = vunpack.c.l.b16 %v439
  %v2207 = vunpack.c.l.b16 %v440
  %v2208 = vunpack.c.l.b16 %v441
  %v2209 = vunpack.c.l.b16 %v442
  %v2210 = vunpack.c.l.b16 %v443
  %v2211 = vunpack.c.l.b16 %v444
  %v2212 = vunpack.c.l.b16 %v445
  %v2213 = vunpack.c.l.b16 %v446
  %v2214 = vunpack.c.l.b16 %v447
  %v2215 = vunpack.c.l.b16 %v448
  %v2216 = vunpack.c.l.b16 %v449
  %v2217 = vunpack.c.l.b16 %v450
  %v2218 = vunpack.c.l.b16 %v451
  %v2219 = vunpack.c.l.b16 %v452
  %v2220 = vunpack.c.l.b16 %v453
  %v2221 = vunpack.c.l.b16 %v454
  %v2222 = vunpack.c.l.b16 %v455
  %v2223 = vunpack.c.l.b16 %v456
  %v2224 = vunpack.c.l.b16 %v457
  %v2225 = vunpack.c.l.b16 %v458
  %v2226 = vunpack.c.l.b16 %v459
  %v2227 = vunpack.c.l.b16 %v460
  %v2228 = vunpack.c.l.b16 %v461
  %v2229 = vunpack.c.l.b16 %v462
  %v2230 = vunpack.c.l.b16 %v463
  %v2231 = vunpack.c.l.b16 %v464
  %v2232 = vunpack.c.l.b16 %v465
  %v2233 = vunpack.c.l.b16 %v466
  %v2234 = vunpack.c.l.b16 %v467
  %v2235 = vunpack.c.l.b16 %v468
  %v2236 = vunpack.c.l.b16 %v469
  %v2237 = vunpack.c.l.b16 %v470
  %v2238 = vunpack.c.l.b16 %v471
  %v2239 = vunpack.c.l.b16 %v472
  %v2240 = vunpack.c.l.b16 %v473
  %v2241 = vunpack.c.l.b16 %v474
  %v2242 = vunpack.c.l.b16 %v475
  %v2243 = vunpack.c.l.b16 %v476
  %v2244 = vunpack.c.l.b16 %v477
  %v2245 = vunpack.c.l.b16 %v478
  %v2246 = vpack.c.b16 %v2103, %v2102
  %v2247 = vpack.c.b16 %v2105, %v2104
  %v2248 = vpack.c.b16 %v2107, %v2106
  %v2249 = vpack.c.b16 %v2109, %v2108
  %v2250 = vpack.c.b16 %v2111, %v2110
  %v2251 = vpack.c.b16 %v2113, %v2112
  %v2252 = vpack.c.b16 %v2115, %v2114
  %v2253 = vpack.c.b16 %v2117, %v2116
  %v2254 = vpack.c.b16 %v2119, %v2118
  %v2255 = vpack.c.b16 %v2121, %v2120
  %v2256 = vpack.c.b16 %v2123, %v2122
  %v2257 = vpack.c.b16 %v2125, %v2124
  %v2258 = vpack.c.b16 %v2127, %v2126
  %v2259 = vpack.c.b16 %v2129, %v2128
  %v2260 = vpack.c.b16 %v2131, %v2130
  %v2261 = vpack.c.b16 %v2133, %v2132
  %v2262 = vpack.c.b16 %v2135, %v2134
  %v2263 = vpack.c.b16 %v2137, %v2136
  %v2264 = vpack.c.b16 %v2139, %v2138
  %v2265 = vpack.c.b16 %v2141, %v2140
  %v2266 = vpack.c.b16 %v2143, %v2142
  %v2267 = vpack.c.b16 %v2145, %v2144
  %v2268 = vpack.c.b16 %v2147, %v2146
  %v2269 = vpack.c.b16 %v2149, %v2148
  %v2270 = vpack.c.b16 %v2151, %v2150
  %v2271 = vpack.c.b16 %v2153, %v2152
  %v2272 = vpack.c.b16 %v2155, %v2154
  %v2273 = vpack.c.b16 %v2157, %v2156
  %v2274 = vpack.c.b16 %v2159, %v2158
  %v2275 = vpack.c.b16 %v2161, %v2160
  %v2276 = vpack.c.b16 %v2163, %v2162
  %v2277 = vpack.c.b16 %v2165, %v2164
  %v2278 = vpack.c.b16 %v2167, %v2166
  %v2279 = vpack.c.b16 %v2169, %v2168
  %v2280 = vpack.c.b16 %v2171, %v2170
  %v2281 = vpack.c.b16 %v2173, %v2172
  %v2282 = vpack.c.b16 %v2175, %v2174
  %v2283 = vpack.c.b16 %v2177, %v2176
  %v2284 = vpack.c.b16 %v2179, %v2178
  %v2285 = vpack.c.b16 %v2181, %v2180
  %v2286 = vpack.c.b16 %v2183, %v2182
  %v2287 = vpack.c.b16 %v2185, %v2184
  %v2288 = vpack.c.b16 %v2187, %v2186
  %v2289 = vpack.c.b16 %v2189, %v2188
  %v2290 = vpack.c.b16 %v2191, %v2190
  %v2291 = vpack.c.b16 %v2193, %v2192
  %v2292 = vpack.c.b16 %v2195, %v2194
  %v2293 = vpack.c.b16 %v2197, %v2196
  %v2294 = vpack.c.b16 %v2199, %v2198
  %v2295 = vpack.c.b16 %v2201, %v2200
  %v2296 = vpack.c.b16 %v2203, %v2202
  %v2297 = vpack.c.b16 %v2205, %v2204
  %v2298 = vpack.c.b16 %v2207, %v2206
  %v2299 = vpack.c.b16 %v2209, %v2208
  %v2300 = vpack.c.b16 %v2211, %v2210
  %v2301 = vpack.c.b16 %v2213, %v2212
  %v2302 = vpack.c.b16 %v2215, %v2214
  %v2303 = vpack.c.b16 %v2217, %v2216
  %v2304 = vpack.c.b16 %v2219, %v2218
  %v2305 = vpack.c.b16 %v2221, %v2220
  %v2306 = vpack.c.b16 %v2223, %v2222
  %v2307 = vpack.c.b16 %v2225, %v2224
  %v2308 = vpack.c.b16 %v2227, %v2226
  %v2309 = vpack.c.b16 %v2229, %v2228
  %v2310 = vpack.c.b16 %v2231, %v2230
  %v2311 = vpack.c.b16 %v2233, %v2232
  %v2312 = vpack.c.b16 %v2235, %v2234
  %v2313 = vpack.c.b16 %v2237, %v2236
  %v2314 = vpack.c.b16 %v2239, %v2238
  %v2315 = vpack.c.b16 %v2241, %v2240
  %v2316 = vpack.c.b16 %v2243, %v2242
  %v2317 = vpack.c.b16 %v2245, %v2244
  %2390 = vmatprep.subr.bf16.mxu0 0
  %2391 = vmatpush1.bf16.msra.mxu0 %v2246
  %2392 = vmatprep.subr.bf16.mxu0 0
  %2393 = vmatpush1.bf16.msra.mxu0 %v2247
  %2394 = vmatprep.subr.bf16.mxu0 0
  %2395 = vmatpush1.bf16.msra.mxu0 %v2248
  %2396 = vmatprep.subr.bf16.mxu0 0
  %2397 = vmatpush1.bf16.msra.mxu0 %v2249
  %2398 = vmatprep.subr.bf16.mxu0 0
  %2399 = vmatpush1.bf16.msra.mxu0 %v2250
  %2400 = vmatprep.subr.bf16.mxu0 0
  %2401 = vmatpush1.bf16.msra.mxu0 %v2251
  %2402 = vmatprep.subr.bf16.mxu0 0
  %2403 = vmatpush1.bf16.msra.mxu0 %v2252
  %2404 = vmatprep.subr.bf16.mxu0 0
  %2405 = vmatpush1.bf16.msra.mxu0 %v2253
  %2406 = vmatprep.subr.bf16.mxu0 0
  %2407 = vmatpush1.bf16.msra.mxu0 %v2254
  %2408 = vmatprep.subr.bf16.mxu0 0
  %2409 = vmatpush1.bf16.msra.mxu0 %v2255
  %2410 = vmatprep.subr.bf16.mxu0 0
  %2411 = vmatpush1.bf16.msra.mxu0 %v2256
  %2412 = vmatprep.subr.bf16.mxu0 0
  %2413 = vmatpush1.bf16.msra.mxu0 %v2257
  %2414 = vmatprep.subr.bf16.mxu0 0
  %2415 = vmatpush1.bf16.msra.mxu0 %v2258
  %2416 = vmatprep.subr.bf16.mxu0 0
  %2417 = vmatpush1.bf16.msra.mxu0 %v2259
  %2418 = vmatprep.subr.bf16.mxu0 0
  %2419 = vmatpush1.bf16.msra.mxu0 %v2260
  %2420 = vmatprep.subr.bf16.mxu0 0
  %2421 = vmatpush1.bf16.msra.mxu0 %v2261
  %2422 = vmatprep.mubr.bf16.mxu0 %v1383
  %2423 = vmatmul.mubr.bf16.gmra.mrb[0].mxu0 %v1382
  %v2424 = vpop.f32.mrb[0].mxu0
  %v2425 = vadd.f32 %v484, %v2424
  %v2426 = vpop.f32.mrb[0].mxu0
  %v2427 = vpop.f32.mrb[0].mxu0
  %v2428 = vadd.f32 %v484, %v2427
  %v2429 = vpop.f32.mrb[0].mxu0
  %2430 = vmatprep.mubr.bf16.mxu0 %v1392
  %2431 = vmatmul.mubr.bf16.gmra.mrb[0].mxu0 %v1391
  %v2432 = vpop.f32.mrb[0].mxu0
  %v2433 = vadd.f32 %v484, %v2432
  %v2434 = vpop.f32.mrb[0].mxu0
  %v2435 = vpop.f32.mrb[0].mxu0
  %v2436 = vadd.f32 %v484, %v2435
  %v2437 = vpop.f32.mrb[0].mxu0
  %2438 = vmatprep.mubr.bf16.mxu0 %v1401
  %2439 = vmatmul.mubr.bf16.gmra.mrb[0].mxu0 %v1400
  %v2440 = vpop.f32.mrb[0].mxu0
  %v2441 = vadd.f32 %v484, %v2440
  %v2442 = vpop.f32.mrb[0].mxu0
  %v2443 = vpop.f32.mrb[0].mxu0
  %v2444 = vadd.f32 %v484, %v2443
  %v2445 = vpop.f32.mrb[0].mxu0
  %2446 = vmatprep.mubr.bf16.mxu0 %v1410
  %2447 = vmatmul.mubr.bf16.gmra.mrb[0].mxu0 %v1409
  %v2448 = vpop.f32.mrb[0].mxu0
  %v2449 = vadd.f32 %v484, %v2448
  %v2450 = vpop.f32.mrb[0].mxu0
  %v2451 = vpop.f32.mrb[0].mxu0
  %v2452 = vadd.f32 %v484, %v2451
  %v2453 = vpop.f32.mrb[0].mxu0
  %2454 = vmatprep.mubr.bf16.mxu0 %v1419
  %2455 = vmatmul.mubr.bf16.gmra.mrb[0].mxu0 %v1418
  %v2456 = vpop.f32.mrb[0].mxu0
  %v2457 = vadd.f32 %v484, %v2456
  %v2458 = vpop.f32.mrb[0].mxu0
  %v2459 = vpop.f32.mrb[0].mxu0
  %v2460 = vadd.f32 %v484, %v2459
  %v2461 = vpop.f32.mrb[0].mxu0
  %2462 = vmatprep.mubr.bf16.mxu0 %v1428
  %2463 = vmatmul.mubr.bf16.gmra.mrb[0].mxu0 %v1427
  %v2464 = vpop.f32.mrb[0].mxu0
  %v2465 = vadd.f32 %v484, %v2464
  %v2466 = vpop.f32.mrb[0].mxu0
  %v2467 = vpop.f32.mrb[0].mxu0
  %v2468 = vadd.f32 %v484, %v2467
  %v2469 = vpop.f32.mrb[0].mxu0
  %2470 = vmatprep.mubr.bf16.mxu0 %v1437
  %2471 = vmatmul.mubr.bf16.gmra.mrb[0].mxu0 %v1436
  %v2472 = vpop.f32.mrb[0].mxu0
  %v2473 = vadd.f32 %v484, %v2472
  %v2474 = vpop.f32.mrb[0].mxu0
  %v2475 = vpop.f32.mrb[0].mxu0
  %v2476 = vadd.f32 %v484, %v2475
  %v2477 = vpop.f32.mrb[0].mxu0
  %2478 = vmatprep.mubr.bf16.mxu0 %v1446
  %2479 = vmatmul.mubr.bf16.gmra.mrb[0].mxu0 %v1445
  %v2480 = vpop.f32.mrb[0].mxu0
  %v2481 = vadd.f32 %v484, %v2480
  %v2482 = vpop.f32.mrb[0].mxu0
  %v2483 = vpop.f32.mrb[0].mxu0
  %v2484 = vadd.f32 %v484, %v2483
  %v2485 = vpop.f32.mrb[0].mxu0
  %2486 = vmatprep.mubr.bf16.mxu0 %v1455
  %2487 = vmatmul.mubr.bf16.gmra.mrb[0].mxu0 %v1454
  %v2488 = vpop.f32.mrb[0].mxu0
  %v2489 = vadd.f32 %v484, %v2488
  %v2490 = vpop.f32.mrb[0].mxu0
  %v2491 = vpop.f32.mrb[0].mxu0
  %v2492 = vadd.f32 %v484, %v2491
  %v2493 = vpop.f32.mrb[0].mxu0
  %2494 = vmatprep.mubr.bf16.mxu0 %v1464
  %2495 = vmatmul.mubr.bf16.gmra.mrb[0].mxu0 %v1463
  %v2496 = vpop.f32.mrb[0].mxu0
  %v2497 = vadd.f32 %v484, %v2496
  %v2498 = vpop.f32.mrb[0].mxu0
  %v2499 = vpop.f32.mrb[0].mxu0
  %v2500 = vadd.f32 %v484, %v2499
  %v2501 = vpop.f32.mrb[0].mxu0
  %2502 = vmatprep.mubr.bf16.mxu0 %v1473
  %2503 = vmatmul.mubr.bf16.gmra.mrb[0].mxu0 %v1472
  %v2504 = vpop.f32.mrb[0].mxu0
  %v2505 = vadd.f32 %v484, %v2504
  %v2506 = vpop.f32.mrb[0].mxu0
  %v2507 = vpop.f32.mrb[0].mxu0
  %v2508 = vadd.f32 %v484, %v2507
  %v2509 = vpop.f32.mrb[0].mxu0
  %2510 = vmatprep.mubr.bf16.mxu0 %v1482
  %2511 = vmatmul.mubr.bf16.gmra.mrb[0].mxu0 %v1481
  %v2512 = vpop.f32.mrb[0].mxu0
  %v2513 = vadd.f32 %v484, %v2512
  %v2514 = vpop.f32.mrb[0].mxu0
  %v2515 = vpop.f32.mrb[0].mxu0
  %v2516 = vadd.f32 %v484, %v2515
  %v2517 = vpop.f32.mrb[0].mxu0
  %2518 = vmatprep.mubr.bf16.mxu0 %v1491
  %2519 = vmatmul.mubr.bf16.gmra.mrb[0].mxu0 %v1490
  %v2520 = vpop.f32.mrb[0].mxu0
  %v2521 = vadd.f32 %v484, %v2520
  %v2522 = vpop.f32.mrb[0].mxu0
  %v2523 = vpop.f32.mrb[0].mxu0
  %v2524 = vadd.f32 %v484, %v2523
  %v2525 = vpop.f32.mrb[0].mxu0
  %2526 = vmatprep.mubr.bf16.mxu0 %v1500
  %2527 = vmatmul.mubr.bf16.gmra.mrb[0].mxu0 %v1499
  %v2528 = vpop.f32.mrb[0].mxu0
  %v2529 = vadd.f32 %v484, %v2528
  %v2530 = vpop.f32.mrb[0].mxu0
  %v2531 = vpop.f32.mrb[0].mxu0
  %v2532 = vadd.f32 %v484, %v2531
  %v2533 = vpop.f32.mrb[0].mxu0
  %2534 = vmatprep.mubr.bf16.mxu0 %v1509
  %2535 = vmatmul.mubr.bf16.gmra.mrb[0].mxu0 %v1508
  %v2536 = vpop.f32.mrb[0].mxu0
  %v2537 = vadd.f32 %v484, %v2536
  %v2538 = vpop.f32.mrb[0].mxu0
  %v2539 = vpop.f32.mrb[0].mxu0
  %v2540 = vadd.f32 %v484, %v2539
  %v2541 = vpop.f32.mrb[0].mxu0
  %2542 = vmatprep.mubr.bf16.mxu0 %v1518
  %2543 = vmatmul.mubr.bf16.gmra.mrb[0].mxu0 %v1517
  %v2544 = vpop.f32.mrb[0].mxu0
  %v2545 = vadd.f32 %v484, %v2544
  %v2546 = vpop.f32.mrb[0].mxu0
  %v2547 = vpop.f32.mrb[0].mxu0
  %v2548 = vadd.f32 %v484, %v2547
  %v2549 = vpop.f32.mrb[0].mxu0
  %2550 = vmatprep.mubr.bf16.mxu0 %v1527
  %2551 = vmatmul.mubr.bf16.gmra.mrb[0].mxu0 %v1526
  %v2552 = vpop.f32.mrb[0].mxu0
  %v2553 = vadd.f32 %v484, %v2552
  %v2554 = vpop.f32.mrb[0].mxu0
  %v2555 = vpop.f32.mrb[0].mxu0
  %v2556 = vadd.f32 %v484, %v2555
  %v2557 = vpop.f32.mrb[0].mxu0
  %2558 = vmatprep.mubr.bf16.mxu0 %v1536
  %2559 = vmatmul.mubr.bf16.gmra.mrb[0].mxu0 %v1535
  %v2560 = vpop.f32.mrb[0].mxu0
  %v2561 = vadd.f32 %v484, %v2560
  %v2562 = vpop.f32.mrb[0].mxu0
  %v2563 = vpop.f32.mrb[0].mxu0
  %v2564 = vadd.f32 %v484, %v2563
  %v2565 = vpop.f32.mrb[0].mxu0
  %2566 = vmatprep.mubr.bf16.mxu0 %v1545
  %2567 = vmatmul.mubr.bf16.gmra.mrb[0].mxu0 %v1544
  %v2568 = vpop.f32.mrb[0].mxu0
  %v2569 = vadd.f32 %v484, %v2568
  %v2570 = vpop.f32.mrb[0].mxu0
  %v2571 = vpop.f32.mrb[0].mxu0
  %v2572 = vadd.f32 %v484, %v2571
  %v2573 = vpop.f32.mrb[0].mxu0
  %2574 = vmatprep.mubr.bf16.mxu0 %v1554
  %2575 = vmatmul.mubr.bf16.gmra.mrb[0].mxu0 %v1553
  %v2576 = vpop.f32.mrb[0].mxu0
  %v2577 = vadd.f32 %v484, %v2576
  %v2578 = vpop.f32.mrb[0].mxu0
  %v2579 = vpop.f32.mrb[0].mxu0
  %v2580 = vadd.f32 %v484, %v2579
  %v2581 = vpop.f32.mrb[0].mxu0
  %2582 = vmatprep.mubr.bf16.mxu0 %v1563
  %2583 = vmatmul.mubr.bf16.gmra.mrb[0].mxu0 %v1562
  %v2584 = vpop.f32.mrb[0].mxu0
  %v2585 = vadd.f32 %v484, %v2584
  %v2586 = vpop.f32.mrb[0].mxu0
  %v2587 = vpop.f32.mrb[0].mxu0
  %v2588 = vadd.f32 %v484, %v2587
  %v2589 = vpop.f32.mrb[0].mxu0
  %2590 = vmatprep.mubr.bf16.mxu0 %v1572
  %2591 = vmatmul.mubr.bf16.gmra.mrb[0].mxu0 %v1571
  %v2592 = vpop.f32.mrb[0].mxu0
  %v2593 = vadd.f32 %v484, %v2592
  %v2594 = vpop.f32.mrb[0].mxu0
  %v2595 = vpop.f32.mrb[0].mxu0
  %v2596 = vadd.f32 %v484, %v2595
  %v2597 = vpop.f32.mrb[0].mxu0
  %2598 = vmatprep.mubr.bf16.mxu0 %v1581
  %2599 = vmatmul.mubr.bf16.gmra.mrb[0].mxu0 %v1580
  %v2600 = vpop.f32.mrb[0].mxu0
  %v2601 = vadd.f32 %v484, %v2600
  %v2602 = vpop.f32.mrb[0].mxu0
  %v2603 = vpop.f32.mrb[0].mxu0
  %v2604 = vadd.f32 %v484, %v2603
  %v2605 = vpop.f32.mrb[0].mxu0
  %2606 = vmatprep.mubr.bf16.mxu0 %v1590
  %2607 = vmatmul.mubr.bf16.gmra.mrb[0].mxu0 %v1589
  %v2608 = vpop.f32.mrb[0].mxu0
  %v2609 = vadd.f32 %v484, %v2608
  %v2610 = vpop.f32.mrb[0].mxu0
  %v2611 = vpop.f32.mrb[0].mxu0
  %v2612 = vadd.f32 %v484, %v2611
  %v2613 = vpop.f32.mrb[0].mxu0
  %2614 = vmatprep.mubr.bf16.mxu0 %v1599
  %2615 = vmatmul.mubr.bf16.gmra.mrb[0].mxu0 %v1598
  %v2616 = vpop.f32.mrb[0].mxu0
  %v2617 = vadd.f32 %v484, %v2616
  %v2618 = vpop.f32.mrb[0].mxu0
  %v2619 = vpop.f32.mrb[0].mxu0
  %v2620 = vadd.f32 %v484, %v2619
  %v2621 = vpop.f32.mrb[0].mxu0
  %2622 = vmatprep.mubr.bf16.mxu0 %v1608
  %2623 = vmatmul.mubr.bf16.gmra.mrb[0].mxu0 %v1607
  %v2624 = vpop.f32.mrb[0].mxu0
  %v2625 = vadd.f32 %v484, %v2624
  %v2626 = vpop.f32.mrb[0].mxu0
  %v2627 = vpop.f32.mrb[0].mxu0
  %v2628 = vadd.f32 %v484, %v2627
  %v2629 = vpop.f32.mrb[0].mxu0
  %2630 = vmatprep.mubr.bf16.mxu0 %v1617
  %2631 = vmatmul.mubr.bf16.gmra.mrb[0].mxu0 %v1616
  %v2632 = vpop.f32.mrb[0].mxu0
  %v2633 = vadd.f32 %v484, %v2632
  %v2634 = vpop.f32.mrb[0].mxu0
  %v2635 = vpop.f32.mrb[0].mxu0
  %v2636 = vadd.f32 %v484, %v2635
  %v2637 = vpop.f32.mrb[0].mxu0
  %2638 = vmatprep.mubr.bf16.mxu0 %v1626
  %2639 = vmatmul.mubr.bf16.gmra.mrb[0].mxu0 %v1625
  %v2640 = vpop.f32.mrb[0].mxu0
  %v2641 = vadd.f32 %v484, %v2640
  %v2642 = vpop.f32.mrb[0].mxu0
  %v2643 = vpop.f32.mrb[0].mxu0
  %v2644 = vadd.f32 %v484, %v2643
  %v2645 = vpop.f32.mrb[0].mxu0
  %2646 = vmatprep.mubr.bf16.mxu0 %v1635
  %2647 = vmatmul.mubr.bf16.gmra.mrb[0].mxu0 %v1634
  %v2648 = vpop.f32.mrb[0].mxu0
  %v2649 = vadd.f32 %v484, %v2648
  %v2650 = vpop.f32.mrb[0].mxu0
  %v2651 = vpop.f32.mrb[0].mxu0
  %v2652 = vadd.f32 %v484, %v2651
  %v2653 = vpop.f32.mrb[0].mxu0
  %2654 = vmatprep.mubr.bf16.mxu0 %v1644
  %2655 = vmatmul.mubr.bf16.gmra.mrb[0].mxu0 %v1643
  %v2656 = vpop.f32.mrb[0].mxu0
  %v2657 = vadd.f32 %v484, %v2656
  %v2658 = vpop.f32.mrb[0].mxu0
  %v2659 = vpop.f32.mrb[0].mxu0
  %v2660 = vadd.f32 %v484, %v2659
  %v2661 = vpop.f32.mrb[0].mxu0
  %2662 = vmatprep.mubr.bf16.mxu0 %v1653
  %2663 = vmatmul.mubr.bf16.gmra.mrb[0].mxu0 %v1652
  %v2664 = vpop.f32.mrb[0].mxu0
  %v2665 = vadd.f32 %v484, %v2664
  %v2666 = vpop.f32.mrb[0].mxu0
  %v2667 = vpop.f32.mrb[0].mxu0
  %v2668 = vadd.f32 %v484, %v2667
  %v2669 = vpop.f32.mrb[0].mxu0
  %2670 = vmatprep.mubr.bf16.mxu0 %v1662
  %2671 = vmatmul.mubr.bf16.gmra.mrb[0].mxu0 %v1661
  %v2672 = vpop.f32.mrb[0].mxu0
  %v2673 = vadd.f32 %v484, %v2672
  %v2674 = vpop.f32.mrb[0].mxu0
  %v2675 = vpop.f32.mrb[0].mxu0
  %v2676 = vadd.f32 %v484, %v2675
  %v2677 = vpop.f32.mrb[0].mxu0
  %2678 = vdwg.mxu0
  %2679 = vmatprep.subr.bf16.mxu0 0
  %2680 = vmatpush1.bf16.msra.mxu0 %v2262
  %2681 = vmatprep.subr.bf16.mxu0 0
  %2682 = vmatpush1.bf16.msra.mxu0 %v2263
  %2683 = vmatprep.subr.bf16.mxu0 0
  %2684 = vmatpush1.bf16.msra.mxu0 %v2264
  %2685 = vmatprep.subr.bf16.mxu0 0
  %2686 = vmatpush1.bf16.msra.mxu0 %v2265
  %2687 = vmatprep.subr.bf16.mxu0 0
  %2688 = vmatpush1.bf16.msra.mxu0 %v2266
  %2689 = vmatprep.subr.bf16.mxu0 0
  %2690 = vmatpush1.bf16.msra.mxu0 %v2267
  %2691 = vmatprep.subr.bf16.mxu0 0
  %2692 = vmatpush1.bf16.msra.mxu0 %v2268
  %2693 = vmatprep.subr.bf16.mxu0 0
  %2694 = vmatpush1.bf16.msra.mxu0 %v2269
  %2695 = vmatprep.subr.bf16.mxu0 0
  %2696 = vmatpush1.bf16.msra.mxu0 %v2270
  %2697 = vmatprep.subr.bf16.mxu0 0
  %2698 = vmatpush1.bf16.msra.mxu0 %v2271
  %2699 = vmatprep.subr.bf16.mxu0 0
  %2700 = vmatpush1.bf16.msra.mxu0 %v2272
  %2701 = vmatprep.subr.bf16.mxu0 0
  %2702 = vmatpush1.bf16.msra.mxu0 %v2273
  %2703 = vmatprep.subr.bf16.mxu0 0
  %2704 = vmatpush1.bf16.msra.mxu0 %v2274
  %2705 = vmatprep.subr.bf16.mxu0 0
  %2706 = vmatpush1.bf16.msra.mxu0 %v2275
  %2707 = vmatprep.subr.bf16.mxu0 0
  %2708 = vmatpush1.bf16.msra.mxu0 %v2276
  %2709 = vmatprep.subr.bf16.mxu0 0
  %2710 = vmatpush1.bf16.msra.mxu0 %v2277
  %2711 = vmatprep.mubr.bf16.mxu0 %v1385
  %2712 = vmatmul.mubr.bf16.gmra.mrb[0].mxu0 %v1384
  %v2713 = vpop.f32.mrb[0].mxu0
  %v2714 = vadd.f32 %v2425, %v2713
  %v2715 = vpop.f32.mrb[0].mxu0
  %v2716 = vpop.f32.mrb[0].mxu0
  %v2717 = vadd.f32 %v2428, %v2716
  %v2718 = vpop.f32.mrb[0].mxu0
  %2719 = vmatprep.mubr.bf16.mxu0 %v1394
  %2720 = vmatmul.mubr.bf16.gmra.mrb[0].mxu0 %v1393
  %v2721 = vpop.f32.mrb[0].mxu0
  %v2722 = vadd.f32 %v2433, %v2721
  %v2723 = vpop.f32.mrb[0].mxu0
  %v2724 = vpop.f32.mrb[0].mxu0
  %v2725 = vadd.f32 %v2436, %v2724
  %v2726 = vpop.f32.mrb[0].mxu0
  %2727 = vmatprep.mubr.bf16.mxu0 %v1403
  %2728 = vmatmul.mubr.bf16.gmra.mrb[0].mxu0 %v1402
  %v2729 = vpop.f32.mrb[0].mxu0
  %v2730 = vadd.f32 %v2441, %v2729
  %v2731 = vpop.f32.mrb[0].mxu0
  %v2732 = vpop.f32.mrb[0].mxu0
  %v2733 = vadd.f32 %v2444, %v2732
  %v2734 = vpop.f32.mrb[0].mxu0
  %2735 = vmatprep.mubr.bf16.mxu0 %v1412
  %2736 = vmatmul.mubr.bf16.gmra.mrb[0].mxu0 %v1411
  %v2737 = vpop.f32.mrb[0].mxu0
  %v2738 = vadd.f32 %v2449, %v2737
  %v2739 = vpop.f32.mrb[0].mxu0
  %v2740 = vpop.f32.mrb[0].mxu0
  %v2741 = vadd.f32 %v2452, %v2740
  %v2742 = vpop.f32.mrb[0].mxu0
  %2743 = vmatprep.mubr.bf16.mxu0 %v1421
  %2744 = vmatmul.mubr.bf16.gmra.mrb[0].mxu0 %v1420
  %v2745 = vpop.f32.mrb[0].mxu0
  %v2746 = vadd.f32 %v2457, %v2745
  %v2747 = vpop.f32.mrb[0].mxu0
  %v2748 = vpop.f32.mrb[0].mxu0
  %v2749 = vadd.f32 %v2460, %v2748
  %v2750 = vpop.f32.mrb[0].mxu0
  %2751 = vmatprep.mubr.bf16.mxu0 %v1430
  %2752 = vmatmul.mubr.bf16.gmra.mrb[0].mxu0 %v1429
  %v2753 = vpop.f32.mrb[0].mxu0
  %v2754 = vadd.f32 %v2465, %v2753
  %v2755 = vpop.f32.mrb[0].mxu0
  %v2756 = vpop.f32.mrb[0].mxu0
  %v2757 = vadd.f32 %v2468, %v2756
  %v2758 = vpop.f32.mrb[0].mxu0
  %2759 = vmatprep.mubr.bf16.mxu0 %v1439
  %2760 = vmatmul.mubr.bf16.gmra.mrb[0].mxu0 %v1438
  %v2761 = vpop.f32.mrb[0].mxu0
  %v2762 = vadd.f32 %v2473, %v2761
  %v2763 = vpop.f32.mrb[0].mxu0
  %v2764 = vpop.f32.mrb[0].mxu0
  %v2765 = vadd.f32 %v2476, %v2764
  %v2766 = vpop.f32.mrb[0].mxu0
  %2767 = vmatprep.mubr.bf16.mxu0 %v1448
  %2768 = vmatmul.mubr.bf16.gmra.mrb[0].mxu0 %v1447
  %v2769 = vpop.f32.mrb[0].mxu0
  %v2770 = vadd.f32 %v2481, %v2769
  %v2771 = vpop.f32.mrb[0].mxu0
  %v2772 = vpop.f32.mrb[0].mxu0
  %v2773 = vadd.f32 %v2484, %v2772
  %v2774 = vpop.f32.mrb[0].mxu0
  %2775 = vmatprep.mubr.bf16.mxu0 %v1457
  %2776 = vmatmul.mubr.bf16.gmra.mrb[0].mxu0 %v1456
  %v2777 = vpop.f32.mrb[0].mxu0
  %v2778 = vadd.f32 %v2489, %v2777
  %v2779 = vpop.f32.mrb[0].mxu0
  %v2780 = vpop.f32.mrb[0].mxu0
  %v2781 = vadd.f32 %v2492, %v2780
  %v2782 = vpop.f32.mrb[0].mxu0
  %2783 = vmatprep.mubr.bf16.mxu0 %v1466
  %2784 = vmatmul.mubr.bf16.gmra.mrb[0].mxu0 %v1465
  %v2785 = vpop.f32.mrb[0].mxu0
  %v2786 = vadd.f32 %v2497, %v2785
  %v2787 = vpop.f32.mrb[0].mxu0
  %v2788 = vpop.f32.mrb[0].mxu0
  %v2789 = vadd.f32 %v2500, %v2788
  %v2790 = vpop.f32.mrb[0].mxu0
  %2791 = vmatprep.mubr.bf16.mxu0 %v1475
  %2792 = vmatmul.mubr.bf16.gmra.mrb[0].mxu0 %v1474
  %v2793 = vpop.f32.mrb[0].mxu0
  %v2794 = vadd.f32 %v2505, %v2793
  %v2795 = vpop.f32.mrb[0].mxu0
  %v2796 = vpop.f32.mrb[0].mxu0
  %v2797 = vadd.f32 %v2508, %v2796
  %v2798 = vpop.f32.mrb[0].mxu0
  %2799 = vmatprep.mubr.bf16.mxu0 %v1484
  %2800 = vmatmul.mubr.bf16.gmra.mrb[0].mxu0 %v1483
  %v2801 = vpop.f32.mrb[0].mxu0
  %v2802 = vadd.f32 %v2513, %v2801
  %v2803 = vpop.f32.mrb[0].mxu0
  %v2804 = vpop.f32.mrb[0].mxu0
  %v2805 = vadd.f32 %v2516, %v2804
  %v2806 = vpop.f32.mrb[0].mxu0
  %2807 = vmatprep.mubr.bf16.mxu0 %v1493
  %2808 = vmatmul.mubr.bf16.gmra.mrb[0].mxu0 %v1492
  %v2809 = vpop.f32.mrb[0].mxu0
  %v2810 = vadd.f32 %v2521, %v2809
  %v2811 = vpop.f32.mrb[0].mxu0
  %v2812 = vpop.f32.mrb[0].mxu0
  %v2813 = vadd.f32 %v2524, %v2812
  %v2814 = vpop.f32.mrb[0].mxu0
  %2815 = vmatprep.mubr.bf16.mxu0 %v1502
  %2816 = vmatmul.mubr.bf16.gmra.mrb[0].mxu0 %v1501
  %v2817 = vpop.f32.mrb[0].mxu0
  %v2818 = vadd.f32 %v2529, %v2817
  %v2819 = vpop.f32.mrb[0].mxu0
  %v2820 = vpop.f32.mrb[0].mxu0
  %v2821 = vadd.f32 %v2532, %v2820
  %v2822 = vpop.f32.mrb[0].mxu0
  %2823 = vmatprep.mubr.bf16.mxu0 %v1511
  %2824 = vmatmul.mubr.bf16.gmra.mrb[0].mxu0 %v1510
  %v2825 = vpop.f32.mrb[0].mxu0
  %v2826 = vadd.f32 %v2537, %v2825
  %v2827 = vpop.f32.mrb[0].mxu0
  %v2828 = vpop.f32.mrb[0].mxu0
  %v2829 = vadd.f32 %v2540, %v2828
  %v2830 = vpop.f32.mrb[0].mxu0
  %2831 = vmatprep.mubr.bf16.mxu0 %v1520
  %2832 = vmatmul.mubr.bf16.gmra.mrb[0].mxu0 %v1519
  %v2833 = vpop.f32.mrb[0].mxu0
  %v2834 = vadd.f32 %v2545, %v2833
  %v2835 = vpop.f32.mrb[0].mxu0
  %v2836 = vpop.f32.mrb[0].mxu0
  %v2837 = vadd.f32 %v2548, %v2836
  %v2838 = vpop.f32.mrb[0].mxu0
  %2839 = vmatprep.mubr.bf16.mxu0 %v1529
  %2840 = vmatmul.mubr.bf16.gmra.mrb[0].mxu0 %v1528
  %v2841 = vpop.f32.mrb[0].mxu0
  %v2842 = vadd.f32 %v2553, %v2841
  %v2843 = vpop.f32.mrb[0].mxu0
  %v2844 = vpop.f32.mrb[0].mxu0
  %v2845 = vadd.f32 %v2556, %v2844
  %v2846 = vpop.f32.mrb[0].mxu0
  %2847 = vmatprep.mubr.bf16.mxu0 %v1538
  %2848 = vmatmul.mubr.bf16.gmra.mrb[0].mxu0 %v1537
  %v2849 = vpop.f32.mrb[0].mxu0
  %v2850 = vadd.f32 %v2561, %v2849
  %v2851 = vpop.f32.mrb[0].mxu0
  %v2852 = vpop.f32.mrb[0].mxu0
  %v2853 = vadd.f32 %v2564, %v2852
  %v2854 = vpop.f32.mrb[0].mxu0
  %2855 = vmatprep.mubr.bf16.mxu0 %v1547
  %2856 = vmatmul.mubr.bf16.gmra.mrb[0].mxu0 %v1546
  %v2857 = vpop.f32.mrb[0].mxu0
  %v2858 = vadd.f32 %v2569, %v2857
  %v2859 = vpop.f32.mrb[0].mxu0
  %v2860 = vpop.f32.mrb[0].mxu0
  %v2861 = vadd.f32 %v2572, %v2860
  %v2862 = vpop.f32.mrb[0].mxu0
  %2863 = vmatprep.mubr.bf16.mxu0 %v1556
  %2864 = vmatmul.mubr.bf16.gmra.mrb[0].mxu0 %v1555
  %v2865 = vpop.f32.mrb[0].mxu0
  %v2866 = vadd.f32 %v2577, %v2865
  %v2867 = vpop.f32.mrb[0].mxu0
  %v2868 = vpop.f32.mrb[0].mxu0
  %v2869 = vadd.f32 %v2580, %v2868
  %v2870 = vpop.f32.mrb[0].mxu0
  %2871 = vmatprep.mubr.bf16.mxu0 %v1565
  %2872 = vmatmul.mubr.bf16.gmra.mrb[0].mxu0 %v1564
  %v2873 = vpop.f32.mrb[0].mxu0
  %v2874 = vadd.f32 %v2585, %v2873
  %v2875 = vpop.f32.mrb[0].mxu0
  %v2876 = vpop.f32.mrb[0].mxu0
  %v2877 = vadd.f32 %v2588, %v2876
  %v2878 = vpop.f32.mrb[0].mxu0
  %2879 = vmatprep.mubr.bf16.mxu0 %v1574
  %2880 = vmatmul.mubr.bf16.gmra.mrb[0].mxu0 %v1573
  %v2881 = vpop.f32.mrb[0].mxu0
  %v2882 = vadd.f32 %v2593, %v2881
  %v2883 = vpop.f32.mrb[0].mxu0
  %v2884 = vpop.f32.mrb[0].mxu0
  %v2885 = vadd.f32 %v2596, %v2884
  %v2886 = vpop.f32.mrb[0].mxu0
  %2887 = vmatprep.mubr.bf16.mxu0 %v1583
  %2888 = vmatmul.mubr.bf16.gmra.mrb[0].mxu0 %v1582
  %v2889 = vpop.f32.mrb[0].mxu0
  %v2890 = vadd.f32 %v2601, %v2889
  %v2891 = vpop.f32.mrb[0].mxu0
  %v2892 = vpop.f32.mrb[0].mxu0
  %v2893 = vadd.f32 %v2604, %v2892
  %v2894 = vpop.f32.mrb[0].mxu0
  %2895 = vmatprep.mubr.bf16.mxu0 %v1592
  %2896 = vmatmul.mubr.bf16.gmra.mrb[0].mxu0 %v1591
  %v2897 = vpop.f32.mrb[0].mxu0
  %v2898 = vadd.f32 %v2609, %v2897
  %v2899 = vpop.f32.mrb[0].mxu0
  %v2900 = vpop.f32.mrb[0].mxu0
  %v2901 = vadd.f32 %v2612, %v2900
  %v2902 = vpop.f32.mrb[0].mxu0
  %2903 = vmatprep.mubr.bf16.mxu0 %v1601
  %2904 = vmatmul.mubr.bf16.gmra.mrb[0].mxu0 %v1600
  %v2905 = vpop.f32.mrb[0].mxu0
  %v2906 = vadd.f32 %v2617, %v2905
  %v2907 = vpop.f32.mrb[0].mxu0
  %v2908 = vpop.f32.mrb[0].mxu0
  %v2909 = vadd.f32 %v2620, %v2908
  %v2910 = vpop.f32.mrb[0].mxu0
  %2911 = vmatprep.mubr.bf16.mxu0 %v1610
  %2912 = vmatmul.mubr.bf16.gmra.mrb[0].mxu0 %v1609
  %v2913 = vpop.f32.mrb[0].mxu0
  %v2914 = vadd.f32 %v2625, %v2913
  %v2915 = vpop.f32.mrb[0].mxu0
  %v2916 = vpop.f32.mrb[0].mxu0
  %v2917 = vadd.f32 %v2628, %v2916
  %v2918 = vpop.f32.mrb[0].mxu0
  %2919 = vmatprep.mubr.bf16.mxu0 %v1619
  %2920 = vmatmul.mubr.bf16.gmra.mrb[0].mxu0 %v1618
  %v2921 = vpop.f32.mrb[0].mxu0
  %v2922 = vadd.f32 %v2633, %v2921
  %v2923 = vpop.f32.mrb[0].mxu0
  %v2924 = vpop.f32.mrb[0].mxu0
  %v2925 = vadd.f32 %v2636, %v2924
  %v2926 = vpop.f32.mrb[0].mxu0
  %2927 = vmatprep.mubr.bf16.mxu0 %v1628
  %2928 = vmatmul.mubr.bf16.gmra.mrb[0].mxu0 %v1627
  %v2929 = vpop.f32.mrb[0].mxu0
  %v2930 = vadd.f32 %v2641, %v2929
  %v2931 = vpop.f32.mrb[0].mxu0
  %v2932 = vpop.f32.mrb[0].mxu0
  %v2933 = vadd.f32 %v2644, %v2932
  %v2934 = vpop.f32.mrb[0].mxu0
  %2935 = vmatprep.mubr.bf16.mxu0 %v1637
  %2936 = vmatmul.mubr.bf16.gmra.mrb[0].mxu0 %v1636
  %v2937 = vpop.f32.mrb[0].mxu0
  %v2938 = vadd.f32 %v2649, %v2937
  %v2939 = vpop.f32.mrb[0].mxu0
  %v2940 = vpop.f32.mrb[0].mxu0
  %v2941 = vadd.f32 %v2652, %v2940
  %v2942 = vpop.f32.mrb[0].mxu0
  %2943 = vmatprep.mubr.bf16.mxu0 %v1646
  %2944 = vmatmul.mubr.bf16.gmra.mrb[0].mxu0 %v1645
  %v2945 = vpop.f32.mrb[0].mxu0
  %v2946 = vadd.f32 %v2657, %v2945
  %v2947 = vpop.f32.mrb[0].mxu0
  %v2948 = vpop.f32.mrb[0].mxu0
  %v2949 = vadd.f32 %v2660, %v2948
  %v2950 = vpop.f32.mrb[0].mxu0
  %2951 = vmatprep.mubr.bf16.mxu0 %v1655
  %2952 = vmatmul.mubr.bf16.gmra.mrb[0].mxu0 %v1654
  %v2953 = vpop.f32.mrb[0].mxu0
  %v2954 = vadd.f32 %v2665, %v2953
  %v2955 = vpop.f32.mrb[0].mxu0
  %v2956 = vpop.f32.mrb[0].mxu0
  %v2957 = vadd.f32 %v2668, %v2956
  %v2958 = vpop.f32.mrb[0].mxu0
  %2959 = vmatprep.mubr.bf16.mxu0 %v1664
  %2960 = vmatmul.mubr.bf16.gmra.mrb[0].mxu0 %v1663
  %v2961 = vpop.f32.mrb[0].mxu0
  %v2962 = vadd.f32 %v2673, %v2961
  %v2963 = vpop.f32.mrb[0].mxu0
  %v2964 = vpop.f32.mrb[0].mxu0
  %v2965 = vadd.f32 %v2676, %v2964
  %v2966 = vpop.f32.mrb[0].mxu0
  %2967 = vdwg.mxu0
  %2968 = vmatprep.subr.bf16.mxu0 0
  %2969 = vmatpush1.bf16.msra.mxu0 %v2278
  %2970 = vmatprep.subr.bf16.mxu0 0
  %2971 = vmatpush1.bf16.msra.mxu0 %v2279
  %2972 = vmatprep.subr.bf16.mxu0 0
  %2973 = vmatpush1.bf16.msra.mxu0 %v2280
  %2974 = vmatprep.subr.bf16.mxu0 0
  %2975 = vmatpush1.bf16.msra.mxu0 %v2281
  %2976 = vmatprep.subr.bf16.mxu0 0
  %2977 = vmatpush1.bf16.msra.mxu0 %v2282
  %2978 = vmatprep.subr.bf16.mxu0 0
  %2979 = vmatpush1.bf16.msra.mxu0 %v2283
  %2980 = vmatprep.subr.bf16.mxu0 0
  %2981 = vmatpush1.bf16.msra.mxu0 %v2284
  %2982 = vmatprep.subr.bf16.mxu0 0
  %2983 = vmatpush1.bf16.msra.mxu0 %v2285
  %2984 = vmatprep.subr.bf16.mxu0 0
  %2985 = vmatpush1.bf16.msra.mxu0 %v2286
  %2986 = vmatprep.subr.bf16.mxu0 0
  %2987 = vmatpush1.bf16.msra.mxu0 %v2287
  %2988 = vmatprep.subr.bf16.mxu0 0
  %2989 = vmatpush1.bf16.msra.mxu0 %v2288
  %2990 = vmatprep.subr.bf16.mxu0 0
  %2991 = vmatpush1.bf16.msra.mxu0 %v2289
  %2992 = vmatprep.subr.bf16.mxu0 0
  %2993 = vmatpush1.bf16.msra.mxu0 %v2290
  %2994 = vmatprep.subr.bf16.mxu0 0
  %2995 = vmatpush1.bf16.msra.mxu0 %v2291
  %2996 = vmatprep.subr.bf16.mxu0 0
  %2997 = vmatpush1.bf16.msra.mxu0 %v2292
  %2998 = vmatprep.subr.bf16.mxu0 0
  %2999 = vmatpush1.bf16.msra.mxu0 %v2293
  %3000 = vmatprep.mubr.bf16.mxu0 %v1387
  %3001 = vmatmul.mubr.bf16.gmra.mrb[0].mxu0 %v1386
  %v3002 = vpop.f32.mrb[0].mxu0
  %v3003 = vadd.f32 %v2714, %v3002
  %v3004 = vpop.f32.mrb[0].mxu0
  %v3005 = vpop.f32.mrb[0].mxu0
  %v3006 = vadd.f32 %v2717, %v3005
  %v3007 = vpop.f32.mrb[0].mxu0
  %3008 = vmatprep.mubr.bf16.mxu0 %v1396
  %3009 = vmatmul.mubr.bf16.gmra.mrb[0].mxu0 %v1395
  %v3010 = vpop.f32.mrb[0].mxu0
  %v3011 = vadd.f32 %v2722, %v3010
  %v3012 = vpop.f32.mrb[0].mxu0
  %v3013 = vpop.f32.mrb[0].mxu0
  %v3014 = vadd.f32 %v2725, %v3013
  %v3015 = vpop.f32.mrb[0].mxu0
  %3016 = vmatprep.mubr.bf16.mxu0 %v1405
  %3017 = vmatmul.mubr.bf16.gmra.mrb[0].mxu0 %v1404
  %v3018 = vpop.f32.mrb[0].mxu0
  %v3019 = vadd.f32 %v2730, %v3018
  %v3020 = vpop.f32.mrb[0].mxu0
  %v3021 = vpop.f32.mrb[0].mxu0
  %v3022 = vadd.f32 %v2733, %v3021
  %v3023 = vpop.f32.mrb[0].mxu0
  %3024 = vmatprep.mubr.bf16.mxu0 %v1414
  %3025 = vmatmul.mubr.bf16.gmra.mrb[0].mxu0 %v1413
  %v3026 = vpop.f32.mrb[0].mxu0
  %v3027 = vadd.f32 %v2738, %v3026
  %v3028 = vpop.f32.mrb[0].mxu0
  %v3029 = vpop.f32.mrb[0].mxu0
  %v3030 = vadd.f32 %v2741, %v3029
  %v3031 = vpop.f32.mrb[0].mxu0
  %3032 = vmatprep.mubr.bf16.mxu0 %v1423
  %3033 = vmatmul.mubr.bf16.gmra.mrb[0].mxu0 %v1422
  %v3034 = vpop.f32.mrb[0].mxu0
  %v3035 = vadd.f32 %v2746, %v3034
  %v3036 = vpop.f32.mrb[0].mxu0
  %v3037 = vpop.f32.mrb[0].mxu0
  %v3038 = vadd.f32 %v2749, %v3037
  %v3039 = vpop.f32.mrb[0].mxu0
  %3040 = vmatprep.mubr.bf16.mxu0 %v1432
  %3041 = vmatmul.mubr.bf16.gmra.mrb[0].mxu0 %v1431
  %v3042 = vpop.f32.mrb[0].mxu0
  %v3043 = vadd.f32 %v2754, %v3042
  %v3044 = vpop.f32.mrb[0].mxu0
  %v3045 = vpop.f32.mrb[0].mxu0
  %v3046 = vadd.f32 %v2757, %v3045
  %v3047 = vpop.f32.mrb[0].mxu0
  %3048 = vmatprep.mubr.bf16.mxu0 %v1441
  %3049 = vmatmul.mubr.bf16.gmra.mrb[0].mxu0 %v1440
  %v3050 = vpop.f32.mrb[0].mxu0
  %v3051 = vadd.f32 %v2762, %v3050
  %v3052 = vpop.f32.mrb[0].mxu0
  %v3053 = vpop.f32.mrb[0].mxu0
  %v3054 = vadd.f32 %v2765, %v3053
  %v3055 = vpop.f32.mrb[0].mxu0
  %3056 = vmatprep.mubr.bf16.mxu0 %v1450
  %3057 = vmatmul.mubr.bf16.gmra.mrb[0].mxu0 %v1449
  %v3058 = vpop.f32.mrb[0].mxu0
  %v3059 = vadd.f32 %v2770, %v3058
  %v3060 = vpop.f32.mrb[0].mxu0
  %v3061 = vpop.f32.mrb[0].mxu0
  %v3062 = vadd.f32 %v2773, %v3061
  %v3063 = vpop.f32.mrb[0].mxu0
  %3064 = vmatprep.mubr.bf16.mxu0 %v1459
  %3065 = vmatmul.mubr.bf16.gmra.mrb[0].mxu0 %v1458
  %v3066 = vpop.f32.mrb[0].mxu0
  %v3067 = vadd.f32 %v2778, %v3066
  %v3068 = vpop.f32.mrb[0].mxu0
  %v3069 = vpop.f32.mrb[0].mxu0
  %v3070 = vadd.f32 %v2781, %v3069
  %v3071 = vpop.f32.mrb[0].mxu0
  %3072 = vmatprep.mubr.bf16.mxu0 %v1468
  %3073 = vmatmul.mubr.bf16.gmra.mrb[0].mxu0 %v1467
  %v3074 = vpop.f32.mrb[0].mxu0
  %v3075 = vadd.f32 %v2786, %v3074
  %v3076 = vpop.f32.mrb[0].mxu0
  %v3077 = vpop.f32.mrb[0].mxu0
  %v3078 = vadd.f32 %v2789, %v3077
  %v3079 = vpop.f32.mrb[0].mxu0
  %3080 = vmatprep.mubr.bf16.mxu0 %v1477
  %3081 = vmatmul.mubr.bf16.gmra.mrb[0].mxu0 %v1476
  %v3082 = vpop.f32.mrb[0].mxu0
  %v3083 = vadd.f32 %v2794, %v3082
  %v3084 = vpop.f32.mrb[0].mxu0
  %v3085 = vpop.f32.mrb[0].mxu0
  %v3086 = vadd.f32 %v2797, %v3085
  %v3087 = vpop.f32.mrb[0].mxu0
  %3088 = vmatprep.mubr.bf16.mxu0 %v1486
  %3089 = vmatmul.mubr.bf16.gmra.mrb[0].mxu0 %v1485
  %v3090 = vpop.f32.mrb[0].mxu0
  %v3091 = vadd.f32 %v2802, %v3090
  %v3092 = vpop.f32.mrb[0].mxu0
  %v3093 = vpop.f32.mrb[0].mxu0
  %v3094 = vadd.f32 %v2805, %v3093
  %v3095 = vpop.f32.mrb[0].mxu0
  %3096 = vmatprep.mubr.bf16.mxu0 %v1495
  %3097 = vmatmul.mubr.bf16.gmra.mrb[0].mxu0 %v1494
  %v3098 = vpop.f32.mrb[0].mxu0
  %v3099 = vadd.f32 %v2810, %v3098
  %v3100 = vpop.f32.mrb[0].mxu0
  %v3101 = vpop.f32.mrb[0].mxu0
  %v3102 = vadd.f32 %v2813, %v3101
  %v3103 = vpop.f32.mrb[0].mxu0
  %3104 = vmatprep.mubr.bf16.mxu0 %v1504
  %3105 = vmatmul.mubr.bf16.gmra.mrb[0].mxu0 %v1503
  %v3106 = vpop.f32.mrb[0].mxu0
  %v3107 = vadd.f32 %v2818, %v3106
  %v3108 = vpop.f32.mrb[0].mxu0
  %v3109 = vpop.f32.mrb[0].mxu0
  %v3110 = vadd.f32 %v2821, %v3109
  %v3111 = vpop.f32.mrb[0].mxu0
  %3112 = vmatprep.mubr.bf16.mxu0 %v1513
  %3113 = vmatmul.mubr.bf16.gmra.mrb[0].mxu0 %v1512
  %v3114 = vpop.f32.mrb[0].mxu0
  %v3115 = vadd.f32 %v2826, %v3114
  %v3116 = vpop.f32.mrb[0].mxu0
  %v3117 = vpop.f32.mrb[0].mxu0
  %v3118 = vadd.f32 %v2829, %v3117
  %v3119 = vpop.f32.mrb[0].mxu0
  %3120 = vmatprep.mubr.bf16.mxu0 %v1522
  %3121 = vmatmul.mubr.bf16.gmra.mrb[0].mxu0 %v1521
  %v3122 = vpop.f32.mrb[0].mxu0
  %v3123 = vadd.f32 %v2834, %v3122
  %v3124 = vpop.f32.mrb[0].mxu0
  %v3125 = vpop.f32.mrb[0].mxu0
  %v3126 = vadd.f32 %v2837, %v3125
  %v3127 = vpop.f32.mrb[0].mxu0
  %3128 = vmatprep.mubr.bf16.mxu0 %v1531
  %3129 = vmatmul.mubr.bf16.gmra.mrb[0].mxu0 %v1530
  %v3130 = vpop.f32.mrb[0].mxu0
  %v3131 = vadd.f32 %v2842, %v3130
  %v3132 = vpop.f32.mrb[0].mxu0
  %v3133 = vpop.f32.mrb[0].mxu0
  %v3134 = vadd.f32 %v2845, %v3133
  %v3135 = vpop.f32.mrb[0].mxu0
  %3136 = vmatprep.mubr.bf16.mxu0 %v1540
  %3137 = vmatmul.mubr.bf16.gmra.mrb[0].mxu0 %v1539
  %v3138 = vpop.f32.mrb[0].mxu0
  %v3139 = vadd.f32 %v2850, %v3138
  %v3140 = vpop.f32.mrb[0].mxu0
  %v3141 = vpop.f32.mrb[0].mxu0
  %v3142 = vadd.f32 %v2853, %v3141
  %v3143 = vpop.f32.mrb[0].mxu0
  %3144 = vmatprep.mubr.bf16.mxu0 %v1549
  %3145 = vmatmul.mubr.bf16.gmra.mrb[0].mxu0 %v1548
  %v3146 = vpop.f32.mrb[0].mxu0
  %v3147 = vadd.f32 %v2858, %v3146
  %v3148 = vpop.f32.mrb[0].mxu0
  %v3149 = vpop.f32.mrb[0].mxu0
  %v3150 = vadd.f32 %v2861, %v3149
  %v3151 = vpop.f32.mrb[0].mxu0
  %3152 = vmatprep.mubr.bf16.mxu0 %v1558
  %3153 = vmatmul.mubr.bf16.gmra.mrb[0].mxu0 %v1557
  %v3154 = vpop.f32.mrb[0].mxu0
  %v3155 = vadd.f32 %v2866, %v3154
  %v3156 = vpop.f32.mrb[0].mxu0
  %v3157 = vpop.f32.mrb[0].mxu0
  %v3158 = vadd.f32 %v2869, %v3157
  %v3159 = vpop.f32.mrb[0].mxu0
  %3160 = vmatprep.mubr.bf16.mxu0 %v1567
  %3161 = vmatmul.mubr.bf16.gmra.mrb[0].mxu0 %v1566
  %v3162 = vpop.f32.mrb[0].mxu0
  %v3163 = vadd.f32 %v2874, %v3162
  %v3164 = vpop.f32.mrb[0].mxu0
  %v3165 = vpop.f32.mrb[0].mxu0
  %v3166 = vadd.f32 %v2877, %v3165
  %v3167 = vpop.f32.mrb[0].mxu0
  %3168 = vmatprep.mubr.bf16.mxu0 %v1576
  %3169 = vmatmul.mubr.bf16.gmra.mrb[0].mxu0 %v1575
  %v3170 = vpop.f32.mrb[0].mxu0
  %v3171 = vadd.f32 %v2882, %v3170
  %v3172 = vpop.f32.mrb[0].mxu0
  %v3173 = vpop.f32.mrb[0].mxu0
  %v3174 = vadd.f32 %v2885, %v3173
  %v3175 = vpop.f32.mrb[0].mxu0
  %3176 = vmatprep.mubr.bf16.mxu0 %v1585
  %3177 = vmatmul.mubr.bf16.gmra.mrb[0].mxu0 %v1584
  %v3178 = vpop.f32.mrb[0].mxu0
  %v3179 = vadd.f32 %v2890, %v3178
  %v3180 = vpop.f32.mrb[0].mxu0
  %v3181 = vpop.f32.mrb[0].mxu0
  %v3182 = vadd.f32 %v2893, %v3181
  %v3183 = vpop.f32.mrb[0].mxu0
  %3184 = vmatprep.mubr.bf16.mxu0 %v1594
  %3185 = vmatmul.mubr.bf16.gmra.mrb[0].mxu0 %v1593
  %v3186 = vpop.f32.mrb[0].mxu0
  %v3187 = vadd.f32 %v2898, %v3186
  %v3188 = vpop.f32.mrb[0].mxu0
  %v3189 = vpop.f32.mrb[0].mxu0
  %v3190 = vadd.f32 %v2901, %v3189
  %v3191 = vpop.f32.mrb[0].mxu0
  %3192 = vmatprep.mubr.bf16.mxu0 %v1603
  %3193 = vmatmul.mubr.bf16.gmra.mrb[0].mxu0 %v1602
  %v3194 = vpop.f32.mrb[0].mxu0
  %v3195 = vadd.f32 %v2906, %v3194
  %v3196 = vpop.f32.mrb[0].mxu0
  %v3197 = vpop.f32.mrb[0].mxu0
  %v3198 = vadd.f32 %v2909, %v3197
  %v3199 = vpop.f32.mrb[0].mxu0
  %3200 = vmatprep.mubr.bf16.mxu0 %v1612
  %3201 = vmatmul.mubr.bf16.gmra.mrb[0].mxu0 %v1611
  %v3202 = vpop.f32.mrb[0].mxu0
  %v3203 = vadd.f32 %v2914, %v3202
  %v3204 = vpop.f32.mrb[0].mxu0
  %v3205 = vpop.f32.mrb[0].mxu0
  %v3206 = vadd.f32 %v2917, %v3205
  %v3207 = vpop.f32.mrb[0].mxu0
  %3208 = vmatprep.mubr.bf16.mxu0 %v1621
  %3209 = vmatmul.mubr.bf16.gmra.mrb[0].mxu0 %v1620
  %v3210 = vpop.f32.mrb[0].mxu0
  %v3211 = vadd.f32 %v2922, %v3210
  %v3212 = vpop.f32.mrb[0].mxu0
  %v3213 = vpop.f32.mrb[0].mxu0
  %v3214 = vadd.f32 %v2925, %v3213
  %v3215 = vpop.f32.mrb[0].mxu0
  %3216 = vmatprep.mubr.bf16.mxu0 %v1630
  %3217 = vmatmul.mubr.bf16.gmra.mrb[0].mxu0 %v1629
  %v3218 = vpop.f32.mrb[0].mxu0
  %v3219 = vadd.f32 %v2930, %v3218
  %v3220 = vpop.f32.mrb[0].mxu0
  %v3221 = vpop.f32.mrb[0].mxu0
  %v3222 = vadd.f32 %v2933, %v3221
  %v3223 = vpop.f32.mrb[0].mxu0
  %3224 = vmatprep.mubr.bf16.mxu0 %v1639
  %3225 = vmatmul.mubr.bf16.gmra.mrb[0].mxu0 %v1638
  %v3226 = vpop.f32.mrb[0].mxu0
  %v3227 = vadd.f32 %v2938, %v3226
  %v3228 = vpop.f32.mrb[0].mxu0
  %v3229 = vpop.f32.mrb[0].mxu0
  %v3230 = vadd.f32 %v2941, %v3229
  %v3231 = vpop.f32.mrb[0].mxu0
  %3232 = vmatprep.mubr.bf16.mxu0 %v1648
  %3233 = vmatmul.mubr.bf16.gmra.mrb[0].mxu0 %v1647
  %v3234 = vpop.f32.mrb[0].mxu0
  %v3235 = vadd.f32 %v2946, %v3234
  %v3236 = vpop.f32.mrb[0].mxu0
  %v3237 = vpop.f32.mrb[0].mxu0
  %v3238 = vadd.f32 %v2949, %v3237
  %v3239 = vpop.f32.mrb[0].mxu0
  %3240 = vmatprep.mubr.bf16.mxu0 %v1657
  %3241 = vmatmul.mubr.bf16.gmra.mrb[0].mxu0 %v1656
  %v3242 = vpop.f32.mrb[0].mxu0
  %v3243 = vadd.f32 %v2954, %v3242
  %v3244 = vpop.f32.mrb[0].mxu0
  %v3245 = vpop.f32.mrb[0].mxu0
  %v3246 = vadd.f32 %v2957, %v3245
  %v3247 = vpop.f32.mrb[0].mxu0
  %3248 = vmatprep.mubr.bf16.mxu0 %v1666
  %3249 = vmatmul.mubr.bf16.gmra.mrb[0].mxu0 %v1665
  %v3250 = vpop.f32.mrb[0].mxu0
  %v3251 = vadd.f32 %v2962, %v3250
  %v3252 = vpop.f32.mrb[0].mxu0
  %v3253 = vpop.f32.mrb[0].mxu0
  %v3254 = vadd.f32 %v2965, %v3253
  %v3255 = vpop.f32.mrb[0].mxu0
  %3256 = vdwg.mxu0
  %3257 = vmatprep.subr.bf16.mxu0 0
  %3258 = vmatpush1.bf16.msra.mxu0 %v2294
  %3259 = vmatprep.subr.bf16.mxu0 0
  %3260 = vmatpush1.bf16.msra.mxu0 %v2295
  %3261 = vmatprep.subr.bf16.mxu0 0
  %3262 = vmatpush1.bf16.msra.mxu0 %v2296
  %3263 = vmatprep.subr.bf16.mxu0 0
  %3264 = vmatpush1.bf16.msra.mxu0 %v2297
  %3265 = vmatprep.subr.bf16.mxu0 0
  %3266 = vmatpush1.bf16.msra.mxu0 %v2298
  %3267 = vmatprep.subr.bf16.mxu0 0
  %3268 = vmatpush1.bf16.msra.mxu0 %v2299
  %3269 = vmatprep.subr.bf16.mxu0 0
  %3270 = vmatpush1.bf16.msra.mxu0 %v2300
  %3271 = vmatprep.subr.bf16.mxu0 0
  %3272 = vmatpush1.bf16.msra.mxu0 %v2301
  %3273 = vmatprep.subr.bf16.mxu0 0
  %3274 = vmatpush1.bf16.msra.mxu0 %v2302
  %3275 = vmatprep.subr.bf16.mxu0 0
  %3276 = vmatpush1.bf16.msra.mxu0 %v2303
  %3277 = vmatprep.subr.bf16.mxu0 0
  %3278 = vmatpush1.bf16.msra.mxu0 %v2304
  %3279 = vmatprep.subr.bf16.mxu0 0
  %3280 = vmatpush1.bf16.msra.mxu0 %v2305
  %3281 = vmatprep.subr.bf16.mxu0 0
  %3282 = vmatpush1.bf16.msra.mxu0 %v2306
  %3283 = vmatprep.subr.bf16.mxu0 0
  %3284 = vmatpush1.bf16.msra.mxu0 %v2307
  %3285 = vmatprep.subr.bf16.mxu0 0
  %3286 = vmatpush1.bf16.msra.mxu0 %v2308
  %3287 = vmatprep.subr.bf16.mxu0 0
  %3288 = vmatpush1.bf16.msra.mxu0 %v2309
  %3289 = vmatprep.mubr.bf16.mxu0 %v1389
  %3290 = vmatmul.mubr.bf16.gmra.mrb[0].mxu0 %v1388
  %v3291 = vpop.f32.mrb[0].mxu0
  %v3292 = vadd.f32 %v3003, %v3291
  %v3293 = vpop.f32.mrb[0].mxu0
  %v3294 = vpop.f32.mrb[0].mxu0
  %v3295 = vadd.f32 %v3006, %v3294
  %v3296 = vpop.f32.mrb[0].mxu0
  %3297 = vmatprep.mubr.bf16.mxu0 %v1398
  %3298 = vmatmul.mubr.bf16.gmra.mrb[0].mxu0 %v1397
  %v3299 = vpop.f32.mrb[0].mxu0
  %v3300 = vadd.f32 %v3011, %v3299
  %v3301 = vpop.f32.mrb[0].mxu0
  %v3302 = vpop.f32.mrb[0].mxu0
  %v3303 = vadd.f32 %v3014, %v3302
  %v3304 = vpop.f32.mrb[0].mxu0
  %3305 = vmatprep.mubr.bf16.mxu0 %v1407
  %3306 = vmatmul.mubr.bf16.gmra.mrb[0].mxu0 %v1406
  %v3307 = vpop.f32.mrb[0].mxu0
  %v3308 = vadd.f32 %v3019, %v3307
  %v3309 = vpop.f32.mrb[0].mxu0
  %v3310 = vpop.f32.mrb[0].mxu0
  %v3311 = vadd.f32 %v3022, %v3310
  %v3312 = vpop.f32.mrb[0].mxu0
  %3313 = vmatprep.mubr.bf16.mxu0 %v1416
  %3314 = vmatmul.mubr.bf16.gmra.mrb[0].mxu0 %v1415
  %v3315 = vpop.f32.mrb[0].mxu0
  %v3316 = vadd.f32 %v3027, %v3315
  %v3317 = vpop.f32.mrb[0].mxu0
  %v3318 = vpop.f32.mrb[0].mxu0
  %v3319 = vadd.f32 %v3030, %v3318
  %v3320 = vpop.f32.mrb[0].mxu0
  %3321 = vmatprep.mubr.bf16.mxu0 %v1425
  %3322 = vmatmul.mubr.bf16.gmra.mrb[0].mxu0 %v1424
  %v3323 = vpop.f32.mrb[0].mxu0
  %v3324 = vadd.f32 %v3035, %v3323
  %v3325 = vpop.f32.mrb[0].mxu0
  %v3326 = vpop.f32.mrb[0].mxu0
  %v3327 = vadd.f32 %v3038, %v3326
  %v3328 = vpop.f32.mrb[0].mxu0
  %3329 = vmatprep.mubr.bf16.mxu0 %v1434
  %3330 = vmatmul.mubr.bf16.gmra.mrb[0].mxu0 %v1433
  %v3331 = vpop.f32.mrb[0].mxu0
  %v3332 = vadd.f32 %v3043, %v3331
  %v3333 = vpop.f32.mrb[0].mxu0
  %v3334 = vpop.f32.mrb[0].mxu0
  %v3335 = vadd.f32 %v3046, %v3334
  %v3336 = vpop.f32.mrb[0].mxu0
  %3337 = vmatprep.mubr.bf16.mxu0 %v1443
  %3338 = vmatmul.mubr.bf16.gmra.mrb[0].mxu0 %v1442
  %v3339 = vpop.f32.mrb[0].mxu0
  %v3340 = vadd.f32 %v3051, %v3339
  %v3341 = vpop.f32.mrb[0].mxu0
  %v3342 = vpop.f32.mrb[0].mxu0
  %v3343 = vadd.f32 %v3054, %v3342
  %v3344 = vpop.f32.mrb[0].mxu0
  %3345 = vmatprep.mubr.bf16.mxu0 %v1452
  %3346 = vmatmul.mubr.bf16.gmra.mrb[0].mxu0 %v1451
  %v3347 = vpop.f32.mrb[0].mxu0
  %v3348 = vadd.f32 %v3059, %v3347
  %v3349 = vpop.f32.mrb[0].mxu0
  %v3350 = vpop.f32.mrb[0].mxu0
  %v3351 = vadd.f32 %v3062, %v3350
  %v3352 = vpop.f32.mrb[0].mxu0
  %3353 = vmatprep.mubr.bf16.mxu0 %v1461
  %3354 = vmatmul.mubr.bf16.gmra.mrb[0].mxu0 %v1460
  %v3355 = vpop.f32.mrb[0].mxu0
  %v3356 = vadd.f32 %v3067, %v3355
  %v3357 = vpop.f32.mrb[0].mxu0
  %v3358 = vpop.f32.mrb[0].mxu0
  %v3359 = vadd.f32 %v3070, %v3358
  %v3360 = vpop.f32.mrb[0].mxu0
  %3361 = vmatprep.mubr.bf16.mxu0 %v1470
  %3362 = vmatmul.mubr.bf16.gmra.mrb[0].mxu0 %v1469
  %v3363 = vpop.f32.mrb[0].mxu0
  %v3364 = vadd.f32 %v3075, %v3363
  %v3365 = vpop.f32.mrb[0].mxu0
  %v3366 = vpop.f32.mrb[0].mxu0
  %v3367 = vadd.f32 %v3078, %v3366
  %v3368 = vpop.f32.mrb[0].mxu0
  %3369 = vmatprep.mubr.bf16.mxu0 %v1479
  %3370 = vmatmul.mubr.bf16.gmra.mrb[0].mxu0 %v1478
  %v3371 = vpop.f32.mrb[0].mxu0
  %v3372 = vadd.f32 %v3083, %v3371
  %v3373 = vpop.f32.mrb[0].mxu0
  %v3374 = vpop.f32.mrb[0].mxu0
  %v3375 = vadd.f32 %v3086, %v3374
  %v3376 = vpop.f32.mrb[0].mxu0
  %3377 = vmatprep.mubr.bf16.mxu0 %v1488
  %3378 = vmatmul.mubr.bf16.gmra.mrb[0].mxu0 %v1487
  %v3379 = vpop.f32.mrb[0].mxu0
  %v3380 = vadd.f32 %v3091, %v3379
  %v3381 = vpop.f32.mrb[0].mxu0
  %v3382 = vpop.f32.mrb[0].mxu0
  %v3383 = vadd.f32 %v3094, %v3382
  %v3384 = vpop.f32.mrb[0].mxu0
  %3385 = vmatprep.mubr.bf16.mxu0 %v1497
  %3386 = vmatmul.mubr.bf16.gmra.mrb[0].mxu0 %v1496
  %v3387 = vpop.f32.mrb[0].mxu0
  %v3388 = vadd.f32 %v3099, %v3387
  %v3389 = vpop.f32.mrb[0].mxu0
  %v3390 = vpop.f32.mrb[0].mxu0
  %v3391 = vadd.f32 %v3102, %v3390
  %v3392 = vpop.f32.mrb[0].mxu0
  %3393 = vmatprep.mubr.bf16.mxu0 %v1506
  %3394 = vmatmul.mubr.bf16.gmra.mrb[0].mxu0 %v1505
  %v3395 = vpop.f32.mrb[0].mxu0
  %v3396 = vadd.f32 %v3107, %v3395
  %v3397 = vpop.f32.mrb[0].mxu0
  %v3398 = vpop.f32.mrb[0].mxu0
  %v3399 = vadd.f32 %v3110, %v3398
  %v3400 = vpop.f32.mrb[0].mxu0
  %3401 = vmatprep.mubr.bf16.mxu0 %v1515
  %3402 = vmatmul.mubr.bf16.gmra.mrb[0].mxu0 %v1514
  %v3403 = vpop.f32.mrb[0].mxu0
  %v3404 = vadd.f32 %v3115, %v3403
  %v3405 = vpop.f32.mrb[0].mxu0
  %v3406 = vpop.f32.mrb[0].mxu0
  %v3407 = vadd.f32 %v3118, %v3406
  %v3408 = vpop.f32.mrb[0].mxu0
  %3409 = vmatprep.mubr.bf16.mxu0 %v1524
  %3410 = vmatmul.mubr.bf16.gmra.mrb[0].mxu0 %v1523
  %v3411 = vpop.f32.mrb[0].mxu0
  %v3412 = vadd.f32 %v3123, %v3411
  %v3413 = vpop.f32.mrb[0].mxu0
  %v3414 = vpop.f32.mrb[0].mxu0
  %v3415 = vadd.f32 %v3126, %v3414
  %v3416 = vpop.f32.mrb[0].mxu0
  %3417 = vmatprep.mubr.bf16.mxu0 %v1533
  %3418 = vmatmul.mubr.bf16.gmra.mrb[0].mxu0 %v1532
  %v3419 = vpop.f32.mrb[0].mxu0
  %v3420 = vadd.f32 %v3131, %v3419
  %v3421 = vpop.f32.mrb[0].mxu0
  %v3422 = vpop.f32.mrb[0].mxu0
  %v3423 = vadd.f32 %v3134, %v3422
  %v3424 = vpop.f32.mrb[0].mxu0
  %3425 = vmatprep.mubr.bf16.mxu0 %v1542
  %3426 = vmatmul.mubr.bf16.gmra.mrb[0].mxu0 %v1541
  %v3427 = vpop.f32.mrb[0].mxu0
  %v3428 = vadd.f32 %v3139, %v3427
  %v3429 = vpop.f32.mrb[0].mxu0
  %v3430 = vpop.f32.mrb[0].mxu0
  %v3431 = vadd.f32 %v3142, %v3430
  %v3432 = vpop.f32.mrb[0].mxu0
  %3433 = vmatprep.mubr.bf16.mxu0 %v1551
  %3434 = vmatmul.mubr.bf16.gmra.mrb[0].mxu0 %v1550
  %v3435 = vpop.f32.mrb[0].mxu0
  %v3436 = vadd.f32 %v3147, %v3435
  %v3437 = vpop.f32.mrb[0].mxu0
  %v3438 = vpop.f32.mrb[0].mxu0
  %v3439 = vadd.f32 %v3150, %v3438
  %v3440 = vpop.f32.mrb[0].mxu0
  %3441 = vmatprep.mubr.bf16.mxu0 %v1560
  %3442 = vmatmul.mubr.bf16.gmra.mrb[0].mxu0 %v1559
  %v3443 = vpop.f32.mrb[0].mxu0
  %v3444 = vadd.f32 %v3155, %v3443
  %v3445 = vpop.f32.mrb[0].mxu0
  %v3446 = vpop.f32.mrb[0].mxu0
  %v3447 = vadd.f32 %v3158, %v3446
  %v3448 = vpop.f32.mrb[0].mxu0
  %3449 = vmatprep.mubr.bf16.mxu0 %v1569
  %3450 = vmatmul.mubr.bf16.gmra.mrb[0].mxu0 %v1568
  %v3451 = vpop.f32.mrb[0].mxu0
  %v3452 = vadd.f32 %v3163, %v3451
  %v3453 = vpop.f32.mrb[0].mxu0
  %v3454 = vpop.f32.mrb[0].mxu0
  %v3455 = vadd.f32 %v3166, %v3454
  %v3456 = vpop.f32.mrb[0].mxu0
  %3457 = vmatprep.mubr.bf16.mxu0 %v1578
  %3458 = vmatmul.mubr.bf16.gmra.mrb[0].mxu0 %v1577
  %v3459 = vpop.f32.mrb[0].mxu0
  %v3460 = vadd.f32 %v3171, %v3459
  %v3461 = vpop.f32.mrb[0].mxu0
  %v3462 = vpop.f32.mrb[0].mxu0
  %v3463 = vadd.f32 %v3174, %v3462
  %v3464 = vpop.f32.mrb[0].mxu0
  %3465 = vmatprep.mubr.bf16.mxu0 %v1587
  %3466 = vmatmul.mubr.bf16.gmra.mrb[0].mxu0 %v1586
  %v3467 = vpop.f32.mrb[0].mxu0
  %v3468 = vadd.f32 %v3179, %v3467
  %v3469 = vpop.f32.mrb[0].mxu0
  %v3470 = vpop.f32.mrb[0].mxu0
  %v3471 = vadd.f32 %v3182, %v3470
  %v3472 = vpop.f32.mrb[0].mxu0
  %3473 = vmatprep.mubr.bf16.mxu0 %v1596
  %3474 = vmatmul.mubr.bf16.gmra.mrb[0].mxu0 %v1595
  %v3475 = vpop.f32.mrb[0].mxu0
  %v3476 = vadd.f32 %v3187, %v3475
  %v3477 = vpop.f32.mrb[0].mxu0
  %v3478 = vpop.f32.mrb[0].mxu0
  %v3479 = vadd.f32 %v3190, %v3478
  %v3480 = vpop.f32.mrb[0].mxu0
  %3481 = vmatprep.mubr.bf16.mxu0 %v1605
  %3482 = vmatmul.mubr.bf16.gmra.mrb[0].mxu0 %v1604
  %v3483 = vpop.f32.mrb[0].mxu0
  %v3484 = vadd.f32 %v3195, %v3483
  %v3485 = vpop.f32.mrb[0].mxu0
  %v3486 = vpop.f32.mrb[0].mxu0
  %v3487 = vadd.f32 %v3198, %v3486
  %v3488 = vpop.f32.mrb[0].mxu0
  %3489 = vmatprep.mubr.bf16.mxu0 %v1614
  %3490 = vmatmul.mubr.bf16.gmra.mrb[0].mxu0 %v1613
  %v3491 = vpop.f32.mrb[0].mxu0
  %v3492 = vadd.f32 %v3203, %v3491
  %v3493 = vpop.f32.mrb[0].mxu0
  %v3494 = vpop.f32.mrb[0].mxu0
  %v3495 = vadd.f32 %v3206, %v3494
  %v3496 = vpop.f32.mrb[0].mxu0
  %3497 = vmatprep.mubr.bf16.mxu0 %v1623
  %3498 = vmatmul.mubr.bf16.gmra.mrb[0].mxu0 %v1622
  %v3499 = vpop.f32.mrb[0].mxu0
  %v3500 = vadd.f32 %v3211, %v3499
  %v3501 = vpop.f32.mrb[0].mxu0
  %v3502 = vpop.f32.mrb[0].mxu0
  %v3503 = vadd.f32 %v3214, %v3502
  %v3504 = vpop.f32.mrb[0].mxu0
  %3505 = vmatprep.mubr.bf16.mxu0 %v1632
  %3506 = vmatmul.mubr.bf16.gmra.mrb[0].mxu0 %v1631
  %v3507 = vpop.f32.mrb[0].mxu0
  %v3508 = vadd.f32 %v3219, %v3507
  %v3509 = vpop.f32.mrb[0].mxu0
  %v3510 = vpop.f32.mrb[0].mxu0
  %v3511 = vadd.f32 %v3222, %v3510
  %v3512 = vpop.f32.mrb[0].mxu0
  %3513 = vmatprep.mubr.bf16.mxu0 %v1641
  %3514 = vmatmul.mubr.bf16.gmra.mrb[0].mxu0 %v1640
  %v3515 = vpop.f32.mrb[0].mxu0
  %v3516 = vadd.f32 %v3227, %v3515
  %v3517 = vpop.f32.mrb[0].mxu0
  %v3518 = vpop.f32.mrb[0].mxu0
  %v3519 = vadd.f32 %v3230, %v3518
  %v3520 = vpop.f32.mrb[0].mxu0
  %3521 = vmatprep.mubr.bf16.mxu0 %v1650
  %3522 = vmatmul.mubr.bf16.gmra.mrb[0].mxu0 %v1649
  %v3523 = vpop.f32.mrb[0].mxu0
  %v3524 = vadd.f32 %v3235, %v3523
  %v3525 = vpop.f32.mrb[0].mxu0
  %v3526 = vpop.f32.mrb[0].mxu0
  %v3527 = vadd.f32 %v3238, %v3526
  %v3528 = vpop.f32.mrb[0].mxu0
  %3529 = vmatprep.mubr.bf16.mxu0 %v1659
  %3530 = vmatmul.mubr.bf16.gmra.mrb[0].mxu0 %v1658
  %v3531 = vpop.f32.mrb[0].mxu0
  %v3532 = vadd.f32 %v3243, %v3531
  %v3533 = vpop.f32.mrb[0].mxu0
  %v3534 = vpop.f32.mrb[0].mxu0
  %v3535 = vadd.f32 %v3246, %v3534
  %v3536 = vpop.f32.mrb[0].mxu0
  %3537 = vmatprep.mubr.bf16.mxu0 %v1668
  %3538 = vmatmul.mubr.bf16.gmra.mrb[0].mxu0 %v1667
  %v3539 = vpop.f32.mrb[0].mxu0
  %v3540 = vadd.f32 %v3251, %v3539
  %v3541 = vpop.f32.mrb[0].mxu0
  %v3542 = vpop.f32.mrb[0].mxu0
  %v3543 = vadd.f32 %v3254, %v3542
  %v3544 = vpop.f32.mrb[0].mxu0
  %3545 = vdwg.mxu0
  %3546 = vmatprep.subr.bf16.mxu0 0
  %3547 = vmatpush1.bf16.msra.mxu0 %v2310
  %3548 = vmatprep.subr.bf16.mxu0 0
  %3549 = vmatpush1.bf16.msra.mxu0 %v2311
  %3550 = vmatprep.subr.bf16.mxu0 0
  %3551 = vmatpush1.bf16.msra.mxu0 %v2312
  %3552 = vmatprep.subr.bf16.mxu0 0
  %3553 = vmatpush1.bf16.msra.mxu0 %v2313
  %3554 = vmatprep.subr.bf16.mxu0 0
  %3555 = vmatpush1.bf16.msra.mxu0 %v2314
  %3556 = vmatprep.subr.bf16.mxu0 0
  %3557 = vmatpush1.bf16.msra.mxu0 %v2315
  %3558 = vmatprep.subr.bf16.mxu0 0
  %3559 = vmatpush1.bf16.msra.mxu0 %v2316
  %3560 = vmatprep.subr.bf16.mxu0 0
  %3561 = vmatpush1.bf16.msra.mxu0 %v2317
  %3562 = vmatprep.subr.bf16.mxu0 0
  %3563 = vmatpush1.bf16.msra.mxu0 0
  %3564 = vmatprep.subr.bf16.mxu0 0
  %3565 = vmatpush1.bf16.msra.mxu0 0
  %3566 = vmatprep.subr.bf16.mxu0 0
  %3567 = vmatpush1.bf16.msra.mxu0 0
  %3568 = vmatprep.subr.bf16.mxu0 0
  %3569 = vmatpush1.bf16.msra.mxu0 0
  %3570 = vmatprep.subr.bf16.mxu0 0
  %3571 = vmatpush1.bf16.msra.mxu0 0
  %3572 = vmatprep.subr.bf16.mxu0 0
  %3573 = vmatpush1.bf16.msra.mxu0 0
  %3574 = vmatprep.subr.bf16.mxu0 0
  %3575 = vmatpush1.bf16.msra.mxu0 0
  %3576 = vmatprep.subr.bf16.mxu0 0
  %3577 = vmatpush1.bf16.msra.mxu0 0
  %3578 = vmatprep.mubr.bf16.mxu0 0
  %3579 = vmatmul.mubr.bf16.gmra.mrb[0].mxu0 %v1390
  %v3580 = vpop.f32.mrb[0].mxu0
  %v3581 = vadd.f32 %v3292, %v3580
  %v3582 = vpop.f32.mrb[0].mxu0
  %v3583 = vpop.f32.mrb[0].mxu0
  %v3584 = vadd.f32 %v3295, %v3583
  %v3585 = vpop.f32.mrb[0].mxu0
  %3586 = vmatprep.mubr.bf16.mxu0 0
  %3587 = vmatmul.mubr.bf16.gmra.mrb[0].mxu0 %v1399
  %v3588 = vpop.f32.mrb[0].mxu0
  %v3589 = vadd.f32 %v3300, %v3588
  %v3590 = vpop.f32.mrb[0].mxu0
  %v3591 = vpop.f32.mrb[0].mxu0
  %v3592 = vadd.f32 %v3303, %v3591
  %v3593 = vpop.f32.mrb[0].mxu0
  %3594 = vmatprep.mubr.bf16.mxu0 0
  %3595 = vmatmul.mubr.bf16.gmra.mrb[0].mxu0 %v1408
  %v3596 = vpop.f32.mrb[0].mxu0
  %v3597 = vadd.f32 %v3308, %v3596
  %v3598 = vpop.f32.mrb[0].mxu0
  %v3599 = vpop.f32.mrb[0].mxu0
  %v3600 = vadd.f32 %v3311, %v3599
  %v3601 = vpop.f32.mrb[0].mxu0
  %3602 = vmatprep.mubr.bf16.mxu0 0
  %3603 = vmatmul.mubr.bf16.gmra.mrb[0].mxu0 %v1417
  %v3604 = vpop.f32.mrb[0].mxu0
  %v3605 = vadd.f32 %v3316, %v3604
  %v3606 = vpop.f32.mrb[0].mxu0
  %v3607 = vpop.f32.mrb[0].mxu0
  %v3608 = vadd.f32 %v3319, %v3607
  %v3609 = vpop.f32.mrb[0].mxu0
  %3610 = vmatprep.mubr.bf16.mxu0 0
  %3611 = vmatmul.mubr.bf16.gmra.mrb[0].mxu0 %v1426
  %v3612 = vpop.f32.mrb[0].mxu0
  %v3613 = vadd.f32 %v3324, %v3612
  %v3614 = vpop.f32.mrb[0].mxu0
  %v3615 = vpop.f32.mrb[0].mxu0
  %v3616 = vadd.f32 %v3327, %v3615
  %v3617 = vpop.f32.mrb[0].mxu0
  %3618 = vmatprep.mubr.bf16.mxu0 0
  %3619 = vmatmul.mubr.bf16.gmra.mrb[0].mxu0 %v1435
  %v3620 = vpop.f32.mrb[0].mxu0
  %v3621 = vadd.f32 %v3332, %v3620
  %v3622 = vpop.f32.mrb[0].mxu0
  %v3623 = vpop.f32.mrb[0].mxu0
  %v3624 = vadd.f32 %v3335, %v3623
  %v3625 = vpop.f32.mrb[0].mxu0
  %3626 = vmatprep.mubr.bf16.mxu0 0
  %3627 = vmatmul.mubr.bf16.gmra.mrb[0].mxu0 %v1444
  %v3628 = vpop.f32.mrb[0].mxu0
  %v3629 = vadd.f32 %v3340, %v3628
  %v3630 = vpop.f32.mrb[0].mxu0
  %v3631 = vpop.f32.mrb[0].mxu0
  %v3632 = vadd.f32 %v3343, %v3631
  %v3633 = vpop.f32.mrb[0].mxu0
  %3634 = vmatprep.mubr.bf16.mxu0 0
  %3635 = vmatmul.mubr.bf16.gmra.mrb[0].mxu0 %v1453
  %v3636 = vpop.f32.mrb[0].mxu0
  %v3637 = vadd.f32 %v3348, %v3636
  %v3638 = vpop.f32.mrb[0].mxu0
  %v3639 = vpop.f32.mrb[0].mxu0
  %v3640 = vadd.f32 %v3351, %v3639
  %v3641 = vpop.f32.mrb[0].mxu0
  %3642 = vmatprep.mubr.bf16.mxu0 0
  %3643 = vmatmul.mubr.bf16.gmra.mrb[0].mxu0 %v1462
  %v3644 = vpop.f32.mrb[0].mxu0
  %v3645 = vadd.f32 %v3356, %v3644
  %v3646 = vpop.f32.mrb[0].mxu0
  %v3647 = vpop.f32.mrb[0].mxu0
  %v3648 = vadd.f32 %v3359, %v3647
  %v3649 = vpop.f32.mrb[0].mxu0
  %3650 = vmatprep.mubr.bf16.mxu0 0
  %3651 = vmatmul.mubr.bf16.gmra.mrb[0].mxu0 %v1471
  %v3652 = vpop.f32.mrb[0].mxu0
  %v3653 = vadd.f32 %v3364, %v3652
  %v3654 = vpop.f32.mrb[0].mxu0
  %v3655 = vpop.f32.mrb[0].mxu0
  %v3656 = vadd.f32 %v3367, %v3655
  %v3657 = vpop.f32.mrb[0].mxu0
  %3658 = vmatprep.mubr.bf16.mxu0 0
  %3659 = vmatmul.mubr.bf16.gmra.mrb[0].mxu0 %v1480
  %v3660 = vpop.f32.mrb[0].mxu0
  %v3661 = vadd.f32 %v3372, %v3660
  %v3662 = vpop.f32.mrb[0].mxu0
  %v3663 = vpop.f32.mrb[0].mxu0
  %v3664 = vadd.f32 %v3375, %v3663
  %v3665 = vpop.f32.mrb[0].mxu0
  %3666 = vmatprep.mubr.bf16.mxu0 0
  %3667 = vmatmul.mubr.bf16.gmra.mrb[0].mxu0 %v1489
  %v3668 = vpop.f32.mrb[0].mxu0
  %v3669 = vadd.f32 %v3380, %v3668
  %v3670 = vpop.f32.mrb[0].mxu0
  %v3671 = vpop.f32.mrb[0].mxu0
  %v3672 = vadd.f32 %v3383, %v3671
  %v3673 = vpop.f32.mrb[0].mxu0
  %3674 = vmatprep.mubr.bf16.mxu0 0
  %3675 = vmatmul.mubr.bf16.gmra.mrb[0].mxu0 %v1498
  %v3676 = vpop.f32.mrb[0].mxu0
  %v3677 = vadd.f32 %v3388, %v3676
  %v3678 = vpop.f32.mrb[0].mxu0
  %v3679 = vpop.f32.mrb[0].mxu0
  %v3680 = vadd.f32 %v3391, %v3679
  %v3681 = vpop.f32.mrb[0].mxu0
  %3682 = vmatprep.mubr.bf16.mxu0 0
  %3683 = vmatmul.mubr.bf16.gmra.mrb[0].mxu0 %v1507
  %v3684 = vpop.f32.mrb[0].mxu0
  %v3685 = vadd.f32 %v3396, %v3684
  %v3686 = vpop.f32.mrb[0].mxu0
  %v3687 = vpop.f32.mrb[0].mxu0
  %v3688 = vadd.f32 %v3399, %v3687
  %v3689 = vpop.f32.mrb[0].mxu0
  %3690 = vmatprep.mubr.bf16.mxu0 0
  %3691 = vmatmul.mubr.bf16.gmra.mrb[0].mxu0 %v1516
  %v3692 = vpop.f32.mrb[0].mxu0
  %v3693 = vadd.f32 %v3404, %v3692
  %v3694 = vpop.f32.mrb[0].mxu0
  %v3695 = vpop.f32.mrb[0].mxu0
  %v3696 = vadd.f32 %v3407, %v3695
  %v3697 = vpop.f32.mrb[0].mxu0
  %3698 = vmatprep.mubr.bf16.mxu0 0
  %3699 = vmatmul.mubr.bf16.gmra.mrb[0].mxu0 %v1525
  %v3700 = vpop.f32.mrb[0].mxu0
  %v3701 = vadd.f32 %v3412, %v3700
  %v3702 = vpop.f32.mrb[0].mxu0
  %v3703 = vpop.f32.mrb[0].mxu0
  %v3704 = vadd.f32 %v3415, %v3703
  %v3705 = vpop.f32.mrb[0].mxu0
  %3706 = vmatprep.mubr.bf16.mxu0 0
  %3707 = vmatmul.mubr.bf16.gmra.mrb[0].mxu0 %v1534
  %v3708 = vpop.f32.mrb[0].mxu0
  %v3709 = vadd.f32 %v3420, %v3708
  %v3710 = vpop.f32.mrb[0].mxu0
  %v3711 = vpop.f32.mrb[0].mxu0
  %v3712 = vadd.f32 %v3423, %v3711
  %v3713 = vpop.f32.mrb[0].mxu0
  %3714 = vmatprep.mubr.bf16.mxu0 0
  %3715 = vmatmul.mubr.bf16.gmra.mrb[0].mxu0 %v1543
  %v3716 = vpop.f32.mrb[0].mxu0
  %v3717 = vadd.f32 %v3428, %v3716
  %v3718 = vpop.f32.mrb[0].mxu0
  %v3719 = vpop.f32.mrb[0].mxu0
  %v3720 = vadd.f32 %v3431, %v3719
  %v3721 = vpop.f32.mrb[0].mxu0
  %3722 = vmatprep.mubr.bf16.mxu0 0
  %3723 = vmatmul.mubr.bf16.gmra.mrb[0].mxu0 %v1552
  %v3724 = vpop.f32.mrb[0].mxu0
  %v3725 = vadd.f32 %v3436, %v3724
  %v3726 = vpop.f32.mrb[0].mxu0
  %v3727 = vpop.f32.mrb[0].mxu0
  %v3728 = vadd.f32 %v3439, %v3727
  %v3729 = vpop.f32.mrb[0].mxu0
  %3730 = vmatprep.mubr.bf16.mxu0 0
  %3731 = vmatmul.mubr.bf16.gmra.mrb[0].mxu0 %v1561
  %v3732 = vpop.f32.mrb[0].mxu0
  %v3733 = vadd.f32 %v3444, %v3732
  %v3734 = vpop.f32.mrb[0].mxu0
  %v3735 = vpop.f32.mrb[0].mxu0
  %v3736 = vadd.f32 %v3447, %v3735
  %v3737 = vpop.f32.mrb[0].mxu0
  %3738 = vmatprep.mubr.bf16.mxu0 0
  %3739 = vmatmul.mubr.bf16.gmra.mrb[0].mxu0 %v1570
  %v3740 = vpop.f32.mrb[0].mxu0
  %v3741 = vadd.f32 %v3452, %v3740
  %v3742 = vpop.f32.mrb[0].mxu0
  %v3743 = vpop.f32.mrb[0].mxu0
  %v3744 = vadd.f32 %v3455, %v3743
  %v3745 = vpop.f32.mrb[0].mxu0
  %3746 = vmatprep.mubr.bf16.mxu0 0
  %3747 = vmatmul.mubr.bf16.gmra.mrb[0].mxu0 %v1579
  %v3748 = vpop.f32.mrb[0].mxu0
  %v3749 = vadd.f32 %v3460, %v3748
  %v3750 = vpop.f32.mrb[0].mxu0
  %v3751 = vpop.f32.mrb[0].mxu0
  %v3752 = vadd.f32 %v3463, %v3751
  %v3753 = vpop.f32.mrb[0].mxu0
  %3754 = vmatprep.mubr.bf16.mxu0 0
  %3755 = vmatmul.mubr.bf16.gmra.mrb[0].mxu0 %v1588
  %v3756 = vpop.f32.mrb[0].mxu0
  %v3757 = vadd.f32 %v3468, %v3756
  %v3758 = vpop.f32.mrb[0].mxu0
  %v3759 = vpop.f32.mrb[0].mxu0
  %v3760 = vadd.f32 %v3471, %v3759
  %v3761 = vpop.f32.mrb[0].mxu0
  %3762 = vmatprep.mubr.bf16.mxu0 0
  %3763 = vmatmul.mubr.bf16.gmra.mrb[0].mxu0 %v1597
  %v3764 = vpop.f32.mrb[0].mxu0
  %v3765 = vadd.f32 %v3476, %v3764
  %v3766 = vpop.f32.mrb[0].mxu0
  %v3767 = vpop.f32.mrb[0].mxu0
  %v3768 = vadd.f32 %v3479, %v3767
  %v3769 = vpop.f32.mrb[0].mxu0
  %3770 = vmatprep.mubr.bf16.mxu0 0
  %3771 = vmatmul.mubr.bf16.gmra.mrb[0].mxu0 %v1606
  %v3772 = vpop.f32.mrb[0].mxu0
  %v3773 = vadd.f32 %v3484, %v3772
  %v3774 = vpop.f32.mrb[0].mxu0
  %v3775 = vpop.f32.mrb[0].mxu0
  %v3776 = vadd.f32 %v3487, %v3775
  %v3777 = vpop.f32.mrb[0].mxu0
  %3778 = vmatprep.mubr.bf16.mxu0 0
  %3779 = vmatmul.mubr.bf16.gmra.mrb[0].mxu0 %v1615
  %v3780 = vpop.f32.mrb[0].mxu0
  %v3781 = vadd.f32 %v3492, %v3780
  %v3782 = vpop.f32.mrb[0].mxu0
  %v3783 = vpop.f32.mrb[0].mxu0
  %v3784 = vadd.f32 %v3495, %v3783
  %v3785 = vpop.f32.mrb[0].mxu0
  %3786 = vmatprep.mubr.bf16.mxu0 0
  %3787 = vmatmul.mubr.bf16.gmra.mrb[0].mxu0 %v1624
  %v3788 = vpop.f32.mrb[0].mxu0
  %v3789 = vadd.f32 %v3500, %v3788
  %v3790 = vpop.f32.mrb[0].mxu0
  %v3791 = vpop.f32.mrb[0].mxu0
  %v3792 = vadd.f32 %v3503, %v3791
  %v3793 = vpop.f32.mrb[0].mxu0
  %3794 = vmatprep.mubr.bf16.mxu0 0
  %3795 = vmatmul.mubr.bf16.gmra.mrb[0].mxu0 %v1633
  %v3796 = vpop.f32.mrb[0].mxu0
  %v3797 = vadd.f32 %v3508, %v3796
  %v3798 = vpop.f32.mrb[0].mxu0
  %v3799 = vpop.f32.mrb[0].mxu0
  %v3800 = vadd.f32 %v3511, %v3799
  %v3801 = vpop.f32.mrb[0].mxu0
  %3802 = vmatprep.mubr.bf16.mxu0 0
  %3803 = vmatmul.mubr.bf16.gmra.mrb[0].mxu0 %v1642
  %v3804 = vpop.f32.mrb[0].mxu0
  %v3805 = vadd.f32 %v3516, %v3804
  %v3806 = vpop.f32.mrb[0].mxu0
  %v3807 = vpop.f32.mrb[0].mxu0
  %v3808 = vadd.f32 %v3519, %v3807
  %v3809 = vpop.f32.mrb[0].mxu0
  %3810 = vmatprep.mubr.bf16.mxu0 0
  %3811 = vmatmul.mubr.bf16.gmra.mrb[0].mxu0 %v1651
  %v3812 = vpop.f32.mrb[0].mxu0
  %v3813 = vadd.f32 %v3524, %v3812
  %v3814 = vpop.f32.mrb[0].mxu0
  %v3815 = vpop.f32.mrb[0].mxu0
  %v3816 = vadd.f32 %v3527, %v3815
  %v3817 = vpop.f32.mrb[0].mxu0
  %3818 = vmatprep.mubr.bf16.mxu0 0
  %3819 = vmatmul.mubr.bf16.gmra.mrb[0].mxu0 %v1660
  %v3820 = vpop.f32.mrb[0].mxu0
  %v3821 = vadd.f32 %v3532, %v3820
  %v3822 = vpop.f32.mrb[0].mxu0
  %v3823 = vpop.f32.mrb[0].mxu0
  %v3824 = vadd.f32 %v3535, %v3823
  %v3825 = vpop.f32.mrb[0].mxu0
  %3826 = vmatprep.mubr.bf16.mxu0 0
  %3827 = vmatmul.mubr.bf16.gmra.mrb[0].mxu0 %v1669
  %v3828 = vpop.f32.mrb[0].mxu0
  %v3829 = vadd.f32 %v3540, %v3828
  %v3830 = vpop.f32.mrb[0].mxu0
  %v3831 = vpop.f32.mrb[0].mxu0
  %v3832 = vadd.f32 %v3543, %v3831
  %v3833 = vpop.f32.mrb[0].mxu0
  %3834 = vdwg.mxu0
  %v3835 = vtanh.pop %v3581
  %v3836 = vtanh.pop %v3584
  %v3837 = vtanh.pop %v3589
  %v3838 = vtanh.pop %v3592
  %v3839 = vtanh.pop %v3597
  %v3840 = vtanh.pop %v3600
  %v3841 = vtanh.pop %v3605
  %v3842 = vtanh.pop %v3608
  %v3843 = vtanh.pop %v3613
  %v3844 = vtanh.pop %v3616
  %v3845 = vtanh.pop %v3621
  %v3846 = vtanh.pop %v3624
  %v3847 = vtanh.pop %v3629
  %v3848 = vtanh.pop %v3632
  %v3849 = vtanh.pop %v3637
  %v3850 = vtanh.pop %v3640
  %v3851 = vtanh.pop %v3645
  %v3852 = vtanh.pop %v3648
  %v3853 = vtanh.pop %v3653
  %v3854 = vtanh.pop %v3656
  %v3855 = vtanh.pop %v3661
  %v3856 = vtanh.pop %v3664
  %v3857 = vtanh.pop %v3669
  %v3858 = vtanh.pop %v3672
  %v3859 = vtanh.pop %v3677
  %v3860 = vtanh.pop %v3680
  %v3861 = vtanh.pop %v3685
  %v3862 = vtanh.pop %v3688
  %v3863 = vtanh.pop %v3693
  %v3864 = vtanh.pop %v3696
  %v3865 = vtanh.pop %v3701
  %v3866 = vtanh.pop %v3704
  %v3867 = vtanh.pop %v3709
  %v3868 = vtanh.pop %v3712
  %v3869 = vtanh.pop %v3717
  %v3870 = vtanh.pop %v3720
  %v3871 = vtanh.pop %v3725
  %v3872 = vtanh.pop %v3728
  %v3873 = vtanh.pop %v3733
  %v3874 = vtanh.pop %v3736
  %v3875 = vtanh.pop %v3741
  %v3876 = vtanh.pop %v3744
  %v3877 = vtanh.pop %v3749
  %v3878 = vtanh.pop %v3752
  %v3879 = vtanh.pop %v3757
  %v3880 = vtanh.pop %v3760
  %v3881 = vtanh.pop %v3765
  %v3882 = vtanh.pop %v3768
  %v3883 = vtanh.pop %v3773
  %v3884 = vtanh.pop %v3776
  %v3885 = vtanh.pop %v3781
  %v3886 = vtanh.pop %v3784
  %v3887 = vtanh.pop %v3789
  %v3888 = vtanh.pop %v3792
  %v3889 = vtanh.pop %v3797
  %v3890 = vtanh.pop %v3800
  %v3891 = vtanh.pop %v3805
  %v3892 = vtanh.pop %v3808
  %v3893 = vtanh.pop %v3813
  %v3894 = vtanh.pop %v3816
  %v3895 = vtanh.pop %v3821
  %v3896 = vtanh.pop %v3824
  %v3897 = vtanh.pop %v3829
  %v3898 = vtanh.pop %v3832
  %v3899 = vpack.c.bf16 %v3836, %v3835
  %v3900 = vpack.c.bf16 %v3838, %v3837
  %v3901 = vpack.c.bf16 %v3840, %v3839
  %v3902 = vpack.c.bf16 %v3842, %v3841
  %v3903 = vpack.c.bf16 %v3844, %v3843
  %v3904 = vpack.c.bf16 %v3846, %v3845
  %v3905 = vpack.c.bf16 %v3848, %v3847
  %v3906 = vpack.c.bf16 %v3850, %v3849
  %v3907 = vpack.c.bf16 %v3852, %v3851
  %v3908 = vpack.c.bf16 %v3854, %v3853
  %v3909 = vpack.c.bf16 %v3856, %v3855
  %v3910 = vpack.c.bf16 %v3858, %v3857
  %v3911 = vpack.c.bf16 %v3860, %v3859
  %v3912 = vpack.c.bf16 %v3862, %v3861
  %v3913 = vpack.c.bf16 %v3864, %v3863
  %v3914 = vpack.c.bf16 %v3866, %v3865
  %v3915 = vpack.c.bf16 %v3868, %v3867
  %v3916 = vpack.c.bf16 %v3870, %v3869
  %v3917 = vpack.c.bf16 %v3872, %v3871
  %v3918 = vpack.c.bf16 %v3874, %v3873
  %v3919 = vpack.c.bf16 %v3876, %v3875
  %v3920 = vpack.c.bf16 %v3878, %v3877
  %v3921 = vpack.c.bf16 %v3880, %v3879
  %v3922 = vpack.c.bf16 %v3882, %v3881
  %v3923 = vpack.c.bf16 %v3884, %v3883
  %v3924 = vpack.c.bf16 %v3886, %v3885
  %v3925 = vpack.c.bf16 %v3888, %v3887
  %v3926 = vpack.c.bf16 %v3890, %v3889
  %v3927 = vpack.c.bf16 %v3892, %v3891
  %v3928 = vpack.c.bf16 %v3894, %v3893
  %v3929 = vpack.c.bf16 %v3896, %v3895
  %v3930 = vpack.c.bf16 %v3898, %v3897
  %v3963 = vunpack.c.l.b16 %v3899
  %v3964 = vunpack.c.h.b16 %v3899
  %v3965 = vunpack.c.l.b16 %v3900
  %v3966 = vunpack.c.h.b16 %v3900
  %v3967 = vunpack.c.l.b16 %v3901
  %v3968 = vunpack.c.h.b16 %v3901
  %v3969 = vunpack.c.l.b16 %v3902
  %v3970 = vunpack.c.h.b16 %v3902
  %v3971 = vunpack.c.l.b16 %v3903
  %v3972 = vunpack.c.h.b16 %v3903
  %v3973 = vunpack.c.l.b16 %v3904
  %v3974 = vunpack.c.h.b16 %v3904
  %v3975 = vunpack.c.l.b16 %v3905
  %v3976 = vunpack.c.h.b16 %v3905
  %v3977 = vunpack.c.l.b16 %v3906
  %v3978 = vunpack.c.h.b16 %v3906
  %v3979 = vunpack.c.l.b16 %v3907
  %v3980 = vunpack.c.h.b16 %v3907
  %v3981 = vunpack.c.l.b16 %v3908
  %v3982 = vunpack.c.h.b16 %v3908
  %v3983 = vunpack.c.l.b16 %v3909
  %v3984 = vunpack.c.h.b16 %v3909
  %v3985 = vunpack.c.l.b16 %v3910
  %v3986 = vunpack.c.h.b16 %v3910
  %v3987 = vunpack.c.l.b16 %v3911
  %v3988 = vunpack.c.h.b16 %v3911
  %v3989 = vunpack.c.l.b16 %v3912
  %v3990 = vunpack.c.h.b16 %v3912
  %v3991 = vunpack.c.l.b16 %v3913
  %v3992 = vunpack.c.h.b16 %v3913
  %v3993 = vunpack.c.l.b16 %v3914
  %v3994 = vunpack.c.h.b16 %v3914
  %v3995 = vunpack.c.l.b16 %v3915
  %v3996 = vunpack.c.h.b16 %v3915
  %v3997 = vunpack.c.l.b16 %v3916
  %v3998 = vunpack.c.h.b16 %v3916
  %v3999 = vunpack.c.l.b16 %v3917
  %v4000 = vunpack.c.h.b16 %v3917
  %v4001 = vunpack.c.l.b16 %v3918
  %v4002 = vunpack.c.h.b16 %v3918
  %v4003 = vunpack.c.l.b16 %v3919
  %v4004 = vunpack.c.h.b16 %v3919
  %v4005 = vunpack.c.l.b16 %v3920
  %v4006 = vunpack.c.h.b16 %v3920
  %v4007 = vunpack.c.l.b16 %v3921
  %v4008 = vunpack.c.h.b16 %v3921
  %v4009 = vunpack.c.l.b16 %v3922
  %v4010 = vunpack.c.h.b16 %v3922
  %v4011 = vunpack.c.l.b16 %v3923
  %v4012 = vunpack.c.h.b16 %v3923
  %v4013 = vunpack.c.l.b16 %v3924
  %v4014 = vunpack.c.h.b16 %v3924
  %v4015 = vunpack.c.l.b16 %v3925
  %v4016 = vunpack.c.h.b16 %v3925
  %v4017 = vunpack.c.l.b16 %v3926
  %v4018 = vunpack.c.h.b16 %v3926
  %v4019 = vunpack.c.l.b16 %v3927
  %v4020 = vunpack.c.h.b16 %v3927
  %v4021 = vunpack.c.l.b16 %v3928
  %v4022 = vunpack.c.h.b16 %v3928
  %v4023 = vunpack.c.l.b16 %v3929
  %v4024 = vunpack.c.h.b16 %v3929
  %v4025 = vunpack.c.l.b16 %v3930
  %v4026 = vunpack.c.h.b16 %v3930
  %v4027 = vpack.c.b16 %v3963, %v3963
  %v4028 = vpack.c.b16 %v3964, %v3964
  %v4029 = vpack.c.b16 %v3965, %v3965
  %v4030 = vpack.c.b16 %v3966, %v3966
  %v4031 = vpack.c.b16 %v3967, %v3967
  %v4032 = vpack.c.b16 %v3968, %v3968
  %v4033 = vpack.c.b16 %v3969, %v3969
  %v4034 = vpack.c.b16 %v3970, %v3970
  %v4035 = vpack.c.b16 %v3971, %v3971
  %v4036 = vpack.c.b16 %v3972, %v3972
  %v4037 = vpack.c.b16 %v3973, %v3973
  %v4038 = vpack.c.b16 %v3974, %v3974
  %v4039 = vpack.c.b16 %v3975, %v3975
  %v4040 = vpack.c.b16 %v3976, %v3976
  %v4041 = vpack.c.b16 %v3977, %v3977
  %v4042 = vpack.c.b16 %v3978, %v3978
  %v4043 = vpack.c.b16 %v3979, %v3979
  %v4044 = vpack.c.b16 %v3980, %v3980
  %v4045 = vpack.c.b16 %v3981, %v3981
  %v4046 = vpack.c.b16 %v3982, %v3982
  %v4047 = vpack.c.b16 %v3983, %v3983
  %v4048 = vpack.c.b16 %v3984, %v3984
  %v4049 = vpack.c.b16 %v3985, %v3985
  %v4050 = vpack.c.b16 %v3986, %v3986
  %v4051 = vpack.c.b16 %v3987, %v3987
  %v4052 = vpack.c.b16 %v3988, %v3988
  %v4053 = vpack.c.b16 %v3989, %v3989
  %v4054 = vpack.c.b16 %v3990, %v3990
  %v4055 = vpack.c.b16 %v3991, %v3991
  %v4056 = vpack.c.b16 %v3992, %v3992
  %v4057 = vpack.c.b16 %v3993, %v3993
  %v4058 = vpack.c.b16 %v3994, %v3994
  %v4059 = vpack.c.b16 %v3995, %v3995
  %v4060 = vpack.c.b16 %v3996, %v3996
  %v4061 = vpack.c.b16 %v3997, %v3997
  %v4062 = vpack.c.b16 %v3998, %v3998
  %v4063 = vpack.c.b16 %v3999, %v3999
  %v4064 = vpack.c.b16 %v4000, %v4000
  %v4065 = vpack.c.b16 %v4001, %v4001
  %v4066 = vpack.c.b16 %v4002, %v4002
  %v4067 = vpack.c.b16 %v4003, %v4003
  %v4068 = vpack.c.b16 %v4004, %v4004
  %v4069 = vpack.c.b16 %v4005, %v4005
  %v4070 = vpack.c.b16 %v4006, %v4006
  %v4071 = vpack.c.b16 %v4007, %v4007
  %v4072 = vpack.c.b16 %v4008, %v4008
  %v4073 = vpack.c.b16 %v4009, %v4009
  %v4074 = vpack.c.b16 %v4010, %v4010
  %v4075 = vpack.c.b16 %v4011, %v4011
  %v4076 = vpack.c.b16 %v4012, %v4012
  %v4077 = vpack.c.b16 %v4013, %v4013
  %v4078 = vpack.c.b16 %v4014, %v4014
  %v4079 = vpack.c.b16 %v4015, %v4015
  %v4080 = vpack.c.b16 %v4016, %v4016
  %v4081 = vpack.c.b16 %v4017, %v4017
  %v4082 = vpack.c.b16 %v4018, %v4018
  %v4083 = vpack.c.b16 %v4019, %v4019
  %v4084 = vpack.c.b16 %v4020, %v4020
  %v4085 = vpack.c.b16 %v4021, %v4021
  %v4086 = vpack.c.b16 %v4022, %v4022
  %v4087 = vpack.c.b16 %v4023, %v4023
  %v4088 = vpack.c.b16 %v4024, %v4024
  %v4089 = vpack.c.b16 %v4025, %v4025
  %v4090 = vpack.c.b16 %v4026, %v4026
  %4155 = vst [vmem:[%s3] sm:$0xf] %v4027
  %4156 = vst [vmem:[%s3 + $0x4] sm:$0xf] %v4028
  %4157 = vst [vmem:[%s3 + $0x8] sm:$0xf] %v4029
  %4158 = vst [vmem:[%s3 + $0xc] sm:$0xf] %v4030
  %4159 = vst [vmem:[%s3 + $0x10] sm:$0xf] %v4031
  %4160 = vst [vmem:[%s3 + $0x14] sm:$0xf] %v4032
  %4161 = vst [vmem:[%s3 + $0x18] sm:$0xf] %v4033
  %4162 = vst [vmem:[%s3 + $0x1c] sm:$0xf] %v4034
  %4163 = vst [vmem:[%s3 + $0x20] sm:$0xf] %v4035
  %4164 = vst [vmem:[%s3 + $0x24] sm:$0xf] %v4036
  %4165 = vst [vmem:[%s3 + $0x28] sm:$0xf] %v4037
  %4166 = vst [vmem:[%s3 + $0x2c] sm:$0xf] %v4038
  %4167 = vst [vmem:[%s3 + $0x30] sm:$0xf] %v4039
  %4168 = vst [vmem:[%s3 + $0x34] sm:$0xf] %v4040
  %4169 = vst [vmem:[%s3 + $0x38] sm:$0xf] %v4041
  %4170 = vst [vmem:[%s3 + $0x3c] sm:$0xf] %v4042
  %4171 = vst [vmem:[%s3 + $0x40] sm:$0xf] %v4043
  %4172 = vst [vmem:[%s3 + $0x44] sm:$0xf] %v4044
  %4173 = vst [vmem:[%s3 + $0x48] sm:$0xf] %v4045
  %4174 = vst [vmem:[%s3 + $0x4c] sm:$0xf] %v4046
  %4175 = vst [vmem:[%s3 + $0x50] sm:$0xf] %v4047
  %4176 = vst [vmem:[%s3 + $0x54] sm:$0xf] %v4048
  %4177 = vst [vmem:[%s3 + $0x58] sm:$0xf] %v4049
  %4178 = vst [vmem:[%s3 + $0x5c] sm:$0xf] %v4050
  %4179 = vst [vmem:[%s3 + $0x60] sm:$0xf] %v4051
  %4180 = vst [vmem:[%s3 + $0x64] sm:$0xf] %v4052
  %4181 = vst [vmem:[%s3 + $0x68] sm:$0xf] %v4053
  %4182 = vst [vmem:[%s3 + $0x6c] sm:$0xf] %v4054
  %4183 = vst [vmem:[%s3 + $0x70] sm:$0xf] %v4055
  %4184 = vst [vmem:[%s3 + $0x74] sm:$0xf] %v4056
  %4185 = vst [vmem:[%s3 + $0x78] sm:$0xf] %v4057
  %4186 = vst [vmem:[%s3 + $0x7c] sm:$0xf] %v4058
  %4187 = vst [vmem:[%s3 + $0x80] sm:$0xf] %v4059
  %4188 = vst [vmem:[%s3 + $0x84] sm:$0xf] %v4060
  %4189 = vst [vmem:[%s3 + $0x88] sm:$0xf] %v4061
  %4190 = vst [vmem:[%s3 + $0x8c] sm:$0xf] %v4062
  %4191 = vst [vmem:[%s3 + $0x90] sm:$0xf] %v4063
  %4192 = vst [vmem:[%s3 + $0x94] sm:$0xf] %v4064
  %4193 = vst [vmem:[%s3 + $0x98] sm:$0xf] %v4065
  %4194 = vst [vmem:[%s3 + $0x9c] sm:$0xf] %v4066
  %4195 = vst [vmem:[%s3 + $0xa0] sm:$0xf] %v4067
  %4196 = vst [vmem:[%s3 + $0xa4] sm:$0xf] %v4068
  %4197 = vst [vmem:[%s3 + $0xa8] sm:$0xf] %v4069
  %4198 = vst [vmem:[%s3 + $0xac] sm:$0xf] %v4070
  %4199 = vst [vmem:[%s3 + $0xb0] sm:$0xf] %v4071
  %4200 = vst [vmem:[%s3 + $0xb4] sm:$0xf] %v4072
  %4201 = vst [vmem:[%s3 + $0xb8] sm:$0xf] %v4073
  %4202 = vst [vmem:[%s3 + $0xbc] sm:$0xf] %v4074
  %4203 = vst [vmem:[%s3 + $0xc0] sm:$0xf] %v4075
  %4204 = vst [vmem:[%s3 + $0xc4] sm:$0xf] %v4076
  %4205 = vst [vmem:[%s3 + $0xc8] sm:$0xf] %v4077
  %4206 = vst [vmem:[%s3 + $0xcc] sm:$0xf] %v4078
  %4207 = vst [vmem:[%s3 + $0xd0] sm:$0xf] %v4079
  %4208 = vst [vmem:[%s3 + $0xd4] sm:$0xf] %v4080
  %4209 = vst [vmem:[%s3 + $0xd8] sm:$0xf] %v4081
  %4210 = vst [vmem:[%s3 + $0xdc] sm:$0xf] %v4082
  %4211 = vst [vmem:[%s3 + $0xe0] sm:$0xf] %v4083
  %4212 = vst [vmem:[%s3 + $0xe4] sm:$0xf] %v4084
  %4213 = vst [vmem:[%s3 + $0xe8] sm:$0xf] %v4085
  %4214 = vst [vmem:[%s3 + $0xec] sm:$0xf] %v4086
  %4215 = vst [vmem:[%s3 + $0xf0] sm:$0xf] %v4087
  %4216 = vst [vmem:[%s3 + $0xf4] sm:$0xf] %v4088
  %4217 = vst [vmem:[%s3 + $0xf8] sm:$0xf] %v4089
  %4218 = vst [vmem:[%s3 + $0xfc] sm:$0xf] %v4090
  // Predicated region
  $region14: #{generator_forward.35} parent=0 // pred_check
    _
  $region15: #{generator_forward.35} parent=0 // pred_check_branch
    %4220 = sbr.rel (0) target = $region17
  $region16: #{generator_forward.35} parent=0 // pred_region
    _
  $region17: #{generator_forward.35} parent=0 // pred_fallthru
    _
  // Predicated region
  $region18: #{generator_forward.35} parent=0 // pred_check
    _
  $region19: #{generator_forward.35} parent=0 // pred_check_branch
    %4222 = sbr.rel (0) target = $region21
  $region20: #{generator_forward.35} parent=0 // pred_region
    _
  $region21: #{generator_forward.35} parent=0 // pred_fallthru
    _

</llo_original>
